<compile_context>
chip_gen: v7x
topology: tpu7x:2x2x1
jax: 0.10.0
libtpu: 0.0.40
codegen_flags: <defaults>
</compile_context>

<pallas_src>
import jax
import jax.numpy as jnp
from jax import lax
from jax.experimental import pallas as pl
from jax.experimental.pallas import tpu as pltpu

LANE = 128


def _round_up(n, m):
    return ((n + m - 1) // m) * m


def _pad_last(a, to):
    pad = to - a.shape[-1]
    if pad == 0:
        return a
    return jnp.pad(a, [(0, 0)] * (a.ndim - 1) + [(0, pad)])


def make_kernel(Bt, H, W, Ci, Pp, Cmax, stride, Ho, Wo, has_shortcut, mxu_dtype):
    """Builds the fused wide_basic kernel for static shapes / config (NHWC, padded channels)."""

    def conv3x3(pad_ref, w_ref, cin, cout, s, Hout, Wout):
        # pad_ref: (Bt, H+2, W+2, Cmax) zero-halo'd activations (f32). 9 taps -> 9 MXU matmuls.
        hlim = (Hout - 1) * s + 1
        wlim = (Wout - 1) * s + 1
        acc = jnp.zeros((Bt * Hout * Wout, cout), jnp.float32)
        for kx in range(3):
            # Hoist the W (sublane) shift out of the ky loop: 3 relayout loads per conv, not 9.
            win = pad_ref[:, :, kx:kx + wlim, :cin]                 # (Bt, H+2, wlim, cin)
            if s != 1:
                # gather strided columns directly (no wasted FLOPs for stride>1)
                win = lax.slice(win, (0, 0, 0, 0), (Bt, H + 2, wlim, cin), (1, 1, s, 1))
            win = win.astype(mxu_dtype)                             # bf16 MXU operand
            for ky in range(3):
                if s == 1:
                    rows = win[:, ky:ky + Hout]                     # (Bt, Hout, Wout, cin)
                else:
                    rows = lax.slice(win, (0, ky, 0, 0),
                                     (Bt, ky + hlim, Wout, cin), (1, s, 1, 1))
                acc = acc + jnp.dot(rows.reshape(Bt * Hout * Wout, cin),
                                    w_ref[ky, kx],
                                    preferred_element_type=jnp.float32)
        return acc.reshape(Bt, Hout, Wout, cout)

    def kernel(*refs):
        if has_shortcut:
            (x_ref, s1_ref, t1_ref, w1_ref, c1_ref,
             s2_ref, t2_ref, w2_ref, c2_ref,
             ws_ref, cs_ref, o_ref, pad_ref) = refs
        else:
            (x_ref, s1_ref, t1_ref, w1_ref, c1_ref,
             s2_ref, t2_ref, w2_ref, c2_ref,
             o_ref, pad_ref) = refs

        x = x_ref[...]                                              # (Bt, H, W, Ci) f32

        # ---- zero only the 1-pixel halo border strips (not the whole buffer) ----
        zrow = jnp.zeros((Bt, 1, W + 2, Cmax), jnp.float32)
        zcol = jnp.zeros((Bt, H + 2, 1, Cmax), jnp.float32)
        pad_ref[:, 0:1, :, :] = zrow
        pad_ref[:, H + 1:H + 2, :, :] = zrow
        pad_ref[:, :, 0:1, :] = zcol
        pad_ref[:, :, W + 1:W + 2, :] = zcol

        # ---- BN1 (folded affine, f32) + ReLU; write interior of the shared halo scratch ----
        a1 = jnp.maximum(x * s1_ref[...] + t1_ref[...], 0.0)
        pad_ref[:, 1:H + 1, 1:W + 1, :Ci] = a1

        # ---- conv1: 3x3, stride 1, padding 1 ----
        out1 = conv3x3(pad_ref, w1_ref, Ci, Pp, 1, H, W) + c1_ref[...]      # (Bt,H,W,Pp) f32

        # ---- BN2 + ReLU; reuse the SAME halo scratch (lifetimes don't overlap) ----
        a2 = jnp.maximum(out1 * s2_ref[...] + t2_ref[...], 0.0)
        pad_ref[:, 1:H + 1, 1:W + 1, :Pp] = a2

        # ---- conv2: 3x3, stride `stride`, padding 1 (direct strided patches) ----
        out2 = conv3x3(pad_ref, w2_ref, Pp, Pp, stride, Ho, Wo) + c2_ref[...]

        # ---- shortcut ----
        if has_shortcut:
            if stride == 1:
                xs = x
            else:
                xs = lax.slice(x, (0, 0, 0, 0),
                               (Bt, (Ho - 1) * stride + 1, (Wo - 1) * stride + 1, Ci),
                               (1, stride, stride, 1))
            sc = jnp.dot(xs.astype(mxu_dtype).reshape(Bt * Ho * Wo, Ci),
                         ws_ref[...], preferred_element_type=jnp.float32)
            sc = sc.reshape(Bt, Ho, Wo, Pp) + cs_ref[...]
        else:
            sc = x                                                  # identity (stride==1, Ci==Pp)

        o_ref[...] = (out2 + sc).astype(o_ref.dtype)

    return kernel


def _pick_batch_tile(B, per_batch_bytes, budget_bytes=12 * 1024 * 1024):
    """Largest batch-divisor tile under the VMEM budget, keeping >=2 grid steps when possible."""
    bt = 1
    for cand in range(1, B + 1):
        if B % cand:
            continue
        if cand * per_batch_bytes > budget_bytes:
            continue
        if B >= 2 and (B // cand) < 2:
            continue  # keep >=2 grid steps so the DMA pipeline / megacore have work
        bt = cand
    return bt


def wide_basic_forward(x_nchw, params, stride=1, mxu_dtype=jnp.bfloat16):
    """Pallas forward of wide_basic. x_nchw: (B, Cin, H, W) f32 -> (B, P, Ho, Wo) f32."""
    eps = 1e-5
    x = jnp.transpose(x_nchw, (0, 2, 3, 1)).astype(jnp.float32)     # -> NHWC
    B, H, W, Cin = x.shape
    P = params["conv1_w"].shape[-1]
    has_shortcut = (stride != 1) or (Cin != P)

    Ci = _round_up(Cin, LANE)          # lane-dense channel padding
    Pp = _round_up(P, LANE)
    Cmax = max(Ci, Pp)
    Ho = (H - 1) // stride + 1
    Wo = (W - 1) // stride + 1

    # fold inference-mode BN into per-channel scale / bias (f32)
    s1 = params["bn1_gamma"] / jnp.sqrt(params["bn1_var"] + eps)
    t1 = params["bn1_beta"] - params["bn1_mean"] * s1
    s2 = params["bn2_gamma"] / jnp.sqrt(params["bn2_var"] + eps)
    t2 = params["bn2_beta"] - params["bn2_mean"] * s2

    inputs = [
        _pad_last(x, Ci),
        _pad_last(s1, Ci).reshape(1, 1, 1, Ci),
        _pad_last(t1, Ci).reshape(1, 1, 1, Ci),
        jnp.pad(params["conv1_w"], ((0, 0), (0, 0), (0, Ci - Cin), (0, Pp - P))).astype(mxu_dtype),
        _pad_last(params["conv1_b"], Pp).reshape(1, 1, 1, Pp),
        _pad_last(s2, Pp).reshape(1, 1, 1, Pp),
        _pad_last(t2, Pp).reshape(1, 1, 1, Pp),
        jnp.pad(params["conv2_w"], ((0, 0), (0, 0), (0, Pp - P), (0, Pp - P))).astype(mxu_dtype),
        _pad_last(params["conv2_b"], Pp).reshape(1, 1, 1, Pp),
    ]
    if has_shortcut:
        inputs += [
            jnp.pad(params["sc_w"], ((0, Ci - Cin), (0, Pp - P))).astype(mxu_dtype),
            _pad_last(params["sc_b"], Pp).reshape(1, 1, 1, Pp),
        ]

    # batch tile sized for a conservative VMEM budget (fits v7x's smaller VMEM)
    per_batch = (H * W * Ci * 4 * 2            # input block (double-buffered)
                 + Ho * Wo * Pp * 4 * 2        # output block (double-buffered)
                 + (H + 2) * (W + 2) * Cmax * 4  # shared halo scratch (f32)
                 + H * W * max(Ci, Pp) * 4 * 4)  # f32 intermediates headroom
    Bt = _pick_batch_tile(B, per_batch)

    kernel = make_kernel(Bt, H, W, Ci, Pp, Cmax, stride, Ho, Wo, has_shortcut, mxu_dtype)

    def _const_spec(a):
        nd = a.ndim
        return pl.BlockSpec(a.shape, lambda b, _nd=nd: (0,) * _nd)

    in_specs = [pl.BlockSpec((Bt, H, W, Ci), lambda b: (b, 0, 0, 0))]
    in_specs += [_const_spec(a) for a in inputs[1:]]

    flops = 2 * B * H * W * 9 * Ci * Pp + 2 * B * Ho * Wo * 9 * Pp * Pp
    if has_shortcut:
        flops += 2 * B * Ho * Wo * Ci * Pp
    bytes_accessed = int(sum(int(a.size) * a.dtype.itemsize for a in inputs)
                         + B * Ho * Wo * Pp * 4)

    out_nhwc = pl.pallas_call(
        kernel,
        out_shape=jax.ShapeDtypeStruct((B, Ho, Wo, Pp), jnp.float32),
        grid=(B // Bt,),
        in_specs=in_specs,
        out_specs=pl.BlockSpec((Bt, Ho, Wo, Pp), lambda b: (b, 0, 0, 0)),
        scratch_shapes=[pltpu.VMEM((Bt, H + 2, W + 2, Cmax), jnp.float32)],
        compiler_params=pltpu.CompilerParams(
            dimension_semantics=("parallel",),
            vmem_limit_bytes=48 * 1024 * 1024),
        cost_estimate=pl.CostEstimate(flops=flops, transcendentals=0,
                                      bytes_accessed=bytes_accessed),
    )(*inputs)

    out_nhwc = out_nhwc[..., :P]                                    # drop lane padding
    return jnp.transpose(out_nhwc, (0, 3, 1, 2))                    # -> NCHW


# ---------------- pure-JAX reference (for correctness check) ----------------
def reference(x_nchw, params, stride=1, conv_dtype=jnp.float32):
    """conv_dtype=bfloat16 mimics the kernel's MXU operand precision (products of bf16
    values are exact in f32, so only the f32 summation order differs)."""
    eps = 1e-5
    Cin = x_nchw.shape[1]
    P = params["conv1_w"].shape[-1]
    has_shortcut = (stride != 1) or (Cin != P)

    def bn_relu(x, g, b, m, v):
        s = g / jnp.sqrt(v + eps)
        t = b - m * s
        return jnp.maximum(x * s[None, :, None, None] + t[None, :, None, None], 0.0)

    def conv(x, w_hwio, b, s, pad):
        out = lax.conv_general_dilated(
            x.astype(conv_dtype), w_hwio.astype(conv_dtype), (s, s),
            [(pad, pad), (pad, pad)],
            dimension_numbers=("NCHW", "HWIO", "NCHW"),
            preferred_element_type=jnp.float32)
        return out + b[None, :, None, None]

    a1 = bn_relu(x_nchw, params["bn1_gamma"], params["bn1_beta"],
                 params["bn1_mean"], params["bn1_var"])
    out1 = conv(a1, params["conv1_w"], params["conv1_b"], 1, 1)
    a2 = bn_relu(out1, params["bn2_gamma"], params["bn2_beta"],
                 params["bn2_mean"], params["bn2_var"])
    out2 = conv(a2, params["conv2_w"], params["conv2_b"], stride, 1)
    if has_shortcut:
        sc = conv(x_nchw, params["sc_w"].reshape(1, 1, Cin, P), params["sc_b"], stride, 0)
    else:
        sc = x_nchw
    return out2 + sc


if __name__ == "__main__":
    B, Cin, H, W = 2, 4, 16, 16
    planes = 8
    stride = 1          # Cin != planes -> the 1x1-conv shortcut path is exercised

    ks = jax.random.split(jax.random.PRNGKey(0), 15)
    params = dict(
        bn1_gamma=1.0 + 0.1 * jax.random.normal(ks[0], (Cin,), jnp.float32),
        bn1_beta=0.1 * jax.random.normal(ks[1], (Cin,), jnp.float32),
        bn1_mean=0.1 * jax.random.normal(ks[2], (Cin,), jnp.float32),
        bn1_var=1.0 + 0.1 * jnp.abs(jax.random.normal(ks[3], (Cin,), jnp.float32)),
        conv1_w=0.1 * jax.random.normal(ks[4], (3, 3, Cin, planes), jnp.float32),
        conv1_b=0.05 * jax.random.normal(ks[5], (planes,), jnp.float32),
        bn2_gamma=1.0 + 0.1 * jax.random.normal(ks[6], (planes,), jnp.float32),
        bn2_beta=0.1 * jax.random.normal(ks[7], (planes,), jnp.float32),
        bn2_mean=0.1 * jax.random.normal(ks[8], (planes,), jnp.float32),
        bn2_var=1.0 + 0.1 * jnp.abs(jax.random.normal(ks[9], (planes,), jnp.float32)),
        conv2_w=0.1 * jax.random.normal(ks[10], (3, 3, planes, planes), jnp.float32),
        conv2_b=0.05 * jax.random.normal(ks[11], (planes,), jnp.float32),
        sc_w=0.1 * jax.random.normal(ks[12], (Cin, planes), jnp.float32),
        sc_b=0.05 * jax.random.normal(ks[13], (planes,), jnp.float32),
    )
    x = jax.random.normal(ks[14], (B, Cin, H, W), jnp.float32)

    out = jax.block_until_ready(wide_basic_forward(x, params, stride=stride))

    ref_matched = reference(x, params, stride=stride, conv_dtype=jnp.bfloat16)  # kernel numerics
    ref_f32 = reference(x, params, stride=stride, conv_dtype=jnp.float32)       # full precision

    assert out.shape == ref_f32.shape, (out.shape, ref_f32.shape)
    err_matched = float(jnp.max(jnp.abs(out - ref_matched)))
    err_f32 = float(jnp.max(jnp.abs(out - ref_f32)))
    if err_matched < 5e-3 and err_f32 < 3e-2:
        print("KERNEL_OK")
    else:
        raise SystemExit(f"mismatch: max err vs bf16-matched ref = {err_matched}, "
                         f"vs f32 ref = {err_f32}")
</pallas_src>

<mosaic_0001>
module attributes {stable_mosaic.version = 11 : i64} {
  func.func @kernel(%arg0: i32, %arg1: memref<1x16x16x128xf32, #tpu.memory_space<vmem>>, %arg2: memref<1x1x1x128xf32, #tpu.memory_space<vmem>>, %arg3: memref<1x1x1x128xf32, #tpu.memory_space<vmem>>, %arg4: memref<3x3x128x128xbf16, #tpu.memory_space<vmem>>, %arg5: memref<1x1x1x128xf32, #tpu.memory_space<vmem>>, %arg6: memref<1x1x1x128xf32, #tpu.memory_space<vmem>>, %arg7: memref<1x1x1x128xf32, #tpu.memory_space<vmem>>, %arg8: memref<3x3x128x128xbf16, #tpu.memory_space<vmem>>, %arg9: memref<1x1x1x128xf32, #tpu.memory_space<vmem>>, %arg10: memref<128x128xbf16, #tpu.memory_space<vmem>>, %arg11: memref<1x1x1x128xf32, #tpu.memory_space<vmem>>, %arg12: memref<1x16x16x128xf32, #tpu.memory_space<vmem>>, %arg13: memref<1x18x18x128xf32, #tpu.memory_space<vmem>>) attributes {dimension_semantics = [#tpu.dimension_semantics<parallel>], iteration_bounds = array<i64: 2>, scalar_prefetch = 0 : i64, scratch_operands = 1 : i64, tpu.core_type = #tpu.core_type<tc>, window_params = [{transform_indices = @transform_0, window_bounds = array<i64: 1, 16, 16, 128>}, {pipeline_mode = #tpu.pipeline_mode<synchronous>, transform_indices = @transform_1, window_bounds = array<i64: 1, 1, 1, 128>}, {pipeline_mode = #tpu.pipeline_mode<synchronous>, transform_indices = @transform_2, window_bounds = array<i64: 1, 1, 1, 128>}, {pipeline_mode = #tpu.pipeline_mode<synchronous>, transform_indices = @transform_3, window_bounds = array<i64: 3, 3, 128, 128>}, {pipeline_mode = #tpu.pipeline_mode<synchronous>, transform_indices = @transform_4, window_bounds = array<i64: 1, 1, 1, 128>}, {pipeline_mode = #tpu.pipeline_mode<synchronous>, transform_indices = @transform_5, window_bounds = array<i64: 1, 1, 1, 128>}, {pipeline_mode = #tpu.pipeline_mode<synchronous>, transform_indices = @transform_6, window_bounds = array<i64: 1, 1, 1, 128>}, {pipeline_mode = #tpu.pipeline_mode<synchronous>, transform_indices = @transform_7, window_bounds = array<i64: 3, 3, 128, 128>}, {pipeline_mode = #tpu.pipeline_mode<synchronous>, transform_indices = @transform_8, window_bounds = array<i64: 1, 1, 1, 128>}, {pipeline_mode = #tpu.pipeline_mode<synchronous>, transform_indices = @transform_9, window_bounds = array<i64: 128, 128>}, {pipeline_mode = #tpu.pipeline_mode<synchronous>, transform_indices = @transform_10, window_bounds = array<i64: 1, 1, 1, 128>}, {transform_indices = @transform_11, window_bounds = array<i64: 1, 16, 16, 128>}]} {
    %c0 = arith.constant 0 : index
    %c0_0 = arith.constant 0 : index
    %c0_1 = arith.constant 0 : index
    %c0_2 = arith.constant 0 : index
    %0 = vector.load %arg1[%c0, %c0_0, %c0_1, %c0_2] : memref<1x16x16x128xf32, #tpu.memory_space<vmem>>, vector<1x16x16x128xf32>
    %cst = arith.constant 0.000000e+00 : f32
    %1 = vector.broadcast %cst : f32 to vector<1x1x18x128xf32>
    %cst_3 = arith.constant 0.000000e+00 : f32
    %2 = vector.broadcast %cst_3 : f32 to vector<1x18x1x128xf32>
    %c0_4 = arith.constant 0 : index
    %c0_5 = arith.constant 0 : index
    %c0_6 = arith.constant 0 : index
    %c0_7 = arith.constant 0 : index
    %3 = vector.load %arg13[%c0_4, %c0_5, %c0_6, %c0_7] : memref<1x18x18x128xf32, #tpu.memory_space<vmem>>, vector<1x1x18x128xf32>
    tpu.vector_store %arg13[%c0_4, %c0_5, %c0_6, %c0_7], %1 {strides = array<i32>} : memref<1x18x18x128xf32, #tpu.memory_space<vmem>>, vector<1x1x18x128xf32>,
    %c0_8 = arith.constant 0 : index
    %c17 = arith.constant 17 : index
    %c0_9 = arith.constant 0 : index
    %c0_10 = arith.constant 0 : index
    %4 = vector.load %arg13[%c0_8, %c17, %c0_9, %c0_10] : memref<1x18x18x128xf32, #tpu.memory_space<vmem>>, vector<1x1x18x128xf32>
    tpu.vector_store %arg13[%c0_8, %c17, %c0_9, %c0_10], %1 {strides = array<i32>} : memref<1x18x18x128xf32, #tpu.memory_space<vmem>>, vector<1x1x18x128xf32>,
    %c0_11 = arith.constant 0 : index
    %c0_12 = arith.constant 0 : index
    %c0_13 = arith.constant 0 : index
    %c0_14 = arith.constant 0 : index
    %5 = vector.load %arg13[%c0_11, %c0_12, %c0_13, %c0_14] : memref<1x18x18x128xf32, #tpu.memory_space<vmem>>, vector<1x18x1x128xf32>
    tpu.vector_store %arg13[%c0_11, %c0_12, %c0_13, %c0_14], %2 {strides = array<i32>} : memref<1x18x18x128xf32, #tpu.memory_space<vmem>>, vector<1x18x1x128xf32>,
    %c0_15 = arith.constant 0 : index
    %c0_16 = arith.constant 0 : index
    %c17_17 = arith.constant 17 : index
    %c0_18 = arith.constant 0 : index
    %6 = vector.load %arg13[%c0_15, %c0_16, %c17_17, %c0_18] : memref<1x18x18x128xf32, #tpu.memory_space<vmem>>, vector<1x18x1x128xf32>
    tpu.vector_store %arg13[%c0_15, %c0_16, %c17_17, %c0_18], %2 {strides = array<i32>} : memref<1x18x18x128xf32, #tpu.memory_space<vmem>>, vector<1x18x1x128xf32>,
    %c0_19 = arith.constant 0 : index
    %c0_20 = arith.constant 0 : index
    %c0_21 = arith.constant 0 : index
    %c0_22 = arith.constant 0 : index
    %7 = vector.load %arg2[%c0_19, %c0_20, %c0_21, %c0_22] : memref<1x1x1x128xf32, #tpu.memory_space<vmem>>, vector<1x1x1x128xf32>
    %8 = vector.broadcast %7 : vector<1x1x1x128xf32> to vector<1x16x16x128xf32>
    %9 = arith.mulf %0, %8 : vector<1x16x16x128xf32>
    %c0_23 = arith.constant 0 : index
    %c0_24 = arith.constant 0 : index
    %c0_25 = arith.constant 0 : index
    %c0_26 = arith.constant 0 : index
    %10 = vector.load %arg3[%c0_23, %c0_24, %c0_25, %c0_26] : memref<1x1x1x128xf32, #tpu.memory_space<vmem>>, vector<1x1x1x128xf32>
    %11 = vector.broadcast %10 : vector<1x1x1x128xf32> to vector<1x16x16x128xf32>
    %12 = arith.addf %9, %11 : vector<1x16x16x128xf32>
    %cst_27 = arith.constant 0.000000e+00 : f32
    %13 = vector.broadcast %cst_27 : f32 to vector<1x16x16x128xf32>
    %14 = arith.maximumf %12, %13 : vector<1x16x16x128xf32>
    %c0_28 = arith.constant 0 : index
    %c1 = arith.constant 1 : index
    %c1_29 = arith.constant 1 : index
    %c0_30 = arith.constant 0 : index
    %15 = vector.load %arg13[%c0_28, %c1, %c1_29, %c0_30] : memref<1x18x18x128xf32, #tpu.memory_space<vmem>>, vector<1x16x16x128xf32>
    tpu.vector_store %arg13[%c0_28, %c1, %c1_29, %c0_30], %14 {strides = array<i32>} : memref<1x18x18x128xf32, #tpu.memory_space<vmem>>, vector<1x16x16x128xf32>,
    %cst_31 = arith.constant 0.000000e+00 : f32
    %16 = vector.broadcast %cst_31 : f32 to vector<256x128xf32>
    %c0_32 = arith.constant 0 : index
    %c0_33 = arith.constant 0 : index
    %c0_34 = arith.constant 0 : index
    %c0_35 = arith.constant 0 : index
    %17 = vector.load %arg13[%c0_32, %c0_33, %c0_34, %c0_35] : memref<1x18x18x128xf32, #tpu.memory_space<vmem>>, vector<1x18x16x128xf32>
    %18 = arith.truncf %17 : vector<1x18x16x128xf32> to vector<1x18x16x128xbf16>
    %19 = vector.extract_strided_slice %18 {offsets = [0, 0, 0, 0], sizes = [1, 16, 16, 128], strides = [1, 1, 1, 1]} : vector<1x18x16x128xbf16> to vector<1x16x16x128xbf16>
    %20 = vector.shape_cast %19 : vector<1x16x16x128xbf16> to vector<256x128xbf16>
    %c0_36 = arith.constant 0 : index
    %c0_37 = arith.constant 0 : index
    %c0_38 = arith.constant 0 : index
    %c0_39 = arith.constant 0 : index
    %21 = vector.load %arg4[%c0_36, %c0_37, %c0_38, %c0_39] : memref<3x3x128x128xbf16, #tpu.memory_space<vmem>>, vector<1x1x128x128xbf16>
    %22 = vector.shape_cast %21 : vector<1x1x128x128xbf16> to vector<128x128xbf16>
    %cst_40 = arith.constant dense<0.000000e+00> : vector<256x128xf32>
    %23 = tpu.matmul %20, %22, %cst_40 {dimension_numbers = #tpu.dot_dimension_numbers<[1], [0], [0], [1], [0, 0, 1, 1], [], []>} : vector<256x128xbf16>, vector<128x128xbf16>, vector<256x128xf32> -> vector<256x128xf32>
    %24 = arith.addf %16, %23 : vector<256x128xf32>
    %25 = vector.extract_strided_slice %18 {offsets = [0, 1, 0, 0], sizes = [1, 16, 16, 128], strides = [1, 1, 1, 1]} : vector<1x18x16x128xbf16> to vector<1x16x16x128xbf16>
    %26 = vector.shape_cast %25 : vector<1x16x16x128xbf16> to vector<256x128xbf16>
    %c1_41 = arith.constant 1 : index
    %c0_42 = arith.constant 0 : index
    %c0_43 = arith.constant 0 : index
    %c0_44 = arith.constant 0 : index
    %27 = vector.load %arg4[%c1_41, %c0_42, %c0_43, %c0_44] : memref<3x3x128x128xbf16, #tpu.memory_space<vmem>>, vector<1x1x128x128xbf16>
    %28 = vector.shape_cast %27 : vector<1x1x128x128xbf16> to vector<128x128xbf16>
    %cst_45 = arith.constant dense<0.000000e+00> : vector<256x128xf32>
    %29 = tpu.matmul %26, %28, %cst_45 {dimension_numbers = #tpu.dot_dimension_numbers<[1], [0], [0], [1], [0, 0, 1, 1], [], []>} : vector<256x128xbf16>, vector<128x128xbf16>, vector<256x128xf32> -> vector<256x128xf32>
    %30 = arith.addf %24, %29 : vector<256x128xf32>
    %31 = vector.extract_strided_slice %18 {offsets = [0, 2, 0, 0], sizes = [1, 16, 16, 128], strides = [1, 1, 1, 1]} : vector<1x18x16x128xbf16> to vector<1x16x16x128xbf16>
    %32 = vector.shape_cast %31 : vector<1x16x16x128xbf16> to vector<256x128xbf16>
    %c2 = arith.constant 2 : index
    %c0_46 = arith.constant 0 : index
    %c0_47 = arith.constant 0 : index
    %c0_48 = arith.constant 0 : index
    %33 = vector.load %arg4[%c2, %c0_46, %c0_47, %c0_48] : memref<3x3x128x128xbf16, #tpu.memory_space<vmem>>, vector<1x1x128x128xbf16>
    %34 = vector.shape_cast %33 : vector<1x1x128x128xbf16> to vector<128x128xbf16>
    %cst_49 = arith.constant dense<0.000000e+00> : vector<256x128xf32>
    %35 = tpu.matmul %32, %34, %cst_49 {dimension_numbers = #tpu.dot_dimension_numbers<[1], [0], [0], [1], [0, 0, 1, 1], [], []>} : vector<256x128xbf16>, vector<128x128xbf16>, vector<256x128xf32> -> vector<256x128xf32>
    %36 = arith.addf %30, %35 : vector<256x128xf32>
    %c0_50 = arith.constant 0 : index
    %c0_51 = arith.constant 0 : index
    %c1_52 = arith.constant 1 : index
    %c0_53 = arith.constant 0 : index
    %37 = vector.load %arg13[%c0_50, %c0_51, %c1_52, %c0_53] : memref<1x18x18x128xf32, #tpu.memory_space<vmem>>, vector<1x18x16x128xf32>
    %38 = arith.truncf %37 : vector<1x18x16x128xf32> to vector<1x18x16x128xbf16>
    %39 = vector.extract_strided_slice %38 {offsets = [0, 0, 0, 0], sizes = [1, 16, 16, 128], strides = [1, 1, 1, 1]} : vector<1x18x16x128xbf16> to vector<1x16x16x128xbf16>
    %40 = vector.shape_cast %39 : vector<1x16x16x128xbf16> to vector<256x128xbf16>
    %c0_54 = arith.constant 0 : index
    %c1_55 = arith.constant 1 : index
    %c0_56 = arith.constant 0 : index
    %c0_57 = arith.constant 0 : index
    %41 = vector.load %arg4[%c0_54, %c1_55, %c0_56, %c0_57] : memref<3x3x128x128xbf16, #tpu.memory_space<vmem>>, vector<1x1x128x128xbf16>
    %42 = vector.shape_cast %41 : vector<1x1x128x128xbf16> to vector<128x128xbf16>
    %cst_58 = arith.constant dense<0.000000e+00> : vector<256x128xf32>
    %43 = tpu.matmul %40, %42, %cst_58 {dimension_numbers = #tpu.dot_dimension_numbers<[1], [0], [0], [1], [0, 0, 1, 1], [], []>} : vector<256x128xbf16>, vector<128x128xbf16>, vector<256x128xf32> -> vector<256x128xf32>
    %44 = arith.addf %36, %43 : vector<256x128xf32>
    %45 = vector.extract_strided_slice %38 {offsets = [0, 1, 0, 0], sizes = [1, 16, 16, 128], strides = [1, 1, 1, 1]} : vector<1x18x16x128xbf16> to vector<1x16x16x128xbf16>
    %46 = vector.shape_cast %45 : vector<1x16x16x128xbf16> to vector<256x128xbf16>
    %c1_59 = arith.constant 1 : index
    %c1_60 = arith.constant 1 : index
    %c0_61 = arith.constant 0 : index
    %c0_62 = arith.constant 0 : index
    %47 = vector.load %arg4[%c1_59, %c1_60, %c0_61, %c0_62] : memref<3x3x128x128xbf16, #tpu.memory_space<vmem>>, vector<1x1x128x128xbf16>
    %48 = vector.shape_cast %47 : vector<1x1x128x128xbf16> to vector<128x128xbf16>
    %cst_63 = arith.constant dense<0.000000e+00> : vector<256x128xf32>
    %49 = tpu.matmul %46, %48, %cst_63 {dimension_numbers = #tpu.dot_dimension_numbers<[1], [0], [0], [1], [0, 0, 1, 1], [], []>} : vector<256x128xbf16>, vector<128x128xbf16>, vector<256x128xf32> -> vector<256x128xf32>
    %50 = arith.addf %44, %49 : vector<256x128xf32>
    %51 = vector.extract_strided_slice %38 {offsets = [0, 2, 0, 0], sizes = [1, 16, 16, 128], strides = [1, 1, 1, 1]} : vector<1x18x16x128xbf16> to vector<1x16x16x128xbf16>
    %52 = vector.shape_cast %51 : vector<1x16x16x128xbf16> to vector<256x128xbf16>
    %c2_64 = arith.constant 2 : index
    %c1_65 = arith.constant 1 : index
    %c0_66 = arith.constant 0 : index
    %c0_67 = arith.constant 0 : index
    %53 = vector.load %arg4[%c2_64, %c1_65, %c0_66, %c0_67] : memref<3x3x128x128xbf16, #tpu.memory_space<vmem>>, vector<1x1x128x128xbf16>
    %54 = vector.shape_cast %53 : vector<1x1x128x128xbf16> to vector<128x128xbf16>
    %cst_68 = arith.constant dense<0.000000e+00> : vector<256x128xf32>
    %55 = tpu.matmul %52, %54, %cst_68 {dimension_numbers = #tpu.dot_dimension_numbers<[1], [0], [0], [1], [0, 0, 1, 1], [], []>} : vector<256x128xbf16>, vector<128x128xbf16>, vector<256x128xf32> -> vector<256x128xf32>
    %56 = arith.addf %50, %55 : vector<256x128xf32>
    %c0_69 = arith.constant 0 : index
    %c0_70 = arith.constant 0 : index
    %c2_71 = arith.constant 2 : index
    %c0_72 = arith.constant 0 : index
    %57 = vector.load %arg13[%c0_69, %c0_70, %c2_71, %c0_72] : memref<1x18x18x128xf32, #tpu.memory_space<vmem>>, vector<1x18x16x128xf32>
    %58 = arith.truncf %57 : vector<1x18x16x128xf32> to vector<1x18x16x128xbf16>
    %59 = vector.extract_strided_slice %58 {offsets = [0, 0, 0, 0], sizes = [1, 16, 16, 128], strides = [1, 1, 1, 1]} : vector<1x18x16x128xbf16> to vector<1x16x16x128xbf16>
    %60 = vector.shape_cast %59 : vector<1x16x16x128xbf16> to vector<256x128xbf16>
    %c0_73 = arith.constant 0 : index
    %c2_74 = arith.constant 2 : index
    %c0_75 = arith.constant 0 : index
    %c0_76 = arith.constant 0 : index
    %61 = vector.load %arg4[%c0_73, %c2_74, %c0_75, %c0_76] : memref<3x3x128x128xbf16, #tpu.memory_space<vmem>>, vector<1x1x128x128xbf16>
    %62 = vector.shape_cast %61 : vector<1x1x128x128xbf16> to vector<128x128xbf16>
    %cst_77 = arith.constant dense<0.000000e+00> : vector<256x128xf32>
    %63 = tpu.matmul %60, %62, %cst_77 {dimension_numbers = #tpu.dot_dimension_numbers<[1], [0], [0], [1], [0, 0, 1, 1], [], []>} : vector<256x128xbf16>, vector<128x128xbf16>, vector<256x128xf32> -> vector<256x128xf32>
    %64 = arith.addf %56, %63 : vector<256x128xf32>
    %65 = vector.extract_strided_slice %58 {offsets = [0, 1, 0, 0], sizes = [1, 16, 16, 128], strides = [1, 1, 1, 1]} : vector<1x18x16x128xbf16> to vector<1x16x16x128xbf16>
    %66 = vector.shape_cast %65 : vector<1x16x16x128xbf16> to vector<256x128xbf16>
    %c1_78 = arith.constant 1 : index
    %c2_79 = arith.constant 2 : index
    %c0_80 = arith.constant 0 : index
    %c0_81 = arith.constant 0 : index
    %67 = vector.load %arg4[%c1_78, %c2_79, %c0_80, %c0_81] : memref<3x3x128x128xbf16, #tpu.memory_space<vmem>>, vector<1x1x128x128xbf16>
    %68 = vector.shape_cast %67 : vector<1x1x128x128xbf16> to vector<128x128xbf16>
    %cst_82 = arith.constant dense<0.000000e+00> : vector<256x128xf32>
    %69 = tpu.matmul %66, %68, %cst_82 {dimension_numbers = #tpu.dot_dimension_numbers<[1], [0], [0], [1], [0, 0, 1, 1], [], []>} : vector<256x128xbf16>, vector<128x128xbf16>, vector<256x128xf32> -> vector<256x128xf32>
    %70 = arith.addf %64, %69 : vector<256x128xf32>
    %71 = vector.extract_strided_slice %58 {offsets = [0, 2, 0, 0], sizes = [1, 16, 16, 128], strides = [1, 1, 1, 1]} : vector<1x18x16x128xbf16> to vector<1x16x16x128xbf16>
    %72 = vector.shape_cast %71 : vector<1x16x16x128xbf16> to vector<256x128xbf16>
    %c2_83 = arith.constant 2 : index
    %c2_84 = arith.constant 2 : index
    %c0_85 = arith.constant 0 : index
    %c0_86 = arith.constant 0 : index
    %73 = vector.load %arg4[%c2_83, %c2_84, %c0_85, %c0_86] : memref<3x3x128x128xbf16, #tpu.memory_space<vmem>>, vector<1x1x128x128xbf16>
    %74 = vector.shape_cast %73 : vector<1x1x128x128xbf16> to vector<128x128xbf16>
    %cst_87 = arith.constant dense<0.000000e+00> : vector<256x128xf32>
    %75 = tpu.matmul %72, %74, %cst_87 {dimension_numbers = #tpu.dot_dimension_numbers<[1], [0], [0], [1], [0, 0, 1, 1], [], []>} : vector<256x128xbf16>, vector<128x128xbf16>, vector<256x128xf32> -> vector<256x128xf32>
    %76 = arith.addf %70, %75 : vector<256x128xf32>
    %77 = vector.shape_cast %76 : vector<256x128xf32> to vector<1x16x16x128xf32>
    %c0_88 = arith.constant 0 : index
    %c0_89 = arith.constant 0 : index
    %c0_90 = arith.constant 0 : index
    %c0_91 = arith.constant 0 : index
    %78 = vector.load %arg5[%c0_88, %c0_89, %c0_90, %c0_91] : memref<1x1x1x128xf32, #tpu.memory_space<vmem>>, vector<1x1x1x128xf32>
    %79 = vector.broadcast %78 : vector<1x1x1x128xf32> to vector<1x16x16x128xf32>
    %80 = arith.addf %77, %79 : vector<1x16x16x128xf32>
    %c0_92 = arith.constant 0 : index
    %c0_93 = arith.constant 0 : index
    %c0_94 = arith.constant 0 : index
    %c0_95 = arith.constant 0 : index
    %81 = vector.load %arg6[%c0_92, %c0_93, %c0_94, %c0_95] : memref<1x1x1x128xf32, #tpu.memory_space<vmem>>, vector<1x1x1x128xf32>
    %82 = vector.broadcast %81 : vector<1x1x1x128xf32> to vector<1x16x16x128xf32>
    %83 = arith.mulf %80, %82 : vector<1x16x16x128xf32>
    %c0_96 = arith.constant 0 : index
    %c0_97 = arith.constant 0 : index
    %c0_98 = arith.constant 0 : index
    %c0_99 = arith.constant 0 : index
    %84 = vector.load %arg7[%c0_96, %c0_97, %c0_98, %c0_99] : memref<1x1x1x128xf32, #tpu.memory_space<vmem>>, vector<1x1x1x128xf32>
    %85 = vector.broadcast %84 : vector<1x1x1x128xf32> to vector<1x16x16x128xf32>
    %86 = arith.addf %83, %85 : vector<1x16x16x128xf32>
    %cst_100 = arith.constant 0.000000e+00 : f32
    %87 = vector.broadcast %cst_100 : f32 to vector<1x16x16x128xf32>
    %88 = arith.maximumf %86, %87 : vector<1x16x16x128xf32>
    %c0_101 = arith.constant 0 : index
    %c1_102 = arith.constant 1 : index
    %c1_103 = arith.constant 1 : index
    %c0_104 = arith.constant 0 : index
    %89 = vector.load %arg13[%c0_101, %c1_102, %c1_103, %c0_104] : memref<1x18x18x128xf32, #tpu.memory_space<vmem>>, vector<1x16x16x128xf32>
    tpu.vector_store %arg13[%c0_101, %c1_102, %c1_103, %c0_104], %88 {strides = array<i32>} : memref<1x18x18x128xf32, #tpu.memory_space<vmem>>, vector<1x16x16x128xf32>,
    %cst_105 = arith.constant 0.000000e+00 : f32
    %90 = vector.broadcast %cst_105 : f32 to vector<256x128xf32>
    %c0_106 = arith.constant 0 : index
    %c0_107 = arith.constant 0 : index
    %c0_108 = arith.constant 0 : index
    %c0_109 = arith.constant 0 : index
    %91 = vector.load %arg13[%c0_106, %c0_107, %c0_108, %c0_109] : memref<1x18x18x128xf32, #tpu.memory_space<vmem>>, vector<1x18x16x128xf32>
    %92 = arith.truncf %91 : vector<1x18x16x128xf32> to vector<1x18x16x128xbf16>
    %93 = vector.extract_strided_slice %92 {offsets = [0, 0, 0, 0], sizes = [1, 16, 16, 128], strides = [1, 1, 1, 1]} : vector<1x18x16x128xbf16> to vector<1x16x16x128xbf16>
    %94 = vector.shape_cast %93 : vector<1x16x16x128xbf16> to vector<256x128xbf16>
    %c0_110 = arith.constant 0 : index
    %c0_111 = arith.constant 0 : index
    %c0_112 = arith.constant 0 : index
    %c0_113 = arith.constant 0 : index
    %95 = vector.load %arg8[%c0_110, %c0_111, %c0_112, %c0_113] : memref<3x3x128x128xbf16, #tpu.memory_space<vmem>>, vector<1x1x128x128xbf16>
    %96 = vector.shape_cast %95 : vector<1x1x128x128xbf16> to vector<128x128xbf16>
    %cst_114 = arith.constant dense<0.000000e+00> : vector<256x128xf32>
    %97 = tpu.matmul %94, %96, %cst_114 {dimension_numbers = #tpu.dot_dimension_numbers<[1], [0], [0], [1], [0, 0, 1, 1], [], []>} : vector<256x128xbf16>, vector<128x128xbf16>, vector<256x128xf32> -> vector<256x128xf32>
    %98 = arith.addf %90, %97 : vector<256x128xf32>
    %99 = vector.extract_strided_slice %92 {offsets = [0, 1, 0, 0], sizes = [1, 16, 16, 128], strides = [1, 1, 1, 1]} : vector<1x18x16x128xbf16> to vector<1x16x16x128xbf16>
    %100 = vector.shape_cast %99 : vector<1x16x16x128xbf16> to vector<256x128xbf16>
    %c1_115 = arith.constant 1 : index
    %c0_116 = arith.constant 0 : index
    %c0_117 = arith.constant 0 : index
    %c0_118 = arith.constant 0 : index
    %101 = vector.load %arg8[%c1_115, %c0_116, %c0_117, %c0_118] : memref<3x3x128x128xbf16, #tpu.memory_space<vmem>>, vector<1x1x128x128xbf16>
    %102 = vector.shape_cast %101 : vector<1x1x128x128xbf16> to vector<128x128xbf16>
    %cst_119 = arith.constant dense<0.000000e+00> : vector<256x128xf32>
    %103 = tpu.matmul %100, %102, %cst_119 {dimension_numbers = #tpu.dot_dimension_numbers<[1], [0], [0], [1], [0, 0, 1, 1], [], []>} : vector<256x128xbf16>, vector<128x128xbf16>, vector<256x128xf32> -> vector<256x128xf32>
    %104 = arith.addf %98, %103 : vector<256x128xf32>
    %105 = vector.extract_strided_slice %92 {offsets = [0, 2, 0, 0], sizes = [1, 16, 16, 128], strides = [1, 1, 1, 1]} : vector<1x18x16x128xbf16> to vector<1x16x16x128xbf16>
    %106 = vector.shape_cast %105 : vector<1x16x16x128xbf16> to vector<256x128xbf16>
    %c2_120 = arith.constant 2 : index
    %c0_121 = arith.constant 0 : index
    %c0_122 = arith.constant 0 : index
    %c0_123 = arith.constant 0 : index
    %107 = vector.load %arg8[%c2_120, %c0_121, %c0_122, %c0_123] : memref<3x3x128x128xbf16, #tpu.memory_space<vmem>>, vector<1x1x128x128xbf16>
    %108 = vector.shape_cast %107 : vector<1x1x128x128xbf16> to vector<128x128xbf16>
    %cst_124 = arith.constant dense<0.000000e+00> : vector<256x128xf32>
    %109 = tpu.matmul %106, %108, %cst_124 {dimension_numbers = #tpu.dot_dimension_numbers<[1], [0], [0], [1], [0, 0, 1, 1], [], []>} : vector<256x128xbf16>, vector<128x128xbf16>, vector<256x128xf32> -> vector<256x128xf32>
    %110 = arith.addf %104, %109 : vector<256x128xf32>
    %c0_125 = arith.constant 0 : index
    %c0_126 = arith.constant 0 : index
    %c1_127 = arith.constant 1 : index
    %c0_128 = arith.constant 0 : index
    %111 = vector.load %arg13[%c0_125, %c0_126, %c1_127, %c0_128] : memref<1x18x18x128xf32, #tpu.memory_space<vmem>>, vector<1x18x16x128xf32>
    %112 = arith.truncf %111 : vector<1x18x16x128xf32> to vector<1x18x16x128xbf16>
    %113 = vector.extract_strided_slice %112 {offsets = [0, 0, 0, 0], sizes = [1, 16, 16, 128], strides = [1, 1, 1, 1]} : vector<1x18x16x128xbf16> to vector<1x16x16x128xbf16>
    %114 = vector.shape_cast %113 : vector<1x16x16x128xbf16> to vector<256x128xbf16>
    %c0_129 = arith.constant 0 : index
    %c1_130 = arith.constant 1 : index
    %c0_131 = arith.constant 0 : index
    %c0_132 = arith.constant 0 : index
    %115 = vector.load %arg8[%c0_129, %c1_130, %c0_131, %c0_132] : memref<3x3x128x128xbf16, #tpu.memory_space<vmem>>, vector<1x1x128x128xbf16>
    %116 = vector.shape_cast %115 : vector<1x1x128x128xbf16> to vector<128x128xbf16>
    %cst_133 = arith.constant dense<0.000000e+00> : vector<256x128xf32>
    %117 = tpu.matmul %114, %116, %cst_133 {dimension_numbers = #tpu.dot_dimension_numbers<[1], [0], [0], [1], [0, 0, 1, 1], [], []>} : vector<256x128xbf16>, vector<128x128xbf16>, vector<256x128xf32> -> vector<256x128xf32>
    %118 = arith.addf %110, %117 : vector<256x128xf32>
    %119 = vector.extract_strided_slice %112 {offsets = [0, 1, 0, 0], sizes = [1, 16, 16, 128], strides = [1, 1, 1, 1]} : vector<1x18x16x128xbf16> to vector<1x16x16x128xbf16>
    %120 = vector.shape_cast %119 : vector<1x16x16x128xbf16> to vector<256x128xbf16>
    %c1_134 = arith.constant 1 : index
    %c1_135 = arith.constant 1 : index
    %c0_136 = arith.constant 0 : index
    %c0_137 = arith.constant 0 : index
    %121 = vector.load %arg8[%c1_134, %c1_135, %c0_136, %c0_137] : memref<3x3x128x128xbf16, #tpu.memory_space<vmem>>, vector<1x1x128x128xbf16>
    %122 = vector.shape_cast %121 : vector<1x1x128x128xbf16> to vector<128x128xbf16>
    %cst_138 = arith.constant dense<0.000000e+00> : vector<256x128xf32>
    %123 = tpu.matmul %120, %122, %cst_138 {dimension_numbers = #tpu.dot_dimension_numbers<[1], [0], [0], [1], [0, 0, 1, 1], [], []>} : vector<256x128xbf16>, vector<128x128xbf16>, vector<256x128xf32> -> vector<256x128xf32>
    %124 = arith.addf %118, %123 : vector<256x128xf32>
    %125 = vector.extract_strided_slice %112 {offsets = [0, 2, 0, 0], sizes = [1, 16, 16, 128], strides = [1, 1, 1, 1]} : vector<1x18x16x128xbf16> to vector<1x16x16x128xbf16>
    %126 = vector.shape_cast %125 : vector<1x16x16x128xbf16> to vector<256x128xbf16>
    %c2_139 = arith.constant 2 : index
    %c1_140 = arith.constant 1 : index
    %c0_141 = arith.constant 0 : index
    %c0_142 = arith.constant 0 : index
    %127 = vector.load %arg8[%c2_139, %c1_140, %c0_141, %c0_142] : memref<3x3x128x128xbf16, #tpu.memory_space<vmem>>, vector<1x1x128x128xbf16>
    %128 = vector.shape_cast %127 : vector<1x1x128x128xbf16> to vector<128x128xbf16>
    %cst_143 = arith.constant dense<0.000000e+00> : vector<256x128xf32>
    %129 = tpu.matmul %126, %128, %cst_143 {dimension_numbers = #tpu.dot_dimension_numbers<[1], [0], [0], [1], [0, 0, 1, 1], [], []>} : vector<256x128xbf16>, vector<128x128xbf16>, vector<256x128xf32> -> vector<256x128xf32>
    %130 = arith.addf %124, %129 : vector<256x128xf32>
    %c0_144 = arith.constant 0 : index
    %c0_145 = arith.constant 0 : index
    %c2_146 = arith.constant 2 : index
    %c0_147 = arith.constant 0 : index
    %131 = vector.load %arg13[%c0_144, %c0_145, %c2_146, %c0_147] : memref<1x18x18x128xf32, #tpu.memory_space<vmem>>, vector<1x18x16x128xf32>
    %132 = arith.truncf %131 : vector<1x18x16x128xf32> to vector<1x18x16x128xbf16>
    %133 = vector.extract_strided_slice %132 {offsets = [0, 0, 0, 0], sizes = [1, 16, 16, 128], strides = [1, 1, 1, 1]} : vector<1x18x16x128xbf16> to vector<1x16x16x128xbf16>
    %134 = vector.shape_cast %133 : vector<1x16x16x128xbf16> to vector<256x128xbf16>
    %c0_148 = arith.constant 0 : index
    %c2_149 = arith.constant 2 : index
    %c0_150 = arith.constant 0 : index
    %c0_151 = arith.constant 0 : index
    %135 = vector.load %arg8[%c0_148, %c2_149, %c0_150, %c0_151] : memref<3x3x128x128xbf16, #tpu.memory_space<vmem>>, vector<1x1x128x128xbf16>
    %136 = vector.shape_cast %135 : vector<1x1x128x128xbf16> to vector<128x128xbf16>
    %cst_152 = arith.constant dense<0.000000e+00> : vector<256x128xf32>
    %137 = tpu.matmul %134, %136, %cst_152 {dimension_numbers = #tpu.dot_dimension_numbers<[1], [0], [0], [1], [0, 0, 1, 1], [], []>} : vector<256x128xbf16>, vector<128x128xbf16>, vector<256x128xf32> -> vector<256x128xf32>
    %138 = arith.addf %130, %137 : vector<256x128xf32>
    %139 = vector.extract_strided_slice %132 {offsets = [0, 1, 0, 0], sizes = [1, 16, 16, 128], strides = [1, 1, 1, 1]} : vector<1x18x16x128xbf16> to vector<1x16x16x128xbf16>
    %140 = vector.shape_cast %139 : vector<1x16x16x128xbf16> to vector<256x128xbf16>
    %c1_153 = arith.constant 1 : index
    %c2_154 = arith.constant 2 : index
    %c0_155 = arith.constant 0 : index
    %c0_156 = arith.constant 0 : index
    %141 = vector.load %arg8[%c1_153, %c2_154, %c0_155, %c0_156] : memref<3x3x128x128xbf16, #tpu.memory_space<vmem>>, vector<1x1x128x128xbf16>
    %142 = vector.shape_cast %141 : vector<1x1x128x128xbf16> to vector<128x128xbf16>
    %cst_157 = arith.constant dense<0.000000e+00> : vector<256x128xf32>
    %143 = tpu.matmul %140, %142, %cst_157 {dimension_numbers = #tpu.dot_dimension_numbers<[1], [0], [0], [1], [0, 0, 1, 1], [], []>} : vector<256x128xbf16>, vector<128x128xbf16>, vector<256x128xf32> -> vector<256x128xf32>
    %144 = arith.addf %138, %143 : vector<256x128xf32>
    %145 = vector.extract_strided_slice %132 {offsets = [0, 2, 0, 0], sizes = [1, 16, 16, 128], strides = [1, 1, 1, 1]} : vector<1x18x16x128xbf16> to vector<1x16x16x128xbf16>
    %146 = vector.shape_cast %145 : vector<1x16x16x128xbf16> to vector<256x128xbf16>
    %c2_158 = arith.constant 2 : index
    %c2_159 = arith.constant 2 : index
    %c0_160 = arith.constant 0 : index
    %c0_161 = arith.constant 0 : index
    %147 = vector.load %arg8[%c2_158, %c2_159, %c0_160, %c0_161] : memref<3x3x128x128xbf16, #tpu.memory_space<vmem>>, vector<1x1x128x128xbf16>
    %148 = vector.shape_cast %147 : vector<1x1x128x128xbf16> to vector<128x128xbf16>
    %cst_162 = arith.constant dense<0.000000e+00> : vector<256x128xf32>
    %149 = tpu.matmul %146, %148, %cst_162 {dimension_numbers = #tpu.dot_dimension_numbers<[1], [0], [0], [1], [0, 0, 1, 1], [], []>} : vector<256x128xbf16>, vector<128x128xbf16>, vector<256x128xf32> -> vector<256x128xf32>
    %150 = arith.addf %144, %149 : vector<256x128xf32>
    %151 = vector.shape_cast %150 : vector<256x128xf32> to vector<1x16x16x128xf32>
    %c0_163 = arith.constant 0 : index
    %c0_164 = arith.constant 0 : index
    %c0_165 = arith.constant 0 : index
    %c0_166 = arith.constant 0 : index
    %152 = vector.load %arg9[%c0_163, %c0_164, %c0_165, %c0_166] : memref<1x1x1x128xf32, #tpu.memory_space<vmem>>, vector<1x1x1x128xf32>
    %153 = vector.broadcast %152 : vector<1x1x1x128xf32> to vector<1x16x16x128xf32>
    %154 = arith.addf %151, %153 : vector<1x16x16x128xf32>
    %155 = arith.truncf %0 : vector<1x16x16x128xf32> to vector<1x16x16x128xbf16>
    %156 = vector.shape_cast %155 : vector<1x16x16x128xbf16> to vector<256x128xbf16>
    %c0_167 = arith.constant 0 : index
    %c0_168 = arith.constant 0 : index
    %157 = vector.load %arg10[%c0_167, %c0_168] : memref<128x128xbf16, #tpu.memory_space<vmem>>, vector<128x128xbf16>
    %cst_169 = arith.constant dense<0.000000e+00> : vector<256x128xf32>
    %158 = tpu.matmul %156, %157, %cst_169 {dimension_numbers = #tpu.dot_dimension_numbers<[1], [0], [0], [1], [0, 0, 1, 1], [], []>} : vector<256x128xbf16>, vector<128x128xbf16>, vector<256x128xf32> -> vector<256x128xf32>
    %159 = vector.shape_cast %158 : vector<256x128xf32> to vector<1x16x16x128xf32>
    %c0_170 = arith.constant 0 : index
    %c0_171 = arith.constant 0 : index
    %c0_172 = arith.constant 0 : index
    %c0_173 = arith.constant 0 : index
    %160 = vector.load %arg11[%c0_170, %c0_171, %c0_172, %c0_173] : memref<1x1x1x128xf32, #tpu.memory_space<vmem>>, vector<1x1x1x128xf32>
    %161 = vector.broadcast %160 : vector<1x1x1x128xf32> to vector<1x16x16x128xf32>
    %162 = arith.addf %159, %161 : vector<1x16x16x128xf32>
    %163 = arith.addf %154, %162 : vector<1x16x16x128xf32>
    %c0_174 = arith.constant 0 : index
    %c0_175 = arith.constant 0 : index
    %c0_176 = arith.constant 0 : index
    %c0_177 = arith.constant 0 : index
    %164 = vector.load %arg12[%c0_174, %c0_175, %c0_176, %c0_177] : memref<1x16x16x128xf32, #tpu.memory_space<vmem>>, vector<1x16x16x128xf32>
    tpu.vector_store %arg12[%c0_174, %c0_175, %c0_176, %c0_177], %163 {strides = array<i32>} : memref<1x16x16x128xf32, #tpu.memory_space<vmem>>, vector<1x16x16x128xf32>,
    return
  }
  func.func @transform_0(%arg0: i32) -> (i32, i32, i32, i32) {
    %c0_i32 = arith.constant 0 : i32
    %c0_i32_0 = arith.constant 0 : i32
    %c0_i32_1 = arith.constant 0 : i32
    %c0_i32_2 = arith.constant 0 : i32
    return %arg0, %c0_i32, %c0_i32_0, %c0_i32_1 : i32, i32, i32, i32
  }
  func.func @transform_1(%arg0: i32) -> (i32, i32, i32, i32) {
    %c0_i32 = arith.constant 0 : i32
    %c0_i32_0 = arith.constant 0 : i32
    %c0_i32_1 = arith.constant 0 : i32
    %c0_i32_2 = arith.constant 0 : i32
    %c0_i32_3 = arith.constant 0 : i32
    return %c0_i32, %c0_i32_0, %c0_i32_1, %c0_i32_2 : i32, i32, i32, i32
  }
  func.func @transform_2(%arg0: i32) -> (i32, i32, i32, i32) {
    %c0_i32 = arith.constant 0 : i32
    %c0_i32_0 = arith.constant 0 : i32
    %c0_i32_1 = arith.constant 0 : i32
    %c0_i32_2 = arith.constant 0 : i32
    %c0_i32_3 = arith.constant 0 : i32
    return %c0_i32, %c0_i32_0, %c0_i32_1, %c0_i32_2 : i32, i32, i32, i32
  }
  func.func @transform_3(%arg0: i32) -> (i32, i32, i32, i32) {
    %c0_i32 = arith.constant 0 : i32
    %c0_i32_0 = arith.constant 0 : i32
    %c0_i32_1 = arith.constant 0 : i32
    %c0_i32_2 = arith.constant 0 : i32
    %c0_i32_3 = arith.constant 0 : i32
    return %c0_i32, %c0_i32_0, %c0_i32_1, %c0_i32_2 : i32, i32, i32, i32
  }
  func.func @transform_4(%arg0: i32) -> (i32, i32, i32, i32) {
    %c0_i32 = arith.constant 0 : i32
    %c0_i32_0 = arith.constant 0 : i32
    %c0_i32_1 = arith.constant 0 : i32
    %c0_i32_2 = arith.constant 0 : i32
    %c0_i32_3 = arith.constant 0 : i32
    return %c0_i32, %c0_i32_0, %c0_i32_1, %c0_i32_2 : i32, i32, i32, i32
  }
  func.func @transform_5(%arg0: i32) -> (i32, i32, i32, i32) {
    %c0_i32 = arith.constant 0 : i32
    %c0_i32_0 = arith.constant 0 : i32
    %c0_i32_1 = arith.constant 0 : i32
    %c0_i32_2 = arith.constant 0 : i32
    %c0_i32_3 = arith.constant 0 : i32
    return %c0_i32, %c0_i32_0, %c0_i32_1, %c0_i32_2 : i32, i32, i32, i32
  }
  func.func @transform_6(%arg0: i32) -> (i32, i32, i32, i32) {
    %c0_i32 = arith.constant 0 : i32
    %c0_i32_0 = arith.constant 0 : i32
    %c0_i32_1 = arith.constant 0 : i32
    %c0_i32_2 = arith.constant 0 : i32
    %c0_i32_3 = arith.constant 0 : i32
    return %c0_i32, %c0_i32_0, %c0_i32_1, %c0_i32_2 : i32, i32, i32, i32
  }
  func.func @transform_7(%arg0: i32) -> (i32, i32, i32, i32) {
    %c0_i32 = arith.constant 0 : i32
    %c0_i32_0 = arith.constant 0 : i32
    %c0_i32_1 = arith.constant 0 : i32
    %c0_i32_2 = arith.constant 0 : i32
    %c0_i32_3 = arith.constant 0 : i32
    return %c0_i32, %c0_i32_0, %c0_i32_1, %c0_i32_2 : i32, i32, i32, i32
  }
  func.func @transform_8(%arg0: i32) -> (i32, i32, i32, i32) {
    %c0_i32 = arith.constant 0 : i32
    %c0_i32_0 = arith.constant 0 : i32
    %c0_i32_1 = arith.constant 0 : i32
    %c0_i32_2 = arith.constant 0 : i32
    %c0_i32_3 = arith.constant 0 : i32
    return %c0_i32, %c0_i32_0, %c0_i32_1, %c0_i32_2 : i32, i32, i32, i32
  }
  func.func @transform_9(%arg0: i32) -> (i32, i32) {
    %c0_i32 = arith.constant 0 : i32
    %c0_i32_0 = arith.constant 0 : i32
    %c0_i32_1 = arith.constant 0 : i32
    return %c0_i32, %c0_i32_0 : i32, i32
  }
  func.func @transform_10(%arg0: i32) -> (i32, i32, i32, i32) {
    %c0_i32 = arith.constant 0 : i32
    %c0_i32_0 = arith.constant 0 : i32
    %c0_i32_1 = arith.constant 0 : i32
    %c0_i32_2 = arith.constant 0 : i32
    %c0_i32_3 = arith.constant 0 : i32
    return %c0_i32, %c0_i32_0, %c0_i32_1, %c0_i32_2 : i32, i32, i32, i32
  }
  func.func @transform_11(%arg0: i32) -> (i32, i32, i32, i32) {
    %c0_i32 = arith.constant 0 : i32
    %c0_i32_0 = arith.constant 0 : i32
    %c0_i32_1 = arith.constant 0 : i32
    %c0_i32_2 = arith.constant 0 : i32
    return %arg0, %c0_i32, %c0_i32_0, %c0_i32_1 : i32, i32, i32, i32
  }
}

</mosaic_0001>

<llo_original>
// kernel: tpu_custom_call.1
$region0: #{tpu_custom_call.1}
  #allocation0 [shape = 'u32[]', space=smem, size = 0x4, offset = 0x4, fixed_abs, tag = 'smem constant byte address 0x4 - core index']
  #allocation1 [shape = 'u32[144,128]{1,0:T(1,128)}', space=vmem, size = 0x12000, scoped, tag = 'internal scratch']
  #allocation2 [shape = 'f32[1,18,18,128]{3,2,1,0:T(8,128)}', space=vmem, size = 0x36000, scoped, tag = 'scratch operand']
  %s0 = inlined_call_operand.hbm [shape: f32[2,16,16,128], index: 0, kind: input, shape index: {}]
  %s1 = inlined_call_operand.vmem [shape: f32[1,1,1,128], index: 1, kind: input, shape index: {}]
  %s2 = inlined_call_operand.vmem [shape: f32[1,1,1,128], index: 2, kind: input, shape index: {}]
  %s3 = inlined_call_operand.hbm [shape: bf16[3,3,128,128], index: 3, kind: input, shape index: {}]
  %s4 = inlined_call_operand.vmem [shape: f32[1,1,1,128], index: 4, kind: input, shape index: {}]
  %s5 = inlined_call_operand.vmem [shape: f32[1,1,1,128], index: 5, kind: input, shape index: {}]
  %s6 = inlined_call_operand.vmem [shape: f32[1,1,1,128], index: 6, kind: input, shape index: {}]
  %s7 = inlined_call_operand.hbm [shape: bf16[3,3,128,128], index: 7, kind: input, shape index: {}]
  %s8 = inlined_call_operand.vmem [shape: f32[1,1,1,128], index: 8, kind: input, shape index: {}]
  %s9 = inlined_call_operand.hbm [shape: bf16[128,128], index: 9, kind: input, shape index: {}]
  %s10 = inlined_call_operand.vmem [shape: f32[1,1,1,128], index: 10, kind: input, shape index: {}]
  %s11 = inlined_call_operand.hbm [shape: f32[2,16,16,128], index: 11, kind: output, shape index: {}]
  %s12 = sld [smem:[#allocation0]]
  $region93: #{tpu_custom_call.1} parent=0
    _
  %s14 = ssub.s32 1, %s12
  %s15 = scalar_select 0, %s14, %s12
  $region1: #{tpu_custom_call.1} parent=0
    #allocation3 [shape = 'u8[262144]{0}', space=vmem, size = 0x40000, scoped, tag = 'input window, operand 0']
    #allocation4 [shape = 's32[2]{0}', space=sflag, size = 0x8, scoped, tag = 'scoped memory for tpu_custom_call.1']
    #allocation5 [shape = 's32[2]{0}', space=sflag, size = 0x8, scoped, tag = 'scoped memory for tpu_custom_call.1']
    #allocation6 [shape = 'u8[294912]{0}', space=vmem, size = 0x48000, scoped, tag = 'input window, operand 3, single buffered']
    #allocation7 [shape = 's32[1]{0}', space=sflag, size = 0x4, scoped, tag = 'scoped memory for tpu_custom_call.1']
    #allocation8 [shape = 'u8[294912]{0}', space=vmem, size = 0x48000, scoped, tag = 'input window, operand 7, single buffered']
    #allocation9 [shape = 'u8[32768]{0}', space=vmem, size = 0x8000, scoped, tag = 'input window, operand 9, single buffered']
    #allocation10 [shape = 's32[1]{0}', space=sflag, size = 0x4, scoped, tag = 'scoped memory for tpu_custom_call.1']
    #allocation11 [shape = 'u8[262144]{0}', space=vmem, size = 0x40000, scoped, tag = 'output window, operand 0']
    %16 = vsyncpa [#allocation4], 0
    %s17 = scalar_lea.sflag [#allocation4], 1
    %18 = vsyncpa %s17, 0
    %19 = vsyncpa [#allocation7], 0
    %20 = vsyncpa [#allocation10], 0
    %21 = vsyncpa [#allocation5], 0
    %s22 = scalar_lea.sflag [#allocation5], 1
    %23 = vsyncpa %s22, 0
    loop: start=0, step=1, limit=4
    $region2: #{tpu_custom_call.1} parent=1 // loop_pre_header
      _
    $region3: #{tpu_custom_call.1} parent=1 // loop_header
      %s25 = sphi 0, %s29
      %p26 = scmp.ge.s32.totalorder %s25, 4
      %s35 = sphi 0, %s37
      %s38 = sphi 0, %s35
      %s39 = sphi 0, %s38
      %s55 = sphi 0, %s39
      %s59 = sphi 0, %s59
      %s61 = sphi 0, %s59
      %s62 = sphi 0, %s61
      %s76 = sphi 0, %s62
      %s80 = sphi 0, %s80
      %s82 = sphi 0, %s80
      %s83 = sphi 0, %s82
      %s97 = sphi 0, %s83
      %s101 = sphi 0, %s101
      %s103 = sphi 0, %s101
      %s104 = sphi 0, %s103
      %s118 = sphi 0, %s104
      %s122 = sphi 0, %s122
      %s124 = sphi 0, %s122
      %s125 = sphi 0, %s124
      %s139 = sphi 0, %s125
      %s143 = sphi 0, %s143
      %s145 = sphi 0, %s143
      %s146 = sphi 0, %s145
      %s160 = sphi 0, %s146
      %s164 = sphi 0, %s164
      %s166 = sphi 0, %s164
      %s167 = sphi 0, %s166
      %s181 = sphi 0, %s167
      %s185 = sphi 0, %s185
      %s187 = sphi 0, %s185
      %s188 = sphi 0, %s187
      %s202 = sphi 0, %s188
      %s206 = sphi 0, %s206
      %s208 = sphi 0, %s206
      %s209 = sphi 0, %s208
      %s223 = sphi 0, %s209
      %s227 = sphi 0, %s227
      %s229 = sphi 0, %s227
      %s230 = sphi 0, %s229
      %s244 = sphi 0, %s230
      %s248 = sphi 0, %s248
      %s250 = sphi 0, %s248
      %s251 = sphi 0, %s250
      %s265 = sphi 0, %s251
      %s271 = sphi 0, %s273
      %s274 = sphi 0, %s271
      %s275 = sphi 0, %s274
      %s291 = sphi 0, %s275
    $region4: #{tpu_custom_call.1} parent=1 // loop_header_branch
      %28 = sbr.rel (%p26) target = $region8
    $region5: #{tpu_custom_call.1} parent=1 // loop_body
      %s30 = ssub.s32 %s25, 1
      %s31 = ssub.s32 %s25, 2
      %s32 = sadd.s32 %s25, 1
      %s33 = ssub.s32 %s25, %s32
      %p34 = scmp.eq.s32.totalorder %s33, 0
      %s36 = sadd.s32 %s35, 1
      %s37 = scalar_select %p34, %s35, %s36
      %p40 = pneg %p34
      %p41 = scmp.eq.s32.totalorder %s25, 1
      %p42 = por %p40, %p41
      %p43 = scmp.ne.s32.totalorder %s35, %s38
      %p44 = scmp.eq.s32.totalorder %s25, 0
      %p45 = por %p43, %p44
      %p46 = scmp.ne.s32.totalorder %s35, %s38
      %p47 = scmp.eq.s32.totalorder %s30, 1
      %p48 = por %p46, %p47
      %p49 = scmp.ne.s32.totalorder %s38, %s39
      %p50 = scmp.eq.s32.totalorder %s30, 0
      %p51 = por %p49, %p50
      %p52 = scmp.ne.s32.totalorder %s38, %s39
      %p53 = scmp.eq.s32.totalorder %s31, 1
      %p54 = por %p52, %p53
      %p56 = scmp.ne.s32.totalorder %s39, %s55
      %p57 = scmp.eq.s32.totalorder %s31, 0
      %p58 = por %p56, %p57
      %s60 = sadd.s32 %s59, 1
      %p63 = scmp.eq.s32.totalorder %s25, 1
      %p64 = scmp.ne.s32.totalorder %s59, %s61
      %p65 = scmp.eq.s32.totalorder %s25, 0
      %p66 = por %p64, %p65
      %p67 = scmp.ne.s32.totalorder %s59, %s61
      %p68 = scmp.eq.s32.totalorder %s30, 1
      %p69 = por %p67, %p68
      %p70 = scmp.ne.s32.totalorder %s61, %s62
      %p71 = scmp.eq.s32.totalorder %s30, 0
      %p72 = por %p70, %p71
      %p73 = scmp.ne.s32.totalorder %s61, %s62
      %p74 = scmp.eq.s32.totalorder %s31, 1
      %p75 = por %p73, %p74
      %p77 = scmp.ne.s32.totalorder %s62, %s76
      %p78 = scmp.eq.s32.totalorder %s31, 0
      %p79 = por %p77, %p78
      %s81 = sadd.s32 %s80, 1
      %p84 = scmp.eq.s32.totalorder %s25, 1
      %p85 = scmp.ne.s32.totalorder %s80, %s82
      %p86 = scmp.eq.s32.totalorder %s25, 0
      %p87 = por %p85, %p86
      %p88 = scmp.ne.s32.totalorder %s80, %s82
      %p89 = scmp.eq.s32.totalorder %s30, 1
      %p90 = por %p88, %p89
      %p91 = scmp.ne.s32.totalorder %s82, %s83
      %p92 = scmp.eq.s32.totalorder %s30, 0
      %p93 = por %p91, %p92
      %p94 = scmp.ne.s32.totalorder %s82, %s83
      %p95 = scmp.eq.s32.totalorder %s31, 1
      %p96 = por %p94, %p95
      %p98 = scmp.ne.s32.totalorder %s83, %s97
      %p99 = scmp.eq.s32.totalorder %s31, 0
      %p100 = por %p98, %p99
      %s102 = sadd.s32 %s101, 1
      %p105 = scmp.eq.s32.totalorder %s25, 1
      %p106 = scmp.ne.s32.totalorder %s101, %s103
      %p107 = scmp.eq.s32.totalorder %s25, 0
      %p108 = por %p106, %p107
      %p109 = scmp.ne.s32.totalorder %s101, %s103
      %p110 = scmp.eq.s32.totalorder %s30, 1
      %p111 = por %p109, %p110
      %p112 = scmp.ne.s32.totalorder %s103, %s104
      %p113 = scmp.eq.s32.totalorder %s30, 0
      %p114 = por %p112, %p113
      %p115 = scmp.ne.s32.totalorder %s103, %s104
      %p116 = scmp.eq.s32.totalorder %s31, 1
      %p117 = por %p115, %p116
      %p119 = scmp.ne.s32.totalorder %s104, %s118
      %p120 = scmp.eq.s32.totalorder %s31, 0
      %p121 = por %p119, %p120
      %s123 = sadd.s32 %s122, 1
      %p126 = scmp.eq.s32.totalorder %s25, 1
      %p127 = scmp.ne.s32.totalorder %s122, %s124
      %p128 = scmp.eq.s32.totalorder %s25, 0
      %p129 = por %p127, %p128
      %p130 = scmp.ne.s32.totalorder %s122, %s124
      %p131 = scmp.eq.s32.totalorder %s30, 1
      %p132 = por %p130, %p131
      %p133 = scmp.ne.s32.totalorder %s124, %s125
      %p134 = scmp.eq.s32.totalorder %s30, 0
      %p135 = por %p133, %p134
      %p136 = scmp.ne.s32.totalorder %s124, %s125
      %p137 = scmp.eq.s32.totalorder %s31, 1
      %p138 = por %p136, %p137
      %p140 = scmp.ne.s32.totalorder %s125, %s139
      %p141 = scmp.eq.s32.totalorder %s31, 0
      %p142 = por %p140, %p141
      %s144 = sadd.s32 %s143, 1
      %p147 = scmp.eq.s32.totalorder %s25, 1
      %p148 = scmp.ne.s32.totalorder %s143, %s145
      %p149 = scmp.eq.s32.totalorder %s25, 0
      %p150 = por %p148, %p149
      %p151 = scmp.ne.s32.totalorder %s143, %s145
      %p152 = scmp.eq.s32.totalorder %s30, 1
      %p153 = por %p151, %p152
      %p154 = scmp.ne.s32.totalorder %s145, %s146
      %p155 = scmp.eq.s32.totalorder %s30, 0
      %p156 = por %p154, %p155
      %p157 = scmp.ne.s32.totalorder %s145, %s146
      %p158 = scmp.eq.s32.totalorder %s31, 1
      %p159 = por %p157, %p158
      %p161 = scmp.ne.s32.totalorder %s146, %s160
      %p162 = scmp.eq.s32.totalorder %s31, 0
      %p163 = por %p161, %p162
      %s165 = sadd.s32 %s164, 1
      %p168 = scmp.eq.s32.totalorder %s25, 1
      %p169 = scmp.ne.s32.totalorder %s164, %s166
      %p170 = scmp.eq.s32.totalorder %s25, 0
      %p171 = por %p169, %p170
      %p172 = scmp.ne.s32.totalorder %s164, %s166
      %p173 = scmp.eq.s32.totalorder %s30, 1
      %p174 = por %p172, %p173
      %p175 = scmp.ne.s32.totalorder %s166, %s167
      %p176 = scmp.eq.s32.totalorder %s30, 0
      %p177 = por %p175, %p176
      %p178 = scmp.ne.s32.totalorder %s166, %s167
      %p179 = scmp.eq.s32.totalorder %s31, 1
      %p180 = por %p178, %p179
      %p182 = scmp.ne.s32.totalorder %s167, %s181
      %p183 = scmp.eq.s32.totalorder %s31, 0
      %p184 = por %p182, %p183
      %s186 = sadd.s32 %s185, 1
      %p189 = scmp.eq.s32.totalorder %s25, 1
      %p190 = scmp.ne.s32.totalorder %s185, %s187
      %p191 = scmp.eq.s32.totalorder %s25, 0
      %p192 = por %p190, %p191
      %p193 = scmp.ne.s32.totalorder %s185, %s187
      %p194 = scmp.eq.s32.totalorder %s30, 1
      %p195 = por %p193, %p194
      %p196 = scmp.ne.s32.totalorder %s187, %s188
      %p197 = scmp.eq.s32.totalorder %s30, 0
      %p198 = por %p196, %p197
      %p199 = scmp.ne.s32.totalorder %s187, %s188
      %p200 = scmp.eq.s32.totalorder %s31, 1
      %p201 = por %p199, %p200
      %p203 = scmp.ne.s32.totalorder %s188, %s202
      %p204 = scmp.eq.s32.totalorder %s31, 0
      %p205 = por %p203, %p204
      %s207 = sadd.s32 %s206, 1
      %p210 = scmp.eq.s32.totalorder %s25, 1
      %p211 = scmp.ne.s32.totalorder %s206, %s208
      %p212 = scmp.eq.s32.totalorder %s25, 0
      %p213 = por %p211, %p212
      %p214 = scmp.ne.s32.totalorder %s206, %s208
      %p215 = scmp.eq.s32.totalorder %s30, 1
      %p216 = por %p214, %p215
      %p217 = scmp.ne.s32.totalorder %s208, %s209
      %p218 = scmp.eq.s32.totalorder %s30, 0
      %p219 = por %p217, %p218
      %p220 = scmp.ne.s32.totalorder %s208, %s209
      %p221 = scmp.eq.s32.totalorder %s31, 1
      %p222 = por %p220, %p221
      %p224 = scmp.ne.s32.totalorder %s209, %s223
      %p225 = scmp.eq.s32.totalorder %s31, 0
      %p226 = por %p224, %p225
      %s228 = sadd.s32 %s227, 1
      %p231 = scmp.eq.s32.totalorder %s25, 1
      %p232 = scmp.ne.s32.totalorder %s227, %s229
      %p233 = scmp.eq.s32.totalorder %s25, 0
      %p234 = por %p232, %p233
      %p235 = scmp.ne.s32.totalorder %s227, %s229
      %p236 = scmp.eq.s32.totalorder %s30, 1
      %p237 = por %p235, %p236
      %p238 = scmp.ne.s32.totalorder %s229, %s230
      %p239 = scmp.eq.s32.totalorder %s30, 0
      %p240 = por %p238, %p239
      %p241 = scmp.ne.s32.totalorder %s229, %s230
      %p242 = scmp.eq.s32.totalorder %s31, 1
      %p243 = por %p241, %p242
      %p245 = scmp.ne.s32.totalorder %s230, %s244
      %p246 = scmp.eq.s32.totalorder %s31, 0
      %p247 = por %p245, %p246
      %s249 = sadd.s32 %s248, 1
      %p252 = scmp.eq.s32.totalorder %s25, 1
      %p253 = scmp.ne.s32.totalorder %s248, %s250
      %p254 = scmp.eq.s32.totalorder %s25, 0
      %p255 = por %p253, %p254
      %p256 = scmp.ne.s32.totalorder %s248, %s250
      %p257 = scmp.eq.s32.totalorder %s30, 1
      %p258 = por %p256, %p257
      %p259 = scmp.ne.s32.totalorder %s250, %s251
      %p260 = scmp.eq.s32.totalorder %s30, 0
      %p261 = por %p259, %p260
      %p262 = scmp.ne.s32.totalorder %s250, %s251
      %p263 = scmp.eq.s32.totalorder %s31, 1
      %p264 = por %p262, %p263
      %p266 = scmp.ne.s32.totalorder %s251, %s265
      %p267 = scmp.eq.s32.totalorder %s31, 0
      %p268 = por %p266, %p267
      %s269 = ssub.s32 %s25, %s32
      %p270 = scmp.eq.s32.totalorder %s269, 0
      %s272 = sadd.s32 %s271, 1
      %s273 = scalar_select %p270, %s271, %s272
      %p276 = pneg %p270
      %p277 = scmp.eq.s32.totalorder %s25, 1
      %p278 = por %p276, %p277
      %p279 = scmp.ne.s32.totalorder %s271, %s274
      %p280 = scmp.eq.s32.totalorder %s25, 0
      %p281 = por %p279, %p280
      %p282 = scmp.ne.s32.totalorder %s271, %s274
      %p283 = scmp.eq.s32.totalorder %s30, 1
      %p284 = por %p282, %p283
      %p285 = scmp.ne.s32.totalorder %s274, %s275
      %p286 = scmp.eq.s32.totalorder %s30, 0
      %p287 = por %p285, %p286
      %p288 = scmp.ne.s32.totalorder %s274, %s275
      %p289 = scmp.eq.s32.totalorder %s31, 1
      %p290 = por %p288, %p289
      %p292 = scmp.ne.s32.totalorder %s275, %s291
      %p293 = scmp.eq.s32.totalorder %s31, 0
      %p294 = por %p292, %p293
      %p295 = scmp.le.s32.totalorder 1, %s25
      %p296 = scmp.lt.s32.totalorder %s25, 3
      %p297 = pnand %p295, %p296
      %p298 = pneg %p297
      // Predicated region
      $region9: #{tpu_custom_call.1} parent=5 // pred_check
        _
      $region10: #{tpu_custom_call.1} parent=5 // pred_check_branch
        %300 = sbr.rel (%p297) target = $region12
      $region11: #{tpu_custom_call.1} parent=5 // pred_region
        %s301 = ssub.s32 %s25, 1
        // Predicated region
        $region13: #{tpu_custom_call.1} parent=11 // pred_check
          %p302 = pneg %p72
        $region14: #{tpu_custom_call.1} parent=11 // pred_check_branch
          %304 = sbr.rel (%p302) target = $region16
        $region15: #{tpu_custom_call.1} parent=11 // pred_region
          _
        $region16: #{tpu_custom_call.1} parent=11 // pred_fallthru
          _
        // Predicated region
        $region17: #{tpu_custom_call.1} parent=11 // pred_check
          %p305 = pneg %p93
        $region18: #{tpu_custom_call.1} parent=11 // pred_check_branch
          %307 = sbr.rel (%p305) target = $region20
        $region19: #{tpu_custom_call.1} parent=11 // pred_region
          _
        $region20: #{tpu_custom_call.1} parent=11 // pred_fallthru
          _
        // Predicated region
        $region21: #{tpu_custom_call.1} parent=11 // pred_check
          %p308 = pneg %p114
        $region22: #{tpu_custom_call.1} parent=11 // pred_check_branch
          %310 = sbr.rel (%p308) target = $region24
        $region23: #{tpu_custom_call.1} parent=11 // pred_region
          %s312 = ssub.s32 9216, 9216
          %313 = vsyncadd [#allocation7], %s312
          %s314 = sshll.u32 [#allocation6], 4
          %s315 = int_to_ptr.vmem [resolvable:$true] %s314
          %320 = dma.hbm_to_vmem [thread:$0]  %s3, 9216, %s315, [#allocation7], 64, 64, 4
        $region24: #{tpu_custom_call.1} parent=11 // pred_fallthru
          _
        // Predicated region
        $region25: #{tpu_custom_call.1} parent=11 // pred_check
          %p321 = pneg %p135
        $region26: #{tpu_custom_call.1} parent=11 // pred_check_branch
          %323 = sbr.rel (%p321) target = $region28
        $region27: #{tpu_custom_call.1} parent=11 // pred_region
          _
        $region28: #{tpu_custom_call.1} parent=11 // pred_fallthru
          _
        // Predicated region
        $region29: #{tpu_custom_call.1} parent=11 // pred_check
          %p324 = pneg %p156
        $region30: #{tpu_custom_call.1} parent=11 // pred_check_branch
          %326 = sbr.rel (%p324) target = $region32
        $region31: #{tpu_custom_call.1} parent=11 // pred_region
          _
        $region32: #{tpu_custom_call.1} parent=11 // pred_fallthru
          _
        // Predicated region
        $region33: #{tpu_custom_call.1} parent=11 // pred_check
          %p327 = pneg %p177
        $region34: #{tpu_custom_call.1} parent=11 // pred_check_branch
          %329 = sbr.rel (%p327) target = $region36
        $region35: #{tpu_custom_call.1} parent=11 // pred_region
          _
        $region36: #{tpu_custom_call.1} parent=11 // pred_fallthru
          _
        // Predicated region
        $region37: #{tpu_custom_call.1} parent=11 // pred_check
          %p330 = pneg %p198
        $region38: #{tpu_custom_call.1} parent=11 // pred_check_branch
          %332 = sbr.rel (%p330) target = $region40
        $region39: #{tpu_custom_call.1} parent=11 // pred_region
          %s334 = ssub.s32 9216, 9216
          %335 = vsyncadd [#allocation7], %s334
          %s336 = sshll.u32 [#allocation8], 4
          %s337 = int_to_ptr.vmem [resolvable:$true] %s336
          %342 = dma.hbm_to_vmem [thread:$0]  %s7, 9216, %s337, [#allocation7], 64, 64, 4
        $region40: #{tpu_custom_call.1} parent=11 // pred_fallthru
          _
        // Predicated region
        $region41: #{tpu_custom_call.1} parent=11 // pred_check
          %p343 = pneg %p219
        $region42: #{tpu_custom_call.1} parent=11 // pred_check_branch
          %345 = sbr.rel (%p343) target = $region44
        $region43: #{tpu_custom_call.1} parent=11 // pred_region
          _
        $region44: #{tpu_custom_call.1} parent=11 // pred_fallthru
          _
        // Predicated region
        $region45: #{tpu_custom_call.1} parent=11 // pred_check
          %p346 = pneg %p240
        $region46: #{tpu_custom_call.1} parent=11 // pred_check_branch
          %348 = sbr.rel (%p346) target = $region48
        $region47: #{tpu_custom_call.1} parent=11 // pred_region
          %s350 = ssub.s32 1024, 1024
          %351 = vsyncadd [#allocation10], %s350
          %s352 = sshll.u32 [#allocation9], 4
          %s353 = int_to_ptr.vmem [resolvable:$true] %s352
          %358 = dma.hbm_to_vmem [thread:$0]  %s9, 1024, %s353, [#allocation10], 64, 64, 4
        $region48: #{tpu_custom_call.1} parent=11 // pred_fallthru
          _
        // Predicated region
        $region49: #{tpu_custom_call.1} parent=11 // pred_check
          %p359 = pneg %p261
        $region50: #{tpu_custom_call.1} parent=11 // pred_check_branch
          %361 = sbr.rel (%p359) target = $region52
        $region51: #{tpu_custom_call.1} parent=11 // pred_region
          _
        $region52: #{tpu_custom_call.1} parent=11 // pred_fallthru
          _
      $region12: #{tpu_custom_call.1} parent=5 // pred_fallthru
        _
      %p362 = scmp.lt.s32.totalorder %s25, 2
      // Predicated region
      $region53: #{tpu_custom_call.1} parent=5 // pred_check
        %p363 = pneg %p362
      $region54: #{tpu_custom_call.1} parent=5 // pred_check_branch
        %365 = sbr.rel (%p363) target = $region56
      $region55: #{tpu_custom_call.1} parent=5 // pred_region
        // Predicated region
        $region57: #{tpu_custom_call.1} parent=55 // pred_check
          %p366 = pneg %p45
        $region58: #{tpu_custom_call.1} parent=55 // pred_check_branch
          %368 = sbr.rel (%p366) target = $region60
        $region59: #{tpu_custom_call.1} parent=55 // pred_region
          %s369 = sand.u32 %s35, 1
          %s370 = scalar_lea.sflag [#allocation4], %s369
          %s371 = sand.u32 %s35, 1
          %s372 = smul.addr %s371, 256
          %s373 = scalar_lea.vmem [#allocation3], %s372
          %s375 = ssub.s32 4096, 4096
          %376 = vsyncadd %s370, %s375
          %s377 = smul.addr %s25, 32
          %s378 = smul.addr %s377, 128
          %s379 = scalar_lea.hbm %s0, %s378
          %s380 = sshll.u32 %s373, 4
          %s381 = int_to_ptr.vmem [resolvable:$true] %s380
          %386 = dma.hbm_to_vmem [thread:$0]  %s379, 4096, %s381, %s370, 128, 128, 8
        $region60: #{tpu_custom_call.1} parent=55 // pred_fallthru
          _
      $region56: #{tpu_custom_call.1} parent=5 // pred_fallthru
        _
      %p387 = scmp.le.s32.totalorder 1, %s25
      %p388 = scmp.lt.s32.totalorder %s25, 3
      %p389 = pnand %p387, %p388
      %p390 = pneg %p389
      // Predicated region
      $region61: #{tpu_custom_call.1} parent=5 // pred_check
        _
      $region62: #{tpu_custom_call.1} parent=5 // pred_check_branch
        %392 = sbr.rel (%p389) target = $region64
      $region63: #{tpu_custom_call.1} parent=5 // pred_region
        %s393 = ssub.s32 %s25, 1
        %s394 = sand.u32 %s38, 1
        %s395 = scalar_lea.sflag [#allocation4], %s394
        %s396 = sand.u32 %s38, 1
        %s397 = smul.addr %s396, 256
        %s398 = scalar_lea.vmem [#allocation3], %s397
        // Predicated region
        $region65: #{tpu_custom_call.1} parent=63 // pred_check
          %p399 = pneg %p51
        $region66: #{tpu_custom_call.1} parent=63 // pred_check_branch
          %401 = sbr.rel (%p399) target = $region68
        $region67: #{tpu_custom_call.1} parent=63 // pred_region
          %402 = dma.done %s395, 4096
        $region68: #{tpu_custom_call.1} parent=63 // pred_fallthru
          _
        // Predicated region
        $region69: #{tpu_custom_call.1} parent=63 // pred_check
          %p403 = pneg %p114
        $region70: #{tpu_custom_call.1} parent=63 // pred_check_branch
          %405 = sbr.rel (%p403) target = $region72
        $region71: #{tpu_custom_call.1} parent=63 // pred_region
          %406 = dma.done [#allocation7], 9216
        $region72: #{tpu_custom_call.1} parent=63 // pred_fallthru
          _
        // Predicated region
        $region73: #{tpu_custom_call.1} parent=63 // pred_check
          %p407 = pneg %p198
        $region74: #{tpu_custom_call.1} parent=63 // pred_check_branch
          %409 = sbr.rel (%p407) target = $region76
        $region75: #{tpu_custom_call.1} parent=63 // pred_region
          %410 = dma.done [#allocation7], 9216
        $region76: #{tpu_custom_call.1} parent=63 // pred_fallthru
          _
        // Predicated region
        $region77: #{tpu_custom_call.1} parent=63 // pred_check
          %p411 = pneg %p240
        $region78: #{tpu_custom_call.1} parent=63 // pred_check_branch
          %413 = sbr.rel (%p411) target = $region80
        $region79: #{tpu_custom_call.1} parent=63 // pred_region
          %414 = dma.done [#allocation10], 1024
        $region80: #{tpu_custom_call.1} parent=63 // pred_fallthru
          _
        %s415 = sand.u32 %s38, 1
        %s416 = scalar_lea.sflag [#allocation4], %s415
        %s417 = sand.u32 %s38, 1
        %s418 = smul.addr %s417, 256
        %s419 = scalar_lea.vmem [#allocation3], %s418
        %p420 = pneg %p51
        %p421 = pneg %p48
        %p422 = pneg %p72
        %p423 = pneg %p69
        %p424 = pneg %p93
        %p425 = pneg %p90
        %p426 = pneg %p114
        %p427 = pneg %p111
        %p428 = pneg %p135
        %p429 = pneg %p132
        %p430 = pneg %p156
        %p431 = pneg %p153
        %p432 = pneg %p177
        %p433 = pneg %p174
        %p434 = pneg %p198
        %p435 = pneg %p195
        %p436 = pneg %p219
        %p437 = pneg %p216
        %p438 = pneg %p240
        %p439 = pneg %p237
        %p440 = pneg %p261
        %p441 = pneg %p258
        %p442 = pneg %p287
        %p443 = pneg %p284
        %s444 = sand.u32 %s274, 1
        %s445 = scalar_lea.sflag [#allocation5], %s444
        %s446 = sand.u32 %s274, 1
        %s447 = smul.addr %s446, 256
        %s448 = scalar_lea.vmem [#allocation11], %s447
        %v450 = vld [vmem:[%s398] sm:$0xff]
        %v451 = vld [vmem:[%s398 + $0x8] sm:$0xff]
        %v452 = vld [vmem:[%s398 + $0x10] sm:$0xff]
        %v453 = vld [vmem:[%s398 + $0x18] sm:$0xff]
        %v454 = vld [vmem:[%s398 + $0x20] sm:$0xff]
        %v455 = vld [vmem:[%s398 + $0x28] sm:$0xff]
        %v456 = vld [vmem:[%s398 + $0x30] sm:$0xff]
        %v457 = vld [vmem:[%s398 + $0x38] sm:$0xff]
        %v458 = vld [vmem:[%s398 + $0x40] sm:$0xff]
        %v459 = vld [vmem:[%s398 + $0x48] sm:$0xff]
        %v460 = vld [vmem:[%s398 + $0x50] sm:$0xff]
        %v461 = vld [vmem:[%s398 + $0x58] sm:$0xff]
        %v462 = vld [vmem:[%s398 + $0x60] sm:$0xff]
        %v463 = vld [vmem:[%s398 + $0x68] sm:$0xff]
        %v464 = vld [vmem:[%s398 + $0x70] sm:$0xff]
        %v465 = vld [vmem:[%s398 + $0x78] sm:$0xff]
        %v466 = vld [vmem:[%s398 + $0x80] sm:$0xff]
        %v467 = vld [vmem:[%s398 + $0x88] sm:$0xff]
        %v468 = vld [vmem:[%s398 + $0x90] sm:$0xff]
        %v469 = vld [vmem:[%s398 + $0x98] sm:$0xff]
        %v470 = vld [vmem:[%s398 + $0xa0] sm:$0xff]
        %v471 = vld [vmem:[%s398 + $0xa8] sm:$0xff]
        %v472 = vld [vmem:[%s398 + $0xb0] sm:$0xff]
        %v473 = vld [vmem:[%s398 + $0xb8] sm:$0xff]
        %v474 = vld [vmem:[%s398 + $0xc0] sm:$0xff]
        %v475 = vld [vmem:[%s398 + $0xc8] sm:$0xff]
        %v476 = vld [vmem:[%s398 + $0xd0] sm:$0xff]
        %v477 = vld [vmem:[%s398 + $0xd8] sm:$0xff]
        %v478 = vld [vmem:[%s398 + $0xe0] sm:$0xff]
        %v479 = vld [vmem:[%s398 + $0xe8] sm:$0xff]
        %v480 = vld [vmem:[%s398 + $0xf0] sm:$0xff]
        %v481 = vld [vmem:[%s398 + $0xf8] sm:$0xff]
        %482 = vst [vmem:[#allocation2] sm:$0xff] 0.0
        %483 = vst [vmem:[#allocation2 + $0x8] sm:$0xff] 0.0
        %484 = vst [vmem:[#allocation2 + $0x10] sm:$0x3] 0.0
        %s485 = scalar_lea.vmem [#allocation2], 408
        %486 = vst [vmem:[%s485] sm:$0xff] 0.0
        %487 = vst [vmem:[%s485 + $0x8] sm:$0xff] 0.0
        %488 = vst [vmem:[%s485 + $0x10] sm:$0x3] 0.0
        %489 = vst [vmem:[#allocation2] sm:$0x1] 0.0
        %490 = vst [vmem:[#allocation2 + $0x18] sm:$0x1] 0.0
        %491 = vst [vmem:[#allocation2 + $0x30] sm:$0x1] 0.0
        %492 = vst [vmem:[#allocation2 + $0x48] sm:$0x1] 0.0
        %493 = vst [vmem:[#allocation2 + $0x60] sm:$0x1] 0.0
        %494 = vst [vmem:[#allocation2 + $0x78] sm:$0x1] 0.0
        %495 = vst [vmem:[#allocation2 + $0x90] sm:$0x1] 0.0
        %496 = vst [vmem:[#allocation2 + $0xa8] sm:$0x1] 0.0
        %497 = vst [vmem:[#allocation2 + $0xc0] sm:$0x1] 0.0
        %498 = vst [vmem:[#allocation2 + $0xd8] sm:$0x1] 0.0
        %499 = vst [vmem:[#allocation2 + $0xf0] sm:$0x1] 0.0
        %500 = vst [vmem:[#allocation2 + $0x108] sm:$0x1] 0.0
        %501 = vst [vmem:[#allocation2 + $0x120] sm:$0x1] 0.0
        %502 = vst [vmem:[#allocation2 + $0x138] sm:$0x1] 0.0
        %503 = vst [vmem:[#allocation2 + $0x150] sm:$0x1] 0.0
        %504 = vst [vmem:[#allocation2 + $0x168] sm:$0x1] 0.0
        %505 = vst [vmem:[#allocation2 + $0x180] sm:$0x1] 0.0
        %506 = vst [vmem:[#allocation2 + $0x198] sm:$0x1] 0.0
        %507 = vst [vmem:[#allocation2 + $0x11] sm:$0x1] 0.0
        %508 = vst [vmem:[#allocation2 + $0x29] sm:$0x1] 0.0
        %509 = vst [vmem:[#allocation2 + $0x41] sm:$0x1] 0.0
        %510 = vst [vmem:[#allocation2 + $0x59] sm:$0x1] 0.0
        %511 = vst [vmem:[#allocation2 + $0x71] sm:$0x1] 0.0
        %512 = vst [vmem:[#allocation2 + $0x89] sm:$0x1] 0.0
        %513 = vst [vmem:[#allocation2 + $0xa1] sm:$0x1] 0.0
        %514 = vst [vmem:[#allocation2 + $0xb9] sm:$0x1] 0.0
        %515 = vst [vmem:[#allocation2 + $0xd1] sm:$0x1] 0.0
        %516 = vst [vmem:[#allocation2 + $0xe9] sm:$0x1] 0.0
        %517 = vst [vmem:[#allocation2 + $0x101] sm:$0x1] 0.0
        %518 = vst [vmem:[#allocation2 + $0x119] sm:$0x1] 0.0
        %519 = vst [vmem:[#allocation2 + $0x131] sm:$0x1] 0.0
        %520 = vst [vmem:[#allocation2 + $0x149] sm:$0x1] 0.0
        %521 = vst [vmem:[#allocation2 + $0x161] sm:$0x1] 0.0
        %522 = vst [vmem:[#allocation2 + $0x179] sm:$0x1] 0.0
        %523 = vst [vmem:[#allocation2 + $0x191] sm:$0x1] 0.0
        %524 = vst [vmem:[#allocation2 + $0x1a9] sm:$0x1] 0.0
        %v525 = vld [vmem:[%s1] sm:$0x1]
        %v527 = vlaneseq
        %v528 = vshrl.u32 %v527, 7
        %v529 = vsub.s32 0, %v528
        %v530 = vrot.slane %v525, %v529
        %v532 = vmul.f32 %v450, %v530
        %v533 = vmul.f32 %v451, %v530
        %v534 = vmul.f32 %v452, %v530
        %v535 = vmul.f32 %v453, %v530
        %v536 = vmul.f32 %v454, %v530
        %v537 = vmul.f32 %v455, %v530
        %v538 = vmul.f32 %v456, %v530
        %v539 = vmul.f32 %v457, %v530
        %v540 = vmul.f32 %v458, %v530
        %v541 = vmul.f32 %v459, %v530
        %v542 = vmul.f32 %v460, %v530
        %v543 = vmul.f32 %v461, %v530
        %v544 = vmul.f32 %v462, %v530
        %v545 = vmul.f32 %v463, %v530
        %v546 = vmul.f32 %v464, %v530
        %v547 = vmul.f32 %v465, %v530
        %v548 = vmul.f32 %v466, %v530
        %v549 = vmul.f32 %v467, %v530
        %v550 = vmul.f32 %v468, %v530
        %v551 = vmul.f32 %v469, %v530
        %v552 = vmul.f32 %v470, %v530
        %v553 = vmul.f32 %v471, %v530
        %v554 = vmul.f32 %v472, %v530
        %v555 = vmul.f32 %v473, %v530
        %v556 = vmul.f32 %v474, %v530
        %v557 = vmul.f32 %v475, %v530
        %v558 = vmul.f32 %v476, %v530
        %v559 = vmul.f32 %v477, %v530
        %v560 = vmul.f32 %v478, %v530
        %v561 = vmul.f32 %v479, %v530
        %v562 = vmul.f32 %v480, %v530
        %v563 = vmul.f32 %v481, %v530
        %v564 = vld [vmem:[%s2] sm:$0x1]
        %v566 = vlaneseq
        %v567 = vshrl.u32 %v566, 7
        %v568 = vsub.s32 0, %v567
        %v569 = vrot.slane %v564, %v568
        %v571 = vadd.f32 %v532, %v569
        %v572 = vadd.f32 %v533, %v569
        %v573 = vadd.f32 %v534, %v569
        %v574 = vadd.f32 %v535, %v569
        %v575 = vadd.f32 %v536, %v569
        %v576 = vadd.f32 %v537, %v569
        %v577 = vadd.f32 %v538, %v569
        %v578 = vadd.f32 %v539, %v569
        %v579 = vadd.f32 %v540, %v569
        %v580 = vadd.f32 %v541, %v569
        %v581 = vadd.f32 %v542, %v569
        %v582 = vadd.f32 %v543, %v569
        %v583 = vadd.f32 %v544, %v569
        %v584 = vadd.f32 %v545, %v569
        %v585 = vadd.f32 %v546, %v569
        %v586 = vadd.f32 %v547, %v569
        %v587 = vadd.f32 %v548, %v569
        %v588 = vadd.f32 %v549, %v569
        %v589 = vadd.f32 %v550, %v569
        %v590 = vadd.f32 %v551, %v569
        %v591 = vadd.f32 %v552, %v569
        %v592 = vadd.f32 %v553, %v569
        %v593 = vadd.f32 %v554, %v569
        %v594 = vadd.f32 %v555, %v569
        %v595 = vadd.f32 %v556, %v569
        %v596 = vadd.f32 %v557, %v569
        %v597 = vadd.f32 %v558, %v569
        %v598 = vadd.f32 %v559, %v569
        %v599 = vadd.f32 %v560, %v569
        %v600 = vadd.f32 %v561, %v569
        %v601 = vadd.f32 %v562, %v569
        %v602 = vadd.f32 %v563, %v569
        %v603 = vmax.f32 %v571, 0.0
        %v604 = vmax.f32 %v572, 0.0
        %v605 = vmax.f32 %v573, 0.0
        %v606 = vmax.f32 %v574, 0.0
        %v607 = vmax.f32 %v575, 0.0
        %v608 = vmax.f32 %v576, 0.0
        %v609 = vmax.f32 %v577, 0.0
        %v610 = vmax.f32 %v578, 0.0
        %v611 = vmax.f32 %v579, 0.0
        %v612 = vmax.f32 %v580, 0.0
        %v613 = vmax.f32 %v581, 0.0
        %v614 = vmax.f32 %v582, 0.0
        %v615 = vmax.f32 %v583, 0.0
        %v616 = vmax.f32 %v584, 0.0
        %v617 = vmax.f32 %v585, 0.0
        %v618 = vmax.f32 %v586, 0.0
        %v619 = vmax.f32 %v587, 0.0
        %v620 = vmax.f32 %v588, 0.0
        %v621 = vmax.f32 %v589, 0.0
        %v622 = vmax.f32 %v590, 0.0
        %v623 = vmax.f32 %v591, 0.0
        %v624 = vmax.f32 %v592, 0.0
        %v625 = vmax.f32 %v593, 0.0
        %v626 = vmax.f32 %v594, 0.0
        %v627 = vmax.f32 %v595, 0.0
        %v628 = vmax.f32 %v596, 0.0
        %v629 = vmax.f32 %v597, 0.0
        %v630 = vmax.f32 %v598, 0.0
        %v631 = vmax.f32 %v599, 0.0
        %v632 = vmax.f32 %v600, 0.0
        %v633 = vmax.f32 %v601, 0.0
        %v634 = vmax.f32 %v602, 0.0
        %s635 = scalar_lea.vmem [#allocation2], 24
        %636 = vst [vmem:[%s635 + $0x1] sm:$0xff] %v603
        %637 = vst [vmem:[%s635 + $0x9] sm:$0xff] %v604
        %638 = vst [vmem:[%s635 + $0x19] sm:$0xff] %v605
        %639 = vst [vmem:[%s635 + $0x21] sm:$0xff] %v606
        %640 = vst [vmem:[%s635 + $0x31] sm:$0xff] %v607
        %641 = vst [vmem:[%s635 + $0x39] sm:$0xff] %v608
        %642 = vst [vmem:[%s635 + $0x49] sm:$0xff] %v609
        %643 = vst [vmem:[%s635 + $0x51] sm:$0xff] %v610
        %644 = vst [vmem:[%s635 + $0x61] sm:$0xff] %v611
        %645 = vst [vmem:[%s635 + $0x69] sm:$0xff] %v612
        %646 = vst [vmem:[%s635 + $0x79] sm:$0xff] %v613
        %647 = vst [vmem:[%s635 + $0x81] sm:$0xff] %v614
        %648 = vst [vmem:[%s635 + $0x91] sm:$0xff] %v615
        %649 = vst [vmem:[%s635 + $0x99] sm:$0xff] %v616
        %650 = vst [vmem:[%s635 + $0xa9] sm:$0xff] %v617
        %651 = vst [vmem:[%s635 + $0xb1] sm:$0xff] %v618
        %652 = vst [vmem:[%s635 + $0xc1] sm:$0xff] %v619
        %653 = vst [vmem:[%s635 + $0xc9] sm:$0xff] %v620
        %654 = vst [vmem:[%s635 + $0xd9] sm:$0xff] %v621
        %655 = vst [vmem:[%s635 + $0xe1] sm:$0xff] %v622
        %656 = vst [vmem:[%s635 + $0xf1] sm:$0xff] %v623
        %657 = vst [vmem:[%s635 + $0xf9] sm:$0xff] %v624
        %658 = vst [vmem:[%s635 + $0x109] sm:$0xff] %v625
        %659 = vst [vmem:[%s635 + $0x111] sm:$0xff] %v626
        %660 = vst [vmem:[%s635 + $0x121] sm:$0xff] %v627
        %661 = vst [vmem:[%s635 + $0x129] sm:$0xff] %v628
        %662 = vst [vmem:[%s635 + $0x139] sm:$0xff] %v629
        %663 = vst [vmem:[%s635 + $0x141] sm:$0xff] %v630
        %664 = vst [vmem:[%s635 + $0x151] sm:$0xff] %v631
        %665 = vst [vmem:[%s635 + $0x159] sm:$0xff] %v632
        %666 = vst [vmem:[%s635 + $0x169] sm:$0xff] %v633
        %667 = vst [vmem:[%s635 + $0x171] sm:$0xff] %v634
        %v668 = vld [vmem:[#allocation2] sm:$0xff]
        %v669 = vld [vmem:[#allocation2 + $0x8] sm:$0xff]
        %v670 = vld [vmem:[#allocation2 + $0x18] sm:$0xff]
        %v671 = vld [vmem:[#allocation2 + $0x20] sm:$0xff]
        %v672 = vld [vmem:[#allocation2 + $0x30] sm:$0xff]
        %v673 = vld [vmem:[#allocation2 + $0x38] sm:$0xff]
        %v674 = vld [vmem:[#allocation2 + $0x48] sm:$0xff]
        %v675 = vld [vmem:[#allocation2 + $0x50] sm:$0xff]
        %v676 = vld [vmem:[#allocation2 + $0x60] sm:$0xff]
        %v677 = vld [vmem:[#allocation2 + $0x68] sm:$0xff]
        %v678 = vld [vmem:[#allocation2 + $0x78] sm:$0xff]
        %v679 = vld [vmem:[#allocation2 + $0x80] sm:$0xff]
        %v680 = vld [vmem:[#allocation2 + $0x90] sm:$0xff]
        %v681 = vld [vmem:[#allocation2 + $0x98] sm:$0xff]
        %v682 = vld [vmem:[#allocation2 + $0xa8] sm:$0xff]
        %v683 = vld [vmem:[#allocation2 + $0xb0] sm:$0xff]
        %v684 = vld [vmem:[#allocation2 + $0xc0] sm:$0xff]
        %v685 = vld [vmem:[#allocation2 + $0xc8] sm:$0xff]
        %v686 = vld [vmem:[#allocation2 + $0xd8] sm:$0xff]
        %v687 = vld [vmem:[#allocation2 + $0xe0] sm:$0xff]
        %v688 = vld [vmem:[#allocation2 + $0xf0] sm:$0xff]
        %v689 = vld [vmem:[#allocation2 + $0xf8] sm:$0xff]
        %v690 = vld [vmem:[#allocation2 + $0x108] sm:$0xff]
        %v691 = vld [vmem:[#allocation2 + $0x110] sm:$0xff]
        %v692 = vld [vmem:[#allocation2 + $0x120] sm:$0xff]
        %v693 = vld [vmem:[#allocation2 + $0x128] sm:$0xff]
        %v694 = vld [vmem:[#allocation2 + $0x138] sm:$0xff]
        %v695 = vld [vmem:[#allocation2 + $0x140] sm:$0xff]
        %v696 = vld [vmem:[#allocation2 + $0x150] sm:$0xff]
        %v697 = vld [vmem:[#allocation2 + $0x158] sm:$0xff]
        %v698 = vld [vmem:[#allocation2 + $0x168] sm:$0xff]
        %v699 = vld [vmem:[#allocation2 + $0x170] sm:$0xff]
        %v700 = vld [vmem:[#allocation2 + $0x180] sm:$0xff]
        %v701 = vld [vmem:[#allocation2 + $0x188] sm:$0xff]
        %v702 = vld [vmem:[#allocation2 + $0x198] sm:$0xff]
        %v703 = vld [vmem:[#allocation2 + $0x1a0] sm:$0xff]
        %v704 = vpack.c.bf16 %v669, %v668
        %v705 = vpack.c.bf16 %v671, %v670
        %v706 = vpack.c.bf16 %v673, %v672
        %v707 = vpack.c.bf16 %v675, %v674
        %v708 = vpack.c.bf16 %v677, %v676
        %v709 = vpack.c.bf16 %v679, %v678
        %v710 = vpack.c.bf16 %v681, %v680
        %v711 = vpack.c.bf16 %v683, %v682
        %v712 = vpack.c.bf16 %v685, %v684
        %v713 = vpack.c.bf16 %v687, %v686
        %v714 = vpack.c.bf16 %v689, %v688
        %v715 = vpack.c.bf16 %v691, %v690
        %v716 = vpack.c.bf16 %v693, %v692
        %v717 = vpack.c.bf16 %v695, %v694
        %v718 = vpack.c.bf16 %v697, %v696
        %v719 = vpack.c.bf16 %v699, %v698
        %v720 = vpack.c.bf16 %v701, %v700
        %v721 = vpack.c.bf16 %v703, %v702
        %v722 = vld [vmem:[#allocation6] sm:$0xf]
        %v723 = vld [vmem:[#allocation6 + $0x4] sm:$0xf]
        %v724 = vld [vmem:[#allocation6 + $0x8] sm:$0xf]
        %v725 = vld [vmem:[#allocation6 + $0xc] sm:$0xf]
        %v726 = vld [vmem:[#allocation6 + $0x10] sm:$0xf]
        %v727 = vld [vmem:[#allocation6 + $0x14] sm:$0xf]
        %v728 = vld [vmem:[#allocation6 + $0x18] sm:$0xf]
        %v729 = vld [vmem:[#allocation6 + $0x1c] sm:$0xf]
        %v730 = vld [vmem:[#allocation6 + $0x20] sm:$0xf]
        %v731 = vld [vmem:[#allocation6 + $0x24] sm:$0xf]
        %v732 = vld [vmem:[#allocation6 + $0x28] sm:$0xf]
        %v733 = vld [vmem:[#allocation6 + $0x2c] sm:$0xf]
        %v734 = vld [vmem:[#allocation6 + $0x30] sm:$0xf]
        %v735 = vld [vmem:[#allocation6 + $0x34] sm:$0xf]
        %v736 = vld [vmem:[#allocation6 + $0x38] sm:$0xf]
        %v737 = vld [vmem:[#allocation6 + $0x3c] sm:$0xf]
        %s738 = scalar_lea.vmem [#allocation6], 192
        %v739 = vld [vmem:[%s738] sm:$0xf]
        %v740 = vld [vmem:[%s738 + $0x4] sm:$0xf]
        %v741 = vld [vmem:[%s738 + $0x8] sm:$0xf]
        %v742 = vld [vmem:[%s738 + $0xc] sm:$0xf]
        %v743 = vld [vmem:[%s738 + $0x10] sm:$0xf]
        %v744 = vld [vmem:[%s738 + $0x14] sm:$0xf]
        %v745 = vld [vmem:[%s738 + $0x18] sm:$0xf]
        %v746 = vld [vmem:[%s738 + $0x1c] sm:$0xf]
        %v747 = vld [vmem:[%s738 + $0x20] sm:$0xf]
        %v748 = vld [vmem:[%s738 + $0x24] sm:$0xf]
        %v749 = vld [vmem:[%s738 + $0x28] sm:$0xf]
        %v750 = vld [vmem:[%s738 + $0x2c] sm:$0xf]
        %v751 = vld [vmem:[%s738 + $0x30] sm:$0xf]
        %v752 = vld [vmem:[%s738 + $0x34] sm:$0xf]
        %v753 = vld [vmem:[%s738 + $0x38] sm:$0xf]
        %v754 = vld [vmem:[%s738 + $0x3c] sm:$0xf]
        %v771 = vunpack.c.l.b16 %v739
        %v772 = vunpack.c.l.b16 %v740
        %v773 = vunpack.c.l.b16 %v741
        %v774 = vunpack.c.l.b16 %v742
        %v775 = vunpack.c.l.b16 %v743
        %v776 = vunpack.c.l.b16 %v744
        %v777 = vunpack.c.l.b16 %v745
        %v778 = vunpack.c.l.b16 %v746
        %v779 = vunpack.c.l.b16 %v747
        %v780 = vunpack.c.l.b16 %v748
        %v781 = vunpack.c.l.b16 %v749
        %v782 = vunpack.c.l.b16 %v750
        %v783 = vunpack.c.l.b16 %v751
        %v784 = vunpack.c.l.b16 %v752
        %v785 = vunpack.c.l.b16 %v753
        %v786 = vunpack.c.l.b16 %v754
        %v787 = vpack.c.b16 %v772, %v771
        %v788 = vpack.c.b16 %v774, %v773
        %v789 = vpack.c.b16 %v776, %v775
        %v790 = vpack.c.b16 %v778, %v777
        %v791 = vpack.c.b16 %v780, %v779
        %v792 = vpack.c.b16 %v782, %v781
        %v793 = vpack.c.b16 %v784, %v783
        %v794 = vpack.c.b16 %v786, %v785
        %803 = vmatprep.subr.bf16.mxu0 0
        %804 = vmatpush1.bf16.msra.mxu0 %v787
        %805 = vmatprep.subr.bf16.mxu0 0
        %806 = vmatpush1.bf16.msra.mxu0 %v788
        %807 = vmatprep.subr.bf16.mxu0 0
        %808 = vmatpush1.bf16.msra.mxu0 %v789
        %809 = vmatprep.subr.bf16.mxu0 0
        %810 = vmatpush1.bf16.msra.mxu0 %v790
        %811 = vmatprep.subr.bf16.mxu0 0
        %812 = vmatpush1.bf16.msra.mxu0 %v791
        %813 = vmatprep.subr.bf16.mxu0 0
        %814 = vmatpush1.bf16.msra.mxu0 %v792
        %815 = vmatprep.subr.bf16.mxu0 0
        %816 = vmatpush1.bf16.msra.mxu0 %v793
        %817 = vmatprep.subr.bf16.mxu0 0
        %818 = vmatpush1.bf16.msra.mxu0 %v794
        %819 = vmatprep.subr.bf16.mxu0 0
        %820 = vmatpush1.bf16.msra.mxu0 0
        %821 = vmatprep.subr.bf16.mxu0 0
        %822 = vmatpush1.bf16.msra.mxu0 0
        %823 = vmatprep.subr.bf16.mxu0 0
        %824 = vmatpush1.bf16.msra.mxu0 0
        %825 = vmatprep.subr.bf16.mxu0 0
        %826 = vmatpush1.bf16.msra.mxu0 0
        %827 = vmatprep.subr.bf16.mxu0 0
        %828 = vmatpush1.bf16.msra.mxu0 0
        %829 = vmatprep.subr.bf16.mxu0 0
        %830 = vmatpush1.bf16.msra.mxu0 0
        %831 = vmatprep.subr.bf16.mxu0 0
        %832 = vmatpush1.bf16.msra.mxu0 0
        %833 = vmatprep.subr.bf16.mxu0 0
        %834 = vmatpush1.bf16.msra.mxu0 0
        %835 = vmatprep.mubr.bf16.mxu0 0
        %836 = vmatmul.mubr.bf16.gmra.mrb[0].mxu0 %v705
        %v837 = vpop.f32.mrb[0].mxu0
        %v838 = vadd.f32 0.0, %v837
        %v839 = vpop.f32.mrb[0].mxu0
        %v840 = vpop.f32.mrb[0].mxu0
        %v841 = vadd.f32 0.0, %v840
        %v842 = vpop.f32.mrb[0].mxu0
        %843 = vmatprep.mubr.bf16.mxu0 0
        %844 = vmatmul.mubr.bf16.gmra.mrb[0].mxu0 %v706
        %v845 = vpop.f32.mrb[0].mxu0
        %v846 = vadd.f32 0.0, %v845
        %v847 = vpop.f32.mrb[0].mxu0
        %v848 = vpop.f32.mrb[0].mxu0
        %v849 = vadd.f32 0.0, %v848
        %v850 = vpop.f32.mrb[0].mxu0
        %851 = vmatprep.mubr.bf16.mxu0 0
        %852 = vmatmul.mubr.bf16.gmra.mrb[0].mxu0 %v707
        %v853 = vpop.f32.mrb[0].mxu0
        %v854 = vadd.f32 0.0, %v853
        %v855 = vpop.f32.mrb[0].mxu0
        %v856 = vpop.f32.mrb[0].mxu0
        %v857 = vadd.f32 0.0, %v856
        %v858 = vpop.f32.mrb[0].mxu0
        %859 = vmatprep.mubr.bf16.mxu0 0
        %860 = vmatmul.mubr.bf16.gmra.mrb[0].mxu0 %v708
        %v861 = vpop.f32.mrb[0].mxu0
        %v862 = vadd.f32 0.0, %v861
        %v863 = vpop.f32.mrb[0].mxu0
        %v864 = vpop.f32.mrb[0].mxu0
        %v865 = vadd.f32 0.0, %v864
        %v866 = vpop.f32.mrb[0].mxu0
        %867 = vmatprep.mubr.bf16.mxu0 0
        %868 = vmatmul.mubr.bf16.gmra.mrb[0].mxu0 %v709
        %v869 = vpop.f32.mrb[0].mxu0
        %v870 = vadd.f32 0.0, %v869
        %v871 = vpop.f32.mrb[0].mxu0
        %v872 = vpop.f32.mrb[0].mxu0
        %v873 = vadd.f32 0.0, %v872
        %v874 = vpop.f32.mrb[0].mxu0
        %875 = vmatprep.mubr.bf16.mxu0 0
        %876 = vmatmul.mubr.bf16.gmra.mrb[0].mxu0 %v710
        %v877 = vpop.f32.mrb[0].mxu0
        %v878 = vadd.f32 0.0, %v877
        %v879 = vpop.f32.mrb[0].mxu0
        %v880 = vpop.f32.mrb[0].mxu0
        %v881 = vadd.f32 0.0, %v880
        %v882 = vpop.f32.mrb[0].mxu0
        %883 = vmatprep.mubr.bf16.mxu0 0
        %884 = vmatmul.mubr.bf16.gmra.mrb[0].mxu0 %v711
        %v885 = vpop.f32.mrb[0].mxu0
        %v886 = vadd.f32 0.0, %v885
        %v887 = vpop.f32.mrb[0].mxu0
        %v888 = vpop.f32.mrb[0].mxu0
        %v889 = vadd.f32 0.0, %v888
        %v890 = vpop.f32.mrb[0].mxu0
        %891 = vmatprep.mubr.bf16.mxu0 0
        %892 = vmatmul.mubr.bf16.gmra.mrb[0].mxu0 %v712
        %v893 = vpop.f32.mrb[0].mxu0
        %v894 = vadd.f32 0.0, %v893
        %v895 = vpop.f32.mrb[0].mxu0
        %v896 = vpop.f32.mrb[0].mxu0
        %v897 = vadd.f32 0.0, %v896
        %v898 = vpop.f32.mrb[0].mxu0
        %899 = vmatprep.mubr.bf16.mxu0 0
        %900 = vmatmul.mubr.bf16.gmra.mrb[0].mxu0 %v713
        %v901 = vpop.f32.mrb[0].mxu0
        %v902 = vadd.f32 0.0, %v901
        %v903 = vpop.f32.mrb[0].mxu0
        %v904 = vpop.f32.mrb[0].mxu0
        %v905 = vadd.f32 0.0, %v904
        %v906 = vpop.f32.mrb[0].mxu0
        %907 = vmatprep.mubr.bf16.mxu0 0
        %908 = vmatmul.mubr.bf16.gmra.mrb[0].mxu0 %v714
        %v909 = vpop.f32.mrb[0].mxu0
        %v910 = vadd.f32 0.0, %v909
        %v911 = vpop.f32.mrb[0].mxu0
        %v912 = vpop.f32.mrb[0].mxu0
        %v913 = vadd.f32 0.0, %v912
        %v914 = vpop.f32.mrb[0].mxu0
        %915 = vmatprep.mubr.bf16.mxu0 0
        %916 = vmatmul.mubr.bf16.gmra.mrb[0].mxu0 %v715
        %v917 = vpop.f32.mrb[0].mxu0
        %v918 = vadd.f32 0.0, %v917
        %v919 = vpop.f32.mrb[0].mxu0
        %v920 = vpop.f32.mrb[0].mxu0
        %v921 = vadd.f32 0.0, %v920
        %v922 = vpop.f32.mrb[0].mxu0
        %923 = vmatprep.mubr.bf16.mxu0 0
        %924 = vmatmul.mubr.bf16.gmra.mrb[0].mxu0 %v716
        %v925 = vpop.f32.mrb[0].mxu0
        %v926 = vadd.f32 0.0, %v925
        %v927 = vpop.f32.mrb[0].mxu0
        %v928 = vpop.f32.mrb[0].mxu0
        %v929 = vadd.f32 0.0, %v928
        %v930 = vpop.f32.mrb[0].mxu0
        %931 = vmatprep.mubr.bf16.mxu0 0
        %932 = vmatmul.mubr.bf16.gmra.mrb[0].mxu0 %v717
        %v933 = vpop.f32.mrb[0].mxu0
        %v934 = vadd.f32 0.0, %v933
        %v935 = vpop.f32.mrb[0].mxu0
        %v936 = vpop.f32.mrb[0].mxu0
        %v937 = vadd.f32 0.0, %v936
        %v938 = vpop.f32.mrb[0].mxu0
        %939 = vmatprep.mubr.bf16.mxu0 0
        %940 = vmatmul.mubr.bf16.gmra.mrb[0].mxu0 %v718
        %v941 = vpop.f32.mrb[0].mxu0
        %v942 = vadd.f32 0.0, %v941
        %v943 = vpop.f32.mrb[0].mxu0
        %v944 = vpop.f32.mrb[0].mxu0
        %v945 = vadd.f32 0.0, %v944
        %v946 = vpop.f32.mrb[0].mxu0
        %947 = vmatprep.mubr.bf16.mxu0 0
        %948 = vmatmul.mubr.bf16.gmra.mrb[0].mxu0 %v719
        %v949 = vpop.f32.mrb[0].mxu0
        %v950 = vadd.f32 0.0, %v949
        %v951 = vpop.f32.mrb[0].mxu0
        %v952 = vpop.f32.mrb[0].mxu0
        %v953 = vadd.f32 0.0, %v952
        %v954 = vpop.f32.mrb[0].mxu0
        %955 = vmatprep.mubr.bf16.mxu0 0
        %956 = vmatmul.mubr.bf16.gmra.mrb[0].mxu0 %v720
        %v957 = vpop.f32.mrb[0].mxu0
        %v958 = vadd.f32 0.0, %v957
        %v959 = vpop.f32.mrb[0].mxu0
        %v960 = vpop.f32.mrb[0].mxu0
        %v961 = vadd.f32 0.0, %v960
        %v962 = vpop.f32.mrb[0].mxu0
        %963 = vdwg.mxu0
        %v980 = vunpack.c.l.b16 %v722
        %v981 = vunpack.c.l.b16 %v723
        %v982 = vunpack.c.l.b16 %v724
        %v983 = vunpack.c.l.b16 %v725
        %v984 = vunpack.c.l.b16 %v726
        %v985 = vunpack.c.l.b16 %v727
        %v986 = vunpack.c.l.b16 %v728
        %v987 = vunpack.c.l.b16 %v729
        %v988 = vunpack.c.l.b16 %v730
        %v989 = vunpack.c.l.b16 %v731
        %v990 = vunpack.c.l.b16 %v732
        %v991 = vunpack.c.l.b16 %v733
        %v992 = vunpack.c.l.b16 %v734
        %v993 = vunpack.c.l.b16 %v735
        %v994 = vunpack.c.l.b16 %v736
        %v995 = vunpack.c.l.b16 %v737
        %v996 = vpack.c.b16 %v981, %v980
        %v997 = vpack.c.b16 %v983, %v982
        %v998 = vpack.c.b16 %v985, %v984
        %v999 = vpack.c.b16 %v987, %v986
        %v1000 = vpack.c.b16 %v989, %v988
        %v1001 = vpack.c.b16 %v991, %v990
        %v1002 = vpack.c.b16 %v993, %v992
        %v1003 = vpack.c.b16 %v995, %v994
        %1012 = vmatprep.subr.bf16.mxu0 0
        %1013 = vmatpush1.bf16.msra.mxu0 %v996
        %1014 = vmatprep.subr.bf16.mxu0 0
        %1015 = vmatpush1.bf16.msra.mxu0 %v997
        %1016 = vmatprep.subr.bf16.mxu0 0
        %1017 = vmatpush1.bf16.msra.mxu0 %v998
        %1018 = vmatprep.subr.bf16.mxu0 0
        %1019 = vmatpush1.bf16.msra.mxu0 %v999
        %1020 = vmatprep.subr.bf16.mxu0 0
        %1021 = vmatpush1.bf16.msra.mxu0 %v1000
        %1022 = vmatprep.subr.bf16.mxu0 0
        %1023 = vmatpush1.bf16.msra.mxu0 %v1001
        %1024 = vmatprep.subr.bf16.mxu0 0
        %1025 = vmatpush1.bf16.msra.mxu0 %v1002
        %1026 = vmatprep.subr.bf16.mxu0 0
        %1027 = vmatpush1.bf16.msra.mxu0 %v1003
        %1028 = vmatprep.subr.bf16.mxu0 0
        %1029 = vmatpush1.bf16.msra.mxu0 0
        %1030 = vmatprep.subr.bf16.mxu0 0
        %1031 = vmatpush1.bf16.msra.mxu0 0
        %1032 = vmatprep.subr.bf16.mxu0 0
        %1033 = vmatpush1.bf16.msra.mxu0 0
        %1034 = vmatprep.subr.bf16.mxu0 0
        %1035 = vmatpush1.bf16.msra.mxu0 0
        %1036 = vmatprep.subr.bf16.mxu0 0
        %1037 = vmatpush1.bf16.msra.mxu0 0
        %1038 = vmatprep.subr.bf16.mxu0 0
        %1039 = vmatpush1.bf16.msra.mxu0 0
        %1040 = vmatprep.subr.bf16.mxu0 0
        %1041 = vmatpush1.bf16.msra.mxu0 0
        %1042 = vmatprep.subr.bf16.mxu0 0
        %1043 = vmatpush1.bf16.msra.mxu0 0
        %1044 = vmatprep.mubr.bf16.mxu0 0
        %1045 = vmatmul.mubr.bf16.gmra.mrb[0].mxu0 %v704
        %v1046 = vpop.f32.mrb[0].mxu0
        %v1047 = vadd.f32 %v838, %v1046
        %v1048 = vpop.f32.mrb[0].mxu0
        %v1049 = vpop.f32.mrb[0].mxu0
        %v1050 = vadd.f32 %v841, %v1049
        %v1051 = vpop.f32.mrb[0].mxu0
        %1052 = vmatprep.mubr.bf16.mxu0 0
        %1053 = vmatmul.mubr.bf16.gmra.mrb[0].mxu0 %v705
        %v1054 = vpop.f32.mrb[0].mxu0
        %v1055 = vadd.f32 %v846, %v1054
        %v1056 = vpop.f32.mrb[0].mxu0
        %v1057 = vpop.f32.mrb[0].mxu0
        %v1058 = vadd.f32 %v849, %v1057
        %v1059 = vpop.f32.mrb[0].mxu0
        %1060 = vmatprep.mubr.bf16.mxu0 0
        %1061 = vmatmul.mubr.bf16.gmra.mrb[0].mxu0 %v706
        %v1062 = vpop.f32.mrb[0].mxu0
        %v1063 = vadd.f32 %v854, %v1062
        %v1064 = vpop.f32.mrb[0].mxu0
        %v1065 = vpop.f32.mrb[0].mxu0
        %v1066 = vadd.f32 %v857, %v1065
        %v1067 = vpop.f32.mrb[0].mxu0
        %1068 = vmatprep.mubr.bf16.mxu0 0
        %1069 = vmatmul.mubr.bf16.gmra.mrb[0].mxu0 %v707
        %v1070 = vpop.f32.mrb[0].mxu0
        %v1071 = vadd.f32 %v862, %v1070
        %v1072 = vpop.f32.mrb[0].mxu0
        %v1073 = vpop.f32.mrb[0].mxu0
        %v1074 = vadd.f32 %v865, %v1073
        %v1075 = vpop.f32.mrb[0].mxu0
        %1076 = vmatprep.mubr.bf16.mxu0 0
        %1077 = vmatmul.mubr.bf16.gmra.mrb[0].mxu0 %v708
        %v1078 = vpop.f32.mrb[0].mxu0
        %v1079 = vadd.f32 %v870, %v1078
        %v1080 = vpop.f32.mrb[0].mxu0
        %v1081 = vpop.f32.mrb[0].mxu0
        %v1082 = vadd.f32 %v873, %v1081
        %v1083 = vpop.f32.mrb[0].mxu0
        %1084 = vmatprep.mubr.bf16.mxu0 0
        %1085 = vmatmul.mubr.bf16.gmra.mrb[0].mxu0 %v709
        %v1086 = vpop.f32.mrb[0].mxu0
        %v1087 = vadd.f32 %v878, %v1086
        %v1088 = vpop.f32.mrb[0].mxu0
        %v1089 = vpop.f32.mrb[0].mxu0
        %v1090 = vadd.f32 %v881, %v1089
        %v1091 = vpop.f32.mrb[0].mxu0
        %1092 = vmatprep.mubr.bf16.mxu0 0
        %1093 = vmatmul.mubr.bf16.gmra.mrb[0].mxu0 %v710
        %v1094 = vpop.f32.mrb[0].mxu0
        %v1095 = vadd.f32 %v886, %v1094
        %v1096 = vpop.f32.mrb[0].mxu0
        %v1097 = vpop.f32.mrb[0].mxu0
        %v1098 = vadd.f32 %v889, %v1097
        %v1099 = vpop.f32.mrb[0].mxu0
        %1100 = vmatprep.mubr.bf16.mxu0 0
        %1101 = vmatmul.mubr.bf16.gmra.mrb[0].mxu0 %v711
        %v1102 = vpop.f32.mrb[0].mxu0
        %v1103 = vadd.f32 %v894, %v1102
        %v1104 = vpop.f32.mrb[0].mxu0
        %v1105 = vpop.f32.mrb[0].mxu0
        %v1106 = vadd.f32 %v897, %v1105
        %v1107 = vpop.f32.mrb[0].mxu0
        %1108 = vmatprep.mubr.bf16.mxu0 0
        %1109 = vmatmul.mubr.bf16.gmra.mrb[0].mxu0 %v712
        %v1110 = vpop.f32.mrb[0].mxu0
        %v1111 = vadd.f32 %v902, %v1110
        %v1112 = vpop.f32.mrb[0].mxu0
        %v1113 = vpop.f32.mrb[0].mxu0
        %v1114 = vadd.f32 %v905, %v1113
        %v1115 = vpop.f32.mrb[0].mxu0
        %1116 = vmatprep.mubr.bf16.mxu0 0
        %1117 = vmatmul.mubr.bf16.gmra.mrb[0].mxu0 %v713
        %v1118 = vpop.f32.mrb[0].mxu0
        %v1119 = vadd.f32 %v910, %v1118
        %v1120 = vpop.f32.mrb[0].mxu0
        %v1121 = vpop.f32.mrb[0].mxu0
        %v1122 = vadd.f32 %v913, %v1121
        %v1123 = vpop.f32.mrb[0].mxu0
        %1124 = vmatprep.mubr.bf16.mxu0 0
        %1125 = vmatmul.mubr.bf16.gmra.mrb[0].mxu0 %v714
        %v1126 = vpop.f32.mrb[0].mxu0
        %v1127 = vadd.f32 %v918, %v1126
        %v1128 = vpop.f32.mrb[0].mxu0
        %v1129 = vpop.f32.mrb[0].mxu0
        %v1130 = vadd.f32 %v921, %v1129
        %v1131 = vpop.f32.mrb[0].mxu0
        %1132 = vmatprep.mubr.bf16.mxu0 0
        %1133 = vmatmul.mubr.bf16.gmra.mrb[0].mxu0 %v715
        %v1134 = vpop.f32.mrb[0].mxu0
        %v1135 = vadd.f32 %v926, %v1134
        %v1136 = vpop.f32.mrb[0].mxu0
        %v1137 = vpop.f32.mrb[0].mxu0
        %v1138 = vadd.f32 %v929, %v1137
        %v1139 = vpop.f32.mrb[0].mxu0
        %1140 = vmatprep.mubr.bf16.mxu0 0
        %1141 = vmatmul.mubr.bf16.gmra.mrb[0].mxu0 %v716
        %v1142 = vpop.f32.mrb[0].mxu0
        %v1143 = vadd.f32 %v934, %v1142
        %v1144 = vpop.f32.mrb[0].mxu0
        %v1145 = vpop.f32.mrb[0].mxu0
        %v1146 = vadd.f32 %v937, %v1145
        %v1147 = vpop.f32.mrb[0].mxu0
        %1148 = vmatprep.mubr.bf16.mxu0 0
        %1149 = vmatmul.mubr.bf16.gmra.mrb[0].mxu0 %v717
        %v1150 = vpop.f32.mrb[0].mxu0
        %v1151 = vadd.f32 %v942, %v1150
        %v1152 = vpop.f32.mrb[0].mxu0
        %v1153 = vpop.f32.mrb[0].mxu0
        %v1154 = vadd.f32 %v945, %v1153
        %v1155 = vpop.f32.mrb[0].mxu0
        %1156 = vmatprep.mubr.bf16.mxu0 0
        %1157 = vmatmul.mubr.bf16.gmra.mrb[0].mxu0 %v718
        %v1158 = vpop.f32.mrb[0].mxu0
        %v1159 = vadd.f32 %v950, %v1158
        %v1160 = vpop.f32.mrb[0].mxu0
        %v1161 = vpop.f32.mrb[0].mxu0
        %v1162 = vadd.f32 %v953, %v1161
        %v1163 = vpop.f32.mrb[0].mxu0
        %1164 = vmatprep.mubr.bf16.mxu0 0
        %1165 = vmatmul.mubr.bf16.gmra.mrb[0].mxu0 %v719
        %v1166 = vpop.f32.mrb[0].mxu0
        %v1167 = vadd.f32 %v958, %v1166
        %v1168 = vpop.f32.mrb[0].mxu0
        %v1169 = vpop.f32.mrb[0].mxu0
        %v1170 = vadd.f32 %v961, %v1169
        %v1171 = vpop.f32.mrb[0].mxu0
        %1172 = vdwg.mxu0
        %s1173 = scalar_lea.vmem [#allocation6], 384
        %v1174 = vld [vmem:[%s1173] sm:$0xf]
        %v1175 = vld [vmem:[%s1173 + $0x4] sm:$0xf]
        %v1176 = vld [vmem:[%s1173 + $0x8] sm:$0xf]
        %v1177 = vld [vmem:[%s1173 + $0xc] sm:$0xf]
        %v1178 = vld [vmem:[%s1173 + $0x10] sm:$0xf]
        %v1179 = vld [vmem:[%s1173 + $0x14] sm:$0xf]
        %v1180 = vld [vmem:[%s1173 + $0x18] sm:$0xf]
        %v1181 = vld [vmem:[%s1173 + $0x1c] sm:$0xf]
        %v1182 = vld [vmem:[%s1173 + $0x20] sm:$0xf]
        %v1183 = vld [vmem:[%s1173 + $0x24] sm:$0xf]
        %v1184 = vld [vmem:[%s1173 + $0x28] sm:$0xf]
        %v1185 = vld [vmem:[%s1173 + $0x2c] sm:$0xf]
        %v1186 = vld [vmem:[%s1173 + $0x30] sm:$0xf]
        %v1187 = vld [vmem:[%s1173 + $0x34] sm:$0xf]
        %v1188 = vld [vmem:[%s1173 + $0x38] sm:$0xf]
        %v1189 = vld [vmem:[%s1173 + $0x3c] sm:$0xf]
        %v1206 = vunpack.c.l.b16 %v1174
        %v1207 = vunpack.c.l.b16 %v1175
        %v1208 = vunpack.c.l.b16 %v1176
        %v1209 = vunpack.c.l.b16 %v1177
        %v1210 = vunpack.c.l.b16 %v1178
        %v1211 = vunpack.c.l.b16 %v1179
        %v1212 = vunpack.c.l.b16 %v1180
        %v1213 = vunpack.c.l.b16 %v1181
        %v1214 = vunpack.c.l.b16 %v1182
        %v1215 = vunpack.c.l.b16 %v1183
        %v1216 = vunpack.c.l.b16 %v1184
        %v1217 = vunpack.c.l.b16 %v1185
        %v1218 = vunpack.c.l.b16 %v1186
        %v1219 = vunpack.c.l.b16 %v1187
        %v1220 = vunpack.c.l.b16 %v1188
        %v1221 = vunpack.c.l.b16 %v1189
        %v1222 = vpack.c.b16 %v1207, %v1206
        %v1223 = vpack.c.b16 %v1209, %v1208
        %v1224 = vpack.c.b16 %v1211, %v1210
        %v1225 = vpack.c.b16 %v1213, %v1212
        %v1226 = vpack.c.b16 %v1215, %v1214
        %v1227 = vpack.c.b16 %v1217, %v1216
        %v1228 = vpack.c.b16 %v1219, %v1218
        %v1229 = vpack.c.b16 %v1221, %v1220
        %1238 = vmatprep.subr.bf16.mxu0 0
        %1239 = vmatpush1.bf16.msra.mxu0 %v1222
        %1240 = vmatprep.subr.bf16.mxu0 0
        %1241 = vmatpush1.bf16.msra.mxu0 %v1223
        %1242 = vmatprep.subr.bf16.mxu0 0
        %1243 = vmatpush1.bf16.msra.mxu0 %v1224
        %1244 = vmatprep.subr.bf16.mxu0 0
        %1245 = vmatpush1.bf16.msra.mxu0 %v1225
        %1246 = vmatprep.subr.bf16.mxu0 0
        %1247 = vmatpush1.bf16.msra.mxu0 %v1226
        %1248 = vmatprep.subr.bf16.mxu0 0
        %1249 = vmatpush1.bf16.msra.mxu0 %v1227
        %1250 = vmatprep.subr.bf16.mxu0 0
        %1251 = vmatpush1.bf16.msra.mxu0 %v1228
        %1252 = vmatprep.subr.bf16.mxu0 0
        %1253 = vmatpush1.bf16.msra.mxu0 %v1229
        %1254 = vmatprep.subr.bf16.mxu0 0
        %1255 = vmatpush1.bf16.msra.mxu0 0
        %1256 = vmatprep.subr.bf16.mxu0 0
        %1257 = vmatpush1.bf16.msra.mxu0 0
        %1258 = vmatprep.subr.bf16.mxu0 0
        %1259 = vmatpush1.bf16.msra.mxu0 0
        %1260 = vmatprep.subr.bf16.mxu0 0
        %1261 = vmatpush1.bf16.msra.mxu0 0
        %1262 = vmatprep.subr.bf16.mxu0 0
        %1263 = vmatpush1.bf16.msra.mxu0 0
        %1264 = vmatprep.subr.bf16.mxu0 0
        %1265 = vmatpush1.bf16.msra.mxu0 0
        %1266 = vmatprep.subr.bf16.mxu0 0
        %1267 = vmatpush1.bf16.msra.mxu0 0
        %1268 = vmatprep.subr.bf16.mxu0 0
        %1269 = vmatpush1.bf16.msra.mxu0 0
        %1270 = vmatprep.mubr.bf16.mxu0 0
        %1271 = vmatmul.mubr.bf16.gmra.mrb[0].mxu0 %v706
        %v1272 = vpop.f32.mrb[0].mxu0
        %v1273 = vadd.f32 0.0, %v1272
        %v1274 = vpop.f32.mrb[0].mxu0
        %v1275 = vpop.f32.mrb[0].mxu0
        %v1276 = vadd.f32 0.0, %v1275
        %v1277 = vpop.f32.mrb[0].mxu0
        %1278 = vmatprep.mubr.bf16.mxu0 0
        %1279 = vmatmul.mubr.bf16.gmra.mrb[0].mxu0 %v707
        %v1280 = vpop.f32.mrb[0].mxu0
        %v1281 = vadd.f32 0.0, %v1280
        %v1282 = vpop.f32.mrb[0].mxu0
        %v1283 = vpop.f32.mrb[0].mxu0
        %v1284 = vadd.f32 0.0, %v1283
        %v1285 = vpop.f32.mrb[0].mxu0
        %1286 = vmatprep.mubr.bf16.mxu0 0
        %1287 = vmatmul.mubr.bf16.gmra.mrb[0].mxu0 %v708
        %v1288 = vpop.f32.mrb[0].mxu0
        %v1289 = vadd.f32 0.0, %v1288
        %v1290 = vpop.f32.mrb[0].mxu0
        %v1291 = vpop.f32.mrb[0].mxu0
        %v1292 = vadd.f32 0.0, %v1291
        %v1293 = vpop.f32.mrb[0].mxu0
        %1294 = vmatprep.mubr.bf16.mxu0 0
        %1295 = vmatmul.mubr.bf16.gmra.mrb[0].mxu0 %v709
        %v1296 = vpop.f32.mrb[0].mxu0
        %v1297 = vadd.f32 0.0, %v1296
        %v1298 = vpop.f32.mrb[0].mxu0
        %v1299 = vpop.f32.mrb[0].mxu0
        %v1300 = vadd.f32 0.0, %v1299
        %v1301 = vpop.f32.mrb[0].mxu0
        %1302 = vmatprep.mubr.bf16.mxu0 0
        %1303 = vmatmul.mubr.bf16.gmra.mrb[0].mxu0 %v710
        %v1304 = vpop.f32.mrb[0].mxu0
        %v1305 = vadd.f32 0.0, %v1304
        %v1306 = vpop.f32.mrb[0].mxu0
        %v1307 = vpop.f32.mrb[0].mxu0
        %v1308 = vadd.f32 0.0, %v1307
        %v1309 = vpop.f32.mrb[0].mxu0
        %1310 = vmatprep.mubr.bf16.mxu0 0
        %1311 = vmatmul.mubr.bf16.gmra.mrb[0].mxu0 %v711
        %v1312 = vpop.f32.mrb[0].mxu0
        %v1313 = vadd.f32 0.0, %v1312
        %v1314 = vpop.f32.mrb[0].mxu0
        %v1315 = vpop.f32.mrb[0].mxu0
        %v1316 = vadd.f32 0.0, %v1315
        %v1317 = vpop.f32.mrb[0].mxu0
        %1318 = vmatprep.mubr.bf16.mxu0 0
        %1319 = vmatmul.mubr.bf16.gmra.mrb[0].mxu0 %v712
        %v1320 = vpop.f32.mrb[0].mxu0
        %v1321 = vadd.f32 0.0, %v1320
        %v1322 = vpop.f32.mrb[0].mxu0
        %v1323 = vpop.f32.mrb[0].mxu0
        %v1324 = vadd.f32 0.0, %v1323
        %v1325 = vpop.f32.mrb[0].mxu0
        %1326 = vmatprep.mubr.bf16.mxu0 0
        %1327 = vmatmul.mubr.bf16.gmra.mrb[0].mxu0 %v713
        %v1328 = vpop.f32.mrb[0].mxu0
        %v1329 = vadd.f32 0.0, %v1328
        %v1330 = vpop.f32.mrb[0].mxu0
        %v1331 = vpop.f32.mrb[0].mxu0
        %v1332 = vadd.f32 0.0, %v1331
        %v1333 = vpop.f32.mrb[0].mxu0
        %1334 = vmatprep.mubr.bf16.mxu0 0
        %1335 = vmatmul.mubr.bf16.gmra.mrb[0].mxu0 %v714
        %v1336 = vpop.f32.mrb[0].mxu0
        %v1337 = vadd.f32 0.0, %v1336
        %v1338 = vpop.f32.mrb[0].mxu0
        %v1339 = vpop.f32.mrb[0].mxu0
        %v1340 = vadd.f32 0.0, %v1339
        %v1341 = vpop.f32.mrb[0].mxu0
        %1342 = vmatprep.mubr.bf16.mxu0 0
        %1343 = vmatmul.mubr.bf16.gmra.mrb[0].mxu0 %v715
        %v1344 = vpop.f32.mrb[0].mxu0
        %v1345 = vadd.f32 0.0, %v1344
        %v1346 = vpop.f32.mrb[0].mxu0
        %v1347 = vpop.f32.mrb[0].mxu0
        %v1348 = vadd.f32 0.0, %v1347
        %v1349 = vpop.f32.mrb[0].mxu0
        %1350 = vmatprep.mubr.bf16.mxu0 0
        %1351 = vmatmul.mubr.bf16.gmra.mrb[0].mxu0 %v716
        %v1352 = vpop.f32.mrb[0].mxu0
        %v1353 = vadd.f32 0.0, %v1352
        %v1354 = vpop.f32.mrb[0].mxu0
        %v1355 = vpop.f32.mrb[0].mxu0
        %v1356 = vadd.f32 0.0, %v1355
        %v1357 = vpop.f32.mrb[0].mxu0
        %1358 = vmatprep.mubr.bf16.mxu0 0
        %1359 = vmatmul.mubr.bf16.gmra.mrb[0].mxu0 %v717
        %v1360 = vpop.f32.mrb[0].mxu0
        %v1361 = vadd.f32 0.0, %v1360
        %v1362 = vpop.f32.mrb[0].mxu0
        %v1363 = vpop.f32.mrb[0].mxu0
        %v1364 = vadd.f32 0.0, %v1363
        %v1365 = vpop.f32.mrb[0].mxu0
        %1366 = vmatprep.mubr.bf16.mxu0 0
        %1367 = vmatmul.mubr.bf16.gmra.mrb[0].mxu0 %v718
        %v1368 = vpop.f32.mrb[0].mxu0
        %v1369 = vadd.f32 0.0, %v1368
        %v1370 = vpop.f32.mrb[0].mxu0
        %v1371 = vpop.f32.mrb[0].mxu0
        %v1372 = vadd.f32 0.0, %v1371
        %v1373 = vpop.f32.mrb[0].mxu0
        %1374 = vmatprep.mubr.bf16.mxu0 0
        %1375 = vmatmul.mubr.bf16.gmra.mrb[0].mxu0 %v719
        %v1376 = vpop.f32.mrb[0].mxu0
        %v1377 = vadd.f32 0.0, %v1376
        %v1378 = vpop.f32.mrb[0].mxu0
        %v1379 = vpop.f32.mrb[0].mxu0
        %v1380 = vadd.f32 0.0, %v1379
        %v1381 = vpop.f32.mrb[0].mxu0
        %1382 = vmatprep.mubr.bf16.mxu0 0
        %1383 = vmatmul.mubr.bf16.gmra.mrb[0].mxu0 %v720
        %v1384 = vpop.f32.mrb[0].mxu0
        %v1385 = vadd.f32 0.0, %v1384
        %v1386 = vpop.f32.mrb[0].mxu0
        %v1387 = vpop.f32.mrb[0].mxu0
        %v1388 = vadd.f32 0.0, %v1387
        %v1389 = vpop.f32.mrb[0].mxu0
        %1390 = vmatprep.mubr.bf16.mxu0 0
        %1391 = vmatmul.mubr.bf16.gmra.mrb[0].mxu0 %v721
        %v1392 = vpop.f32.mrb[0].mxu0
        %v1393 = vadd.f32 0.0, %v1392
        %v1394 = vpop.f32.mrb[0].mxu0
        %v1395 = vpop.f32.mrb[0].mxu0
        %v1396 = vadd.f32 0.0, %v1395
        %v1397 = vpop.f32.mrb[0].mxu0
        %1398 = vdwg.mxu0
        %v1399 = vadd.f32 %v1047, %v1273
        %v1400 = vadd.f32 %v1050, %v1276
        %v1401 = vadd.f32 %v1055, %v1281
        %v1402 = vadd.f32 %v1058, %v1284
        %v1403 = vadd.f32 %v1063, %v1289
        %v1404 = vadd.f32 %v1066, %v1292
        %v1405 = vadd.f32 %v1071, %v1297
        %v1406 = vadd.f32 %v1074, %v1300
        %v1407 = vadd.f32 %v1079, %v1305
        %v1408 = vadd.f32 %v1082, %v1308
        %v1409 = vadd.f32 %v1087, %v1313
        %v1410 = vadd.f32 %v1090, %v1316
        %v1411 = vadd.f32 %v1095, %v1321
        %v1412 = vadd.f32 %v1098, %v1324
        %v1413 = vadd.f32 %v1103, %v1329
        %v1414 = vadd.f32 %v1106, %v1332
        %v1415 = vadd.f32 %v1111, %v1337
        %v1416 = vadd.f32 %v1114, %v1340
        %v1417 = vadd.f32 %v1119, %v1345
        %v1418 = vadd.f32 %v1122, %v1348
        %v1419 = vadd.f32 %v1127, %v1353
        %v1420 = vadd.f32 %v1130, %v1356
        %v1421 = vadd.f32 %v1135, %v1361
        %v1422 = vadd.f32 %v1138, %v1364
        %v1423 = vadd.f32 %v1143, %v1369
        %v1424 = vadd.f32 %v1146, %v1372
        %v1425 = vadd.f32 %v1151, %v1377
        %v1426 = vadd.f32 %v1154, %v1380
        %v1427 = vadd.f32 %v1159, %v1385
        %v1428 = vadd.f32 %v1162, %v1388
        %v1429 = vadd.f32 %v1167, %v1393
        %v1430 = vadd.f32 %v1170, %v1396
        %v1431 = vld [vmem:[#allocation2 + $0x1] sm:$0xff]
        %v1432 = vld [vmem:[#allocation2 + $0x9] sm:$0xff]
        %v1433 = vld [vmem:[#allocation2 + $0x19] sm:$0xff]
        %v1434 = vld [vmem:[#allocation2 + $0x21] sm:$0xff]
        %v1435 = vld [vmem:[#allocation2 + $0x31] sm:$0xff]
        %v1436 = vld [vmem:[#allocation2 + $0x39] sm:$0xff]
        %v1437 = vld [vmem:[#allocation2 + $0x49] sm:$0xff]
        %v1438 = vld [vmem:[#allocation2 + $0x51] sm:$0xff]
        %v1439 = vld [vmem:[#allocation2 + $0x61] sm:$0xff]
        %v1440 = vld [vmem:[#allocation2 + $0x69] sm:$0xff]
        %v1441 = vld [vmem:[#allocation2 + $0x79] sm:$0xff]
        %v1442 = vld [vmem:[#allocation2 + $0x81] sm:$0xff]
        %v1443 = vld [vmem:[#allocation2 + $0x91] sm:$0xff]
        %v1444 = vld [vmem:[#allocation2 + $0x99] sm:$0xff]
        %v1445 = vld [vmem:[#allocation2 + $0xa9] sm:$0xff]
        %v1446 = vld [vmem:[#allocation2 + $0xb1] sm:$0xff]
        %v1447 = vld [vmem:[#allocation2 + $0xc1] sm:$0xff]
        %v1448 = vld [vmem:[#allocation2 + $0xc9] sm:$0xff]
        %v1449 = vld [vmem:[#allocation2 + $0xd9] sm:$0xff]
        %v1450 = vld [vmem:[#allocation2 + $0xe1] sm:$0xff]
        %v1451 = vld [vmem:[#allocation2 + $0xf1] sm:$0xff]
        %v1452 = vld [vmem:[#allocation2 + $0xf9] sm:$0xff]
        %v1453 = vld [vmem:[#allocation2 + $0x109] sm:$0xff]
        %v1454 = vld [vmem:[#allocation2 + $0x111] sm:$0xff]
        %v1455 = vld [vmem:[#allocation2 + $0x121] sm:$0xff]
        %v1456 = vld [vmem:[#allocation2 + $0x129] sm:$0xff]
        %v1457 = vld [vmem:[#allocation2 + $0x139] sm:$0xff]
        %v1458 = vld [vmem:[#allocation2 + $0x141] sm:$0xff]
        %v1459 = vld [vmem:[#allocation2 + $0x151] sm:$0xff]
        %v1460 = vld [vmem:[#allocation2 + $0x159] sm:$0xff]
        %v1461 = vld [vmem:[#allocation2 + $0x169] sm:$0xff]
        %v1462 = vld [vmem:[#allocation2 + $0x171] sm:$0xff]
        %v1463 = vld [vmem:[#allocation2 + $0x181] sm:$0xff]
        %v1464 = vld [vmem:[#allocation2 + $0x189] sm:$0xff]
        %v1465 = vld [vmem:[#allocation2 + $0x199] sm:$0xff]
        %v1466 = vld [vmem:[#allocation2 + $0x1a1] sm:$0xff]
        %v1467 = vpack.c.bf16 %v1432, %v1431
        %v1468 = vpack.c.bf16 %v1434, %v1433
        %v1469 = vpack.c.bf16 %v1436, %v1435
        %v1470 = vpack.c.bf16 %v1438, %v1437
        %v1471 = vpack.c.bf16 %v1440, %v1439
        %v1472 = vpack.c.bf16 %v1442, %v1441
        %v1473 = vpack.c.bf16 %v1444, %v1443
        %v1474 = vpack.c.bf16 %v1446, %v1445
        %v1475 = vpack.c.bf16 %v1448, %v1447
        %v1476 = vpack.c.bf16 %v1450, %v1449
        %v1477 = vpack.c.bf16 %v1452, %v1451
        %v1478 = vpack.c.bf16 %v1454, %v1453
        %v1479 = vpack.c.bf16 %v1456, %v1455
        %v1480 = vpack.c.bf16 %v1458, %v1457
        %v1481 = vpack.c.bf16 %v1460, %v1459
        %v1482 = vpack.c.bf16 %v1462, %v1461
        %v1483 = vpack.c.bf16 %v1464, %v1463
        %v1484 = vpack.c.bf16 %v1466, %v1465
        %s1485 = scalar_lea.vmem [#allocation6], 64
        %v1486 = vld [vmem:[%s1485] sm:$0xf]
        %v1487 = vld [vmem:[%s1485 + $0x4] sm:$0xf]
        %v1488 = vld [vmem:[%s1485 + $0x8] sm:$0xf]
        %v1489 = vld [vmem:[%s1485 + $0xc] sm:$0xf]
        %v1490 = vld [vmem:[%s1485 + $0x10] sm:$0xf]
        %v1491 = vld [vmem:[%s1485 + $0x14] sm:$0xf]
        %v1492 = vld [vmem:[%s1485 + $0x18] sm:$0xf]
        %v1493 = vld [vmem:[%s1485 + $0x1c] sm:$0xf]
        %v1494 = vld [vmem:[%s1485 + $0x20] sm:$0xf]
        %v1495 = vld [vmem:[%s1485 + $0x24] sm:$0xf]
        %v1496 = vld [vmem:[%s1485 + $0x28] sm:$0xf]
        %v1497 = vld [vmem:[%s1485 + $0x2c] sm:$0xf]
        %v1498 = vld [vmem:[%s1485 + $0x30] sm:$0xf]
        %v1499 = vld [vmem:[%s1485 + $0x34] sm:$0xf]
        %v1500 = vld [vmem:[%s1485 + $0x38] sm:$0xf]
        %v1501 = vld [vmem:[%s1485 + $0x3c] sm:$0xf]
        %v1518 = vunpack.c.l.b16 %v1486
        %v1519 = vunpack.c.l.b16 %v1487
        %v1520 = vunpack.c.l.b16 %v1488
        %v1521 = vunpack.c.l.b16 %v1489
        %v1522 = vunpack.c.l.b16 %v1490
        %v1523 = vunpack.c.l.b16 %v1491
        %v1524 = vunpack.c.l.b16 %v1492
        %v1525 = vunpack.c.l.b16 %v1493
        %v1526 = vunpack.c.l.b16 %v1494
        %v1527 = vunpack.c.l.b16 %v1495
        %v1528 = vunpack.c.l.b16 %v1496
        %v1529 = vunpack.c.l.b16 %v1497
        %v1530 = vunpack.c.l.b16 %v1498
        %v1531 = vunpack.c.l.b16 %v1499
        %v1532 = vunpack.c.l.b16 %v1500
        %v1533 = vunpack.c.l.b16 %v1501
        %v1534 = vpack.c.b16 %v1519, %v1518
        %v1535 = vpack.c.b16 %v1521, %v1520
        %v1536 = vpack.c.b16 %v1523, %v1522
        %v1537 = vpack.c.b16 %v1525, %v1524
        %v1538 = vpack.c.b16 %v1527, %v1526
        %v1539 = vpack.c.b16 %v1529, %v1528
        %v1540 = vpack.c.b16 %v1531, %v1530
        %v1541 = vpack.c.b16 %v1533, %v1532
        %1550 = vmatprep.subr.bf16.mxu0 0
        %1551 = vmatpush1.bf16.msra.mxu0 %v1534
        %1552 = vmatprep.subr.bf16.mxu0 0
        %1553 = vmatpush1.bf16.msra.mxu0 %v1535
        %1554 = vmatprep.subr.bf16.mxu0 0
        %1555 = vmatpush1.bf16.msra.mxu0 %v1536
        %1556 = vmatprep.subr.bf16.mxu0 0
        %1557 = vmatpush1.bf16.msra.mxu0 %v1537
        %1558 = vmatprep.subr.bf16.mxu0 0
        %1559 = vmatpush1.bf16.msra.mxu0 %v1538
        %1560 = vmatprep.subr.bf16.mxu0 0
        %1561 = vmatpush1.bf16.msra.mxu0 %v1539
        %1562 = vmatprep.subr.bf16.mxu0 0
        %1563 = vmatpush1.bf16.msra.mxu0 %v1540
        %1564 = vmatprep.subr.bf16.mxu0 0
        %1565 = vmatpush1.bf16.msra.mxu0 %v1541
        %1566 = vmatprep.subr.bf16.mxu0 0
        %1567 = vmatpush1.bf16.msra.mxu0 0
        %1568 = vmatprep.subr.bf16.mxu0 0
        %1569 = vmatpush1.bf16.msra.mxu0 0
        %1570 = vmatprep.subr.bf16.mxu0 0
        %1571 = vmatpush1.bf16.msra.mxu0 0
        %1572 = vmatprep.subr.bf16.mxu0 0
        %1573 = vmatpush1.bf16.msra.mxu0 0
        %1574 = vmatprep.subr.bf16.mxu0 0
        %1575 = vmatpush1.bf16.msra.mxu0 0
        %1576 = vmatprep.subr.bf16.mxu0 0
        %1577 = vmatpush1.bf16.msra.mxu0 0
        %1578 = vmatprep.subr.bf16.mxu0 0
        %1579 = vmatpush1.bf16.msra.mxu0 0
        %1580 = vmatprep.subr.bf16.mxu0 0
        %1581 = vmatpush1.bf16.msra.mxu0 0
        %1582 = vmatprep.mubr.bf16.mxu0 0
        %1583 = vmatmul.mubr.bf16.gmra.mrb[0].mxu0 %v1467
        %v1584 = vpop.f32.mrb[0].mxu0
        %v1585 = vadd.f32 0.0, %v1584
        %v1586 = vpop.f32.mrb[0].mxu0
        %v1587 = vpop.f32.mrb[0].mxu0
        %v1588 = vadd.f32 0.0, %v1587
        %v1589 = vpop.f32.mrb[0].mxu0
        %1590 = vmatprep.mubr.bf16.mxu0 0
        %1591 = vmatmul.mubr.bf16.gmra.mrb[0].mxu0 %v1468
        %v1592 = vpop.f32.mrb[0].mxu0
        %v1593 = vadd.f32 0.0, %v1592
        %v1594 = vpop.f32.mrb[0].mxu0
        %v1595 = vpop.f32.mrb[0].mxu0
        %v1596 = vadd.f32 0.0, %v1595
        %v1597 = vpop.f32.mrb[0].mxu0
        %1598 = vmatprep.mubr.bf16.mxu0 0
        %1599 = vmatmul.mubr.bf16.gmra.mrb[0].mxu0 %v1469
        %v1600 = vpop.f32.mrb[0].mxu0
        %v1601 = vadd.f32 0.0, %v1600
        %v1602 = vpop.f32.mrb[0].mxu0
        %v1603 = vpop.f32.mrb[0].mxu0
        %v1604 = vadd.f32 0.0, %v1603
        %v1605 = vpop.f32.mrb[0].mxu0
        %1606 = vmatprep.mubr.bf16.mxu0 0
        %1607 = vmatmul.mubr.bf16.gmra.mrb[0].mxu0 %v1470
        %v1608 = vpop.f32.mrb[0].mxu0
        %v1609 = vadd.f32 0.0, %v1608
        %v1610 = vpop.f32.mrb[0].mxu0
        %v1611 = vpop.f32.mrb[0].mxu0
        %v1612 = vadd.f32 0.0, %v1611
        %v1613 = vpop.f32.mrb[0].mxu0
        %1614 = vmatprep.mubr.bf16.mxu0 0
        %1615 = vmatmul.mubr.bf16.gmra.mrb[0].mxu0 %v1471
        %v1616 = vpop.f32.mrb[0].mxu0
        %v1617 = vadd.f32 0.0, %v1616
        %v1618 = vpop.f32.mrb[0].mxu0
        %v1619 = vpop.f32.mrb[0].mxu0
        %v1620 = vadd.f32 0.0, %v1619
        %v1621 = vpop.f32.mrb[0].mxu0
        %1622 = vmatprep.mubr.bf16.mxu0 0
        %1623 = vmatmul.mubr.bf16.gmra.mrb[0].mxu0 %v1472
        %v1624 = vpop.f32.mrb[0].mxu0
        %v1625 = vadd.f32 0.0, %v1624
        %v1626 = vpop.f32.mrb[0].mxu0
        %v1627 = vpop.f32.mrb[0].mxu0
        %v1628 = vadd.f32 0.0, %v1627
        %v1629 = vpop.f32.mrb[0].mxu0
        %1630 = vmatprep.mubr.bf16.mxu0 0
        %1631 = vmatmul.mubr.bf16.gmra.mrb[0].mxu0 %v1473
        %v1632 = vpop.f32.mrb[0].mxu0
        %v1633 = vadd.f32 0.0, %v1632
        %v1634 = vpop.f32.mrb[0].mxu0
        %v1635 = vpop.f32.mrb[0].mxu0
        %v1636 = vadd.f32 0.0, %v1635
        %v1637 = vpop.f32.mrb[0].mxu0
        %1638 = vmatprep.mubr.bf16.mxu0 0
        %1639 = vmatmul.mubr.bf16.gmra.mrb[0].mxu0 %v1474
        %v1640 = vpop.f32.mrb[0].mxu0
        %v1641 = vadd.f32 0.0, %v1640
        %v1642 = vpop.f32.mrb[0].mxu0
        %v1643 = vpop.f32.mrb[0].mxu0
        %v1644 = vadd.f32 0.0, %v1643
        %v1645 = vpop.f32.mrb[0].mxu0
        %1646 = vmatprep.mubr.bf16.mxu0 0
        %1647 = vmatmul.mubr.bf16.gmra.mrb[0].mxu0 %v1475
        %v1648 = vpop.f32.mrb[0].mxu0
        %v1649 = vadd.f32 0.0, %v1648
        %v1650 = vpop.f32.mrb[0].mxu0
        %v1651 = vpop.f32.mrb[0].mxu0
        %v1652 = vadd.f32 0.0, %v1651
        %v1653 = vpop.f32.mrb[0].mxu0
        %1654 = vmatprep.mubr.bf16.mxu0 0
        %1655 = vmatmul.mubr.bf16.gmra.mrb[0].mxu0 %v1476
        %v1656 = vpop.f32.mrb[0].mxu0
        %v1657 = vadd.f32 0.0, %v1656
        %v1658 = vpop.f32.mrb[0].mxu0
        %v1659 = vpop.f32.mrb[0].mxu0
        %v1660 = vadd.f32 0.0, %v1659
        %v1661 = vpop.f32.mrb[0].mxu0
        %1662 = vmatprep.mubr.bf16.mxu0 0
        %1663 = vmatmul.mubr.bf16.gmra.mrb[0].mxu0 %v1477
        %v1664 = vpop.f32.mrb[0].mxu0
        %v1665 = vadd.f32 0.0, %v1664
        %v1666 = vpop.f32.mrb[0].mxu0
        %v1667 = vpop.f32.mrb[0].mxu0
        %v1668 = vadd.f32 0.0, %v1667
        %v1669 = vpop.f32.mrb[0].mxu0
        %1670 = vmatprep.mubr.bf16.mxu0 0
        %1671 = vmatmul.mubr.bf16.gmra.mrb[0].mxu0 %v1478
        %v1672 = vpop.f32.mrb[0].mxu0
        %v1673 = vadd.f32 0.0, %v1672
        %v1674 = vpop.f32.mrb[0].mxu0
        %v1675 = vpop.f32.mrb[0].mxu0
        %v1676 = vadd.f32 0.0, %v1675
        %v1677 = vpop.f32.mrb[0].mxu0
        %1678 = vmatprep.mubr.bf16.mxu0 0
        %1679 = vmatmul.mubr.bf16.gmra.mrb[0].mxu0 %v1479
        %v1680 = vpop.f32.mrb[0].mxu0
        %v1681 = vadd.f32 0.0, %v1680
        %v1682 = vpop.f32.mrb[0].mxu0
        %v1683 = vpop.f32.mrb[0].mxu0
        %v1684 = vadd.f32 0.0, %v1683
        %v1685 = vpop.f32.mrb[0].mxu0
        %1686 = vmatprep.mubr.bf16.mxu0 0
        %1687 = vmatmul.mubr.bf16.gmra.mrb[0].mxu0 %v1480
        %v1688 = vpop.f32.mrb[0].mxu0
        %v1689 = vadd.f32 0.0, %v1688
        %v1690 = vpop.f32.mrb[0].mxu0
        %v1691 = vpop.f32.mrb[0].mxu0
        %v1692 = vadd.f32 0.0, %v1691
        %v1693 = vpop.f32.mrb[0].mxu0
        %1694 = vmatprep.mubr.bf16.mxu0 0
        %1695 = vmatmul.mubr.bf16.gmra.mrb[0].mxu0 %v1481
        %v1696 = vpop.f32.mrb[0].mxu0
        %v1697 = vadd.f32 0.0, %v1696
        %v1698 = vpop.f32.mrb[0].mxu0
        %v1699 = vpop.f32.mrb[0].mxu0
        %v1700 = vadd.f32 0.0, %v1699
        %v1701 = vpop.f32.mrb[0].mxu0
        %1702 = vmatprep.mubr.bf16.mxu0 0
        %1703 = vmatmul.mubr.bf16.gmra.mrb[0].mxu0 %v1482
        %v1704 = vpop.f32.mrb[0].mxu0
        %v1705 = vadd.f32 0.0, %v1704
        %v1706 = vpop.f32.mrb[0].mxu0
        %v1707 = vpop.f32.mrb[0].mxu0
        %v1708 = vadd.f32 0.0, %v1707
        %v1709 = vpop.f32.mrb[0].mxu0
        %1710 = vdwg.mxu0
        %v1711 = vadd.f32 %v1399, %v1585
        %v1712 = vadd.f32 %v1400, %v1588
        %v1713 = vadd.f32 %v1401, %v1593
        %v1714 = vadd.f32 %v1402, %v1596
        %v1715 = vadd.f32 %v1403, %v1601
        %v1716 = vadd.f32 %v1404, %v1604
        %v1717 = vadd.f32 %v1405, %v1609
        %v1718 = vadd.f32 %v1406, %v1612
        %v1719 = vadd.f32 %v1407, %v1617
        %v1720 = vadd.f32 %v1408, %v1620
        %v1721 = vadd.f32 %v1409, %v1625
        %v1722 = vadd.f32 %v1410, %v1628
        %v1723 = vadd.f32 %v1411, %v1633
        %v1724 = vadd.f32 %v1412, %v1636
        %v1725 = vadd.f32 %v1413, %v1641
        %v1726 = vadd.f32 %v1414, %v1644
        %v1727 = vadd.f32 %v1415, %v1649
        %v1728 = vadd.f32 %v1416, %v1652
        %v1729 = vadd.f32 %v1417, %v1657
        %v1730 = vadd.f32 %v1418, %v1660
        %v1731 = vadd.f32 %v1419, %v1665
        %v1732 = vadd.f32 %v1420, %v1668
        %v1733 = vadd.f32 %v1421, %v1673
        %v1734 = vadd.f32 %v1422, %v1676
        %v1735 = vadd.f32 %v1423, %v1681
        %v1736 = vadd.f32 %v1424, %v1684
        %v1737 = vadd.f32 %v1425, %v1689
        %v1738 = vadd.f32 %v1426, %v1692
        %v1739 = vadd.f32 %v1427, %v1697
        %v1740 = vadd.f32 %v1428, %v1700
        %v1741 = vadd.f32 %v1429, %v1705
        %v1742 = vadd.f32 %v1430, %v1708
        %s1743 = scalar_lea.vmem [#allocation6], 256
        %v1744 = vld [vmem:[%s1743] sm:$0xf]
        %v1745 = vld [vmem:[%s1743 + $0x4] sm:$0xf]
        %v1746 = vld [vmem:[%s1743 + $0x8] sm:$0xf]
        %v1747 = vld [vmem:[%s1743 + $0xc] sm:$0xf]
        %v1748 = vld [vmem:[%s1743 + $0x10] sm:$0xf]
        %v1749 = vld [vmem:[%s1743 + $0x14] sm:$0xf]
        %v1750 = vld [vmem:[%s1743 + $0x18] sm:$0xf]
        %v1751 = vld [vmem:[%s1743 + $0x1c] sm:$0xf]
        %v1752 = vld [vmem:[%s1743 + $0x20] sm:$0xf]
        %v1753 = vld [vmem:[%s1743 + $0x24] sm:$0xf]
        %v1754 = vld [vmem:[%s1743 + $0x28] sm:$0xf]
        %v1755 = vld [vmem:[%s1743 + $0x2c] sm:$0xf]
        %v1756 = vld [vmem:[%s1743 + $0x30] sm:$0xf]
        %v1757 = vld [vmem:[%s1743 + $0x34] sm:$0xf]
        %v1758 = vld [vmem:[%s1743 + $0x38] sm:$0xf]
        %v1759 = vld [vmem:[%s1743 + $0x3c] sm:$0xf]
        %v1776 = vunpack.c.l.b16 %v1744
        %v1777 = vunpack.c.l.b16 %v1745
        %v1778 = vunpack.c.l.b16 %v1746
        %v1779 = vunpack.c.l.b16 %v1747
        %v1780 = vunpack.c.l.b16 %v1748
        %v1781 = vunpack.c.l.b16 %v1749
        %v1782 = vunpack.c.l.b16 %v1750
        %v1783 = vunpack.c.l.b16 %v1751
        %v1784 = vunpack.c.l.b16 %v1752
        %v1785 = vunpack.c.l.b16 %v1753
        %v1786 = vunpack.c.l.b16 %v1754
        %v1787 = vunpack.c.l.b16 %v1755
        %v1788 = vunpack.c.l.b16 %v1756
        %v1789 = vunpack.c.l.b16 %v1757
        %v1790 = vunpack.c.l.b16 %v1758
        %v1791 = vunpack.c.l.b16 %v1759
        %v1792 = vpack.c.b16 %v1777, %v1776
        %v1793 = vpack.c.b16 %v1779, %v1778
        %v1794 = vpack.c.b16 %v1781, %v1780
        %v1795 = vpack.c.b16 %v1783, %v1782
        %v1796 = vpack.c.b16 %v1785, %v1784
        %v1797 = vpack.c.b16 %v1787, %v1786
        %v1798 = vpack.c.b16 %v1789, %v1788
        %v1799 = vpack.c.b16 %v1791, %v1790
        %1808 = vmatprep.subr.bf16.mxu0 0
        %1809 = vmatpush1.bf16.msra.mxu0 %v1792
        %1810 = vmatprep.subr.bf16.mxu0 0
        %1811 = vmatpush1.bf16.msra.mxu0 %v1793
        %1812 = vmatprep.subr.bf16.mxu0 0
        %1813 = vmatpush1.bf16.msra.mxu0 %v1794
        %1814 = vmatprep.subr.bf16.mxu0 0
        %1815 = vmatpush1.bf16.msra.mxu0 %v1795
        %1816 = vmatprep.subr.bf16.mxu0 0
        %1817 = vmatpush1.bf16.msra.mxu0 %v1796
        %1818 = vmatprep.subr.bf16.mxu0 0
        %1819 = vmatpush1.bf16.msra.mxu0 %v1797
        %1820 = vmatprep.subr.bf16.mxu0 0
        %1821 = vmatpush1.bf16.msra.mxu0 %v1798
        %1822 = vmatprep.subr.bf16.mxu0 0
        %1823 = vmatpush1.bf16.msra.mxu0 %v1799
        %1824 = vmatprep.subr.bf16.mxu0 0
        %1825 = vmatpush1.bf16.msra.mxu0 0
        %1826 = vmatprep.subr.bf16.mxu0 0
        %1827 = vmatpush1.bf16.msra.mxu0 0
        %1828 = vmatprep.subr.bf16.mxu0 0
        %1829 = vmatpush1.bf16.msra.mxu0 0
        %1830 = vmatprep.subr.bf16.mxu0 0
        %1831 = vmatpush1.bf16.msra.mxu0 0
        %1832 = vmatprep.subr.bf16.mxu0 0
        %1833 = vmatpush1.bf16.msra.mxu0 0
        %1834 = vmatprep.subr.bf16.mxu0 0
        %1835 = vmatpush1.bf16.msra.mxu0 0
        %1836 = vmatprep.subr.bf16.mxu0 0
        %1837 = vmatpush1.bf16.msra.mxu0 0
        %1838 = vmatprep.subr.bf16.mxu0 0
        %1839 = vmatpush1.bf16.msra.mxu0 0
        %1840 = vmatprep.mubr.bf16.mxu0 0
        %1841 = vmatmul.mubr.bf16.gmra.mrb[0].mxu0 %v1468
        %v1842 = vpop.f32.mrb[0].mxu0
        %v1843 = vadd.f32 0.0, %v1842
        %v1844 = vpop.f32.mrb[0].mxu0
        %v1845 = vpop.f32.mrb[0].mxu0
        %v1846 = vadd.f32 0.0, %v1845
        %v1847 = vpop.f32.mrb[0].mxu0
        %1848 = vmatprep.mubr.bf16.mxu0 0
        %1849 = vmatmul.mubr.bf16.gmra.mrb[0].mxu0 %v1469
        %v1850 = vpop.f32.mrb[0].mxu0
        %v1851 = vadd.f32 0.0, %v1850
        %v1852 = vpop.f32.mrb[0].mxu0
        %v1853 = vpop.f32.mrb[0].mxu0
        %v1854 = vadd.f32 0.0, %v1853
        %v1855 = vpop.f32.mrb[0].mxu0
        %1856 = vmatprep.mubr.bf16.mxu0 0
        %1857 = vmatmul.mubr.bf16.gmra.mrb[0].mxu0 %v1470
        %v1858 = vpop.f32.mrb[0].mxu0
        %v1859 = vadd.f32 0.0, %v1858
        %v1860 = vpop.f32.mrb[0].mxu0
        %v1861 = vpop.f32.mrb[0].mxu0
        %v1862 = vadd.f32 0.0, %v1861
        %v1863 = vpop.f32.mrb[0].mxu0
        %1864 = vmatprep.mubr.bf16.mxu0 0
        %1865 = vmatmul.mubr.bf16.gmra.mrb[0].mxu0 %v1471
        %v1866 = vpop.f32.mrb[0].mxu0
        %v1867 = vadd.f32 0.0, %v1866
        %v1868 = vpop.f32.mrb[0].mxu0
        %v1869 = vpop.f32.mrb[0].mxu0
        %v1870 = vadd.f32 0.0, %v1869
        %v1871 = vpop.f32.mrb[0].mxu0
        %1872 = vmatprep.mubr.bf16.mxu0 0
        %1873 = vmatmul.mubr.bf16.gmra.mrb[0].mxu0 %v1472
        %v1874 = vpop.f32.mrb[0].mxu0
        %v1875 = vadd.f32 0.0, %v1874
        %v1876 = vpop.f32.mrb[0].mxu0
        %v1877 = vpop.f32.mrb[0].mxu0
        %v1878 = vadd.f32 0.0, %v1877
        %v1879 = vpop.f32.mrb[0].mxu0
        %1880 = vmatprep.mubr.bf16.mxu0 0
        %1881 = vmatmul.mubr.bf16.gmra.mrb[0].mxu0 %v1473
        %v1882 = vpop.f32.mrb[0].mxu0
        %v1883 = vadd.f32 0.0, %v1882
        %v1884 = vpop.f32.mrb[0].mxu0
        %v1885 = vpop.f32.mrb[0].mxu0
        %v1886 = vadd.f32 0.0, %v1885
        %v1887 = vpop.f32.mrb[0].mxu0
        %1888 = vmatprep.mubr.bf16.mxu0 0
        %1889 = vmatmul.mubr.bf16.gmra.mrb[0].mxu0 %v1474
        %v1890 = vpop.f32.mrb[0].mxu0
        %v1891 = vadd.f32 0.0, %v1890
        %v1892 = vpop.f32.mrb[0].mxu0
        %v1893 = vpop.f32.mrb[0].mxu0
        %v1894 = vadd.f32 0.0, %v1893
        %v1895 = vpop.f32.mrb[0].mxu0
        %1896 = vmatprep.mubr.bf16.mxu0 0
        %1897 = vmatmul.mubr.bf16.gmra.mrb[0].mxu0 %v1475
        %v1898 = vpop.f32.mrb[0].mxu0
        %v1899 = vadd.f32 0.0, %v1898
        %v1900 = vpop.f32.mrb[0].mxu0
        %v1901 = vpop.f32.mrb[0].mxu0
        %v1902 = vadd.f32 0.0, %v1901
        %v1903 = vpop.f32.mrb[0].mxu0
        %1904 = vmatprep.mubr.bf16.mxu0 0
        %1905 = vmatmul.mubr.bf16.gmra.mrb[0].mxu0 %v1476
        %v1906 = vpop.f32.mrb[0].mxu0
        %v1907 = vadd.f32 0.0, %v1906
        %v1908 = vpop.f32.mrb[0].mxu0
        %v1909 = vpop.f32.mrb[0].mxu0
        %v1910 = vadd.f32 0.0, %v1909
        %v1911 = vpop.f32.mrb[0].mxu0
        %1912 = vmatprep.mubr.bf16.mxu0 0
        %1913 = vmatmul.mubr.bf16.gmra.mrb[0].mxu0 %v1477
        %v1914 = vpop.f32.mrb[0].mxu0
        %v1915 = vadd.f32 0.0, %v1914
        %v1916 = vpop.f32.mrb[0].mxu0
        %v1917 = vpop.f32.mrb[0].mxu0
        %v1918 = vadd.f32 0.0, %v1917
        %v1919 = vpop.f32.mrb[0].mxu0
        %1920 = vmatprep.mubr.bf16.mxu0 0
        %1921 = vmatmul.mubr.bf16.gmra.mrb[0].mxu0 %v1478
        %v1922 = vpop.f32.mrb[0].mxu0
        %v1923 = vadd.f32 0.0, %v1922
        %v1924 = vpop.f32.mrb[0].mxu0
        %v1925 = vpop.f32.mrb[0].mxu0
        %v1926 = vadd.f32 0.0, %v1925
        %v1927 = vpop.f32.mrb[0].mxu0
        %1928 = vmatprep.mubr.bf16.mxu0 0
        %1929 = vmatmul.mubr.bf16.gmra.mrb[0].mxu0 %v1479
        %v1930 = vpop.f32.mrb[0].mxu0
        %v1931 = vadd.f32 0.0, %v1930
        %v1932 = vpop.f32.mrb[0].mxu0
        %v1933 = vpop.f32.mrb[0].mxu0
        %v1934 = vadd.f32 0.0, %v1933
        %v1935 = vpop.f32.mrb[0].mxu0
        %1936 = vmatprep.mubr.bf16.mxu0 0
        %1937 = vmatmul.mubr.bf16.gmra.mrb[0].mxu0 %v1480
        %v1938 = vpop.f32.mrb[0].mxu0
        %v1939 = vadd.f32 0.0, %v1938
        %v1940 = vpop.f32.mrb[0].mxu0
        %v1941 = vpop.f32.mrb[0].mxu0
        %v1942 = vadd.f32 0.0, %v1941
        %v1943 = vpop.f32.mrb[0].mxu0
        %1944 = vmatprep.mubr.bf16.mxu0 0
        %1945 = vmatmul.mubr.bf16.gmra.mrb[0].mxu0 %v1481
        %v1946 = vpop.f32.mrb[0].mxu0
        %v1947 = vadd.f32 0.0, %v1946
        %v1948 = vpop.f32.mrb[0].mxu0
        %v1949 = vpop.f32.mrb[0].mxu0
        %v1950 = vadd.f32 0.0, %v1949
        %v1951 = vpop.f32.mrb[0].mxu0
        %1952 = vmatprep.mubr.bf16.mxu0 0
        %1953 = vmatmul.mubr.bf16.gmra.mrb[0].mxu0 %v1482
        %v1954 = vpop.f32.mrb[0].mxu0
        %v1955 = vadd.f32 0.0, %v1954
        %v1956 = vpop.f32.mrb[0].mxu0
        %v1957 = vpop.f32.mrb[0].mxu0
        %v1958 = vadd.f32 0.0, %v1957
        %v1959 = vpop.f32.mrb[0].mxu0
        %1960 = vmatprep.mubr.bf16.mxu0 0
        %1961 = vmatmul.mubr.bf16.gmra.mrb[0].mxu0 %v1483
        %v1962 = vpop.f32.mrb[0].mxu0
        %v1963 = vadd.f32 0.0, %v1962
        %v1964 = vpop.f32.mrb[0].mxu0
        %v1965 = vpop.f32.mrb[0].mxu0
        %v1966 = vadd.f32 0.0, %v1965
        %v1967 = vpop.f32.mrb[0].mxu0
        %1968 = vdwg.mxu0
        %v1969 = vadd.f32 %v1711, %v1843
        %v1970 = vadd.f32 %v1712, %v1846
        %v1971 = vadd.f32 %v1713, %v1851
        %v1972 = vadd.f32 %v1714, %v1854
        %v1973 = vadd.f32 %v1715, %v1859
        %v1974 = vadd.f32 %v1716, %v1862
        %v1975 = vadd.f32 %v1717, %v1867
        %v1976 = vadd.f32 %v1718, %v1870
        %v1977 = vadd.f32 %v1719, %v1875
        %v1978 = vadd.f32 %v1720, %v1878
        %v1979 = vadd.f32 %v1721, %v1883
        %v1980 = vadd.f32 %v1722, %v1886
        %v1981 = vadd.f32 %v1723, %v1891
        %v1982 = vadd.f32 %v1724, %v1894
        %v1983 = vadd.f32 %v1725, %v1899
        %v1984 = vadd.f32 %v1726, %v1902
        %v1985 = vadd.f32 %v1727, %v1907
        %v1986 = vadd.f32 %v1728, %v1910
        %v1987 = vadd.f32 %v1729, %v1915
        %v1988 = vadd.f32 %v1730, %v1918
        %v1989 = vadd.f32 %v1731, %v1923
        %v1990 = vadd.f32 %v1732, %v1926
        %v1991 = vadd.f32 %v1733, %v1931
        %v1992 = vadd.f32 %v1734, %v1934
        %v1993 = vadd.f32 %v1735, %v1939
        %v1994 = vadd.f32 %v1736, %v1942
        %v1995 = vadd.f32 %v1737, %v1947
        %v1996 = vadd.f32 %v1738, %v1950
        %v1997 = vadd.f32 %v1739, %v1955
        %v1998 = vadd.f32 %v1740, %v1958
        %v1999 = vadd.f32 %v1741, %v1963
        %v2000 = vadd.f32 %v1742, %v1966
        %s2001 = scalar_lea.vmem [#allocation6], 448
        %v2002 = vld [vmem:[%s2001] sm:$0xf]
        %v2003 = vld [vmem:[%s2001 + $0x4] sm:$0xf]
        %v2004 = vld [vmem:[%s2001 + $0x8] sm:$0xf]
        %v2005 = vld [vmem:[%s2001 + $0xc] sm:$0xf]
        %v2006 = vld [vmem:[%s2001 + $0x10] sm:$0xf]
        %v2007 = vld [vmem:[%s2001 + $0x14] sm:$0xf]
        %v2008 = vld [vmem:[%s2001 + $0x18] sm:$0xf]
        %v2009 = vld [vmem:[%s2001 + $0x1c] sm:$0xf]
        %v2010 = vld [vmem:[%s2001 + $0x20] sm:$0xf]
        %v2011 = vld [vmem:[%s2001 + $0x24] sm:$0xf]
        %v2012 = vld [vmem:[%s2001 + $0x28] sm:$0xf]
        %v2013 = vld [vmem:[%s2001 + $0x2c] sm:$0xf]
        %v2014 = vld [vmem:[%s2001 + $0x30] sm:$0xf]
        %v2015 = vld [vmem:[%s2001 + $0x34] sm:$0xf]
        %v2016 = vld [vmem:[%s2001 + $0x38] sm:$0xf]
        %v2017 = vld [vmem:[%s2001 + $0x3c] sm:$0xf]
        %v2034 = vunpack.c.l.b16 %v2002
        %v2035 = vunpack.c.l.b16 %v2003
        %v2036 = vunpack.c.l.b16 %v2004
        %v2037 = vunpack.c.l.b16 %v2005
        %v2038 = vunpack.c.l.b16 %v2006
        %v2039 = vunpack.c.l.b16 %v2007
        %v2040 = vunpack.c.l.b16 %v2008
        %v2041 = vunpack.c.l.b16 %v2009
        %v2042 = vunpack.c.l.b16 %v2010
        %v2043 = vunpack.c.l.b16 %v2011
        %v2044 = vunpack.c.l.b16 %v2012
        %v2045 = vunpack.c.l.b16 %v2013
        %v2046 = vunpack.c.l.b16 %v2014
        %v2047 = vunpack.c.l.b16 %v2015
        %v2048 = vunpack.c.l.b16 %v2016
        %v2049 = vunpack.c.l.b16 %v2017
        %v2050 = vpack.c.b16 %v2035, %v2034
        %v2051 = vpack.c.b16 %v2037, %v2036
        %v2052 = vpack.c.b16 %v2039, %v2038
        %v2053 = vpack.c.b16 %v2041, %v2040
        %v2054 = vpack.c.b16 %v2043, %v2042
        %v2055 = vpack.c.b16 %v2045, %v2044
        %v2056 = vpack.c.b16 %v2047, %v2046
        %v2057 = vpack.c.b16 %v2049, %v2048
        %2066 = vmatprep.subr.bf16.mxu0 0
        %2067 = vmatpush1.bf16.msra.mxu0 %v2050
        %2068 = vmatprep.subr.bf16.mxu0 0
        %2069 = vmatpush1.bf16.msra.mxu0 %v2051
        %2070 = vmatprep.subr.bf16.mxu0 0
        %2071 = vmatpush1.bf16.msra.mxu0 %v2052
        %2072 = vmatprep.subr.bf16.mxu0 0
        %2073 = vmatpush1.bf16.msra.mxu0 %v2053
        %2074 = vmatprep.subr.bf16.mxu0 0
        %2075 = vmatpush1.bf16.msra.mxu0 %v2054
        %2076 = vmatprep.subr.bf16.mxu0 0
        %2077 = vmatpush1.bf16.msra.mxu0 %v2055
        %2078 = vmatprep.subr.bf16.mxu0 0
        %2079 = vmatpush1.bf16.msra.mxu0 %v2056
        %2080 = vmatprep.subr.bf16.mxu0 0
        %2081 = vmatpush1.bf16.msra.mxu0 %v2057
        %2082 = vmatprep.subr.bf16.mxu0 0
        %2083 = vmatpush1.bf16.msra.mxu0 0
        %2084 = vmatprep.subr.bf16.mxu0 0
        %2085 = vmatpush1.bf16.msra.mxu0 0
        %2086 = vmatprep.subr.bf16.mxu0 0
        %2087 = vmatpush1.bf16.msra.mxu0 0
        %2088 = vmatprep.subr.bf16.mxu0 0
        %2089 = vmatpush1.bf16.msra.mxu0 0
        %2090 = vmatprep.subr.bf16.mxu0 0
        %2091 = vmatpush1.bf16.msra.mxu0 0
        %2092 = vmatprep.subr.bf16.mxu0 0
        %2093 = vmatpush1.bf16.msra.mxu0 0
        %2094 = vmatprep.subr.bf16.mxu0 0
        %2095 = vmatpush1.bf16.msra.mxu0 0
        %2096 = vmatprep.subr.bf16.mxu0 0
        %2097 = vmatpush1.bf16.msra.mxu0 0
        %2098 = vmatprep.mubr.bf16.mxu0 0
        %2099 = vmatmul.mubr.bf16.gmra.mrb[0].mxu0 %v1469
        %v2100 = vpop.f32.mrb[0].mxu0
        %v2101 = vadd.f32 0.0, %v2100
        %v2102 = vpop.f32.mrb[0].mxu0
        %v2103 = vpop.f32.mrb[0].mxu0
        %v2104 = vadd.f32 0.0, %v2103
        %v2105 = vpop.f32.mrb[0].mxu0
        %2106 = vmatprep.mubr.bf16.mxu0 0
        %2107 = vmatmul.mubr.bf16.gmra.mrb[0].mxu0 %v1470
        %v2108 = vpop.f32.mrb[0].mxu0
        %v2109 = vadd.f32 0.0, %v2108
        %v2110 = vpop.f32.mrb[0].mxu0
        %v2111 = vpop.f32.mrb[0].mxu0
        %v2112 = vadd.f32 0.0, %v2111
        %v2113 = vpop.f32.mrb[0].mxu0
        %2114 = vmatprep.mubr.bf16.mxu0 0
        %2115 = vmatmul.mubr.bf16.gmra.mrb[0].mxu0 %v1471
        %v2116 = vpop.f32.mrb[0].mxu0
        %v2117 = vadd.f32 0.0, %v2116
        %v2118 = vpop.f32.mrb[0].mxu0
        %v2119 = vpop.f32.mrb[0].mxu0
        %v2120 = vadd.f32 0.0, %v2119
        %v2121 = vpop.f32.mrb[0].mxu0
        %2122 = vmatprep.mubr.bf16.mxu0 0
        %2123 = vmatmul.mubr.bf16.gmra.mrb[0].mxu0 %v1472
        %v2124 = vpop.f32.mrb[0].mxu0
        %v2125 = vadd.f32 0.0, %v2124
        %v2126 = vpop.f32.mrb[0].mxu0
        %v2127 = vpop.f32.mrb[0].mxu0
        %v2128 = vadd.f32 0.0, %v2127
        %v2129 = vpop.f32.mrb[0].mxu0
        %2130 = vmatprep.mubr.bf16.mxu0 0
        %2131 = vmatmul.mubr.bf16.gmra.mrb[0].mxu0 %v1473
        %v2132 = vpop.f32.mrb[0].mxu0
        %v2133 = vadd.f32 0.0, %v2132
        %v2134 = vpop.f32.mrb[0].mxu0
        %v2135 = vpop.f32.mrb[0].mxu0
        %v2136 = vadd.f32 0.0, %v2135
        %v2137 = vpop.f32.mrb[0].mxu0
        %2138 = vmatprep.mubr.bf16.mxu0 0
        %2139 = vmatmul.mubr.bf16.gmra.mrb[0].mxu0 %v1474
        %v2140 = vpop.f32.mrb[0].mxu0
        %v2141 = vadd.f32 0.0, %v2140
        %v2142 = vpop.f32.mrb[0].mxu0
        %v2143 = vpop.f32.mrb[0].mxu0
        %v2144 = vadd.f32 0.0, %v2143
        %v2145 = vpop.f32.mrb[0].mxu0
        %2146 = vmatprep.mubr.bf16.mxu0 0
        %2147 = vmatmul.mubr.bf16.gmra.mrb[0].mxu0 %v1475
        %v2148 = vpop.f32.mrb[0].mxu0
        %v2149 = vadd.f32 0.0, %v2148
        %v2150 = vpop.f32.mrb[0].mxu0
        %v2151 = vpop.f32.mrb[0].mxu0
        %v2152 = vadd.f32 0.0, %v2151
        %v2153 = vpop.f32.mrb[0].mxu0
        %2154 = vmatprep.mubr.bf16.mxu0 0
        %2155 = vmatmul.mubr.bf16.gmra.mrb[0].mxu0 %v1476
        %v2156 = vpop.f32.mrb[0].mxu0
        %v2157 = vadd.f32 0.0, %v2156
        %v2158 = vpop.f32.mrb[0].mxu0
        %v2159 = vpop.f32.mrb[0].mxu0
        %v2160 = vadd.f32 0.0, %v2159
        %v2161 = vpop.f32.mrb[0].mxu0
        %2162 = vmatprep.mubr.bf16.mxu0 0
        %2163 = vmatmul.mubr.bf16.gmra.mrb[0].mxu0 %v1477
        %v2164 = vpop.f32.mrb[0].mxu0
        %v2165 = vadd.f32 0.0, %v2164
        %v2166 = vpop.f32.mrb[0].mxu0
        %v2167 = vpop.f32.mrb[0].mxu0
        %v2168 = vadd.f32 0.0, %v2167
        %v2169 = vpop.f32.mrb[0].mxu0
        %2170 = vmatprep.mubr.bf16.mxu0 0
        %2171 = vmatmul.mubr.bf16.gmra.mrb[0].mxu0 %v1478
        %v2172 = vpop.f32.mrb[0].mxu0
        %v2173 = vadd.f32 0.0, %v2172
        %v2174 = vpop.f32.mrb[0].mxu0
        %v2175 = vpop.f32.mrb[0].mxu0
        %v2176 = vadd.f32 0.0, %v2175
        %v2177 = vpop.f32.mrb[0].mxu0
        %2178 = vmatprep.mubr.bf16.mxu0 0
        %2179 = vmatmul.mubr.bf16.gmra.mrb[0].mxu0 %v1479
        %v2180 = vpop.f32.mrb[0].mxu0
        %v2181 = vadd.f32 0.0, %v2180
        %v2182 = vpop.f32.mrb[0].mxu0
        %v2183 = vpop.f32.mrb[0].mxu0
        %v2184 = vadd.f32 0.0, %v2183
        %v2185 = vpop.f32.mrb[0].mxu0
        %2186 = vmatprep.mubr.bf16.mxu0 0
        %2187 = vmatmul.mubr.bf16.gmra.mrb[0].mxu0 %v1480
        %v2188 = vpop.f32.mrb[0].mxu0
        %v2189 = vadd.f32 0.0, %v2188
        %v2190 = vpop.f32.mrb[0].mxu0
        %v2191 = vpop.f32.mrb[0].mxu0
        %v2192 = vadd.f32 0.0, %v2191
        %v2193 = vpop.f32.mrb[0].mxu0
        %2194 = vmatprep.mubr.bf16.mxu0 0
        %2195 = vmatmul.mubr.bf16.gmra.mrb[0].mxu0 %v1481
        %v2196 = vpop.f32.mrb[0].mxu0
        %v2197 = vadd.f32 0.0, %v2196
        %v2198 = vpop.f32.mrb[0].mxu0
        %v2199 = vpop.f32.mrb[0].mxu0
        %v2200 = vadd.f32 0.0, %v2199
        %v2201 = vpop.f32.mrb[0].mxu0
        %2202 = vmatprep.mubr.bf16.mxu0 0
        %2203 = vmatmul.mubr.bf16.gmra.mrb[0].mxu0 %v1482
        %v2204 = vpop.f32.mrb[0].mxu0
        %v2205 = vadd.f32 0.0, %v2204
        %v2206 = vpop.f32.mrb[0].mxu0
        %v2207 = vpop.f32.mrb[0].mxu0
        %v2208 = vadd.f32 0.0, %v2207
        %v2209 = vpop.f32.mrb[0].mxu0
        %2210 = vmatprep.mubr.bf16.mxu0 0
        %2211 = vmatmul.mubr.bf16.gmra.mrb[0].mxu0 %v1483
        %v2212 = vpop.f32.mrb[0].mxu0
        %v2213 = vadd.f32 0.0, %v2212
        %v2214 = vpop.f32.mrb[0].mxu0
        %v2215 = vpop.f32.mrb[0].mxu0
        %v2216 = vadd.f32 0.0, %v2215
        %v2217 = vpop.f32.mrb[0].mxu0
        %2218 = vmatprep.mubr.bf16.mxu0 0
        %2219 = vmatmul.mubr.bf16.gmra.mrb[0].mxu0 %v1484
        %v2220 = vpop.f32.mrb[0].mxu0
        %v2221 = vadd.f32 0.0, %v2220
        %v2222 = vpop.f32.mrb[0].mxu0
        %v2223 = vpop.f32.mrb[0].mxu0
        %v2224 = vadd.f32 0.0, %v2223
        %v2225 = vpop.f32.mrb[0].mxu0
        %2226 = vdwg.mxu0
        %v2227 = vadd.f32 %v1969, %v2101
        %v2228 = vadd.f32 %v1970, %v2104
        %v2229 = vadd.f32 %v1971, %v2109
        %v2230 = vadd.f32 %v1972, %v2112
        %v2231 = vadd.f32 %v1973, %v2117
        %v2232 = vadd.f32 %v1974, %v2120
        %v2233 = vadd.f32 %v1975, %v2125
        %v2234 = vadd.f32 %v1976, %v2128
        %v2235 = vadd.f32 %v1977, %v2133
        %v2236 = vadd.f32 %v1978, %v2136
        %v2237 = vadd.f32 %v1979, %v2141
        %v2238 = vadd.f32 %v1980, %v2144
        %v2239 = vadd.f32 %v1981, %v2149
        %v2240 = vadd.f32 %v1982, %v2152
        %v2241 = vadd.f32 %v1983, %v2157
        %v2242 = vadd.f32 %v1984, %v2160
        %v2243 = vadd.f32 %v1985, %v2165
        %v2244 = vadd.f32 %v1986, %v2168
        %v2245 = vadd.f32 %v1987, %v2173
        %v2246 = vadd.f32 %v1988, %v2176
        %v2247 = vadd.f32 %v1989, %v2181
        %v2248 = vadd.f32 %v1990, %v2184
        %v2249 = vadd.f32 %v1991, %v2189
        %v2250 = vadd.f32 %v1992, %v2192
        %v2251 = vadd.f32 %v1993, %v2197
        %v2252 = vadd.f32 %v1994, %v2200
        %v2253 = vadd.f32 %v1995, %v2205
        %v2254 = vadd.f32 %v1996, %v2208
        %v2255 = vadd.f32 %v1997, %v2213
        %v2256 = vadd.f32 %v1998, %v2216
        %v2257 = vadd.f32 %v1999, %v2221
        %v2258 = vadd.f32 %v2000, %v2224
        %v2259 = vld [vmem:[#allocation2 + $0x2] sm:$0xff]
        %v2260 = vld [vmem:[#allocation2 + $0xa] sm:$0xff]
        %v2261 = vld [vmem:[#allocation2 + $0x1a] sm:$0xff]
        %v2262 = vld [vmem:[#allocation2 + $0x22] sm:$0xff]
        %v2263 = vld [vmem:[#allocation2 + $0x32] sm:$0xff]
        %v2264 = vld [vmem:[#allocation2 + $0x3a] sm:$0xff]
        %v2265 = vld [vmem:[#allocation2 + $0x4a] sm:$0xff]
        %v2266 = vld [vmem:[#allocation2 + $0x52] sm:$0xff]
        %v2267 = vld [vmem:[#allocation2 + $0x62] sm:$0xff]
        %v2268 = vld [vmem:[#allocation2 + $0x6a] sm:$0xff]
        %v2269 = vld [vmem:[#allocation2 + $0x7a] sm:$0xff]
        %v2270 = vld [vmem:[#allocation2 + $0x82] sm:$0xff]
        %v2271 = vld [vmem:[#allocation2 + $0x92] sm:$0xff]
        %v2272 = vld [vmem:[#allocation2 + $0x9a] sm:$0xff]
        %v2273 = vld [vmem:[#allocation2 + $0xaa] sm:$0xff]
        %v2274 = vld [vmem:[#allocation2 + $0xb2] sm:$0xff]
        %v2275 = vld [vmem:[#allocation2 + $0xc2] sm:$0xff]
        %v2276 = vld [vmem:[#allocation2 + $0xca] sm:$0xff]
        %v2277 = vld [vmem:[#allocation2 + $0xda] sm:$0xff]
        %v2278 = vld [vmem:[#allocation2 + $0xe2] sm:$0xff]
        %v2279 = vld [vmem:[#allocation2 + $0xf2] sm:$0xff]
        %v2280 = vld [vmem:[#allocation2 + $0xfa] sm:$0xff]
        %v2281 = vld [vmem:[#allocation2 + $0x10a] sm:$0xff]
        %v2282 = vld [vmem:[#allocation2 + $0x112] sm:$0xff]
        %v2283 = vld [vmem:[#allocation2 + $0x122] sm:$0xff]
        %v2284 = vld [vmem:[#allocation2 + $0x12a] sm:$0xff]
        %v2285 = vld [vmem:[#allocation2 + $0x13a] sm:$0xff]
        %v2286 = vld [vmem:[#allocation2 + $0x142] sm:$0xff]
        %v2287 = vld [vmem:[#allocation2 + $0x152] sm:$0xff]
        %v2288 = vld [vmem:[#allocation2 + $0x15a] sm:$0xff]
        %v2289 = vld [vmem:[#allocation2 + $0x16a] sm:$0xff]
        %v2290 = vld [vmem:[#allocation2 + $0x172] sm:$0xff]
        %v2291 = vld [vmem:[#allocation2 + $0x182] sm:$0xff]
        %v2292 = vld [vmem:[#allocation2 + $0x18a] sm:$0xff]
        %v2293 = vld [vmem:[#allocation2 + $0x19a] sm:$0xff]
        %v2294 = vld [vmem:[#allocation2 + $0x1a2] sm:$0xff]
        %v2295 = vpack.c.bf16 %v2260, %v2259
        %v2296 = vpack.c.bf16 %v2262, %v2261
        %v2297 = vpack.c.bf16 %v2264, %v2263
        %v2298 = vpack.c.bf16 %v2266, %v2265
        %v2299 = vpack.c.bf16 %v2268, %v2267
        %v2300 = vpack.c.bf16 %v2270, %v2269
        %v2301 = vpack.c.bf16 %v2272, %v2271
        %v2302 = vpack.c.bf16 %v2274, %v2273
        %v2303 = vpack.c.bf16 %v2276, %v2275
        %v2304 = vpack.c.bf16 %v2278, %v2277
        %v2305 = vpack.c.bf16 %v2280, %v2279
        %v2306 = vpack.c.bf16 %v2282, %v2281
        %v2307 = vpack.c.bf16 %v2284, %v2283
        %v2308 = vpack.c.bf16 %v2286, %v2285
        %v2309 = vpack.c.bf16 %v2288, %v2287
        %v2310 = vpack.c.bf16 %v2290, %v2289
        %v2311 = vpack.c.bf16 %v2292, %v2291
        %v2312 = vpack.c.bf16 %v2294, %v2293
        %s2313 = scalar_lea.vmem [#allocation6], 128
        %v2314 = vld [vmem:[%s2313] sm:$0xf]
        %v2315 = vld [vmem:[%s2313 + $0x4] sm:$0xf]
        %v2316 = vld [vmem:[%s2313 + $0x8] sm:$0xf]
        %v2317 = vld [vmem:[%s2313 + $0xc] sm:$0xf]
        %v2318 = vld [vmem:[%s2313 + $0x10] sm:$0xf]
        %v2319 = vld [vmem:[%s2313 + $0x14] sm:$0xf]
        %v2320 = vld [vmem:[%s2313 + $0x18] sm:$0xf]
        %v2321 = vld [vmem:[%s2313 + $0x1c] sm:$0xf]
        %v2322 = vld [vmem:[%s2313 + $0x20] sm:$0xf]
        %v2323 = vld [vmem:[%s2313 + $0x24] sm:$0xf]
        %v2324 = vld [vmem:[%s2313 + $0x28] sm:$0xf]
        %v2325 = vld [vmem:[%s2313 + $0x2c] sm:$0xf]
        %v2326 = vld [vmem:[%s2313 + $0x30] sm:$0xf]
        %v2327 = vld [vmem:[%s2313 + $0x34] sm:$0xf]
        %v2328 = vld [vmem:[%s2313 + $0x38] sm:$0xf]
        %v2329 = vld [vmem:[%s2313 + $0x3c] sm:$0xf]
        %v2346 = vunpack.c.l.b16 %v2314
        %v2347 = vunpack.c.l.b16 %v2315
        %v2348 = vunpack.c.l.b16 %v2316
        %v2349 = vunpack.c.l.b16 %v2317
        %v2350 = vunpack.c.l.b16 %v2318
        %v2351 = vunpack.c.l.b16 %v2319
        %v2352 = vunpack.c.l.b16 %v2320
        %v2353 = vunpack.c.l.b16 %v2321
        %v2354 = vunpack.c.l.b16 %v2322
        %v2355 = vunpack.c.l.b16 %v2323
        %v2356 = vunpack.c.l.b16 %v2324
        %v2357 = vunpack.c.l.b16 %v2325
        %v2358 = vunpack.c.l.b16 %v2326
        %v2359 = vunpack.c.l.b16 %v2327
        %v2360 = vunpack.c.l.b16 %v2328
        %v2361 = vunpack.c.l.b16 %v2329
        %v2362 = vpack.c.b16 %v2347, %v2346
        %v2363 = vpack.c.b16 %v2349, %v2348
        %v2364 = vpack.c.b16 %v2351, %v2350
        %v2365 = vpack.c.b16 %v2353, %v2352
        %v2366 = vpack.c.b16 %v2355, %v2354
        %v2367 = vpack.c.b16 %v2357, %v2356
        %v2368 = vpack.c.b16 %v2359, %v2358
        %v2369 = vpack.c.b16 %v2361, %v2360
        %2378 = vmatprep.subr.bf16.mxu0 0
        %2379 = vmatpush1.bf16.msra.mxu0 %v2362
        %2380 = vmatprep.subr.bf16.mxu0 0
        %2381 = vmatpush1.bf16.msra.mxu0 %v2363
        %2382 = vmatprep.subr.bf16.mxu0 0
        %2383 = vmatpush1.bf16.msra.mxu0 %v2364
        %2384 = vmatprep.subr.bf16.mxu0 0
        %2385 = vmatpush1.bf16.msra.mxu0 %v2365
        %2386 = vmatprep.subr.bf16.mxu0 0
        %2387 = vmatpush1.bf16.msra.mxu0 %v2366
        %2388 = vmatprep.subr.bf16.mxu0 0
        %2389 = vmatpush1.bf16.msra.mxu0 %v2367
        %2390 = vmatprep.subr.bf16.mxu0 0
        %2391 = vmatpush1.bf16.msra.mxu0 %v2368
        %2392 = vmatprep.subr.bf16.mxu0 0
        %2393 = vmatpush1.bf16.msra.mxu0 %v2369
        %2394 = vmatprep.subr.bf16.mxu0 0
        %2395 = vmatpush1.bf16.msra.mxu0 0
        %2396 = vmatprep.subr.bf16.mxu0 0
        %2397 = vmatpush1.bf16.msra.mxu0 0
        %2398 = vmatprep.subr.bf16.mxu0 0
        %2399 = vmatpush1.bf16.msra.mxu0 0
        %2400 = vmatprep.subr.bf16.mxu0 0
        %2401 = vmatpush1.bf16.msra.mxu0 0
        %2402 = vmatprep.subr.bf16.mxu0 0
        %2403 = vmatpush1.bf16.msra.mxu0 0
        %2404 = vmatprep.subr.bf16.mxu0 0
        %2405 = vmatpush1.bf16.msra.mxu0 0
        %2406 = vmatprep.subr.bf16.mxu0 0
        %2407 = vmatpush1.bf16.msra.mxu0 0
        %2408 = vmatprep.subr.bf16.mxu0 0
        %2409 = vmatpush1.bf16.msra.mxu0 0
        %2410 = vmatprep.mubr.bf16.mxu0 0
        %2411 = vmatmul.mubr.bf16.gmra.mrb[0].mxu0 %v2295
        %v2412 = vpop.f32.mrb[0].mxu0
        %v2413 = vadd.f32 0.0, %v2412
        %v2414 = vpop.f32.mrb[0].mxu0
        %v2415 = vpop.f32.mrb[0].mxu0
        %v2416 = vadd.f32 0.0, %v2415
        %v2417 = vpop.f32.mrb[0].mxu0
        %2418 = vmatprep.mubr.bf16.mxu0 0
        %2419 = vmatmul.mubr.bf16.gmra.mrb[0].mxu0 %v2296
        %v2420 = vpop.f32.mrb[0].mxu0
        %v2421 = vadd.f32 0.0, %v2420
        %v2422 = vpop.f32.mrb[0].mxu0
        %v2423 = vpop.f32.mrb[0].mxu0
        %v2424 = vadd.f32 0.0, %v2423
        %v2425 = vpop.f32.mrb[0].mxu0
        %2426 = vmatprep.mubr.bf16.mxu0 0
        %2427 = vmatmul.mubr.bf16.gmra.mrb[0].mxu0 %v2297
        %v2428 = vpop.f32.mrb[0].mxu0
        %v2429 = vadd.f32 0.0, %v2428
        %v2430 = vpop.f32.mrb[0].mxu0
        %v2431 = vpop.f32.mrb[0].mxu0
        %v2432 = vadd.f32 0.0, %v2431
        %v2433 = vpop.f32.mrb[0].mxu0
        %2434 = vmatprep.mubr.bf16.mxu0 0
        %2435 = vmatmul.mubr.bf16.gmra.mrb[0].mxu0 %v2298
        %v2436 = vpop.f32.mrb[0].mxu0
        %v2437 = vadd.f32 0.0, %v2436
        %v2438 = vpop.f32.mrb[0].mxu0
        %v2439 = vpop.f32.mrb[0].mxu0
        %v2440 = vadd.f32 0.0, %v2439
        %v2441 = vpop.f32.mrb[0].mxu0
        %2442 = vmatprep.mubr.bf16.mxu0 0
        %2443 = vmatmul.mubr.bf16.gmra.mrb[0].mxu0 %v2299
        %v2444 = vpop.f32.mrb[0].mxu0
        %v2445 = vadd.f32 0.0, %v2444
        %v2446 = vpop.f32.mrb[0].mxu0
        %v2447 = vpop.f32.mrb[0].mxu0
        %v2448 = vadd.f32 0.0, %v2447
        %v2449 = vpop.f32.mrb[0].mxu0
        %2450 = vmatprep.mubr.bf16.mxu0 0
        %2451 = vmatmul.mubr.bf16.gmra.mrb[0].mxu0 %v2300
        %v2452 = vpop.f32.mrb[0].mxu0
        %v2453 = vadd.f32 0.0, %v2452
        %v2454 = vpop.f32.mrb[0].mxu0
        %v2455 = vpop.f32.mrb[0].mxu0
        %v2456 = vadd.f32 0.0, %v2455
        %v2457 = vpop.f32.mrb[0].mxu0
        %2458 = vmatprep.mubr.bf16.mxu0 0
        %2459 = vmatmul.mubr.bf16.gmra.mrb[0].mxu0 %v2301
        %v2460 = vpop.f32.mrb[0].mxu0
        %v2461 = vadd.f32 0.0, %v2460
        %v2462 = vpop.f32.mrb[0].mxu0
        %v2463 = vpop.f32.mrb[0].mxu0
        %v2464 = vadd.f32 0.0, %v2463
        %v2465 = vpop.f32.mrb[0].mxu0
        %2466 = vmatprep.mubr.bf16.mxu0 0
        %2467 = vmatmul.mubr.bf16.gmra.mrb[0].mxu0 %v2302
        %v2468 = vpop.f32.mrb[0].mxu0
        %v2469 = vadd.f32 0.0, %v2468
        %v2470 = vpop.f32.mrb[0].mxu0
        %v2471 = vpop.f32.mrb[0].mxu0
        %v2472 = vadd.f32 0.0, %v2471
        %v2473 = vpop.f32.mrb[0].mxu0
        %2474 = vmatprep.mubr.bf16.mxu0 0
        %2475 = vmatmul.mubr.bf16.gmra.mrb[0].mxu0 %v2303
        %v2476 = vpop.f32.mrb[0].mxu0
        %v2477 = vadd.f32 0.0, %v2476
        %v2478 = vpop.f32.mrb[0].mxu0
        %v2479 = vpop.f32.mrb[0].mxu0
        %v2480 = vadd.f32 0.0, %v2479
        %v2481 = vpop.f32.mrb[0].mxu0
        %2482 = vmatprep.mubr.bf16.mxu0 0
        %2483 = vmatmul.mubr.bf16.gmra.mrb[0].mxu0 %v2304
        %v2484 = vpop.f32.mrb[0].mxu0
        %v2485 = vadd.f32 0.0, %v2484
        %v2486 = vpop.f32.mrb[0].mxu0
        %v2487 = vpop.f32.mrb[0].mxu0
        %v2488 = vadd.f32 0.0, %v2487
        %v2489 = vpop.f32.mrb[0].mxu0
        %2490 = vmatprep.mubr.bf16.mxu0 0
        %2491 = vmatmul.mubr.bf16.gmra.mrb[0].mxu0 %v2305
        %v2492 = vpop.f32.mrb[0].mxu0
        %v2493 = vadd.f32 0.0, %v2492
        %v2494 = vpop.f32.mrb[0].mxu0
        %v2495 = vpop.f32.mrb[0].mxu0
        %v2496 = vadd.f32 0.0, %v2495
        %v2497 = vpop.f32.mrb[0].mxu0
        %2498 = vmatprep.mubr.bf16.mxu0 0
        %2499 = vmatmul.mubr.bf16.gmra.mrb[0].mxu0 %v2306
        %v2500 = vpop.f32.mrb[0].mxu0
        %v2501 = vadd.f32 0.0, %v2500
        %v2502 = vpop.f32.mrb[0].mxu0
        %v2503 = vpop.f32.mrb[0].mxu0
        %v2504 = vadd.f32 0.0, %v2503
        %v2505 = vpop.f32.mrb[0].mxu0
        %2506 = vmatprep.mubr.bf16.mxu0 0
        %2507 = vmatmul.mubr.bf16.gmra.mrb[0].mxu0 %v2307
        %v2508 = vpop.f32.mrb[0].mxu0
        %v2509 = vadd.f32 0.0, %v2508
        %v2510 = vpop.f32.mrb[0].mxu0
        %v2511 = vpop.f32.mrb[0].mxu0
        %v2512 = vadd.f32 0.0, %v2511
        %v2513 = vpop.f32.mrb[0].mxu0
        %2514 = vmatprep.mubr.bf16.mxu0 0
        %2515 = vmatmul.mubr.bf16.gmra.mrb[0].mxu0 %v2308
        %v2516 = vpop.f32.mrb[0].mxu0
        %v2517 = vadd.f32 0.0, %v2516
        %v2518 = vpop.f32.mrb[0].mxu0
        %v2519 = vpop.f32.mrb[0].mxu0
        %v2520 = vadd.f32 0.0, %v2519
        %v2521 = vpop.f32.mrb[0].mxu0
        %2522 = vmatprep.mubr.bf16.mxu0 0
        %2523 = vmatmul.mubr.bf16.gmra.mrb[0].mxu0 %v2309
        %v2524 = vpop.f32.mrb[0].mxu0
        %v2525 = vadd.f32 0.0, %v2524
        %v2526 = vpop.f32.mrb[0].mxu0
        %v2527 = vpop.f32.mrb[0].mxu0
        %v2528 = vadd.f32 0.0, %v2527
        %v2529 = vpop.f32.mrb[0].mxu0
        %2530 = vmatprep.mubr.bf16.mxu0 0
        %2531 = vmatmul.mubr.bf16.gmra.mrb[0].mxu0 %v2310
        %v2532 = vpop.f32.mrb[0].mxu0
        %v2533 = vadd.f32 0.0, %v2532
        %v2534 = vpop.f32.mrb[0].mxu0
        %v2535 = vpop.f32.mrb[0].mxu0
        %v2536 = vadd.f32 0.0, %v2535
        %v2537 = vpop.f32.mrb[0].mxu0
        %2538 = vdwg.mxu0
        %v2539 = vadd.f32 %v2227, %v2413
        %v2540 = vadd.f32 %v2228, %v2416
        %v2541 = vadd.f32 %v2229, %v2421
        %v2542 = vadd.f32 %v2230, %v2424
        %v2543 = vadd.f32 %v2231, %v2429
        %v2544 = vadd.f32 %v2232, %v2432
        %v2545 = vadd.f32 %v2233, %v2437
        %v2546 = vadd.f32 %v2234, %v2440
        %v2547 = vadd.f32 %v2235, %v2445
        %v2548 = vadd.f32 %v2236, %v2448
        %v2549 = vadd.f32 %v2237, %v2453
        %v2550 = vadd.f32 %v2238, %v2456
        %v2551 = vadd.f32 %v2239, %v2461
        %v2552 = vadd.f32 %v2240, %v2464
        %v2553 = vadd.f32 %v2241, %v2469
        %v2554 = vadd.f32 %v2242, %v2472
        %v2555 = vadd.f32 %v2243, %v2477
        %v2556 = vadd.f32 %v2244, %v2480
        %v2557 = vadd.f32 %v2245, %v2485
        %v2558 = vadd.f32 %v2246, %v2488
        %v2559 = vadd.f32 %v2247, %v2493
        %v2560 = vadd.f32 %v2248, %v2496
        %v2561 = vadd.f32 %v2249, %v2501
        %v2562 = vadd.f32 %v2250, %v2504
        %v2563 = vadd.f32 %v2251, %v2509
        %v2564 = vadd.f32 %v2252, %v2512
        %v2565 = vadd.f32 %v2253, %v2517
        %v2566 = vadd.f32 %v2254, %v2520
        %v2567 = vadd.f32 %v2255, %v2525
        %v2568 = vadd.f32 %v2256, %v2528
        %v2569 = vadd.f32 %v2257, %v2533
        %v2570 = vadd.f32 %v2258, %v2536
        %s2571 = scalar_lea.vmem [#allocation6], 320
        %v2572 = vld [vmem:[%s2571] sm:$0xf]
        %v2573 = vld [vmem:[%s2571 + $0x4] sm:$0xf]
        %v2574 = vld [vmem:[%s2571 + $0x8] sm:$0xf]
        %v2575 = vld [vmem:[%s2571 + $0xc] sm:$0xf]
        %v2576 = vld [vmem:[%s2571 + $0x10] sm:$0xf]
        %v2577 = vld [vmem:[%s2571 + $0x14] sm:$0xf]
        %v2578 = vld [vmem:[%s2571 + $0x18] sm:$0xf]
        %v2579 = vld [vmem:[%s2571 + $0x1c] sm:$0xf]
        %v2580 = vld [vmem:[%s2571 + $0x20] sm:$0xf]
        %v2581 = vld [vmem:[%s2571 + $0x24] sm:$0xf]
        %v2582 = vld [vmem:[%s2571 + $0x28] sm:$0xf]
        %v2583 = vld [vmem:[%s2571 + $0x2c] sm:$0xf]
        %v2584 = vld [vmem:[%s2571 + $0x30] sm:$0xf]
        %v2585 = vld [vmem:[%s2571 + $0x34] sm:$0xf]
        %v2586 = vld [vmem:[%s2571 + $0x38] sm:$0xf]
        %v2587 = vld [vmem:[%s2571 + $0x3c] sm:$0xf]
        %v2604 = vunpack.c.l.b16 %v2572
        %v2605 = vunpack.c.l.b16 %v2573
        %v2606 = vunpack.c.l.b16 %v2574
        %v2607 = vunpack.c.l.b16 %v2575
        %v2608 = vunpack.c.l.b16 %v2576
        %v2609 = vunpack.c.l.b16 %v2577
        %v2610 = vunpack.c.l.b16 %v2578
        %v2611 = vunpack.c.l.b16 %v2579
        %v2612 = vunpack.c.l.b16 %v2580
        %v2613 = vunpack.c.l.b16 %v2581
        %v2614 = vunpack.c.l.b16 %v2582
        %v2615 = vunpack.c.l.b16 %v2583
        %v2616 = vunpack.c.l.b16 %v2584
        %v2617 = vunpack.c.l.b16 %v2585
        %v2618 = vunpack.c.l.b16 %v2586
        %v2619 = vunpack.c.l.b16 %v2587
        %v2620 = vpack.c.b16 %v2605, %v2604
        %v2621 = vpack.c.b16 %v2607, %v2606
        %v2622 = vpack.c.b16 %v2609, %v2608
        %v2623 = vpack.c.b16 %v2611, %v2610
        %v2624 = vpack.c.b16 %v2613, %v2612
        %v2625 = vpack.c.b16 %v2615, %v2614
        %v2626 = vpack.c.b16 %v2617, %v2616
        %v2627 = vpack.c.b16 %v2619, %v2618
        %2636 = vmatprep.subr.bf16.mxu0 0
        %2637 = vmatpush1.bf16.msra.mxu0 %v2620
        %2638 = vmatprep.subr.bf16.mxu0 0
        %2639 = vmatpush1.bf16.msra.mxu0 %v2621
        %2640 = vmatprep.subr.bf16.mxu0 0
        %2641 = vmatpush1.bf16.msra.mxu0 %v2622
        %2642 = vmatprep.subr.bf16.mxu0 0
        %2643 = vmatpush1.bf16.msra.mxu0 %v2623
        %2644 = vmatprep.subr.bf16.mxu0 0
        %2645 = vmatpush1.bf16.msra.mxu0 %v2624
        %2646 = vmatprep.subr.bf16.mxu0 0
        %2647 = vmatpush1.bf16.msra.mxu0 %v2625
        %2648 = vmatprep.subr.bf16.mxu0 0
        %2649 = vmatpush1.bf16.msra.mxu0 %v2626
        %2650 = vmatprep.subr.bf16.mxu0 0
        %2651 = vmatpush1.bf16.msra.mxu0 %v2627
        %2652 = vmatprep.subr.bf16.mxu0 0
        %2653 = vmatpush1.bf16.msra.mxu0 0
        %2654 = vmatprep.subr.bf16.mxu0 0
        %2655 = vmatpush1.bf16.msra.mxu0 0
        %2656 = vmatprep.subr.bf16.mxu0 0
        %2657 = vmatpush1.bf16.msra.mxu0 0
        %2658 = vmatprep.subr.bf16.mxu0 0
        %2659 = vmatpush1.bf16.msra.mxu0 0
        %2660 = vmatprep.subr.bf16.mxu0 0
        %2661 = vmatpush1.bf16.msra.mxu0 0
        %2662 = vmatprep.subr.bf16.mxu0 0
        %2663 = vmatpush1.bf16.msra.mxu0 0
        %2664 = vmatprep.subr.bf16.mxu0 0
        %2665 = vmatpush1.bf16.msra.mxu0 0
        %2666 = vmatprep.subr.bf16.mxu0 0
        %2667 = vmatpush1.bf16.msra.mxu0 0
        %2668 = vmatprep.mubr.bf16.mxu0 0
        %2669 = vmatmul.mubr.bf16.gmra.mrb[0].mxu0 %v2296
        %v2670 = vpop.f32.mrb[0].mxu0
        %v2671 = vadd.f32 0.0, %v2670
        %v2672 = vpop.f32.mrb[0].mxu0
        %v2673 = vpop.f32.mrb[0].mxu0
        %v2674 = vadd.f32 0.0, %v2673
        %v2675 = vpop.f32.mrb[0].mxu0
        %2676 = vmatprep.mubr.bf16.mxu0 0
        %2677 = vmatmul.mubr.bf16.gmra.mrb[0].mxu0 %v2297
        %v2678 = vpop.f32.mrb[0].mxu0
        %v2679 = vadd.f32 0.0, %v2678
        %v2680 = vpop.f32.mrb[0].mxu0
        %v2681 = vpop.f32.mrb[0].mxu0
        %v2682 = vadd.f32 0.0, %v2681
        %v2683 = vpop.f32.mrb[0].mxu0
        %2684 = vmatprep.mubr.bf16.mxu0 0
        %2685 = vmatmul.mubr.bf16.gmra.mrb[0].mxu0 %v2298
        %v2686 = vpop.f32.mrb[0].mxu0
        %v2687 = vadd.f32 0.0, %v2686
        %v2688 = vpop.f32.mrb[0].mxu0
        %v2689 = vpop.f32.mrb[0].mxu0
        %v2690 = vadd.f32 0.0, %v2689
        %v2691 = vpop.f32.mrb[0].mxu0
        %2692 = vmatprep.mubr.bf16.mxu0 0
        %2693 = vmatmul.mubr.bf16.gmra.mrb[0].mxu0 %v2299
        %v2694 = vpop.f32.mrb[0].mxu0
        %v2695 = vadd.f32 0.0, %v2694
        %v2696 = vpop.f32.mrb[0].mxu0
        %v2697 = vpop.f32.mrb[0].mxu0
        %v2698 = vadd.f32 0.0, %v2697
        %v2699 = vpop.f32.mrb[0].mxu0
        %2700 = vmatprep.mubr.bf16.mxu0 0
        %2701 = vmatmul.mubr.bf16.gmra.mrb[0].mxu0 %v2300
        %v2702 = vpop.f32.mrb[0].mxu0
        %v2703 = vadd.f32 0.0, %v2702
        %v2704 = vpop.f32.mrb[0].mxu0
        %v2705 = vpop.f32.mrb[0].mxu0
        %v2706 = vadd.f32 0.0, %v2705
        %v2707 = vpop.f32.mrb[0].mxu0
        %2708 = vmatprep.mubr.bf16.mxu0 0
        %2709 = vmatmul.mubr.bf16.gmra.mrb[0].mxu0 %v2301
        %v2710 = vpop.f32.mrb[0].mxu0
        %v2711 = vadd.f32 0.0, %v2710
        %v2712 = vpop.f32.mrb[0].mxu0
        %v2713 = vpop.f32.mrb[0].mxu0
        %v2714 = vadd.f32 0.0, %v2713
        %v2715 = vpop.f32.mrb[0].mxu0
        %2716 = vmatprep.mubr.bf16.mxu0 0
        %2717 = vmatmul.mubr.bf16.gmra.mrb[0].mxu0 %v2302
        %v2718 = vpop.f32.mrb[0].mxu0
        %v2719 = vadd.f32 0.0, %v2718
        %v2720 = vpop.f32.mrb[0].mxu0
        %v2721 = vpop.f32.mrb[0].mxu0
        %v2722 = vadd.f32 0.0, %v2721
        %v2723 = vpop.f32.mrb[0].mxu0
        %2724 = vmatprep.mubr.bf16.mxu0 0
        %2725 = vmatmul.mubr.bf16.gmra.mrb[0].mxu0 %v2303
        %v2726 = vpop.f32.mrb[0].mxu0
        %v2727 = vadd.f32 0.0, %v2726
        %v2728 = vpop.f32.mrb[0].mxu0
        %v2729 = vpop.f32.mrb[0].mxu0
        %v2730 = vadd.f32 0.0, %v2729
        %v2731 = vpop.f32.mrb[0].mxu0
        %2732 = vmatprep.mubr.bf16.mxu0 0
        %2733 = vmatmul.mubr.bf16.gmra.mrb[0].mxu0 %v2304
        %v2734 = vpop.f32.mrb[0].mxu0
        %v2735 = vadd.f32 0.0, %v2734
        %v2736 = vpop.f32.mrb[0].mxu0
        %v2737 = vpop.f32.mrb[0].mxu0
        %v2738 = vadd.f32 0.0, %v2737
        %v2739 = vpop.f32.mrb[0].mxu0
        %2740 = vmatprep.mubr.bf16.mxu0 0
        %2741 = vmatmul.mubr.bf16.gmra.mrb[0].mxu0 %v2305
        %v2742 = vpop.f32.mrb[0].mxu0
        %v2743 = vadd.f32 0.0, %v2742
        %v2744 = vpop.f32.mrb[0].mxu0
        %v2745 = vpop.f32.mrb[0].mxu0
        %v2746 = vadd.f32 0.0, %v2745
        %v2747 = vpop.f32.mrb[0].mxu0
        %2748 = vmatprep.mubr.bf16.mxu0 0
        %2749 = vmatmul.mubr.bf16.gmra.mrb[0].mxu0 %v2306
        %v2750 = vpop.f32.mrb[0].mxu0
        %v2751 = vadd.f32 0.0, %v2750
        %v2752 = vpop.f32.mrb[0].mxu0
        %v2753 = vpop.f32.mrb[0].mxu0
        %v2754 = vadd.f32 0.0, %v2753
        %v2755 = vpop.f32.mrb[0].mxu0
        %2756 = vmatprep.mubr.bf16.mxu0 0
        %2757 = vmatmul.mubr.bf16.gmra.mrb[0].mxu0 %v2307
        %v2758 = vpop.f32.mrb[0].mxu0
        %v2759 = vadd.f32 0.0, %v2758
        %v2760 = vpop.f32.mrb[0].mxu0
        %v2761 = vpop.f32.mrb[0].mxu0
        %v2762 = vadd.f32 0.0, %v2761
        %v2763 = vpop.f32.mrb[0].mxu0
        %2764 = vmatprep.mubr.bf16.mxu0 0
        %2765 = vmatmul.mubr.bf16.gmra.mrb[0].mxu0 %v2308
        %v2766 = vpop.f32.mrb[0].mxu0
        %v2767 = vadd.f32 0.0, %v2766
        %v2768 = vpop.f32.mrb[0].mxu0
        %v2769 = vpop.f32.mrb[0].mxu0
        %v2770 = vadd.f32 0.0, %v2769
        %v2771 = vpop.f32.mrb[0].mxu0
        %2772 = vmatprep.mubr.bf16.mxu0 0
        %2773 = vmatmul.mubr.bf16.gmra.mrb[0].mxu0 %v2309
        %v2774 = vpop.f32.mrb[0].mxu0
        %v2775 = vadd.f32 0.0, %v2774
        %v2776 = vpop.f32.mrb[0].mxu0
        %v2777 = vpop.f32.mrb[0].mxu0
        %v2778 = vadd.f32 0.0, %v2777
        %v2779 = vpop.f32.mrb[0].mxu0
        %2780 = vmatprep.mubr.bf16.mxu0 0
        %2781 = vmatmul.mubr.bf16.gmra.mrb[0].mxu0 %v2310
        %v2782 = vpop.f32.mrb[0].mxu0
        %v2783 = vadd.f32 0.0, %v2782
        %v2784 = vpop.f32.mrb[0].mxu0
        %v2785 = vpop.f32.mrb[0].mxu0
        %v2786 = vadd.f32 0.0, %v2785
        %v2787 = vpop.f32.mrb[0].mxu0
        %2788 = vmatprep.mubr.bf16.mxu0 0
        %2789 = vmatmul.mubr.bf16.gmra.mrb[0].mxu0 %v2311
        %v2790 = vpop.f32.mrb[0].mxu0
        %v2791 = vadd.f32 0.0, %v2790
        %v2792 = vpop.f32.mrb[0].mxu0
        %v2793 = vpop.f32.mrb[0].mxu0
        %v2794 = vadd.f32 0.0, %v2793
        %v2795 = vpop.f32.mrb[0].mxu0
        %2796 = vdwg.mxu0
        %v2797 = vadd.f32 %v2539, %v2671
        %v2798 = vadd.f32 %v2540, %v2674
        %v2799 = vadd.f32 %v2541, %v2679
        %v2800 = vadd.f32 %v2542, %v2682
        %v2801 = vadd.f32 %v2543, %v2687
        %v2802 = vadd.f32 %v2544, %v2690
        %v2803 = vadd.f32 %v2545, %v2695
        %v2804 = vadd.f32 %v2546, %v2698
        %v2805 = vadd.f32 %v2547, %v2703
        %v2806 = vadd.f32 %v2548, %v2706
        %v2807 = vadd.f32 %v2549, %v2711
        %v2808 = vadd.f32 %v2550, %v2714
        %v2809 = vadd.f32 %v2551, %v2719
        %v2810 = vadd.f32 %v2552, %v2722
        %v2811 = vadd.f32 %v2553, %v2727
        %v2812 = vadd.f32 %v2554, %v2730
        %v2813 = vadd.f32 %v2555, %v2735
        %v2814 = vadd.f32 %v2556, %v2738
        %v2815 = vadd.f32 %v2557, %v2743
        %v2816 = vadd.f32 %v2558, %v2746
        %v2817 = vadd.f32 %v2559, %v2751
        %v2818 = vadd.f32 %v2560, %v2754
        %v2819 = vadd.f32 %v2561, %v2759
        %v2820 = vadd.f32 %v2562, %v2762
        %v2821 = vadd.f32 %v2563, %v2767
        %v2822 = vadd.f32 %v2564, %v2770
        %v2823 = vadd.f32 %v2565, %v2775
        %v2824 = vadd.f32 %v2566, %v2778
        %v2825 = vadd.f32 %v2567, %v2783
        %v2826 = vadd.f32 %v2568, %v2786
        %v2827 = vadd.f32 %v2569, %v2791
        %v2828 = vadd.f32 %v2570, %v2794
        %s2829 = scalar_lea.vmem [#allocation6], 512
        %v2830 = vld [vmem:[%s2829] sm:$0xf]
        %v2831 = vld [vmem:[%s2829 + $0x4] sm:$0xf]
        %v2832 = vld [vmem:[%s2829 + $0x8] sm:$0xf]
        %v2833 = vld [vmem:[%s2829 + $0xc] sm:$0xf]
        %v2834 = vld [vmem:[%s2829 + $0x10] sm:$0xf]
        %v2835 = vld [vmem:[%s2829 + $0x14] sm:$0xf]
        %v2836 = vld [vmem:[%s2829 + $0x18] sm:$0xf]
        %v2837 = vld [vmem:[%s2829 + $0x1c] sm:$0xf]
        %v2838 = vld [vmem:[%s2829 + $0x20] sm:$0xf]
        %v2839 = vld [vmem:[%s2829 + $0x24] sm:$0xf]
        %v2840 = vld [vmem:[%s2829 + $0x28] sm:$0xf]
        %v2841 = vld [vmem:[%s2829 + $0x2c] sm:$0xf]
        %v2842 = vld [vmem:[%s2829 + $0x30] sm:$0xf]
        %v2843 = vld [vmem:[%s2829 + $0x34] sm:$0xf]
        %v2844 = vld [vmem:[%s2829 + $0x38] sm:$0xf]
        %v2845 = vld [vmem:[%s2829 + $0x3c] sm:$0xf]
        %v2862 = vunpack.c.l.b16 %v2830
        %v2863 = vunpack.c.l.b16 %v2831
        %v2864 = vunpack.c.l.b16 %v2832
        %v2865 = vunpack.c.l.b16 %v2833
        %v2866 = vunpack.c.l.b16 %v2834
        %v2867 = vunpack.c.l.b16 %v2835
        %v2868 = vunpack.c.l.b16 %v2836
        %v2869 = vunpack.c.l.b16 %v2837
        %v2870 = vunpack.c.l.b16 %v2838
        %v2871 = vunpack.c.l.b16 %v2839
        %v2872 = vunpack.c.l.b16 %v2840
        %v2873 = vunpack.c.l.b16 %v2841
        %v2874 = vunpack.c.l.b16 %v2842
        %v2875 = vunpack.c.l.b16 %v2843
        %v2876 = vunpack.c.l.b16 %v2844
        %v2877 = vunpack.c.l.b16 %v2845
        %v2878 = vpack.c.b16 %v2863, %v2862
        %v2879 = vpack.c.b16 %v2865, %v2864
        %v2880 = vpack.c.b16 %v2867, %v2866
        %v2881 = vpack.c.b16 %v2869, %v2868
        %v2882 = vpack.c.b16 %v2871, %v2870
        %v2883 = vpack.c.b16 %v2873, %v2872
        %v2884 = vpack.c.b16 %v2875, %v2874
        %v2885 = vpack.c.b16 %v2877, %v2876
        %2894 = vmatprep.subr.bf16.mxu0 0
        %2895 = vmatpush1.bf16.msra.mxu0 %v2878
        %2896 = vmatprep.subr.bf16.mxu0 0
        %2897 = vmatpush1.bf16.msra.mxu0 %v2879
        %2898 = vmatprep.subr.bf16.mxu0 0
        %2899 = vmatpush1.bf16.msra.mxu0 %v2880
        %2900 = vmatprep.subr.bf16.mxu0 0
        %2901 = vmatpush1.bf16.msra.mxu0 %v2881
        %2902 = vmatprep.subr.bf16.mxu0 0
        %2903 = vmatpush1.bf16.msra.mxu0 %v2882
        %2904 = vmatprep.subr.bf16.mxu0 0
        %2905 = vmatpush1.bf16.msra.mxu0 %v2883
        %2906 = vmatprep.subr.bf16.mxu0 0
        %2907 = vmatpush1.bf16.msra.mxu0 %v2884
        %2908 = vmatprep.subr.bf16.mxu0 0
        %2909 = vmatpush1.bf16.msra.mxu0 %v2885
        %2910 = vmatprep.subr.bf16.mxu0 0
        %2911 = vmatpush1.bf16.msra.mxu0 0
        %2912 = vmatprep.subr.bf16.mxu0 0
        %2913 = vmatpush1.bf16.msra.mxu0 0
        %2914 = vmatprep.subr.bf16.mxu0 0
        %2915 = vmatpush1.bf16.msra.mxu0 0
        %2916 = vmatprep.subr.bf16.mxu0 0
        %2917 = vmatpush1.bf16.msra.mxu0 0
        %2918 = vmatprep.subr.bf16.mxu0 0
        %2919 = vmatpush1.bf16.msra.mxu0 0
        %2920 = vmatprep.subr.bf16.mxu0 0
        %2921 = vmatpush1.bf16.msra.mxu0 0
        %2922 = vmatprep.subr.bf16.mxu0 0
        %2923 = vmatpush1.bf16.msra.mxu0 0
        %2924 = vmatprep.subr.bf16.mxu0 0
        %2925 = vmatpush1.bf16.msra.mxu0 0
        %2926 = vmatprep.mubr.bf16.mxu0 0
        %2927 = vmatmul.mubr.bf16.gmra.mrb[0].mxu0 %v2297
        %v2928 = vpop.f32.mrb[0].mxu0
        %v2929 = vadd.f32 0.0, %v2928
        %v2930 = vpop.f32.mrb[0].mxu0
        %v2931 = vpop.f32.mrb[0].mxu0
        %v2932 = vadd.f32 0.0, %v2931
        %v2933 = vpop.f32.mrb[0].mxu0
        %2934 = vmatprep.mubr.bf16.mxu0 0
        %2935 = vmatmul.mubr.bf16.gmra.mrb[0].mxu0 %v2298
        %v2936 = vpop.f32.mrb[0].mxu0
        %v2937 = vadd.f32 0.0, %v2936
        %v2938 = vpop.f32.mrb[0].mxu0
        %v2939 = vpop.f32.mrb[0].mxu0
        %v2940 = vadd.f32 0.0, %v2939
        %v2941 = vpop.f32.mrb[0].mxu0
        %2942 = vmatprep.mubr.bf16.mxu0 0
        %2943 = vmatmul.mubr.bf16.gmra.mrb[0].mxu0 %v2299
        %v2944 = vpop.f32.mrb[0].mxu0
        %v2945 = vadd.f32 0.0, %v2944
        %v2946 = vpop.f32.mrb[0].mxu0
        %v2947 = vpop.f32.mrb[0].mxu0
        %v2948 = vadd.f32 0.0, %v2947
        %v2949 = vpop.f32.mrb[0].mxu0
        %2950 = vmatprep.mubr.bf16.mxu0 0
        %2951 = vmatmul.mubr.bf16.gmra.mrb[0].mxu0 %v2300
        %v2952 = vpop.f32.mrb[0].mxu0
        %v2953 = vadd.f32 0.0, %v2952
        %v2954 = vpop.f32.mrb[0].mxu0
        %v2955 = vpop.f32.mrb[0].mxu0
        %v2956 = vadd.f32 0.0, %v2955
        %v2957 = vpop.f32.mrb[0].mxu0
        %2958 = vmatprep.mubr.bf16.mxu0 0
        %2959 = vmatmul.mubr.bf16.gmra.mrb[0].mxu0 %v2301
        %v2960 = vpop.f32.mrb[0].mxu0
        %v2961 = vadd.f32 0.0, %v2960
        %v2962 = vpop.f32.mrb[0].mxu0
        %v2963 = vpop.f32.mrb[0].mxu0
        %v2964 = vadd.f32 0.0, %v2963
        %v2965 = vpop.f32.mrb[0].mxu0
        %2966 = vmatprep.mubr.bf16.mxu0 0
        %2967 = vmatmul.mubr.bf16.gmra.mrb[0].mxu0 %v2302
        %v2968 = vpop.f32.mrb[0].mxu0
        %v2969 = vadd.f32 0.0, %v2968
        %v2970 = vpop.f32.mrb[0].mxu0
        %v2971 = vpop.f32.mrb[0].mxu0
        %v2972 = vadd.f32 0.0, %v2971
        %v2973 = vpop.f32.mrb[0].mxu0
        %2974 = vmatprep.mubr.bf16.mxu0 0
        %2975 = vmatmul.mubr.bf16.gmra.mrb[0].mxu0 %v2303
        %v2976 = vpop.f32.mrb[0].mxu0
        %v2977 = vadd.f32 0.0, %v2976
        %v2978 = vpop.f32.mrb[0].mxu0
        %v2979 = vpop.f32.mrb[0].mxu0
        %v2980 = vadd.f32 0.0, %v2979
        %v2981 = vpop.f32.mrb[0].mxu0
        %2982 = vmatprep.mubr.bf16.mxu0 0
        %2983 = vmatmul.mubr.bf16.gmra.mrb[0].mxu0 %v2304
        %v2984 = vpop.f32.mrb[0].mxu0
        %v2985 = vadd.f32 0.0, %v2984
        %v2986 = vpop.f32.mrb[0].mxu0
        %v2987 = vpop.f32.mrb[0].mxu0
        %v2988 = vadd.f32 0.0, %v2987
        %v2989 = vpop.f32.mrb[0].mxu0
        %2990 = vmatprep.mubr.bf16.mxu0 0
        %2991 = vmatmul.mubr.bf16.gmra.mrb[0].mxu0 %v2305
        %v2992 = vpop.f32.mrb[0].mxu0
        %v2993 = vadd.f32 0.0, %v2992
        %v2994 = vpop.f32.mrb[0].mxu0
        %v2995 = vpop.f32.mrb[0].mxu0
        %v2996 = vadd.f32 0.0, %v2995
        %v2997 = vpop.f32.mrb[0].mxu0
        %2998 = vmatprep.mubr.bf16.mxu0 0
        %2999 = vmatmul.mubr.bf16.gmra.mrb[0].mxu0 %v2306
        %v3000 = vpop.f32.mrb[0].mxu0
        %v3001 = vadd.f32 0.0, %v3000
        %v3002 = vpop.f32.mrb[0].mxu0
        %v3003 = vpop.f32.mrb[0].mxu0
        %v3004 = vadd.f32 0.0, %v3003
        %v3005 = vpop.f32.mrb[0].mxu0
        %3006 = vmatprep.mubr.bf16.mxu0 0
        %3007 = vmatmul.mubr.bf16.gmra.mrb[0].mxu0 %v2307
        %v3008 = vpop.f32.mrb[0].mxu0
        %v3009 = vadd.f32 0.0, %v3008
        %v3010 = vpop.f32.mrb[0].mxu0
        %v3011 = vpop.f32.mrb[0].mxu0
        %v3012 = vadd.f32 0.0, %v3011
        %v3013 = vpop.f32.mrb[0].mxu0
        %3014 = vmatprep.mubr.bf16.mxu0 0
        %3015 = vmatmul.mubr.bf16.gmra.mrb[0].mxu0 %v2308
        %v3016 = vpop.f32.mrb[0].mxu0
        %v3017 = vadd.f32 0.0, %v3016
        %v3018 = vpop.f32.mrb[0].mxu0
        %v3019 = vpop.f32.mrb[0].mxu0
        %v3020 = vadd.f32 0.0, %v3019
        %v3021 = vpop.f32.mrb[0].mxu0
        %3022 = vmatprep.mubr.bf16.mxu0 0
        %3023 = vmatmul.mubr.bf16.gmra.mrb[0].mxu0 %v2309
        %v3024 = vpop.f32.mrb[0].mxu0
        %v3025 = vadd.f32 0.0, %v3024
        %v3026 = vpop.f32.mrb[0].mxu0
        %v3027 = vpop.f32.mrb[0].mxu0
        %v3028 = vadd.f32 0.0, %v3027
        %v3029 = vpop.f32.mrb[0].mxu0
        %3030 = vmatprep.mubr.bf16.mxu0 0
        %3031 = vmatmul.mubr.bf16.gmra.mrb[0].mxu0 %v2310
        %v3032 = vpop.f32.mrb[0].mxu0
        %v3033 = vadd.f32 0.0, %v3032
        %v3034 = vpop.f32.mrb[0].mxu0
        %v3035 = vpop.f32.mrb[0].mxu0
        %v3036 = vadd.f32 0.0, %v3035
        %v3037 = vpop.f32.mrb[0].mxu0
        %3038 = vmatprep.mubr.bf16.mxu0 0
        %3039 = vmatmul.mubr.bf16.gmra.mrb[0].mxu0 %v2311
        %v3040 = vpop.f32.mrb[0].mxu0
        %v3041 = vadd.f32 0.0, %v3040
        %v3042 = vpop.f32.mrb[0].mxu0
        %v3043 = vpop.f32.mrb[0].mxu0
        %v3044 = vadd.f32 0.0, %v3043
        %v3045 = vpop.f32.mrb[0].mxu0
        %3046 = vmatprep.mubr.bf16.mxu0 0
        %3047 = vmatmul.mubr.bf16.gmra.mrb[0].mxu0 %v2312
        %v3048 = vpop.f32.mrb[0].mxu0
        %v3049 = vadd.f32 0.0, %v3048
        %v3050 = vpop.f32.mrb[0].mxu0
        %v3051 = vpop.f32.mrb[0].mxu0
        %v3052 = vadd.f32 0.0, %v3051
        %v3053 = vpop.f32.mrb[0].mxu0
        %3054 = vdwg.mxu0
        %v3055 = vadd.f32 %v2797, %v2929
        %v3056 = vadd.f32 %v2798, %v2932
        %v3057 = vadd.f32 %v2799, %v2937
        %v3058 = vadd.f32 %v2800, %v2940
        %v3059 = vadd.f32 %v2801, %v2945
        %v3060 = vadd.f32 %v2802, %v2948
        %v3061 = vadd.f32 %v2803, %v2953
        %v3062 = vadd.f32 %v2804, %v2956
        %v3063 = vadd.f32 %v2805, %v2961
        %v3064 = vadd.f32 %v2806, %v2964
        %v3065 = vadd.f32 %v2807, %v2969
        %v3066 = vadd.f32 %v2808, %v2972
        %v3067 = vadd.f32 %v2809, %v2977
        %v3068 = vadd.f32 %v2810, %v2980
        %v3069 = vadd.f32 %v2811, %v2985
        %v3070 = vadd.f32 %v2812, %v2988
        %v3071 = vadd.f32 %v2813, %v2993
        %v3072 = vadd.f32 %v2814, %v2996
        %v3073 = vadd.f32 %v2815, %v3001
        %v3074 = vadd.f32 %v2816, %v3004
        %v3075 = vadd.f32 %v2817, %v3009
        %v3076 = vadd.f32 %v2818, %v3012
        %v3077 = vadd.f32 %v2819, %v3017
        %v3078 = vadd.f32 %v2820, %v3020
        %v3079 = vadd.f32 %v2821, %v3025
        %v3080 = vadd.f32 %v2822, %v3028
        %v3081 = vadd.f32 %v2823, %v3033
        %v3082 = vadd.f32 %v2824, %v3036
        %v3083 = vadd.f32 %v2825, %v3041
        %v3084 = vadd.f32 %v2826, %v3044
        %v3085 = vadd.f32 %v2827, %v3049
        %v3086 = vadd.f32 %v2828, %v3052
        %v3087 = vld [vmem:[%s4] sm:$0x1]
        %v3089 = vlaneseq
        %v3090 = vshrl.u32 %v3089, 7
        %v3091 = vsub.s32 0, %v3090
        %v3092 = vrot.slane %v3087, %v3091
        %v3094 = vadd.f32 %v3055, %v3092
        %v3095 = vadd.f32 %v3056, %v3092
        %v3096 = vadd.f32 %v3057, %v3092
        %v3097 = vadd.f32 %v3058, %v3092
        %v3098 = vadd.f32 %v3059, %v3092
        %v3099 = vadd.f32 %v3060, %v3092
        %v3100 = vadd.f32 %v3061, %v3092
        %v3101 = vadd.f32 %v3062, %v3092
        %v3102 = vadd.f32 %v3063, %v3092
        %v3103 = vadd.f32 %v3064, %v3092
        %v3104 = vadd.f32 %v3065, %v3092
        %v3105 = vadd.f32 %v3066, %v3092
        %v3106 = vadd.f32 %v3067, %v3092
        %v3107 = vadd.f32 %v3068, %v3092
        %v3108 = vadd.f32 %v3069, %v3092
        %v3109 = vadd.f32 %v3070, %v3092
        %v3110 = vadd.f32 %v3071, %v3092
        %v3111 = vadd.f32 %v3072, %v3092
        %v3112 = vadd.f32 %v3073, %v3092
        %v3113 = vadd.f32 %v3074, %v3092
        %v3114 = vadd.f32 %v3075, %v3092
        %v3115 = vadd.f32 %v3076, %v3092
        %v3116 = vadd.f32 %v3077, %v3092
        %v3117 = vadd.f32 %v3078, %v3092
        %v3118 = vadd.f32 %v3079, %v3092
        %v3119 = vadd.f32 %v3080, %v3092
        %v3120 = vadd.f32 %v3081, %v3092
        %v3121 = vadd.f32 %v3082, %v3092
        %v3122 = vadd.f32 %v3083, %v3092
        %v3123 = vadd.f32 %v3084, %v3092
        %v3124 = vadd.f32 %v3085, %v3092
        %v3125 = vadd.f32 %v3086, %v3092
        %v3126 = vld [vmem:[%s5] sm:$0x1]
        %v3128 = vlaneseq
        %v3129 = vshrl.u32 %v3128, 7
        %v3130 = vsub.s32 0, %v3129
        %v3131 = vrot.slane %v3126, %v3130
        %v3133 = vmul.f32 %v3094, %v3131
        %v3134 = vmul.f32 %v3095, %v3131
        %v3135 = vmul.f32 %v3096, %v3131
        %v3136 = vmul.f32 %v3097, %v3131
        %v3137 = vmul.f32 %v3098, %v3131
        %v3138 = vmul.f32 %v3099, %v3131
        %v3139 = vmul.f32 %v3100, %v3131
        %v3140 = vmul.f32 %v3101, %v3131
        %v3141 = vmul.f32 %v3102, %v3131
        %v3142 = vmul.f32 %v3103, %v3131
        %v3143 = vmul.f32 %v3104, %v3131
        %v3144 = vmul.f32 %v3105, %v3131
        %v3145 = vmul.f32 %v3106, %v3131
        %v3146 = vmul.f32 %v3107, %v3131
        %v3147 = vmul.f32 %v3108, %v3131
        %v3148 = vmul.f32 %v3109, %v3131
        %v3149 = vmul.f32 %v3110, %v3131
        %v3150 = vmul.f32 %v3111, %v3131
        %v3151 = vmul.f32 %v3112, %v3131
        %v3152 = vmul.f32 %v3113, %v3131
        %v3153 = vmul.f32 %v3114, %v3131
        %v3154 = vmul.f32 %v3115, %v3131
        %v3155 = vmul.f32 %v3116, %v3131
        %v3156 = vmul.f32 %v3117, %v3131
        %v3157 = vmul.f32 %v3118, %v3131
        %v3158 = vmul.f32 %v3119, %v3131
        %v3159 = vmul.f32 %v3120, %v3131
        %v3160 = vmul.f32 %v3121, %v3131
        %v3161 = vmul.f32 %v3122, %v3131
        %v3162 = vmul.f32 %v3123, %v3131
        %v3163 = vmul.f32 %v3124, %v3131
        %v3164 = vmul.f32 %v3125, %v3131
        %v3165 = vld [vmem:[%s6] sm:$0x1]
        %v3167 = vlaneseq
        %v3168 = vshrl.u32 %v3167, 7
        %v3169 = vsub.s32 0, %v3168
        %v3170 = vrot.slane %v3165, %v3169
        %v3172 = vadd.f32 %v3133, %v3170
        %v3173 = vadd.f32 %v3134, %v3170
        %v3174 = vadd.f32 %v3135, %v3170
        %v3175 = vadd.f32 %v3136, %v3170
        %v3176 = vadd.f32 %v3137, %v3170
        %v3177 = vadd.f32 %v3138, %v3170
        %v3178 = vadd.f32 %v3139, %v3170
        %v3179 = vadd.f32 %v3140, %v3170
        %v3180 = vadd.f32 %v3141, %v3170
        %v3181 = vadd.f32 %v3142, %v3170
        %v3182 = vadd.f32 %v3143, %v3170
        %v3183 = vadd.f32 %v3144, %v3170
        %v3184 = vadd.f32 %v3145, %v3170
        %v3185 = vadd.f32 %v3146, %v3170
        %v3186 = vadd.f32 %v3147, %v3170
        %v3187 = vadd.f32 %v3148, %v3170
        %v3188 = vadd.f32 %v3149, %v3170
        %v3189 = vadd.f32 %v3150, %v3170
        %v3190 = vadd.f32 %v3151, %v3170
        %v3191 = vadd.f32 %v3152, %v3170
        %v3192 = vadd.f32 %v3153, %v3170
        %v3193 = vadd.f32 %v3154, %v3170
        %v3194 = vadd.f32 %v3155, %v3170
        %v3195 = vadd.f32 %v3156, %v3170
        %v3196 = vadd.f32 %v3157, %v3170
        %v3197 = vadd.f32 %v3158, %v3170
        %v3198 = vadd.f32 %v3159, %v3170
        %v3199 = vadd.f32 %v3160, %v3170
        %v3200 = vadd.f32 %v3161, %v3170
        %v3201 = vadd.f32 %v3162, %v3170
        %v3202 = vadd.f32 %v3163, %v3170
        %v3203 = vadd.f32 %v3164, %v3170
        %v3204 = vmax.f32 %v3172, 0.0
        %v3205 = vmax.f32 %v3173, 0.0
        %v3206 = vmax.f32 %v3174, 0.0
        %v3207 = vmax.f32 %v3175, 0.0
        %v3208 = vmax.f32 %v3176, 0.0
        %v3209 = vmax.f32 %v3177, 0.0
        %v3210 = vmax.f32 %v3178, 0.0
        %v3211 = vmax.f32 %v3179, 0.0
        %v3212 = vmax.f32 %v3180, 0.0
        %v3213 = vmax.f32 %v3181, 0.0
        %v3214 = vmax.f32 %v3182, 0.0
        %v3215 = vmax.f32 %v3183, 0.0
        %v3216 = vmax.f32 %v3184, 0.0
        %v3217 = vmax.f32 %v3185, 0.0
        %v3218 = vmax.f32 %v3186, 0.0
        %v3219 = vmax.f32 %v3187, 0.0
        %v3220 = vmax.f32 %v3188, 0.0
        %v3221 = vmax.f32 %v3189, 0.0
        %v3222 = vmax.f32 %v3190, 0.0
        %v3223 = vmax.f32 %v3191, 0.0
        %v3224 = vmax.f32 %v3192, 0.0
        %v3225 = vmax.f32 %v3193, 0.0
        %v3226 = vmax.f32 %v3194, 0.0
        %v3227 = vmax.f32 %v3195, 0.0
        %v3228 = vmax.f32 %v3196, 0.0
        %v3229 = vmax.f32 %v3197, 0.0
        %v3230 = vmax.f32 %v3198, 0.0
        %v3231 = vmax.f32 %v3199, 0.0
        %v3232 = vmax.f32 %v3200, 0.0
        %v3233 = vmax.f32 %v3201, 0.0
        %v3234 = vmax.f32 %v3202, 0.0
        %v3235 = vmax.f32 %v3203, 0.0
        %3236 = vst [vmem:[%s635 + $0x1] sm:$0xff] %v3204
        %3237 = vst [vmem:[%s635 + $0x9] sm:$0xff] %v3205
        %3238 = vst [vmem:[%s635 + $0x19] sm:$0xff] %v3206
        %3239 = vst [vmem:[%s635 + $0x21] sm:$0xff] %v3207
        %3240 = vst [vmem:[%s635 + $0x31] sm:$0xff] %v3208
        %3241 = vst [vmem:[%s635 + $0x39] sm:$0xff] %v3209
        %3242 = vst [vmem:[%s635 + $0x49] sm:$0xff] %v3210
        %3243 = vst [vmem:[%s635 + $0x51] sm:$0xff] %v3211
        %3244 = vst [vmem:[%s635 + $0x61] sm:$0xff] %v3212
        %3245 = vst [vmem:[%s635 + $0x69] sm:$0xff] %v3213
        %3246 = vst [vmem:[%s635 + $0x79] sm:$0xff] %v3214
        %3247 = vst [vmem:[%s635 + $0x81] sm:$0xff] %v3215
        %3248 = vst [vmem:[%s635 + $0x91] sm:$0xff] %v3216
        %3249 = vst [vmem:[%s635 + $0x99] sm:$0xff] %v3217
        %3250 = vst [vmem:[%s635 + $0xa9] sm:$0xff] %v3218
        %3251 = vst [vmem:[%s635 + $0xb1] sm:$0xff] %v3219
        %3252 = vst [vmem:[%s635 + $0xc1] sm:$0xff] %v3220
        %3253 = vst [vmem:[%s635 + $0xc9] sm:$0xff] %v3221
        %3254 = vst [vmem:[%s635 + $0xd9] sm:$0xff] %v3222
        %3255 = vst [vmem:[%s635 + $0xe1] sm:$0xff] %v3223
        %3256 = vst [vmem:[%s635 + $0xf1] sm:$0xff] %v3224
        %3257 = vst [vmem:[%s635 + $0xf9] sm:$0xff] %v3225
        %3258 = vst [vmem:[%s635 + $0x109] sm:$0xff] %v3226
        %3259 = vst [vmem:[%s635 + $0x111] sm:$0xff] %v3227
        %3260 = vst [vmem:[%s635 + $0x121] sm:$0xff] %v3228
        %3261 = vst [vmem:[%s635 + $0x129] sm:$0xff] %v3229
        %3262 = vst [vmem:[%s635 + $0x139] sm:$0xff] %v3230
        %3263 = vst [vmem:[%s635 + $0x141] sm:$0xff] %v3231
        %3264 = vst [vmem:[%s635 + $0x151] sm:$0xff] %v3232
        %3265 = vst [vmem:[%s635 + $0x159] sm:$0xff] %v3233
        %3266 = vst [vmem:[%s635 + $0x169] sm:$0xff] %v3234
        %3267 = vst [vmem:[%s635 + $0x171] sm:$0xff] %v3235
        %v3268 = vld [vmem:[#allocation2] sm:$0xff]
        %v3269 = vld [vmem:[#allocation2 + $0x8] sm:$0xff]
        %v3270 = vld [vmem:[#allocation2 + $0x18] sm:$0xff]
        %v3271 = vld [vmem:[#allocation2 + $0x20] sm:$0xff]
        %v3272 = vld [vmem:[#allocation2 + $0x30] sm:$0xff]
        %v3273 = vld [vmem:[#allocation2 + $0x38] sm:$0xff]
        %v3274 = vld [vmem:[#allocation2 + $0x48] sm:$0xff]
        %v3275 = vld [vmem:[#allocation2 + $0x50] sm:$0xff]
        %v3276 = vld [vmem:[#allocation2 + $0x60] sm:$0xff]
        %v3277 = vld [vmem:[#allocation2 + $0x68] sm:$0xff]
        %v3278 = vld [vmem:[#allocation2 + $0x78] sm:$0xff]
        %v3279 = vld [vmem:[#allocation2 + $0x80] sm:$0xff]
        %v3280 = vld [vmem:[#allocation2 + $0x90] sm:$0xff]
        %v3281 = vld [vmem:[#allocation2 + $0x98] sm:$0xff]
        %v3282 = vld [vmem:[#allocation2 + $0xa8] sm:$0xff]
        %v3283 = vld [vmem:[#allocation2 + $0xb0] sm:$0xff]
        %v3284 = vld [vmem:[#allocation2 + $0xc0] sm:$0xff]
        %v3285 = vld [vmem:[#allocation2 + $0xc8] sm:$0xff]
        %v3286 = vld [vmem:[#allocation2 + $0xd8] sm:$0xff]
        %v3287 = vld [vmem:[#allocation2 + $0xe0] sm:$0xff]
        %v3288 = vld [vmem:[#allocation2 + $0xf0] sm:$0xff]
        %v3289 = vld [vmem:[#allocation2 + $0xf8] sm:$0xff]
        %v3290 = vld [vmem:[#allocation2 + $0x108] sm:$0xff]
        %v3291 = vld [vmem:[#allocation2 + $0x110] sm:$0xff]
        %v3292 = vld [vmem:[#allocation2 + $0x120] sm:$0xff]
        %v3293 = vld [vmem:[#allocation2 + $0x128] sm:$0xff]
        %v3294 = vld [vmem:[#allocation2 + $0x138] sm:$0xff]
        %v3295 = vld [vmem:[#allocation2 + $0x140] sm:$0xff]
        %v3296 = vld [vmem:[#allocation2 + $0x150] sm:$0xff]
        %v3297 = vld [vmem:[#allocation2 + $0x158] sm:$0xff]
        %v3298 = vld [vmem:[#allocation2 + $0x168] sm:$0xff]
        %v3299 = vld [vmem:[#allocation2 + $0x170] sm:$0xff]
        %v3300 = vld [vmem:[#allocation2 + $0x180] sm:$0xff]
        %v3301 = vld [vmem:[#allocation2 + $0x188] sm:$0xff]
        %v3302 = vld [vmem:[#allocation2 + $0x198] sm:$0xff]
        %v3303 = vld [vmem:[#allocation2 + $0x1a0] sm:$0xff]
        %v3304 = vpack.c.bf16 %v3269, %v3268
        %v3305 = vpack.c.bf16 %v3271, %v3270
        %v3306 = vpack.c.bf16 %v3273, %v3272
        %v3307 = vpack.c.bf16 %v3275, %v3274
        %v3308 = vpack.c.bf16 %v3277, %v3276
        %v3309 = vpack.c.bf16 %v3279, %v3278
        %v3310 = vpack.c.bf16 %v3281, %v3280
        %v3311 = vpack.c.bf16 %v3283, %v3282
        %v3312 = vpack.c.bf16 %v3285, %v3284
        %v3313 = vpack.c.bf16 %v3287, %v3286
        %v3314 = vpack.c.bf16 %v3289, %v3288
        %v3315 = vpack.c.bf16 %v3291, %v3290
        %v3316 = vpack.c.bf16 %v3293, %v3292
        %v3317 = vpack.c.bf16 %v3295, %v3294
        %v3318 = vpack.c.bf16 %v3297, %v3296
        %v3319 = vpack.c.bf16 %v3299, %v3298
        %v3320 = vpack.c.bf16 %v3301, %v3300
        %v3321 = vpack.c.bf16 %v3303, %v3302
        %v3322 = vld [vmem:[#allocation8] sm:$0xf]
        %v3323 = vld [vmem:[#allocation8 + $0x4] sm:$0xf]
        %v3324 = vld [vmem:[#allocation8 + $0x8] sm:$0xf]
        %v3325 = vld [vmem:[#allocation8 + $0xc] sm:$0xf]
        %v3326 = vld [vmem:[#allocation8 + $0x10] sm:$0xf]
        %v3327 = vld [vmem:[#allocation8 + $0x14] sm:$0xf]
        %v3328 = vld [vmem:[#allocation8 + $0x18] sm:$0xf]
        %v3329 = vld [vmem:[#allocation8 + $0x1c] sm:$0xf]
        %v3330 = vld [vmem:[#allocation8 + $0x20] sm:$0xf]
        %v3331 = vld [vmem:[#allocation8 + $0x24] sm:$0xf]
        %v3332 = vld [vmem:[#allocation8 + $0x28] sm:$0xf]
        %v3333 = vld [vmem:[#allocation8 + $0x2c] sm:$0xf]
        %v3334 = vld [vmem:[#allocation8 + $0x30] sm:$0xf]
        %v3335 = vld [vmem:[#allocation8 + $0x34] sm:$0xf]
        %v3336 = vld [vmem:[#allocation8 + $0x38] sm:$0xf]
        %v3337 = vld [vmem:[#allocation8 + $0x3c] sm:$0xf]
        %s3338 = scalar_lea.vmem [#allocation8], 192
        %v3339 = vld [vmem:[%s3338] sm:$0xf]
        %v3340 = vld [vmem:[%s3338 + $0x4] sm:$0xf]
        %v3341 = vld [vmem:[%s3338 + $0x8] sm:$0xf]
        %v3342 = vld [vmem:[%s3338 + $0xc] sm:$0xf]
        %v3343 = vld [vmem:[%s3338 + $0x10] sm:$0xf]
        %v3344 = vld [vmem:[%s3338 + $0x14] sm:$0xf]
        %v3345 = vld [vmem:[%s3338 + $0x18] sm:$0xf]
        %v3346 = vld [vmem:[%s3338 + $0x1c] sm:$0xf]
        %v3347 = vld [vmem:[%s3338 + $0x20] sm:$0xf]
        %v3348 = vld [vmem:[%s3338 + $0x24] sm:$0xf]
        %v3349 = vld [vmem:[%s3338 + $0x28] sm:$0xf]
        %v3350 = vld [vmem:[%s3338 + $0x2c] sm:$0xf]
        %v3351 = vld [vmem:[%s3338 + $0x30] sm:$0xf]
        %v3352 = vld [vmem:[%s3338 + $0x34] sm:$0xf]
        %v3353 = vld [vmem:[%s3338 + $0x38] sm:$0xf]
        %v3354 = vld [vmem:[%s3338 + $0x3c] sm:$0xf]
        %v3371 = vunpack.c.l.b16 %v3339
        %v3372 = vunpack.c.l.b16 %v3340
        %v3373 = vunpack.c.l.b16 %v3341
        %v3374 = vunpack.c.l.b16 %v3342
        %v3375 = vunpack.c.l.b16 %v3343
        %v3376 = vunpack.c.l.b16 %v3344
        %v3377 = vunpack.c.l.b16 %v3345
        %v3378 = vunpack.c.l.b16 %v3346
        %v3379 = vunpack.c.l.b16 %v3347
        %v3380 = vunpack.c.l.b16 %v3348
        %v3381 = vunpack.c.l.b16 %v3349
        %v3382 = vunpack.c.l.b16 %v3350
        %v3383 = vunpack.c.l.b16 %v3351
        %v3384 = vunpack.c.l.b16 %v3352
        %v3385 = vunpack.c.l.b16 %v3353
        %v3386 = vunpack.c.l.b16 %v3354
        %v3387 = vpack.c.b16 %v3372, %v3371
        %v3388 = vpack.c.b16 %v3374, %v3373
        %v3389 = vpack.c.b16 %v3376, %v3375
        %v3390 = vpack.c.b16 %v3378, %v3377
        %v3391 = vpack.c.b16 %v3380, %v3379
        %v3392 = vpack.c.b16 %v3382, %v3381
        %v3393 = vpack.c.b16 %v3384, %v3383
        %v3394 = vpack.c.b16 %v3386, %v3385
        %3403 = vmatprep.subr.bf16.mxu0 0
        %3404 = vmatpush1.bf16.msra.mxu0 %v3387
        %3405 = vmatprep.subr.bf16.mxu0 0
        %3406 = vmatpush1.bf16.msra.mxu0 %v3388
        %3407 = vmatprep.subr.bf16.mxu0 0
        %3408 = vmatpush1.bf16.msra.mxu0 %v3389
        %3409 = vmatprep.subr.bf16.mxu0 0
        %3410 = vmatpush1.bf16.msra.mxu0 %v3390
        %3411 = vmatprep.subr.bf16.mxu0 0
        %3412 = vmatpush1.bf16.msra.mxu0 %v3391
        %3413 = vmatprep.subr.bf16.mxu0 0
        %3414 = vmatpush1.bf16.msra.mxu0 %v3392
        %3415 = vmatprep.subr.bf16.mxu0 0
        %3416 = vmatpush1.bf16.msra.mxu0 %v3393
        %3417 = vmatprep.subr.bf16.mxu0 0
        %3418 = vmatpush1.bf16.msra.mxu0 %v3394
        %3419 = vmatprep.subr.bf16.mxu0 0
        %3420 = vmatpush1.bf16.msra.mxu0 0
        %3421 = vmatprep.subr.bf16.mxu0 0
        %3422 = vmatpush1.bf16.msra.mxu0 0
        %3423 = vmatprep.subr.bf16.mxu0 0
        %3424 = vmatpush1.bf16.msra.mxu0 0
        %3425 = vmatprep.subr.bf16.mxu0 0
        %3426 = vmatpush1.bf16.msra.mxu0 0
        %3427 = vmatprep.subr.bf16.mxu0 0
        %3428 = vmatpush1.bf16.msra.mxu0 0
        %3429 = vmatprep.subr.bf16.mxu0 0
        %3430 = vmatpush1.bf16.msra.mxu0 0
        %3431 = vmatprep.subr.bf16.mxu0 0
        %3432 = vmatpush1.bf16.msra.mxu0 0
        %3433 = vmatprep.subr.bf16.mxu0 0
        %3434 = vmatpush1.bf16.msra.mxu0 0
        %3435 = vmatprep.mubr.bf16.mxu0 0
        %3436 = vmatmul.mubr.bf16.gmra.mrb[0].mxu0 %v3305
        %v3437 = vpop.f32.mrb[0].mxu0
        %v3438 = vadd.f32 0.0, %v3437
        %v3439 = vpop.f32.mrb[0].mxu0
        %v3440 = vpop.f32.mrb[0].mxu0
        %v3441 = vadd.f32 0.0, %v3440
        %v3442 = vpop.f32.mrb[0].mxu0
        %3443 = vmatprep.mubr.bf16.mxu0 0
        %3444 = vmatmul.mubr.bf16.gmra.mrb[0].mxu0 %v3306
        %v3445 = vpop.f32.mrb[0].mxu0
        %v3446 = vadd.f32 0.0, %v3445
        %v3447 = vpop.f32.mrb[0].mxu0
        %v3448 = vpop.f32.mrb[0].mxu0
        %v3449 = vadd.f32 0.0, %v3448
        %v3450 = vpop.f32.mrb[0].mxu0
        %3451 = vmatprep.mubr.bf16.mxu0 0
        %3452 = vmatmul.mubr.bf16.gmra.mrb[0].mxu0 %v3307
        %v3453 = vpop.f32.mrb[0].mxu0
        %v3454 = vadd.f32 0.0, %v3453
        %v3455 = vpop.f32.mrb[0].mxu0
        %v3456 = vpop.f32.mrb[0].mxu0
        %v3457 = vadd.f32 0.0, %v3456
        %v3458 = vpop.f32.mrb[0].mxu0
        %3459 = vmatprep.mubr.bf16.mxu0 0
        %3460 = vmatmul.mubr.bf16.gmra.mrb[0].mxu0 %v3308
        %v3461 = vpop.f32.mrb[0].mxu0
        %v3462 = vadd.f32 0.0, %v3461
        %v3463 = vpop.f32.mrb[0].mxu0
        %v3464 = vpop.f32.mrb[0].mxu0
        %v3465 = vadd.f32 0.0, %v3464
        %v3466 = vpop.f32.mrb[0].mxu0
        %3467 = vmatprep.mubr.bf16.mxu0 0
        %3468 = vmatmul.mubr.bf16.gmra.mrb[0].mxu0 %v3309
        %v3469 = vpop.f32.mrb[0].mxu0
        %v3470 = vadd.f32 0.0, %v3469
        %v3471 = vpop.f32.mrb[0].mxu0
        %v3472 = vpop.f32.mrb[0].mxu0
        %v3473 = vadd.f32 0.0, %v3472
        %v3474 = vpop.f32.mrb[0].mxu0
        %3475 = vmatprep.mubr.bf16.mxu0 0
        %3476 = vmatmul.mubr.bf16.gmra.mrb[0].mxu0 %v3310
        %v3477 = vpop.f32.mrb[0].mxu0
        %v3478 = vadd.f32 0.0, %v3477
        %v3479 = vpop.f32.mrb[0].mxu0
        %v3480 = vpop.f32.mrb[0].mxu0
        %v3481 = vadd.f32 0.0, %v3480
        %v3482 = vpop.f32.mrb[0].mxu0
        %3483 = vmatprep.mubr.bf16.mxu0 0
        %3484 = vmatmul.mubr.bf16.gmra.mrb[0].mxu0 %v3311
        %v3485 = vpop.f32.mrb[0].mxu0
        %v3486 = vadd.f32 0.0, %v3485
        %v3487 = vpop.f32.mrb[0].mxu0
        %v3488 = vpop.f32.mrb[0].mxu0
        %v3489 = vadd.f32 0.0, %v3488
        %v3490 = vpop.f32.mrb[0].mxu0
        %3491 = vmatprep.mubr.bf16.mxu0 0
        %3492 = vmatmul.mubr.bf16.gmra.mrb[0].mxu0 %v3312
        %v3493 = vpop.f32.mrb[0].mxu0
        %v3494 = vadd.f32 0.0, %v3493
        %v3495 = vpop.f32.mrb[0].mxu0
        %v3496 = vpop.f32.mrb[0].mxu0
        %v3497 = vadd.f32 0.0, %v3496
        %v3498 = vpop.f32.mrb[0].mxu0
        %3499 = vmatprep.mubr.bf16.mxu0 0
        %3500 = vmatmul.mubr.bf16.gmra.mrb[0].mxu0 %v3313
        %v3501 = vpop.f32.mrb[0].mxu0
        %v3502 = vadd.f32 0.0, %v3501
        %v3503 = vpop.f32.mrb[0].mxu0
        %v3504 = vpop.f32.mrb[0].mxu0
        %v3505 = vadd.f32 0.0, %v3504
        %v3506 = vpop.f32.mrb[0].mxu0
        %3507 = vmatprep.mubr.bf16.mxu0 0
        %3508 = vmatmul.mubr.bf16.gmra.mrb[0].mxu0 %v3314
        %v3509 = vpop.f32.mrb[0].mxu0
        %v3510 = vadd.f32 0.0, %v3509
        %v3511 = vpop.f32.mrb[0].mxu0
        %v3512 = vpop.f32.mrb[0].mxu0
        %v3513 = vadd.f32 0.0, %v3512
        %v3514 = vpop.f32.mrb[0].mxu0
        %3515 = vmatprep.mubr.bf16.mxu0 0
        %3516 = vmatmul.mubr.bf16.gmra.mrb[0].mxu0 %v3315
        %v3517 = vpop.f32.mrb[0].mxu0
        %v3518 = vadd.f32 0.0, %v3517
        %v3519 = vpop.f32.mrb[0].mxu0
        %v3520 = vpop.f32.mrb[0].mxu0
        %v3521 = vadd.f32 0.0, %v3520
        %v3522 = vpop.f32.mrb[0].mxu0
        %3523 = vmatprep.mubr.bf16.mxu0 0
        %3524 = vmatmul.mubr.bf16.gmra.mrb[0].mxu0 %v3316
        %v3525 = vpop.f32.mrb[0].mxu0
        %v3526 = vadd.f32 0.0, %v3525
        %v3527 = vpop.f32.mrb[0].mxu0
        %v3528 = vpop.f32.mrb[0].mxu0
        %v3529 = vadd.f32 0.0, %v3528
        %v3530 = vpop.f32.mrb[0].mxu0
        %3531 = vmatprep.mubr.bf16.mxu0 0
        %3532 = vmatmul.mubr.bf16.gmra.mrb[0].mxu0 %v3317
        %v3533 = vpop.f32.mrb[0].mxu0
        %v3534 = vadd.f32 0.0, %v3533
        %v3535 = vpop.f32.mrb[0].mxu0
        %v3536 = vpop.f32.mrb[0].mxu0
        %v3537 = vadd.f32 0.0, %v3536
        %v3538 = vpop.f32.mrb[0].mxu0
        %3539 = vmatprep.mubr.bf16.mxu0 0
        %3540 = vmatmul.mubr.bf16.gmra.mrb[0].mxu0 %v3318
        %v3541 = vpop.f32.mrb[0].mxu0
        %v3542 = vadd.f32 0.0, %v3541
        %v3543 = vpop.f32.mrb[0].mxu0
        %v3544 = vpop.f32.mrb[0].mxu0
        %v3545 = vadd.f32 0.0, %v3544
        %v3546 = vpop.f32.mrb[0].mxu0
        %3547 = vmatprep.mubr.bf16.mxu0 0
        %3548 = vmatmul.mubr.bf16.gmra.mrb[0].mxu0 %v3319
        %v3549 = vpop.f32.mrb[0].mxu0
        %v3550 = vadd.f32 0.0, %v3549
        %v3551 = vpop.f32.mrb[0].mxu0
        %v3552 = vpop.f32.mrb[0].mxu0
        %v3553 = vadd.f32 0.0, %v3552
        %v3554 = vpop.f32.mrb[0].mxu0
        %3555 = vmatprep.mubr.bf16.mxu0 0
        %3556 = vmatmul.mubr.bf16.gmra.mrb[0].mxu0 %v3320
        %v3557 = vpop.f32.mrb[0].mxu0
        %v3558 = vadd.f32 0.0, %v3557
        %v3559 = vpop.f32.mrb[0].mxu0
        %v3560 = vpop.f32.mrb[0].mxu0
        %v3561 = vadd.f32 0.0, %v3560
        %v3562 = vpop.f32.mrb[0].mxu0
        %3563 = vdwg.mxu0
        %v3580 = vunpack.c.l.b16 %v3322
        %v3581 = vunpack.c.l.b16 %v3323
        %v3582 = vunpack.c.l.b16 %v3324
        %v3583 = vunpack.c.l.b16 %v3325
        %v3584 = vunpack.c.l.b16 %v3326
        %v3585 = vunpack.c.l.b16 %v3327
        %v3586 = vunpack.c.l.b16 %v3328
        %v3587 = vunpack.c.l.b16 %v3329
        %v3588 = vunpack.c.l.b16 %v3330
        %v3589 = vunpack.c.l.b16 %v3331
        %v3590 = vunpack.c.l.b16 %v3332
        %v3591 = vunpack.c.l.b16 %v3333
        %v3592 = vunpack.c.l.b16 %v3334
        %v3593 = vunpack.c.l.b16 %v3335
        %v3594 = vunpack.c.l.b16 %v3336
        %v3595 = vunpack.c.l.b16 %v3337
        %v3596 = vpack.c.b16 %v3581, %v3580
        %v3597 = vpack.c.b16 %v3583, %v3582
        %v3598 = vpack.c.b16 %v3585, %v3584
        %v3599 = vpack.c.b16 %v3587, %v3586
        %v3600 = vpack.c.b16 %v3589, %v3588
        %v3601 = vpack.c.b16 %v3591, %v3590
        %v3602 = vpack.c.b16 %v3593, %v3592
        %v3603 = vpack.c.b16 %v3595, %v3594
        %3612 = vmatprep.subr.bf16.mxu0 0
        %3613 = vmatpush1.bf16.msra.mxu0 %v3596
        %3614 = vmatprep.subr.bf16.mxu0 0
        %3615 = vmatpush1.bf16.msra.mxu0 %v3597
        %3616 = vmatprep.subr.bf16.mxu0 0
        %3617 = vmatpush1.bf16.msra.mxu0 %v3598
        %3618 = vmatprep.subr.bf16.mxu0 0
        %3619 = vmatpush1.bf16.msra.mxu0 %v3599
        %3620 = vmatprep.subr.bf16.mxu0 0
        %3621 = vmatpush1.bf16.msra.mxu0 %v3600
        %3622 = vmatprep.subr.bf16.mxu0 0
        %3623 = vmatpush1.bf16.msra.mxu0 %v3601
        %3624 = vmatprep.subr.bf16.mxu0 0
        %3625 = vmatpush1.bf16.msra.mxu0 %v3602
        %3626 = vmatprep.subr.bf16.mxu0 0
        %3627 = vmatpush1.bf16.msra.mxu0 %v3603
        %3628 = vmatprep.subr.bf16.mxu0 0
        %3629 = vmatpush1.bf16.msra.mxu0 0
        %3630 = vmatprep.subr.bf16.mxu0 0
        %3631 = vmatpush1.bf16.msra.mxu0 0
        %3632 = vmatprep.subr.bf16.mxu0 0
        %3633 = vmatpush1.bf16.msra.mxu0 0
        %3634 = vmatprep.subr.bf16.mxu0 0
        %3635 = vmatpush1.bf16.msra.mxu0 0
        %3636 = vmatprep.subr.bf16.mxu0 0
        %3637 = vmatpush1.bf16.msra.mxu0 0
        %3638 = vmatprep.subr.bf16.mxu0 0
        %3639 = vmatpush1.bf16.msra.mxu0 0
        %3640 = vmatprep.subr.bf16.mxu0 0
        %3641 = vmatpush1.bf16.msra.mxu0 0
        %3642 = vmatprep.subr.bf16.mxu0 0
        %3643 = vmatpush1.bf16.msra.mxu0 0
        %3644 = vmatprep.mubr.bf16.mxu0 0
        %3645 = vmatmul.mubr.bf16.gmra.mrb[0].mxu0 %v3304
        %v3646 = vpop.f32.mrb[0].mxu0
        %v3647 = vadd.f32 %v3438, %v3646
        %v3648 = vpop.f32.mrb[0].mxu0
        %v3649 = vpop.f32.mrb[0].mxu0
        %v3650 = vadd.f32 %v3441, %v3649
        %v3651 = vpop.f32.mrb[0].mxu0
        %3652 = vmatprep.mubr.bf16.mxu0 0
        %3653 = vmatmul.mubr.bf16.gmra.mrb[0].mxu0 %v3305
        %v3654 = vpop.f32.mrb[0].mxu0
        %v3655 = vadd.f32 %v3446, %v3654
        %v3656 = vpop.f32.mrb[0].mxu0
        %v3657 = vpop.f32.mrb[0].mxu0
        %v3658 = vadd.f32 %v3449, %v3657
        %v3659 = vpop.f32.mrb[0].mxu0
        %3660 = vmatprep.mubr.bf16.mxu0 0
        %3661 = vmatmul.mubr.bf16.gmra.mrb[0].mxu0 %v3306
        %v3662 = vpop.f32.mrb[0].mxu0
        %v3663 = vadd.f32 %v3454, %v3662
        %v3664 = vpop.f32.mrb[0].mxu0
        %v3665 = vpop.f32.mrb[0].mxu0
        %v3666 = vadd.f32 %v3457, %v3665
        %v3667 = vpop.f32.mrb[0].mxu0
        %3668 = vmatprep.mubr.bf16.mxu0 0
        %3669 = vmatmul.mubr.bf16.gmra.mrb[0].mxu0 %v3307
        %v3670 = vpop.f32.mrb[0].mxu0
        %v3671 = vadd.f32 %v3462, %v3670
        %v3672 = vpop.f32.mrb[0].mxu0
        %v3673 = vpop.f32.mrb[0].mxu0
        %v3674 = vadd.f32 %v3465, %v3673
        %v3675 = vpop.f32.mrb[0].mxu0
        %3676 = vmatprep.mubr.bf16.mxu0 0
        %3677 = vmatmul.mubr.bf16.gmra.mrb[0].mxu0 %v3308
        %v3678 = vpop.f32.mrb[0].mxu0
        %v3679 = vadd.f32 %v3470, %v3678
        %v3680 = vpop.f32.mrb[0].mxu0
        %v3681 = vpop.f32.mrb[0].mxu0
        %v3682 = vadd.f32 %v3473, %v3681
        %v3683 = vpop.f32.mrb[0].mxu0
        %3684 = vmatprep.mubr.bf16.mxu0 0
        %3685 = vmatmul.mubr.bf16.gmra.mrb[0].mxu0 %v3309
        %v3686 = vpop.f32.mrb[0].mxu0
        %v3687 = vadd.f32 %v3478, %v3686
        %v3688 = vpop.f32.mrb[0].mxu0
        %v3689 = vpop.f32.mrb[0].mxu0
        %v3690 = vadd.f32 %v3481, %v3689
        %v3691 = vpop.f32.mrb[0].mxu0
        %3692 = vmatprep.mubr.bf16.mxu0 0
        %3693 = vmatmul.mubr.bf16.gmra.mrb[0].mxu0 %v3310
        %v3694 = vpop.f32.mrb[0].mxu0
        %v3695 = vadd.f32 %v3486, %v3694
        %v3696 = vpop.f32.mrb[0].mxu0
        %v3697 = vpop.f32.mrb[0].mxu0
        %v3698 = vadd.f32 %v3489, %v3697
        %v3699 = vpop.f32.mrb[0].mxu0
        %3700 = vmatprep.mubr.bf16.mxu0 0
        %3701 = vmatmul.mubr.bf16.gmra.mrb[0].mxu0 %v3311
        %v3702 = vpop.f32.mrb[0].mxu0
        %v3703 = vadd.f32 %v3494, %v3702
        %v3704 = vpop.f32.mrb[0].mxu0
        %v3705 = vpop.f32.mrb[0].mxu0
        %v3706 = vadd.f32 %v3497, %v3705
        %v3707 = vpop.f32.mrb[0].mxu0
        %3708 = vmatprep.mubr.bf16.mxu0 0
        %3709 = vmatmul.mubr.bf16.gmra.mrb[0].mxu0 %v3312
        %v3710 = vpop.f32.mrb[0].mxu0
        %v3711 = vadd.f32 %v3502, %v3710
        %v3712 = vpop.f32.mrb[0].mxu0
        %v3713 = vpop.f32.mrb[0].mxu0
        %v3714 = vadd.f32 %v3505, %v3713
        %v3715 = vpop.f32.mrb[0].mxu0
        %3716 = vmatprep.mubr.bf16.mxu0 0
        %3717 = vmatmul.mubr.bf16.gmra.mrb[0].mxu0 %v3313
        %v3718 = vpop.f32.mrb[0].mxu0
        %v3719 = vadd.f32 %v3510, %v3718
        %v3720 = vpop.f32.mrb[0].mxu0
        %v3721 = vpop.f32.mrb[0].mxu0
        %v3722 = vadd.f32 %v3513, %v3721
        %v3723 = vpop.f32.mrb[0].mxu0
        %3724 = vmatprep.mubr.bf16.mxu0 0
        %3725 = vmatmul.mubr.bf16.gmra.mrb[0].mxu0 %v3314
        %v3726 = vpop.f32.mrb[0].mxu0
        %v3727 = vadd.f32 %v3518, %v3726
        %v3728 = vpop.f32.mrb[0].mxu0
        %v3729 = vpop.f32.mrb[0].mxu0
        %v3730 = vadd.f32 %v3521, %v3729
        %v3731 = vpop.f32.mrb[0].mxu0
        %3732 = vmatprep.mubr.bf16.mxu0 0
        %3733 = vmatmul.mubr.bf16.gmra.mrb[0].mxu0 %v3315
        %v3734 = vpop.f32.mrb[0].mxu0
        %v3735 = vadd.f32 %v3526, %v3734
        %v3736 = vpop.f32.mrb[0].mxu0
        %v3737 = vpop.f32.mrb[0].mxu0
        %v3738 = vadd.f32 %v3529, %v3737
        %v3739 = vpop.f32.mrb[0].mxu0
        %3740 = vmatprep.mubr.bf16.mxu0 0
        %3741 = vmatmul.mubr.bf16.gmra.mrb[0].mxu0 %v3316
        %v3742 = vpop.f32.mrb[0].mxu0
        %v3743 = vadd.f32 %v3534, %v3742
        %v3744 = vpop.f32.mrb[0].mxu0
        %v3745 = vpop.f32.mrb[0].mxu0
        %v3746 = vadd.f32 %v3537, %v3745
        %v3747 = vpop.f32.mrb[0].mxu0
        %3748 = vmatprep.mubr.bf16.mxu0 0
        %3749 = vmatmul.mubr.bf16.gmra.mrb[0].mxu0 %v3317
        %v3750 = vpop.f32.mrb[0].mxu0
        %v3751 = vadd.f32 %v3542, %v3750
        %v3752 = vpop.f32.mrb[0].mxu0
        %v3753 = vpop.f32.mrb[0].mxu0
        %v3754 = vadd.f32 %v3545, %v3753
        %v3755 = vpop.f32.mrb[0].mxu0
        %3756 = vmatprep.mubr.bf16.mxu0 0
        %3757 = vmatmul.mubr.bf16.gmra.mrb[0].mxu0 %v3318
        %v3758 = vpop.f32.mrb[0].mxu0
        %v3759 = vadd.f32 %v3550, %v3758
        %v3760 = vpop.f32.mrb[0].mxu0
        %v3761 = vpop.f32.mrb[0].mxu0
        %v3762 = vadd.f32 %v3553, %v3761
        %v3763 = vpop.f32.mrb[0].mxu0
        %3764 = vmatprep.mubr.bf16.mxu0 0
        %3765 = vmatmul.mubr.bf16.gmra.mrb[0].mxu0 %v3319
        %v3766 = vpop.f32.mrb[0].mxu0
        %v3767 = vadd.f32 %v3558, %v3766
        %v3768 = vpop.f32.mrb[0].mxu0
        %v3769 = vpop.f32.mrb[0].mxu0
        %v3770 = vadd.f32 %v3561, %v3769
        %v3771 = vpop.f32.mrb[0].mxu0
        %3772 = vdwg.mxu0
        %s3773 = scalar_lea.vmem [#allocation8], 384
        %v3774 = vld [vmem:[%s3773] sm:$0xf]
        %v3775 = vld [vmem:[%s3773 + $0x4] sm:$0xf]
        %v3776 = vld [vmem:[%s3773 + $0x8] sm:$0xf]
        %v3777 = vld [vmem:[%s3773 + $0xc] sm:$0xf]
        %v3778 = vld [vmem:[%s3773 + $0x10] sm:$0xf]
        %v3779 = vld [vmem:[%s3773 + $0x14] sm:$0xf]
        %v3780 = vld [vmem:[%s3773 + $0x18] sm:$0xf]
        %v3781 = vld [vmem:[%s3773 + $0x1c] sm:$0xf]
        %v3782 = vld [vmem:[%s3773 + $0x20] sm:$0xf]
        %v3783 = vld [vmem:[%s3773 + $0x24] sm:$0xf]
        %v3784 = vld [vmem:[%s3773 + $0x28] sm:$0xf]
        %v3785 = vld [vmem:[%s3773 + $0x2c] sm:$0xf]
        %v3786 = vld [vmem:[%s3773 + $0x30] sm:$0xf]
        %v3787 = vld [vmem:[%s3773 + $0x34] sm:$0xf]
        %v3788 = vld [vmem:[%s3773 + $0x38] sm:$0xf]
        %v3789 = vld [vmem:[%s3773 + $0x3c] sm:$0xf]
        %v3806 = vunpack.c.l.b16 %v3774
        %v3807 = vunpack.c.l.b16 %v3775
        %v3808 = vunpack.c.l.b16 %v3776
        %v3809 = vunpack.c.l.b16 %v3777
        %v3810 = vunpack.c.l.b16 %v3778
        %v3811 = vunpack.c.l.b16 %v3779
        %v3812 = vunpack.c.l.b16 %v3780
        %v3813 = vunpack.c.l.b16 %v3781
        %v3814 = vunpack.c.l.b16 %v3782
        %v3815 = vunpack.c.l.b16 %v3783
        %v3816 = vunpack.c.l.b16 %v3784
        %v3817 = vunpack.c.l.b16 %v3785
        %v3818 = vunpack.c.l.b16 %v3786
        %v3819 = vunpack.c.l.b16 %v3787
        %v3820 = vunpack.c.l.b16 %v3788
        %v3821 = vunpack.c.l.b16 %v3789
        %v3822 = vpack.c.b16 %v3807, %v3806
        %v3823 = vpack.c.b16 %v3809, %v3808
        %v3824 = vpack.c.b16 %v3811, %v3810
        %v3825 = vpack.c.b16 %v3813, %v3812
        %v3826 = vpack.c.b16 %v3815, %v3814
        %v3827 = vpack.c.b16 %v3817, %v3816
        %v3828 = vpack.c.b16 %v3819, %v3818
        %v3829 = vpack.c.b16 %v3821, %v3820
        %3838 = vmatprep.subr.bf16.mxu0 0
        %3839 = vmatpush1.bf16.msra.mxu0 %v3822
        %3840 = vmatprep.subr.bf16.mxu0 0
        %3841 = vmatpush1.bf16.msra.mxu0 %v3823
        %3842 = vmatprep.subr.bf16.mxu0 0
        %3843 = vmatpush1.bf16.msra.mxu0 %v3824
        %3844 = vmatprep.subr.bf16.mxu0 0
        %3845 = vmatpush1.bf16.msra.mxu0 %v3825
        %3846 = vmatprep.subr.bf16.mxu0 0
        %3847 = vmatpush1.bf16.msra.mxu0 %v3826
        %3848 = vmatprep.subr.bf16.mxu0 0
        %3849 = vmatpush1.bf16.msra.mxu0 %v3827
        %3850 = vmatprep.subr.bf16.mxu0 0
        %3851 = vmatpush1.bf16.msra.mxu0 %v3828
        %3852 = vmatprep.subr.bf16.mxu0 0
        %3853 = vmatpush1.bf16.msra.mxu0 %v3829
        %3854 = vmatprep.subr.bf16.mxu0 0
        %3855 = vmatpush1.bf16.msra.mxu0 0
        %3856 = vmatprep.subr.bf16.mxu0 0
        %3857 = vmatpush1.bf16.msra.mxu0 0
        %3858 = vmatprep.subr.bf16.mxu0 0
        %3859 = vmatpush1.bf16.msra.mxu0 0
        %3860 = vmatprep.subr.bf16.mxu0 0
        %3861 = vmatpush1.bf16.msra.mxu0 0
        %3862 = vmatprep.subr.bf16.mxu0 0
        %3863 = vmatpush1.bf16.msra.mxu0 0
        %3864 = vmatprep.subr.bf16.mxu0 0
        %3865 = vmatpush1.bf16.msra.mxu0 0
        %3866 = vmatprep.subr.bf16.mxu0 0
        %3867 = vmatpush1.bf16.msra.mxu0 0
        %3868 = vmatprep.subr.bf16.mxu0 0
        %3869 = vmatpush1.bf16.msra.mxu0 0
        %3870 = vmatprep.mubr.bf16.mxu0 0
        %3871 = vmatmul.mubr.bf16.gmra.mrb[0].mxu0 %v3306
        %v3872 = vpop.f32.mrb[0].mxu0
        %v3873 = vadd.f32 0.0, %v3872
        %v3874 = vpop.f32.mrb[0].mxu0
        %v3875 = vpop.f32.mrb[0].mxu0
        %v3876 = vadd.f32 0.0, %v3875
        %v3877 = vpop.f32.mrb[0].mxu0
        %3878 = vmatprep.mubr.bf16.mxu0 0
        %3879 = vmatmul.mubr.bf16.gmra.mrb[0].mxu0 %v3307
        %v3880 = vpop.f32.mrb[0].mxu0
        %v3881 = vadd.f32 0.0, %v3880
        %v3882 = vpop.f32.mrb[0].mxu0
        %v3883 = vpop.f32.mrb[0].mxu0
        %v3884 = vadd.f32 0.0, %v3883
        %v3885 = vpop.f32.mrb[0].mxu0
        %3886 = vmatprep.mubr.bf16.mxu0 0
        %3887 = vmatmul.mubr.bf16.gmra.mrb[0].mxu0 %v3308
        %v3888 = vpop.f32.mrb[0].mxu0
        %v3889 = vadd.f32 0.0, %v3888
        %v3890 = vpop.f32.mrb[0].mxu0
        %v3891 = vpop.f32.mrb[0].mxu0
        %v3892 = vadd.f32 0.0, %v3891
        %v3893 = vpop.f32.mrb[0].mxu0
        %3894 = vmatprep.mubr.bf16.mxu0 0
        %3895 = vmatmul.mubr.bf16.gmra.mrb[0].mxu0 %v3309
        %v3896 = vpop.f32.mrb[0].mxu0
        %v3897 = vadd.f32 0.0, %v3896
        %v3898 = vpop.f32.mrb[0].mxu0
        %v3899 = vpop.f32.mrb[0].mxu0
        %v3900 = vadd.f32 0.0, %v3899
        %v3901 = vpop.f32.mrb[0].mxu0
        %3902 = vmatprep.mubr.bf16.mxu0 0
        %3903 = vmatmul.mubr.bf16.gmra.mrb[0].mxu0 %v3310
        %v3904 = vpop.f32.mrb[0].mxu0
        %v3905 = vadd.f32 0.0, %v3904
        %v3906 = vpop.f32.mrb[0].mxu0
        %v3907 = vpop.f32.mrb[0].mxu0
        %v3908 = vadd.f32 0.0, %v3907
        %v3909 = vpop.f32.mrb[0].mxu0
        %3910 = vmatprep.mubr.bf16.mxu0 0
        %3911 = vmatmul.mubr.bf16.gmra.mrb[0].mxu0 %v3311
        %v3912 = vpop.f32.mrb[0].mxu0
        %v3913 = vadd.f32 0.0, %v3912
        %v3914 = vpop.f32.mrb[0].mxu0
        %v3915 = vpop.f32.mrb[0].mxu0
        %v3916 = vadd.f32 0.0, %v3915
        %v3917 = vpop.f32.mrb[0].mxu0
        %3918 = vmatprep.mubr.bf16.mxu0 0
        %3919 = vmatmul.mubr.bf16.gmra.mrb[0].mxu0 %v3312
        %v3920 = vpop.f32.mrb[0].mxu0
        %v3921 = vadd.f32 0.0, %v3920
        %v3922 = vpop.f32.mrb[0].mxu0
        %v3923 = vpop.f32.mrb[0].mxu0
        %v3924 = vadd.f32 0.0, %v3923
        %v3925 = vpop.f32.mrb[0].mxu0
        %3926 = vmatprep.mubr.bf16.mxu0 0
        %3927 = vmatmul.mubr.bf16.gmra.mrb[0].mxu0 %v3313
        %v3928 = vpop.f32.mrb[0].mxu0
        %v3929 = vadd.f32 0.0, %v3928
        %v3930 = vpop.f32.mrb[0].mxu0
        %v3931 = vpop.f32.mrb[0].mxu0
        %v3932 = vadd.f32 0.0, %v3931
        %v3933 = vpop.f32.mrb[0].mxu0
        %3934 = vmatprep.mubr.bf16.mxu0 0
        %3935 = vmatmul.mubr.bf16.gmra.mrb[0].mxu0 %v3314
        %v3936 = vpop.f32.mrb[0].mxu0
        %v3937 = vadd.f32 0.0, %v3936
        %v3938 = vpop.f32.mrb[0].mxu0
        %v3939 = vpop.f32.mrb[0].mxu0
        %v3940 = vadd.f32 0.0, %v3939
        %v3941 = vpop.f32.mrb[0].mxu0
        %3942 = vmatprep.mubr.bf16.mxu0 0
        %3943 = vmatmul.mubr.bf16.gmra.mrb[0].mxu0 %v3315
        %v3944 = vpop.f32.mrb[0].mxu0
        %v3945 = vadd.f32 0.0, %v3944
        %v3946 = vpop.f32.mrb[0].mxu0
        %v3947 = vpop.f32.mrb[0].mxu0
        %v3948 = vadd.f32 0.0, %v3947
        %v3949 = vpop.f32.mrb[0].mxu0
        %3950 = vmatprep.mubr.bf16.mxu0 0
        %3951 = vmatmul.mubr.bf16.gmra.mrb[0].mxu0 %v3316
        %v3952 = vpop.f32.mrb[0].mxu0
        %v3953 = vadd.f32 0.0, %v3952
        %v3954 = vpop.f32.mrb[0].mxu0
        %v3955 = vpop.f32.mrb[0].mxu0
        %v3956 = vadd.f32 0.0, %v3955
        %v3957 = vpop.f32.mrb[0].mxu0
        %3958 = vmatprep.mubr.bf16.mxu0 0
        %3959 = vmatmul.mubr.bf16.gmra.mrb[0].mxu0 %v3317
        %v3960 = vpop.f32.mrb[0].mxu0
        %v3961 = vadd.f32 0.0, %v3960
        %v3962 = vpop.f32.mrb[0].mxu0
        %v3963 = vpop.f32.mrb[0].mxu0
        %v3964 = vadd.f32 0.0, %v3963
        %v3965 = vpop.f32.mrb[0].mxu0
        %3966 = vmatprep.mubr.bf16.mxu0 0
        %3967 = vmatmul.mubr.bf16.gmra.mrb[0].mxu0 %v3318
        %v3968 = vpop.f32.mrb[0].mxu0
        %v3969 = vadd.f32 0.0, %v3968
        %v3970 = vpop.f32.mrb[0].mxu0
        %v3971 = vpop.f32.mrb[0].mxu0
        %v3972 = vadd.f32 0.0, %v3971
        %v3973 = vpop.f32.mrb[0].mxu0
        %3974 = vmatprep.mubr.bf16.mxu0 0
        %3975 = vmatmul.mubr.bf16.gmra.mrb[0].mxu0 %v3319
        %v3976 = vpop.f32.mrb[0].mxu0
        %v3977 = vadd.f32 0.0, %v3976
        %v3978 = vpop.f32.mrb[0].mxu0
        %v3979 = vpop.f32.mrb[0].mxu0
        %v3980 = vadd.f32 0.0, %v3979
        %v3981 = vpop.f32.mrb[0].mxu0
        %3982 = vmatprep.mubr.bf16.mxu0 0
        %3983 = vmatmul.mubr.bf16.gmra.mrb[0].mxu0 %v3320
        %v3984 = vpop.f32.mrb[0].mxu0
        %v3985 = vadd.f32 0.0, %v3984
        %v3986 = vpop.f32.mrb[0].mxu0
        %v3987 = vpop.f32.mrb[0].mxu0
        %v3988 = vadd.f32 0.0, %v3987
        %v3989 = vpop.f32.mrb[0].mxu0
        %3990 = vmatprep.mubr.bf16.mxu0 0
        %3991 = vmatmul.mubr.bf16.gmra.mrb[0].mxu0 %v3321
        %v3992 = vpop.f32.mrb[0].mxu0
        %v3993 = vadd.f32 0.0, %v3992
        %v3994 = vpop.f32.mrb[0].mxu0
        %v3995 = vpop.f32.mrb[0].mxu0
        %v3996 = vadd.f32 0.0, %v3995
        %v3997 = vpop.f32.mrb[0].mxu0
        %3998 = vdwg.mxu0
        %v3999 = vadd.f32 %v3647, %v3873
        %v4000 = vadd.f32 %v3650, %v3876
        %v4001 = vadd.f32 %v3655, %v3881
        %v4002 = vadd.f32 %v3658, %v3884
        %v4003 = vadd.f32 %v3663, %v3889
        %v4004 = vadd.f32 %v3666, %v3892
        %v4005 = vadd.f32 %v3671, %v3897
        %v4006 = vadd.f32 %v3674, %v3900
        %v4007 = vadd.f32 %v3679, %v3905
        %v4008 = vadd.f32 %v3682, %v3908
        %v4009 = vadd.f32 %v3687, %v3913
        %v4010 = vadd.f32 %v3690, %v3916
        %v4011 = vadd.f32 %v3695, %v3921
        %v4012 = vadd.f32 %v3698, %v3924
        %v4013 = vadd.f32 %v3703, %v3929
        %v4014 = vadd.f32 %v3706, %v3932
        %v4015 = vadd.f32 %v3711, %v3937
        %v4016 = vadd.f32 %v3714, %v3940
        %v4017 = vadd.f32 %v3719, %v3945
        %v4018 = vadd.f32 %v3722, %v3948
        %v4019 = vadd.f32 %v3727, %v3953
        %v4020 = vadd.f32 %v3730, %v3956
        %v4021 = vadd.f32 %v3735, %v3961
        %v4022 = vadd.f32 %v3738, %v3964
        %v4023 = vadd.f32 %v3743, %v3969
        %v4024 = vadd.f32 %v3746, %v3972
        %v4025 = vadd.f32 %v3751, %v3977
        %v4026 = vadd.f32 %v3754, %v3980
        %v4027 = vadd.f32 %v3759, %v3985
        %v4028 = vadd.f32 %v3762, %v3988
        %v4029 = vadd.f32 %v3767, %v3993
        %v4030 = vadd.f32 %v3770, %v3996
        %v4031 = vld [vmem:[#allocation2 + $0x1] sm:$0xff]
        %v4032 = vld [vmem:[#allocation2 + $0x9] sm:$0xff]
        %v4033 = vld [vmem:[#allocation2 + $0x19] sm:$0xff]
        %v4034 = vld [vmem:[#allocation2 + $0x21] sm:$0xff]
        %v4035 = vld [vmem:[#allocation2 + $0x31] sm:$0xff]
        %v4036 = vld [vmem:[#allocation2 + $0x39] sm:$0xff]
        %v4037 = vld [vmem:[#allocation2 + $0x49] sm:$0xff]
        %v4038 = vld [vmem:[#allocation2 + $0x51] sm:$0xff]
        %v4039 = vld [vmem:[#allocation2 + $0x61] sm:$0xff]
        %v4040 = vld [vmem:[#allocation2 + $0x69] sm:$0xff]
        %v4041 = vld [vmem:[#allocation2 + $0x79] sm:$0xff]
        %v4042 = vld [vmem:[#allocation2 + $0x81] sm:$0xff]
        %v4043 = vld [vmem:[#allocation2 + $0x91] sm:$0xff]
        %v4044 = vld [vmem:[#allocation2 + $0x99] sm:$0xff]
        %v4045 = vld [vmem:[#allocation2 + $0xa9] sm:$0xff]
        %v4046 = vld [vmem:[#allocation2 + $0xb1] sm:$0xff]
        %v4047 = vld [vmem:[#allocation2 + $0xc1] sm:$0xff]
        %v4048 = vld [vmem:[#allocation2 + $0xc9] sm:$0xff]
        %v4049 = vld [vmem:[#allocation2 + $0xd9] sm:$0xff]
        %v4050 = vld [vmem:[#allocation2 + $0xe1] sm:$0xff]
        %v4051 = vld [vmem:[#allocation2 + $0xf1] sm:$0xff]
        %v4052 = vld [vmem:[#allocation2 + $0xf9] sm:$0xff]
        %v4053 = vld [vmem:[#allocation2 + $0x109] sm:$0xff]
        %v4054 = vld [vmem:[#allocation2 + $0x111] sm:$0xff]
        %v4055 = vld [vmem:[#allocation2 + $0x121] sm:$0xff]
        %v4056 = vld [vmem:[#allocation2 + $0x129] sm:$0xff]
        %v4057 = vld [vmem:[#allocation2 + $0x139] sm:$0xff]
        %v4058 = vld [vmem:[#allocation2 + $0x141] sm:$0xff]
        %v4059 = vld [vmem:[#allocation2 + $0x151] sm:$0xff]
        %v4060 = vld [vmem:[#allocation2 + $0x159] sm:$0xff]
        %v4061 = vld [vmem:[#allocation2 + $0x169] sm:$0xff]
        %v4062 = vld [vmem:[#allocation2 + $0x171] sm:$0xff]
        %v4063 = vld [vmem:[#allocation2 + $0x181] sm:$0xff]
        %v4064 = vld [vmem:[#allocation2 + $0x189] sm:$0xff]
        %v4065 = vld [vmem:[#allocation2 + $0x199] sm:$0xff]
        %v4066 = vld [vmem:[#allocation2 + $0x1a1] sm:$0xff]
        %v4067 = vpack.c.bf16 %v4032, %v4031
        %v4068 = vpack.c.bf16 %v4034, %v4033
        %v4069 = vpack.c.bf16 %v4036, %v4035
        %v4070 = vpack.c.bf16 %v4038, %v4037
        %v4071 = vpack.c.bf16 %v4040, %v4039
        %v4072 = vpack.c.bf16 %v4042, %v4041
        %v4073 = vpack.c.bf16 %v4044, %v4043
        %v4074 = vpack.c.bf16 %v4046, %v4045
        %v4075 = vpack.c.bf16 %v4048, %v4047
        %v4076 = vpack.c.bf16 %v4050, %v4049
        %v4077 = vpack.c.bf16 %v4052, %v4051
        %v4078 = vpack.c.bf16 %v4054, %v4053
        %v4079 = vpack.c.bf16 %v4056, %v4055
        %v4080 = vpack.c.bf16 %v4058, %v4057
        %v4081 = vpack.c.bf16 %v4060, %v4059
        %v4082 = vpack.c.bf16 %v4062, %v4061
        %v4083 = vpack.c.bf16 %v4064, %v4063
        %v4084 = vpack.c.bf16 %v4066, %v4065
        %s4085 = scalar_lea.vmem [#allocation8], 64
        %v4086 = vld [vmem:[%s4085] sm:$0xf]
        %v4087 = vld [vmem:[%s4085 + $0x4] sm:$0xf]
        %v4088 = vld [vmem:[%s4085 + $0x8] sm:$0xf]
        %v4089 = vld [vmem:[%s4085 + $0xc] sm:$0xf]
        %v4090 = vld [vmem:[%s4085 + $0x10] sm:$0xf]
        %v4091 = vld [vmem:[%s4085 + $0x14] sm:$0xf]
        %v4092 = vld [vmem:[%s4085 + $0x18] sm:$0xf]
        %v4093 = vld [vmem:[%s4085 + $0x1c] sm:$0xf]
        %v4094 = vld [vmem:[%s4085 + $0x20] sm:$0xf]
        %v4095 = vld [vmem:[%s4085 + $0x24] sm:$0xf]
        %v4096 = vld [vmem:[%s4085 + $0x28] sm:$0xf]
        %v4097 = vld [vmem:[%s4085 + $0x2c] sm:$0xf]
        %v4098 = vld [vmem:[%s4085 + $0x30] sm:$0xf]
        %v4099 = vld [vmem:[%s4085 + $0x34] sm:$0xf]
        %v4100 = vld [vmem:[%s4085 + $0x38] sm:$0xf]
        %v4101 = vld [vmem:[%s4085 + $0x3c] sm:$0xf]
        %v4118 = vunpack.c.l.b16 %v4086
        %v4119 = vunpack.c.l.b16 %v4087
        %v4120 = vunpack.c.l.b16 %v4088
        %v4121 = vunpack.c.l.b16 %v4089
        %v4122 = vunpack.c.l.b16 %v4090
        %v4123 = vunpack.c.l.b16 %v4091
        %v4124 = vunpack.c.l.b16 %v4092
        %v4125 = vunpack.c.l.b16 %v4093
        %v4126 = vunpack.c.l.b16 %v4094
        %v4127 = vunpack.c.l.b16 %v4095
        %v4128 = vunpack.c.l.b16 %v4096
        %v4129 = vunpack.c.l.b16 %v4097
        %v4130 = vunpack.c.l.b16 %v4098
        %v4131 = vunpack.c.l.b16 %v4099
        %v4132 = vunpack.c.l.b16 %v4100
        %v4133 = vunpack.c.l.b16 %v4101
        %v4134 = vpack.c.b16 %v4119, %v4118
        %v4135 = vpack.c.b16 %v4121, %v4120
        %v4136 = vpack.c.b16 %v4123, %v4122
        %v4137 = vpack.c.b16 %v4125, %v4124
        %v4138 = vpack.c.b16 %v4127, %v4126
        %v4139 = vpack.c.b16 %v4129, %v4128
        %v4140 = vpack.c.b16 %v4131, %v4130
        %v4141 = vpack.c.b16 %v4133, %v4132
        %4150 = vmatprep.subr.bf16.mxu0 0
        %4151 = vmatpush1.bf16.msra.mxu0 %v4134
        %4152 = vmatprep.subr.bf16.mxu0 0
        %4153 = vmatpush1.bf16.msra.mxu0 %v4135
        %4154 = vmatprep.subr.bf16.mxu0 0
        %4155 = vmatpush1.bf16.msra.mxu0 %v4136
        %4156 = vmatprep.subr.bf16.mxu0 0
        %4157 = vmatpush1.bf16.msra.mxu0 %v4137
        %4158 = vmatprep.subr.bf16.mxu0 0
        %4159 = vmatpush1.bf16.msra.mxu0 %v4138
        %4160 = vmatprep.subr.bf16.mxu0 0
        %4161 = vmatpush1.bf16.msra.mxu0 %v4139
        %4162 = vmatprep.subr.bf16.mxu0 0
        %4163 = vmatpush1.bf16.msra.mxu0 %v4140
        %4164 = vmatprep.subr.bf16.mxu0 0
        %4165 = vmatpush1.bf16.msra.mxu0 %v4141
        %4166 = vmatprep.subr.bf16.mxu0 0
        %4167 = vmatpush1.bf16.msra.mxu0 0
        %4168 = vmatprep.subr.bf16.mxu0 0
        %4169 = vmatpush1.bf16.msra.mxu0 0
        %4170 = vmatprep.subr.bf16.mxu0 0
        %4171 = vmatpush1.bf16.msra.mxu0 0
        %4172 = vmatprep.subr.bf16.mxu0 0
        %4173 = vmatpush1.bf16.msra.mxu0 0
        %4174 = vmatprep.subr.bf16.mxu0 0
        %4175 = vmatpush1.bf16.msra.mxu0 0
        %4176 = vmatprep.subr.bf16.mxu0 0
        %4177 = vmatpush1.bf16.msra.mxu0 0
        %4178 = vmatprep.subr.bf16.mxu0 0
        %4179 = vmatpush1.bf16.msra.mxu0 0
        %4180 = vmatprep.subr.bf16.mxu0 0
        %4181 = vmatpush1.bf16.msra.mxu0 0
        %4182 = vmatprep.mubr.bf16.mxu0 0
        %4183 = vmatmul.mubr.bf16.gmra.mrb[0].mxu0 %v4067
        %v4184 = vpop.f32.mrb[0].mxu0
        %v4185 = vadd.f32 0.0, %v4184
        %v4186 = vpop.f32.mrb[0].mxu0
        %v4187 = vpop.f32.mrb[0].mxu0
        %v4188 = vadd.f32 0.0, %v4187
        %v4189 = vpop.f32.mrb[0].mxu0
        %4190 = vmatprep.mubr.bf16.mxu0 0
        %4191 = vmatmul.mubr.bf16.gmra.mrb[0].mxu0 %v4068
        %v4192 = vpop.f32.mrb[0].mxu0
        %v4193 = vadd.f32 0.0, %v4192
        %v4194 = vpop.f32.mrb[0].mxu0
        %v4195 = vpop.f32.mrb[0].mxu0
        %v4196 = vadd.f32 0.0, %v4195
        %v4197 = vpop.f32.mrb[0].mxu0
        %4198 = vmatprep.mubr.bf16.mxu0 0
        %4199 = vmatmul.mubr.bf16.gmra.mrb[0].mxu0 %v4069
        %v4200 = vpop.f32.mrb[0].mxu0
        %v4201 = vadd.f32 0.0, %v4200
        %v4202 = vpop.f32.mrb[0].mxu0
        %v4203 = vpop.f32.mrb[0].mxu0
        %v4204 = vadd.f32 0.0, %v4203
        %v4205 = vpop.f32.mrb[0].mxu0
        %4206 = vmatprep.mubr.bf16.mxu0 0
        %4207 = vmatmul.mubr.bf16.gmra.mrb[0].mxu0 %v4070
        %v4208 = vpop.f32.mrb[0].mxu0
        %v4209 = vadd.f32 0.0, %v4208
        %v4210 = vpop.f32.mrb[0].mxu0
        %v4211 = vpop.f32.mrb[0].mxu0
        %v4212 = vadd.f32 0.0, %v4211
        %v4213 = vpop.f32.mrb[0].mxu0
        %4214 = vmatprep.mubr.bf16.mxu0 0
        %4215 = vmatmul.mubr.bf16.gmra.mrb[0].mxu0 %v4071
        %v4216 = vpop.f32.mrb[0].mxu0
        %v4217 = vadd.f32 0.0, %v4216
        %v4218 = vpop.f32.mrb[0].mxu0
        %v4219 = vpop.f32.mrb[0].mxu0
        %v4220 = vadd.f32 0.0, %v4219
        %v4221 = vpop.f32.mrb[0].mxu0
        %4222 = vmatprep.mubr.bf16.mxu0 0
        %4223 = vmatmul.mubr.bf16.gmra.mrb[0].mxu0 %v4072
        %v4224 = vpop.f32.mrb[0].mxu0
        %v4225 = vadd.f32 0.0, %v4224
        %v4226 = vpop.f32.mrb[0].mxu0
        %v4227 = vpop.f32.mrb[0].mxu0
        %v4228 = vadd.f32 0.0, %v4227
        %v4229 = vpop.f32.mrb[0].mxu0
        %4230 = vmatprep.mubr.bf16.mxu0 0
        %4231 = vmatmul.mubr.bf16.gmra.mrb[0].mxu0 %v4073
        %v4232 = vpop.f32.mrb[0].mxu0
        %v4233 = vadd.f32 0.0, %v4232
        %v4234 = vpop.f32.mrb[0].mxu0
        %v4235 = vpop.f32.mrb[0].mxu0
        %v4236 = vadd.f32 0.0, %v4235
        %v4237 = vpop.f32.mrb[0].mxu0
        %4238 = vmatprep.mubr.bf16.mxu0 0
        %4239 = vmatmul.mubr.bf16.gmra.mrb[0].mxu0 %v4074
        %v4240 = vpop.f32.mrb[0].mxu0
        %v4241 = vadd.f32 0.0, %v4240
        %v4242 = vpop.f32.mrb[0].mxu0
        %v4243 = vpop.f32.mrb[0].mxu0
        %v4244 = vadd.f32 0.0, %v4243
        %v4245 = vpop.f32.mrb[0].mxu0
        %4246 = vmatprep.mubr.bf16.mxu0 0
        %4247 = vmatmul.mubr.bf16.gmra.mrb[0].mxu0 %v4075
        %v4248 = vpop.f32.mrb[0].mxu0
        %v4249 = vadd.f32 0.0, %v4248
        %v4250 = vpop.f32.mrb[0].mxu0
        %v4251 = vpop.f32.mrb[0].mxu0
        %v4252 = vadd.f32 0.0, %v4251
        %v4253 = vpop.f32.mrb[0].mxu0
        %4254 = vmatprep.mubr.bf16.mxu0 0
        %4255 = vmatmul.mubr.bf16.gmra.mrb[0].mxu0 %v4076
        %v4256 = vpop.f32.mrb[0].mxu0
        %v4257 = vadd.f32 0.0, %v4256
        %v4258 = vpop.f32.mrb[0].mxu0
        %v4259 = vpop.f32.mrb[0].mxu0
        %v4260 = vadd.f32 0.0, %v4259
        %v4261 = vpop.f32.mrb[0].mxu0
        %4262 = vmatprep.mubr.bf16.mxu0 0
        %4263 = vmatmul.mubr.bf16.gmra.mrb[0].mxu0 %v4077
        %v4264 = vpop.f32.mrb[0].mxu0
        %v4265 = vadd.f32 0.0, %v4264
        %v4266 = vpop.f32.mrb[0].mxu0
        %v4267 = vpop.f32.mrb[0].mxu0
        %v4268 = vadd.f32 0.0, %v4267
        %v4269 = vpop.f32.mrb[0].mxu0
        %4270 = vmatprep.mubr.bf16.mxu0 0
        %4271 = vmatmul.mubr.bf16.gmra.mrb[0].mxu0 %v4078
        %v4272 = vpop.f32.mrb[0].mxu0
        %v4273 = vadd.f32 0.0, %v4272
        %v4274 = vpop.f32.mrb[0].mxu0
        %v4275 = vpop.f32.mrb[0].mxu0
        %v4276 = vadd.f32 0.0, %v4275
        %v4277 = vpop.f32.mrb[0].mxu0
        %4278 = vmatprep.mubr.bf16.mxu0 0
        %4279 = vmatmul.mubr.bf16.gmra.mrb[0].mxu0 %v4079
        %v4280 = vpop.f32.mrb[0].mxu0
        %v4281 = vadd.f32 0.0, %v4280
        %v4282 = vpop.f32.mrb[0].mxu0
        %v4283 = vpop.f32.mrb[0].mxu0
        %v4284 = vadd.f32 0.0, %v4283
        %v4285 = vpop.f32.mrb[0].mxu0
        %4286 = vmatprep.mubr.bf16.mxu0 0
        %4287 = vmatmul.mubr.bf16.gmra.mrb[0].mxu0 %v4080
        %v4288 = vpop.f32.mrb[0].mxu0
        %v4289 = vadd.f32 0.0, %v4288
        %v4290 = vpop.f32.mrb[0].mxu0
        %v4291 = vpop.f32.mrb[0].mxu0
        %v4292 = vadd.f32 0.0, %v4291
        %v4293 = vpop.f32.mrb[0].mxu0
        %4294 = vmatprep.mubr.bf16.mxu0 0
        %4295 = vmatmul.mubr.bf16.gmra.mrb[0].mxu0 %v4081
        %v4296 = vpop.f32.mrb[0].mxu0
        %v4297 = vadd.f32 0.0, %v4296
        %v4298 = vpop.f32.mrb[0].mxu0
        %v4299 = vpop.f32.mrb[0].mxu0
        %v4300 = vadd.f32 0.0, %v4299
        %v4301 = vpop.f32.mrb[0].mxu0
        %4302 = vmatprep.mubr.bf16.mxu0 0
        %4303 = vmatmul.mubr.bf16.gmra.mrb[0].mxu0 %v4082
        %v4304 = vpop.f32.mrb[0].mxu0
        %v4305 = vadd.f32 0.0, %v4304
        %v4306 = vpop.f32.mrb[0].mxu0
        %v4307 = vpop.f32.mrb[0].mxu0
        %v4308 = vadd.f32 0.0, %v4307
        %v4309 = vpop.f32.mrb[0].mxu0
        %4310 = vdwg.mxu0
        %v4311 = vadd.f32 %v3999, %v4185
        %v4312 = vadd.f32 %v4000, %v4188
        %v4313 = vadd.f32 %v4001, %v4193
        %v4314 = vadd.f32 %v4002, %v4196
        %v4315 = vadd.f32 %v4003, %v4201
        %v4316 = vadd.f32 %v4004, %v4204
        %v4317 = vadd.f32 %v4005, %v4209
        %v4318 = vadd.f32 %v4006, %v4212
        %v4319 = vadd.f32 %v4007, %v4217
        %v4320 = vadd.f32 %v4008, %v4220
        %v4321 = vadd.f32 %v4009, %v4225
        %v4322 = vadd.f32 %v4010, %v4228
        %v4323 = vadd.f32 %v4011, %v4233
        %v4324 = vadd.f32 %v4012, %v4236
        %v4325 = vadd.f32 %v4013, %v4241
        %v4326 = vadd.f32 %v4014, %v4244
        %v4327 = vadd.f32 %v4015, %v4249
        %v4328 = vadd.f32 %v4016, %v4252
        %v4329 = vadd.f32 %v4017, %v4257
        %v4330 = vadd.f32 %v4018, %v4260
        %v4331 = vadd.f32 %v4019, %v4265
        %v4332 = vadd.f32 %v4020, %v4268
        %v4333 = vadd.f32 %v4021, %v4273
        %v4334 = vadd.f32 %v4022, %v4276
        %v4335 = vadd.f32 %v4023, %v4281
        %v4336 = vadd.f32 %v4024, %v4284
        %v4337 = vadd.f32 %v4025, %v4289
        %v4338 = vadd.f32 %v4026, %v4292
        %v4339 = vadd.f32 %v4027, %v4297
        %v4340 = vadd.f32 %v4028, %v4300
        %v4341 = vadd.f32 %v4029, %v4305
        %v4342 = vadd.f32 %v4030, %v4308
        %s4343 = scalar_lea.vmem [#allocation8], 256
        %v4344 = vld [vmem:[%s4343] sm:$0xf]
        %v4345 = vld [vmem:[%s4343 + $0x4] sm:$0xf]
        %v4346 = vld [vmem:[%s4343 + $0x8] sm:$0xf]
        %v4347 = vld [vmem:[%s4343 + $0xc] sm:$0xf]
        %v4348 = vld [vmem:[%s4343 + $0x10] sm:$0xf]
        %v4349 = vld [vmem:[%s4343 + $0x14] sm:$0xf]
        %v4350 = vld [vmem:[%s4343 + $0x18] sm:$0xf]
        %v4351 = vld [vmem:[%s4343 + $0x1c] sm:$0xf]
        %v4352 = vld [vmem:[%s4343 + $0x20] sm:$0xf]
        %v4353 = vld [vmem:[%s4343 + $0x24] sm:$0xf]
        %v4354 = vld [vmem:[%s4343 + $0x28] sm:$0xf]
        %v4355 = vld [vmem:[%s4343 + $0x2c] sm:$0xf]
        %v4356 = vld [vmem:[%s4343 + $0x30] sm:$0xf]
        %v4357 = vld [vmem:[%s4343 + $0x34] sm:$0xf]
        %v4358 = vld [vmem:[%s4343 + $0x38] sm:$0xf]
        %v4359 = vld [vmem:[%s4343 + $0x3c] sm:$0xf]
        %v4376 = vunpack.c.l.b16 %v4344
        %v4377 = vunpack.c.l.b16 %v4345
        %v4378 = vunpack.c.l.b16 %v4346
        %v4379 = vunpack.c.l.b16 %v4347
        %v4380 = vunpack.c.l.b16 %v4348
        %v4381 = vunpack.c.l.b16 %v4349
        %v4382 = vunpack.c.l.b16 %v4350
        %v4383 = vunpack.c.l.b16 %v4351
        %v4384 = vunpack.c.l.b16 %v4352
        %v4385 = vunpack.c.l.b16 %v4353
        %v4386 = vunpack.c.l.b16 %v4354
        %v4387 = vunpack.c.l.b16 %v4355
        %v4388 = vunpack.c.l.b16 %v4356
        %v4389 = vunpack.c.l.b16 %v4357
        %v4390 = vunpack.c.l.b16 %v4358
        %v4391 = vunpack.c.l.b16 %v4359
        %v4392 = vpack.c.b16 %v4377, %v4376
        %v4393 = vpack.c.b16 %v4379, %v4378
        %v4394 = vpack.c.b16 %v4381, %v4380
        %v4395 = vpack.c.b16 %v4383, %v4382
        %v4396 = vpack.c.b16 %v4385, %v4384
        %v4397 = vpack.c.b16 %v4387, %v4386
        %v4398 = vpack.c.b16 %v4389, %v4388
        %v4399 = vpack.c.b16 %v4391, %v4390
        %4408 = vmatprep.subr.bf16.mxu0 0
        %4409 = vmatpush1.bf16.msra.mxu0 %v4392
        %4410 = vmatprep.subr.bf16.mxu0 0
        %4411 = vmatpush1.bf16.msra.mxu0 %v4393
        %4412 = vmatprep.subr.bf16.mxu0 0
        %4413 = vmatpush1.bf16.msra.mxu0 %v4394
        %4414 = vmatprep.subr.bf16.mxu0 0
        %4415 = vmatpush1.bf16.msra.mxu0 %v4395
        %4416 = vmatprep.subr.bf16.mxu0 0
        %4417 = vmatpush1.bf16.msra.mxu0 %v4396
        %4418 = vmatprep.subr.bf16.mxu0 0
        %4419 = vmatpush1.bf16.msra.mxu0 %v4397
        %4420 = vmatprep.subr.bf16.mxu0 0
        %4421 = vmatpush1.bf16.msra.mxu0 %v4398
        %4422 = vmatprep.subr.bf16.mxu0 0
        %4423 = vmatpush1.bf16.msra.mxu0 %v4399
        %4424 = vmatprep.subr.bf16.mxu0 0
        %4425 = vmatpush1.bf16.msra.mxu0 0
        %4426 = vmatprep.subr.bf16.mxu0 0
        %4427 = vmatpush1.bf16.msra.mxu0 0
        %4428 = vmatprep.subr.bf16.mxu0 0
        %4429 = vmatpush1.bf16.msra.mxu0 0
        %4430 = vmatprep.subr.bf16.mxu0 0
        %4431 = vmatpush1.bf16.msra.mxu0 0
        %4432 = vmatprep.subr.bf16.mxu0 0
        %4433 = vmatpush1.bf16.msra.mxu0 0
        %4434 = vmatprep.subr.bf16.mxu0 0
        %4435 = vmatpush1.bf16.msra.mxu0 0
        %4436 = vmatprep.subr.bf16.mxu0 0
        %4437 = vmatpush1.bf16.msra.mxu0 0
        %4438 = vmatprep.subr.bf16.mxu0 0
        %4439 = vmatpush1.bf16.msra.mxu0 0
        %4440 = vmatprep.mubr.bf16.mxu0 0
        %4441 = vmatmul.mubr.bf16.gmra.mrb[0].mxu0 %v4068
        %v4442 = vpop.f32.mrb[0].mxu0
        %v4443 = vadd.f32 0.0, %v4442
        %v4444 = vpop.f32.mrb[0].mxu0
        %v4445 = vpop.f32.mrb[0].mxu0
        %v4446 = vadd.f32 0.0, %v4445
        %v4447 = vpop.f32.mrb[0].mxu0
        %4448 = vmatprep.mubr.bf16.mxu0 0
        %4449 = vmatmul.mubr.bf16.gmra.mrb[0].mxu0 %v4069
        %v4450 = vpop.f32.mrb[0].mxu0
        %v4451 = vadd.f32 0.0, %v4450
        %v4452 = vpop.f32.mrb[0].mxu0
        %v4453 = vpop.f32.mrb[0].mxu0
        %v4454 = vadd.f32 0.0, %v4453
        %v4455 = vpop.f32.mrb[0].mxu0
        %4456 = vmatprep.mubr.bf16.mxu0 0
        %4457 = vmatmul.mubr.bf16.gmra.mrb[0].mxu0 %v4070
        %v4458 = vpop.f32.mrb[0].mxu0
        %v4459 = vadd.f32 0.0, %v4458
        %v4460 = vpop.f32.mrb[0].mxu0
        %v4461 = vpop.f32.mrb[0].mxu0
        %v4462 = vadd.f32 0.0, %v4461
        %v4463 = vpop.f32.mrb[0].mxu0
        %4464 = vmatprep.mubr.bf16.mxu0 0
        %4465 = vmatmul.mubr.bf16.gmra.mrb[0].mxu0 %v4071
        %v4466 = vpop.f32.mrb[0].mxu0
        %v4467 = vadd.f32 0.0, %v4466
        %v4468 = vpop.f32.mrb[0].mxu0
        %v4469 = vpop.f32.mrb[0].mxu0
        %v4470 = vadd.f32 0.0, %v4469
        %v4471 = vpop.f32.mrb[0].mxu0
        %4472 = vmatprep.mubr.bf16.mxu0 0
        %4473 = vmatmul.mubr.bf16.gmra.mrb[0].mxu0 %v4072
        %v4474 = vpop.f32.mrb[0].mxu0
        %v4475 = vadd.f32 0.0, %v4474
        %v4476 = vpop.f32.mrb[0].mxu0
        %v4477 = vpop.f32.mrb[0].mxu0
        %v4478 = vadd.f32 0.0, %v4477
        %v4479 = vpop.f32.mrb[0].mxu0
        %4480 = vmatprep.mubr.bf16.mxu0 0
        %4481 = vmatmul.mubr.bf16.gmra.mrb[0].mxu0 %v4073
        %v4482 = vpop.f32.mrb[0].mxu0
        %v4483 = vadd.f32 0.0, %v4482
        %v4484 = vpop.f32.mrb[0].mxu0
        %v4485 = vpop.f32.mrb[0].mxu0
        %v4486 = vadd.f32 0.0, %v4485
        %v4487 = vpop.f32.mrb[0].mxu0
        %4488 = vmatprep.mubr.bf16.mxu0 0
        %4489 = vmatmul.mubr.bf16.gmra.mrb[0].mxu0 %v4074
        %v4490 = vpop.f32.mrb[0].mxu0
        %v4491 = vadd.f32 0.0, %v4490
        %v4492 = vpop.f32.mrb[0].mxu0
        %v4493 = vpop.f32.mrb[0].mxu0
        %v4494 = vadd.f32 0.0, %v4493
        %v4495 = vpop.f32.mrb[0].mxu0
        %4496 = vmatprep.mubr.bf16.mxu0 0
        %4497 = vmatmul.mubr.bf16.gmra.mrb[0].mxu0 %v4075
        %v4498 = vpop.f32.mrb[0].mxu0
        %v4499 = vadd.f32 0.0, %v4498
        %v4500 = vpop.f32.mrb[0].mxu0
        %v4501 = vpop.f32.mrb[0].mxu0
        %v4502 = vadd.f32 0.0, %v4501
        %v4503 = vpop.f32.mrb[0].mxu0
        %4504 = vmatprep.mubr.bf16.mxu0 0
        %4505 = vmatmul.mubr.bf16.gmra.mrb[0].mxu0 %v4076
        %v4506 = vpop.f32.mrb[0].mxu0
        %v4507 = vadd.f32 0.0, %v4506
        %v4508 = vpop.f32.mrb[0].mxu0
        %v4509 = vpop.f32.mrb[0].mxu0
        %v4510 = vadd.f32 0.0, %v4509
        %v4511 = vpop.f32.mrb[0].mxu0
        %4512 = vmatprep.mubr.bf16.mxu0 0
        %4513 = vmatmul.mubr.bf16.gmra.mrb[0].mxu0 %v4077
        %v4514 = vpop.f32.mrb[0].mxu0
        %v4515 = vadd.f32 0.0, %v4514
        %v4516 = vpop.f32.mrb[0].mxu0
        %v4517 = vpop.f32.mrb[0].mxu0
        %v4518 = vadd.f32 0.0, %v4517
        %v4519 = vpop.f32.mrb[0].mxu0
        %4520 = vmatprep.mubr.bf16.mxu0 0
        %4521 = vmatmul.mubr.bf16.gmra.mrb[0].mxu0 %v4078
        %v4522 = vpop.f32.mrb[0].mxu0
        %v4523 = vadd.f32 0.0, %v4522
        %v4524 = vpop.f32.mrb[0].mxu0
        %v4525 = vpop.f32.mrb[0].mxu0
        %v4526 = vadd.f32 0.0, %v4525
        %v4527 = vpop.f32.mrb[0].mxu0
        %4528 = vmatprep.mubr.bf16.mxu0 0
        %4529 = vmatmul.mubr.bf16.gmra.mrb[0].mxu0 %v4079
        %v4530 = vpop.f32.mrb[0].mxu0
        %v4531 = vadd.f32 0.0, %v4530
        %v4532 = vpop.f32.mrb[0].mxu0
        %v4533 = vpop.f32.mrb[0].mxu0
        %v4534 = vadd.f32 0.0, %v4533
        %v4535 = vpop.f32.mrb[0].mxu0
        %4536 = vmatprep.mubr.bf16.mxu0 0
        %4537 = vmatmul.mubr.bf16.gmra.mrb[0].mxu0 %v4080
        %v4538 = vpop.f32.mrb[0].mxu0
        %v4539 = vadd.f32 0.0, %v4538
        %v4540 = vpop.f32.mrb[0].mxu0
        %v4541 = vpop.f32.mrb[0].mxu0
        %v4542 = vadd.f32 0.0, %v4541
        %v4543 = vpop.f32.mrb[0].mxu0
        %4544 = vmatprep.mubr.bf16.mxu0 0
        %4545 = vmatmul.mubr.bf16.gmra.mrb[0].mxu0 %v4081
        %v4546 = vpop.f32.mrb[0].mxu0
        %v4547 = vadd.f32 0.0, %v4546
        %v4548 = vpop.f32.mrb[0].mxu0
        %v4549 = vpop.f32.mrb[0].mxu0
        %v4550 = vadd.f32 0.0, %v4549
        %v4551 = vpop.f32.mrb[0].mxu0
        %4552 = vmatprep.mubr.bf16.mxu0 0
        %4553 = vmatmul.mubr.bf16.gmra.mrb[0].mxu0 %v4082
        %v4554 = vpop.f32.mrb[0].mxu0
        %v4555 = vadd.f32 0.0, %v4554
        %v4556 = vpop.f32.mrb[0].mxu0
        %v4557 = vpop.f32.mrb[0].mxu0
        %v4558 = vadd.f32 0.0, %v4557
        %v4559 = vpop.f32.mrb[0].mxu0
        %4560 = vmatprep.mubr.bf16.mxu0 0
        %4561 = vmatmul.mubr.bf16.gmra.mrb[0].mxu0 %v4083
        %v4562 = vpop.f32.mrb[0].mxu0
        %v4563 = vadd.f32 0.0, %v4562
        %v4564 = vpop.f32.mrb[0].mxu0
        %v4565 = vpop.f32.mrb[0].mxu0
        %v4566 = vadd.f32 0.0, %v4565
        %v4567 = vpop.f32.mrb[0].mxu0
        %4568 = vdwg.mxu0
        %v4569 = vadd.f32 %v4311, %v4443
        %v4570 = vadd.f32 %v4312, %v4446
        %v4571 = vadd.f32 %v4313, %v4451
        %v4572 = vadd.f32 %v4314, %v4454
        %v4573 = vadd.f32 %v4315, %v4459
        %v4574 = vadd.f32 %v4316, %v4462
        %v4575 = vadd.f32 %v4317, %v4467
        %v4576 = vadd.f32 %v4318, %v4470
        %v4577 = vadd.f32 %v4319, %v4475
        %v4578 = vadd.f32 %v4320, %v4478
        %v4579 = vadd.f32 %v4321, %v4483
        %v4580 = vadd.f32 %v4322, %v4486
        %v4581 = vadd.f32 %v4323, %v4491
        %v4582 = vadd.f32 %v4324, %v4494
        %v4583 = vadd.f32 %v4325, %v4499
        %v4584 = vadd.f32 %v4326, %v4502
        %v4585 = vadd.f32 %v4327, %v4507
        %v4586 = vadd.f32 %v4328, %v4510
        %v4587 = vadd.f32 %v4329, %v4515
        %v4588 = vadd.f32 %v4330, %v4518
        %v4589 = vadd.f32 %v4331, %v4523
        %v4590 = vadd.f32 %v4332, %v4526
        %v4591 = vadd.f32 %v4333, %v4531
        %v4592 = vadd.f32 %v4334, %v4534
        %v4593 = vadd.f32 %v4335, %v4539
        %v4594 = vadd.f32 %v4336, %v4542
        %v4595 = vadd.f32 %v4337, %v4547
        %v4596 = vadd.f32 %v4338, %v4550
        %v4597 = vadd.f32 %v4339, %v4555
        %v4598 = vadd.f32 %v4340, %v4558
        %v4599 = vadd.f32 %v4341, %v4563
        %v4600 = vadd.f32 %v4342, %v4566
        %s4601 = scalar_lea.vmem [#allocation8], 448
        %v4602 = vld [vmem:[%s4601] sm:$0xf]
        %v4603 = vld [vmem:[%s4601 + $0x4] sm:$0xf]
        %v4604 = vld [vmem:[%s4601 + $0x8] sm:$0xf]
        %v4605 = vld [vmem:[%s4601 + $0xc] sm:$0xf]
        %v4606 = vld [vmem:[%s4601 + $0x10] sm:$0xf]
        %v4607 = vld [vmem:[%s4601 + $0x14] sm:$0xf]
        %v4608 = vld [vmem:[%s4601 + $0x18] sm:$0xf]
        %v4609 = vld [vmem:[%s4601 + $0x1c] sm:$0xf]
        %v4610 = vld [vmem:[%s4601 + $0x20] sm:$0xf]
        %v4611 = vld [vmem:[%s4601 + $0x24] sm:$0xf]
        %v4612 = vld [vmem:[%s4601 + $0x28] sm:$0xf]
        %v4613 = vld [vmem:[%s4601 + $0x2c] sm:$0xf]
        %v4614 = vld [vmem:[%s4601 + $0x30] sm:$0xf]
        %v4615 = vld [vmem:[%s4601 + $0x34] sm:$0xf]
        %v4616 = vld [vmem:[%s4601 + $0x38] sm:$0xf]
        %v4617 = vld [vmem:[%s4601 + $0x3c] sm:$0xf]
        %v4634 = vunpack.c.l.b16 %v4602
        %v4635 = vunpack.c.l.b16 %v4603
        %v4636 = vunpack.c.l.b16 %v4604
        %v4637 = vunpack.c.l.b16 %v4605
        %v4638 = vunpack.c.l.b16 %v4606
        %v4639 = vunpack.c.l.b16 %v4607
        %v4640 = vunpack.c.l.b16 %v4608
        %v4641 = vunpack.c.l.b16 %v4609
        %v4642 = vunpack.c.l.b16 %v4610
        %v4643 = vunpack.c.l.b16 %v4611
        %v4644 = vunpack.c.l.b16 %v4612
        %v4645 = vunpack.c.l.b16 %v4613
        %v4646 = vunpack.c.l.b16 %v4614
        %v4647 = vunpack.c.l.b16 %v4615
        %v4648 = vunpack.c.l.b16 %v4616
        %v4649 = vunpack.c.l.b16 %v4617
        %v4650 = vpack.c.b16 %v4635, %v4634
        %v4651 = vpack.c.b16 %v4637, %v4636
        %v4652 = vpack.c.b16 %v4639, %v4638
        %v4653 = vpack.c.b16 %v4641, %v4640
        %v4654 = vpack.c.b16 %v4643, %v4642
        %v4655 = vpack.c.b16 %v4645, %v4644
        %v4656 = vpack.c.b16 %v4647, %v4646
        %v4657 = vpack.c.b16 %v4649, %v4648
        %4666 = vmatprep.subr.bf16.mxu0 0
        %4667 = vmatpush1.bf16.msra.mxu0 %v4650
        %4668 = vmatprep.subr.bf16.mxu0 0
        %4669 = vmatpush1.bf16.msra.mxu0 %v4651
        %4670 = vmatprep.subr.bf16.mxu0 0
        %4671 = vmatpush1.bf16.msra.mxu0 %v4652
        %4672 = vmatprep.subr.bf16.mxu0 0
        %4673 = vmatpush1.bf16.msra.mxu0 %v4653
        %4674 = vmatprep.subr.bf16.mxu0 0
        %4675 = vmatpush1.bf16.msra.mxu0 %v4654
        %4676 = vmatprep.subr.bf16.mxu0 0
        %4677 = vmatpush1.bf16.msra.mxu0 %v4655
        %4678 = vmatprep.subr.bf16.mxu0 0
        %4679 = vmatpush1.bf16.msra.mxu0 %v4656
        %4680 = vmatprep.subr.bf16.mxu0 0
        %4681 = vmatpush1.bf16.msra.mxu0 %v4657
        %4682 = vmatprep.subr.bf16.mxu0 0
        %4683 = vmatpush1.bf16.msra.mxu0 0
        %4684 = vmatprep.subr.bf16.mxu0 0
        %4685 = vmatpush1.bf16.msra.mxu0 0
        %4686 = vmatprep.subr.bf16.mxu0 0
        %4687 = vmatpush1.bf16.msra.mxu0 0
        %4688 = vmatprep.subr.bf16.mxu0 0
        %4689 = vmatpush1.bf16.msra.mxu0 0
        %4690 = vmatprep.subr.bf16.mxu0 0
        %4691 = vmatpush1.bf16.msra.mxu0 0
        %4692 = vmatprep.subr.bf16.mxu0 0
        %4693 = vmatpush1.bf16.msra.mxu0 0
        %4694 = vmatprep.subr.bf16.mxu0 0
        %4695 = vmatpush1.bf16.msra.mxu0 0
        %4696 = vmatprep.subr.bf16.mxu0 0
        %4697 = vmatpush1.bf16.msra.mxu0 0
        %4698 = vmatprep.mubr.bf16.mxu0 0
        %4699 = vmatmul.mubr.bf16.gmra.mrb[0].mxu0 %v4069
        %v4700 = vpop.f32.mrb[0].mxu0
        %v4701 = vadd.f32 0.0, %v4700
        %v4702 = vpop.f32.mrb[0].mxu0
        %v4703 = vpop.f32.mrb[0].mxu0
        %v4704 = vadd.f32 0.0, %v4703
        %v4705 = vpop.f32.mrb[0].mxu0
        %4706 = vmatprep.mubr.bf16.mxu0 0
        %4707 = vmatmul.mubr.bf16.gmra.mrb[0].mxu0 %v4070
        %v4708 = vpop.f32.mrb[0].mxu0
        %v4709 = vadd.f32 0.0, %v4708
        %v4710 = vpop.f32.mrb[0].mxu0
        %v4711 = vpop.f32.mrb[0].mxu0
        %v4712 = vadd.f32 0.0, %v4711
        %v4713 = vpop.f32.mrb[0].mxu0
        %4714 = vmatprep.mubr.bf16.mxu0 0
        %4715 = vmatmul.mubr.bf16.gmra.mrb[0].mxu0 %v4071
        %v4716 = vpop.f32.mrb[0].mxu0
        %v4717 = vadd.f32 0.0, %v4716
        %v4718 = vpop.f32.mrb[0].mxu0
        %v4719 = vpop.f32.mrb[0].mxu0
        %v4720 = vadd.f32 0.0, %v4719
        %v4721 = vpop.f32.mrb[0].mxu0
        %4722 = vmatprep.mubr.bf16.mxu0 0
        %4723 = vmatmul.mubr.bf16.gmra.mrb[0].mxu0 %v4072
        %v4724 = vpop.f32.mrb[0].mxu0
        %v4725 = vadd.f32 0.0, %v4724
        %v4726 = vpop.f32.mrb[0].mxu0
        %v4727 = vpop.f32.mrb[0].mxu0
        %v4728 = vadd.f32 0.0, %v4727
        %v4729 = vpop.f32.mrb[0].mxu0
        %4730 = vmatprep.mubr.bf16.mxu0 0
        %4731 = vmatmul.mubr.bf16.gmra.mrb[0].mxu0 %v4073
        %v4732 = vpop.f32.mrb[0].mxu0
        %v4733 = vadd.f32 0.0, %v4732
        %v4734 = vpop.f32.mrb[0].mxu0
        %v4735 = vpop.f32.mrb[0].mxu0
        %v4736 = vadd.f32 0.0, %v4735
        %v4737 = vpop.f32.mrb[0].mxu0
        %4738 = vmatprep.mubr.bf16.mxu0 0
        %4739 = vmatmul.mubr.bf16.gmra.mrb[0].mxu0 %v4074
        %v4740 = vpop.f32.mrb[0].mxu0
        %v4741 = vadd.f32 0.0, %v4740
        %v4742 = vpop.f32.mrb[0].mxu0
        %v4743 = vpop.f32.mrb[0].mxu0
        %v4744 = vadd.f32 0.0, %v4743
        %v4745 = vpop.f32.mrb[0].mxu0
        %4746 = vmatprep.mubr.bf16.mxu0 0
        %4747 = vmatmul.mubr.bf16.gmra.mrb[0].mxu0 %v4075
        %v4748 = vpop.f32.mrb[0].mxu0
        %v4749 = vadd.f32 0.0, %v4748
        %v4750 = vpop.f32.mrb[0].mxu0
        %v4751 = vpop.f32.mrb[0].mxu0
        %v4752 = vadd.f32 0.0, %v4751
        %v4753 = vpop.f32.mrb[0].mxu0
        %4754 = vmatprep.mubr.bf16.mxu0 0
        %4755 = vmatmul.mubr.bf16.gmra.mrb[0].mxu0 %v4076
        %v4756 = vpop.f32.mrb[0].mxu0
        %v4757 = vadd.f32 0.0, %v4756
        %v4758 = vpop.f32.mrb[0].mxu0
        %v4759 = vpop.f32.mrb[0].mxu0
        %v4760 = vadd.f32 0.0, %v4759
        %v4761 = vpop.f32.mrb[0].mxu0
        %4762 = vmatprep.mubr.bf16.mxu0 0
        %4763 = vmatmul.mubr.bf16.gmra.mrb[0].mxu0 %v4077
        %v4764 = vpop.f32.mrb[0].mxu0
        %v4765 = vadd.f32 0.0, %v4764
        %v4766 = vpop.f32.mrb[0].mxu0
        %v4767 = vpop.f32.mrb[0].mxu0
        %v4768 = vadd.f32 0.0, %v4767
        %v4769 = vpop.f32.mrb[0].mxu0
        %4770 = vmatprep.mubr.bf16.mxu0 0
        %4771 = vmatmul.mubr.bf16.gmra.mrb[0].mxu0 %v4078
        %v4772 = vpop.f32.mrb[0].mxu0
        %v4773 = vadd.f32 0.0, %v4772
        %v4774 = vpop.f32.mrb[0].mxu0
        %v4775 = vpop.f32.mrb[0].mxu0
        %v4776 = vadd.f32 0.0, %v4775
        %v4777 = vpop.f32.mrb[0].mxu0
        %4778 = vmatprep.mubr.bf16.mxu0 0
        %4779 = vmatmul.mubr.bf16.gmra.mrb[0].mxu0 %v4079
        %v4780 = vpop.f32.mrb[0].mxu0
        %v4781 = vadd.f32 0.0, %v4780
        %v4782 = vpop.f32.mrb[0].mxu0
        %v4783 = vpop.f32.mrb[0].mxu0
        %v4784 = vadd.f32 0.0, %v4783
        %v4785 = vpop.f32.mrb[0].mxu0
        %4786 = vmatprep.mubr.bf16.mxu0 0
        %4787 = vmatmul.mubr.bf16.gmra.mrb[0].mxu0 %v4080
        %v4788 = vpop.f32.mrb[0].mxu0
        %v4789 = vadd.f32 0.0, %v4788
        %v4790 = vpop.f32.mrb[0].mxu0
        %v4791 = vpop.f32.mrb[0].mxu0
        %v4792 = vadd.f32 0.0, %v4791
        %v4793 = vpop.f32.mrb[0].mxu0
        %4794 = vmatprep.mubr.bf16.mxu0 0
        %4795 = vmatmul.mubr.bf16.gmra.mrb[0].mxu0 %v4081
        %v4796 = vpop.f32.mrb[0].mxu0
        %v4797 = vadd.f32 0.0, %v4796
        %v4798 = vpop.f32.mrb[0].mxu0
        %v4799 = vpop.f32.mrb[0].mxu0
        %v4800 = vadd.f32 0.0, %v4799
        %v4801 = vpop.f32.mrb[0].mxu0
        %4802 = vmatprep.mubr.bf16.mxu0 0
        %4803 = vmatmul.mubr.bf16.gmra.mrb[0].mxu0 %v4082
        %v4804 = vpop.f32.mrb[0].mxu0
        %v4805 = vadd.f32 0.0, %v4804
        %v4806 = vpop.f32.mrb[0].mxu0
        %v4807 = vpop.f32.mrb[0].mxu0
        %v4808 = vadd.f32 0.0, %v4807
        %v4809 = vpop.f32.mrb[0].mxu0
        %4810 = vmatprep.mubr.bf16.mxu0 0
        %4811 = vmatmul.mubr.bf16.gmra.mrb[0].mxu0 %v4083
        %v4812 = vpop.f32.mrb[0].mxu0
        %v4813 = vadd.f32 0.0, %v4812
        %v4814 = vpop.f32.mrb[0].mxu0
        %v4815 = vpop.f32.mrb[0].mxu0
        %v4816 = vadd.f32 0.0, %v4815
        %v4817 = vpop.f32.mrb[0].mxu0
        %4818 = vmatprep.mubr.bf16.mxu0 0
        %4819 = vmatmul.mubr.bf16.gmra.mrb[0].mxu0 %v4084
        %v4820 = vpop.f32.mrb[0].mxu0
        %v4821 = vadd.f32 0.0, %v4820
        %v4822 = vpop.f32.mrb[0].mxu0
        %v4823 = vpop.f32.mrb[0].mxu0
        %v4824 = vadd.f32 0.0, %v4823
        %v4825 = vpop.f32.mrb[0].mxu0
        %4826 = vdwg.mxu0
        %v4827 = vadd.f32 %v4569, %v4701
        %v4828 = vadd.f32 %v4570, %v4704
        %v4829 = vadd.f32 %v4571, %v4709
        %v4830 = vadd.f32 %v4572, %v4712
        %v4831 = vadd.f32 %v4573, %v4717
        %v4832 = vadd.f32 %v4574, %v4720
        %v4833 = vadd.f32 %v4575, %v4725
        %v4834 = vadd.f32 %v4576, %v4728
        %v4835 = vadd.f32 %v4577, %v4733
        %v4836 = vadd.f32 %v4578, %v4736
        %v4837 = vadd.f32 %v4579, %v4741
        %v4838 = vadd.f32 %v4580, %v4744
        %v4839 = vadd.f32 %v4581, %v4749
        %v4840 = vadd.f32 %v4582, %v4752
        %v4841 = vadd.f32 %v4583, %v4757
        %v4842 = vadd.f32 %v4584, %v4760
        %v4843 = vadd.f32 %v4585, %v4765
        %v4844 = vadd.f32 %v4586, %v4768
        %v4845 = vadd.f32 %v4587, %v4773
        %v4846 = vadd.f32 %v4588, %v4776
        %v4847 = vadd.f32 %v4589, %v4781
        %v4848 = vadd.f32 %v4590, %v4784
        %v4849 = vadd.f32 %v4591, %v4789
        %v4850 = vadd.f32 %v4592, %v4792
        %v4851 = vadd.f32 %v4593, %v4797
        %v4852 = vadd.f32 %v4594, %v4800
        %v4853 = vadd.f32 %v4595, %v4805
        %v4854 = vadd.f32 %v4596, %v4808
        %v4855 = vadd.f32 %v4597, %v4813
        %v4856 = vadd.f32 %v4598, %v4816
        %v4857 = vadd.f32 %v4599, %v4821
        %v4858 = vadd.f32 %v4600, %v4824
        %v4859 = vld [vmem:[#allocation2 + $0x2] sm:$0xff]
        %v4860 = vld [vmem:[#allocation2 + $0xa] sm:$0xff]
        %v4861 = vld [vmem:[#allocation2 + $0x1a] sm:$0xff]
        %v4862 = vld [vmem:[#allocation2 + $0x22] sm:$0xff]
        %v4863 = vld [vmem:[#allocation2 + $0x32] sm:$0xff]
        %v4864 = vld [vmem:[#allocation2 + $0x3a] sm:$0xff]
        %v4865 = vld [vmem:[#allocation2 + $0x4a] sm:$0xff]
        %v4866 = vld [vmem:[#allocation2 + $0x52] sm:$0xff]
        %v4867 = vld [vmem:[#allocation2 + $0x62] sm:$0xff]
        %v4868 = vld [vmem:[#allocation2 + $0x6a] sm:$0xff]
        %v4869 = vld [vmem:[#allocation2 + $0x7a] sm:$0xff]
        %v4870 = vld [vmem:[#allocation2 + $0x82] sm:$0xff]
        %v4871 = vld [vmem:[#allocation2 + $0x92] sm:$0xff]
        %v4872 = vld [vmem:[#allocation2 + $0x9a] sm:$0xff]
        %v4873 = vld [vmem:[#allocation2 + $0xaa] sm:$0xff]
        %v4874 = vld [vmem:[#allocation2 + $0xb2] sm:$0xff]
        %v4875 = vld [vmem:[#allocation2 + $0xc2] sm:$0xff]
        %v4876 = vld [vmem:[#allocation2 + $0xca] sm:$0xff]
        %v4877 = vld [vmem:[#allocation2 + $0xda] sm:$0xff]
        %v4878 = vld [vmem:[#allocation2 + $0xe2] sm:$0xff]
        %v4879 = vld [vmem:[#allocation2 + $0xf2] sm:$0xff]
        %v4880 = vld [vmem:[#allocation2 + $0xfa] sm:$0xff]
        %v4881 = vld [vmem:[#allocation2 + $0x10a] sm:$0xff]
        %v4882 = vld [vmem:[#allocation2 + $0x112] sm:$0xff]
        %v4883 = vld [vmem:[#allocation2 + $0x122] sm:$0xff]
        %v4884 = vld [vmem:[#allocation2 + $0x12a] sm:$0xff]
        %v4885 = vld [vmem:[#allocation2 + $0x13a] sm:$0xff]
        %v4886 = vld [vmem:[#allocation2 + $0x142] sm:$0xff]
        %v4887 = vld [vmem:[#allocation2 + $0x152] sm:$0xff]
        %v4888 = vld [vmem:[#allocation2 + $0x15a] sm:$0xff]
        %v4889 = vld [vmem:[#allocation2 + $0x16a] sm:$0xff]
        %v4890 = vld [vmem:[#allocation2 + $0x172] sm:$0xff]
        %v4891 = vld [vmem:[#allocation2 + $0x182] sm:$0xff]
        %v4892 = vld [vmem:[#allocation2 + $0x18a] sm:$0xff]
        %v4893 = vld [vmem:[#allocation2 + $0x19a] sm:$0xff]
        %v4894 = vld [vmem:[#allocation2 + $0x1a2] sm:$0xff]
        %v4895 = vpack.c.bf16 %v4860, %v4859
        %v4896 = vpack.c.bf16 %v4862, %v4861
        %v4897 = vpack.c.bf16 %v4864, %v4863
        %v4898 = vpack.c.bf16 %v4866, %v4865
        %v4899 = vpack.c.bf16 %v4868, %v4867
        %v4900 = vpack.c.bf16 %v4870, %v4869
        %v4901 = vpack.c.bf16 %v4872, %v4871
        %v4902 = vpack.c.bf16 %v4874, %v4873
        %v4903 = vpack.c.bf16 %v4876, %v4875
        %v4904 = vpack.c.bf16 %v4878, %v4877
        %v4905 = vpack.c.bf16 %v4880, %v4879
        %v4906 = vpack.c.bf16 %v4882, %v4881
        %v4907 = vpack.c.bf16 %v4884, %v4883
        %v4908 = vpack.c.bf16 %v4886, %v4885
        %v4909 = vpack.c.bf16 %v4888, %v4887
        %v4910 = vpack.c.bf16 %v4890, %v4889
        %v4911 = vpack.c.bf16 %v4892, %v4891
        %v4912 = vpack.c.bf16 %v4894, %v4893
        %s4913 = scalar_lea.vmem [#allocation8], 128
        %v4914 = vld [vmem:[%s4913] sm:$0xf]
        %v4915 = vld [vmem:[%s4913 + $0x4] sm:$0xf]
        %v4916 = vld [vmem:[%s4913 + $0x8] sm:$0xf]
        %v4917 = vld [vmem:[%s4913 + $0xc] sm:$0xf]
        %v4918 = vld [vmem:[%s4913 + $0x10] sm:$0xf]
        %v4919 = vld [vmem:[%s4913 + $0x14] sm:$0xf]
        %v4920 = vld [vmem:[%s4913 + $0x18] sm:$0xf]
        %v4921 = vld [vmem:[%s4913 + $0x1c] sm:$0xf]
        %v4922 = vld [vmem:[%s4913 + $0x20] sm:$0xf]
        %v4923 = vld [vmem:[%s4913 + $0x24] sm:$0xf]
        %v4924 = vld [vmem:[%s4913 + $0x28] sm:$0xf]
        %v4925 = vld [vmem:[%s4913 + $0x2c] sm:$0xf]
        %v4926 = vld [vmem:[%s4913 + $0x30] sm:$0xf]
        %v4927 = vld [vmem:[%s4913 + $0x34] sm:$0xf]
        %v4928 = vld [vmem:[%s4913 + $0x38] sm:$0xf]
        %v4929 = vld [vmem:[%s4913 + $0x3c] sm:$0xf]
        %v4946 = vunpack.c.l.b16 %v4914
        %v4947 = vunpack.c.l.b16 %v4915
        %v4948 = vunpack.c.l.b16 %v4916
        %v4949 = vunpack.c.l.b16 %v4917
        %v4950 = vunpack.c.l.b16 %v4918
        %v4951 = vunpack.c.l.b16 %v4919
        %v4952 = vunpack.c.l.b16 %v4920
        %v4953 = vunpack.c.l.b16 %v4921
        %v4954 = vunpack.c.l.b16 %v4922
        %v4955 = vunpack.c.l.b16 %v4923
        %v4956 = vunpack.c.l.b16 %v4924
        %v4957 = vunpack.c.l.b16 %v4925
        %v4958 = vunpack.c.l.b16 %v4926
        %v4959 = vunpack.c.l.b16 %v4927
        %v4960 = vunpack.c.l.b16 %v4928
        %v4961 = vunpack.c.l.b16 %v4929
        %v4962 = vpack.c.b16 %v4947, %v4946
        %v4963 = vpack.c.b16 %v4949, %v4948
        %v4964 = vpack.c.b16 %v4951, %v4950
        %v4965 = vpack.c.b16 %v4953, %v4952
        %v4966 = vpack.c.b16 %v4955, %v4954
        %v4967 = vpack.c.b16 %v4957, %v4956
        %v4968 = vpack.c.b16 %v4959, %v4958
        %v4969 = vpack.c.b16 %v4961, %v4960
        %4978 = vmatprep.subr.bf16.mxu0 0
        %4979 = vmatpush1.bf16.msra.mxu0 %v4962
        %4980 = vmatprep.subr.bf16.mxu0 0
        %4981 = vmatpush1.bf16.msra.mxu0 %v4963
        %4982 = vmatprep.subr.bf16.mxu0 0
        %4983 = vmatpush1.bf16.msra.mxu0 %v4964
        %4984 = vmatprep.subr.bf16.mxu0 0
        %4985 = vmatpush1.bf16.msra.mxu0 %v4965
        %4986 = vmatprep.subr.bf16.mxu0 0
        %4987 = vmatpush1.bf16.msra.mxu0 %v4966
        %4988 = vmatprep.subr.bf16.mxu0 0
        %4989 = vmatpush1.bf16.msra.mxu0 %v4967
        %4990 = vmatprep.subr.bf16.mxu0 0
        %4991 = vmatpush1.bf16.msra.mxu0 %v4968
        %4992 = vmatprep.subr.bf16.mxu0 0
        %4993 = vmatpush1.bf16.msra.mxu0 %v4969
        %4994 = vmatprep.subr.bf16.mxu0 0
        %4995 = vmatpush1.bf16.msra.mxu0 0
        %4996 = vmatprep.subr.bf16.mxu0 0
        %4997 = vmatpush1.bf16.msra.mxu0 0
        %4998 = vmatprep.subr.bf16.mxu0 0
        %4999 = vmatpush1.bf16.msra.mxu0 0
        %5000 = vmatprep.subr.bf16.mxu0 0
        %5001 = vmatpush1.bf16.msra.mxu0 0
        %5002 = vmatprep.subr.bf16.mxu0 0
        %5003 = vmatpush1.bf16.msra.mxu0 0
        %5004 = vmatprep.subr.bf16.mxu0 0
        %5005 = vmatpush1.bf16.msra.mxu0 0
        %5006 = vmatprep.subr.bf16.mxu0 0
        %5007 = vmatpush1.bf16.msra.mxu0 0
        %5008 = vmatprep.subr.bf16.mxu0 0
        %5009 = vmatpush1.bf16.msra.mxu0 0
        %5010 = vmatprep.mubr.bf16.mxu0 0
        %5011 = vmatmul.mubr.bf16.gmra.mrb[0].mxu0 %v4895
        %v5012 = vpop.f32.mrb[0].mxu0
        %v5013 = vadd.f32 0.0, %v5012
        %v5014 = vpop.f32.mrb[0].mxu0
        %v5015 = vpop.f32.mrb[0].mxu0
        %v5016 = vadd.f32 0.0, %v5015
        %v5017 = vpop.f32.mrb[0].mxu0
        %5018 = vmatprep.mubr.bf16.mxu0 0
        %5019 = vmatmul.mubr.bf16.gmra.mrb[0].mxu0 %v4896
        %v5020 = vpop.f32.mrb[0].mxu0
        %v5021 = vadd.f32 0.0, %v5020
        %v5022 = vpop.f32.mrb[0].mxu0
        %v5023 = vpop.f32.mrb[0].mxu0
        %v5024 = vadd.f32 0.0, %v5023
        %v5025 = vpop.f32.mrb[0].mxu0
        %5026 = vmatprep.mubr.bf16.mxu0 0
        %5027 = vmatmul.mubr.bf16.gmra.mrb[0].mxu0 %v4897
        %v5028 = vpop.f32.mrb[0].mxu0
        %v5029 = vadd.f32 0.0, %v5028
        %v5030 = vpop.f32.mrb[0].mxu0
        %v5031 = vpop.f32.mrb[0].mxu0
        %v5032 = vadd.f32 0.0, %v5031
        %v5033 = vpop.f32.mrb[0].mxu0
        %5034 = vmatprep.mubr.bf16.mxu0 0
        %5035 = vmatmul.mubr.bf16.gmra.mrb[0].mxu0 %v4898
        %v5036 = vpop.f32.mrb[0].mxu0
        %v5037 = vadd.f32 0.0, %v5036
        %v5038 = vpop.f32.mrb[0].mxu0
        %v5039 = vpop.f32.mrb[0].mxu0
        %v5040 = vadd.f32 0.0, %v5039
        %v5041 = vpop.f32.mrb[0].mxu0
        %5042 = vmatprep.mubr.bf16.mxu0 0
        %5043 = vmatmul.mubr.bf16.gmra.mrb[0].mxu0 %v4899
        %v5044 = vpop.f32.mrb[0].mxu0
        %v5045 = vadd.f32 0.0, %v5044
        %v5046 = vpop.f32.mrb[0].mxu0
        %v5047 = vpop.f32.mrb[0].mxu0
        %v5048 = vadd.f32 0.0, %v5047
        %v5049 = vpop.f32.mrb[0].mxu0
        %5050 = vmatprep.mubr.bf16.mxu0 0
        %5051 = vmatmul.mubr.bf16.gmra.mrb[0].mxu0 %v4900
        %v5052 = vpop.f32.mrb[0].mxu0
        %v5053 = vadd.f32 0.0, %v5052
        %v5054 = vpop.f32.mrb[0].mxu0
        %v5055 = vpop.f32.mrb[0].mxu0
        %v5056 = vadd.f32 0.0, %v5055
        %v5057 = vpop.f32.mrb[0].mxu0
        %5058 = vmatprep.mubr.bf16.mxu0 0
        %5059 = vmatmul.mubr.bf16.gmra.mrb[0].mxu0 %v4901
        %v5060 = vpop.f32.mrb[0].mxu0
        %v5061 = vadd.f32 0.0, %v5060
        %v5062 = vpop.f32.mrb[0].mxu0
        %v5063 = vpop.f32.mrb[0].mxu0
        %v5064 = vadd.f32 0.0, %v5063
        %v5065 = vpop.f32.mrb[0].mxu0
        %5066 = vmatprep.mubr.bf16.mxu0 0
        %5067 = vmatmul.mubr.bf16.gmra.mrb[0].mxu0 %v4902
        %v5068 = vpop.f32.mrb[0].mxu0
        %v5069 = vadd.f32 0.0, %v5068
        %v5070 = vpop.f32.mrb[0].mxu0
        %v5071 = vpop.f32.mrb[0].mxu0
        %v5072 = vadd.f32 0.0, %v5071
        %v5073 = vpop.f32.mrb[0].mxu0
        %5074 = vmatprep.mubr.bf16.mxu0 0
        %5075 = vmatmul.mubr.bf16.gmra.mrb[0].mxu0 %v4903
        %v5076 = vpop.f32.mrb[0].mxu0
        %v5077 = vadd.f32 0.0, %v5076
        %v5078 = vpop.f32.mrb[0].mxu0
        %v5079 = vpop.f32.mrb[0].mxu0
        %v5080 = vadd.f32 0.0, %v5079
        %v5081 = vpop.f32.mrb[0].mxu0
        %5082 = vmatprep.mubr.bf16.mxu0 0
        %5083 = vmatmul.mubr.bf16.gmra.mrb[0].mxu0 %v4904
        %v5084 = vpop.f32.mrb[0].mxu0
        %v5085 = vadd.f32 0.0, %v5084
        %v5086 = vpop.f32.mrb[0].mxu0
        %v5087 = vpop.f32.mrb[0].mxu0
        %v5088 = vadd.f32 0.0, %v5087
        %v5089 = vpop.f32.mrb[0].mxu0
        %5090 = vmatprep.mubr.bf16.mxu0 0
        %5091 = vmatmul.mubr.bf16.gmra.mrb[0].mxu0 %v4905
        %v5092 = vpop.f32.mrb[0].mxu0
        %v5093 = vadd.f32 0.0, %v5092
        %v5094 = vpop.f32.mrb[0].mxu0
        %v5095 = vpop.f32.mrb[0].mxu0
        %v5096 = vadd.f32 0.0, %v5095
        %v5097 = vpop.f32.mrb[0].mxu0
        %5098 = vmatprep.mubr.bf16.mxu0 0
        %5099 = vmatmul.mubr.bf16.gmra.mrb[0].mxu0 %v4906
        %v5100 = vpop.f32.mrb[0].mxu0
        %v5101 = vadd.f32 0.0, %v5100
        %v5102 = vpop.f32.mrb[0].mxu0
        %v5103 = vpop.f32.mrb[0].mxu0
        %v5104 = vadd.f32 0.0, %v5103
        %v5105 = vpop.f32.mrb[0].mxu0
        %5106 = vmatprep.mubr.bf16.mxu0 0
        %5107 = vmatmul.mubr.bf16.gmra.mrb[0].mxu0 %v4907
        %v5108 = vpop.f32.mrb[0].mxu0
        %v5109 = vadd.f32 0.0, %v5108
        %v5110 = vpop.f32.mrb[0].mxu0
        %v5111 = vpop.f32.mrb[0].mxu0
        %v5112 = vadd.f32 0.0, %v5111
        %v5113 = vpop.f32.mrb[0].mxu0
        %5114 = vmatprep.mubr.bf16.mxu0 0
        %5115 = vmatmul.mubr.bf16.gmra.mrb[0].mxu0 %v4908
        %v5116 = vpop.f32.mrb[0].mxu0
        %v5117 = vadd.f32 0.0, %v5116
        %v5118 = vpop.f32.mrb[0].mxu0
        %v5119 = vpop.f32.mrb[0].mxu0
        %v5120 = vadd.f32 0.0, %v5119
        %v5121 = vpop.f32.mrb[0].mxu0
        %5122 = vmatprep.mubr.bf16.mxu0 0
        %5123 = vmatmul.mubr.bf16.gmra.mrb[0].mxu0 %v4909
        %v5124 = vpop.f32.mrb[0].mxu0
        %v5125 = vadd.f32 0.0, %v5124
        %v5126 = vpop.f32.mrb[0].mxu0
        %v5127 = vpop.f32.mrb[0].mxu0
        %v5128 = vadd.f32 0.0, %v5127
        %v5129 = vpop.f32.mrb[0].mxu0
        %5130 = vmatprep.mubr.bf16.mxu0 0
        %5131 = vmatmul.mubr.bf16.gmra.mrb[0].mxu0 %v4910
        %v5132 = vpop.f32.mrb[0].mxu0
        %v5133 = vadd.f32 0.0, %v5132
        %v5134 = vpop.f32.mrb[0].mxu0
        %v5135 = vpop.f32.mrb[0].mxu0
        %v5136 = vadd.f32 0.0, %v5135
        %v5137 = vpop.f32.mrb[0].mxu0
        %5138 = vdwg.mxu0
        %v5139 = vadd.f32 %v4827, %v5013
        %v5140 = vadd.f32 %v4828, %v5016
        %v5141 = vadd.f32 %v4829, %v5021
        %v5142 = vadd.f32 %v4830, %v5024
        %v5143 = vadd.f32 %v4831, %v5029
        %v5144 = vadd.f32 %v4832, %v5032
        %v5145 = vadd.f32 %v4833, %v5037
        %v5146 = vadd.f32 %v4834, %v5040
        %v5147 = vadd.f32 %v4835, %v5045
        %v5148 = vadd.f32 %v4836, %v5048
        %v5149 = vadd.f32 %v4837, %v5053
        %v5150 = vadd.f32 %v4838, %v5056
        %v5151 = vadd.f32 %v4839, %v5061
        %v5152 = vadd.f32 %v4840, %v5064
        %v5153 = vadd.f32 %v4841, %v5069
        %v5154 = vadd.f32 %v4842, %v5072
        %v5155 = vadd.f32 %v4843, %v5077
        %v5156 = vadd.f32 %v4844, %v5080
        %v5157 = vadd.f32 %v4845, %v5085
        %v5158 = vadd.f32 %v4846, %v5088
        %v5159 = vadd.f32 %v4847, %v5093
        %v5160 = vadd.f32 %v4848, %v5096
        %v5161 = vadd.f32 %v4849, %v5101
        %v5162 = vadd.f32 %v4850, %v5104
        %v5163 = vadd.f32 %v4851, %v5109
        %v5164 = vadd.f32 %v4852, %v5112
        %v5165 = vadd.f32 %v4853, %v5117
        %v5166 = vadd.f32 %v4854, %v5120
        %v5167 = vadd.f32 %v4855, %v5125
        %v5168 = vadd.f32 %v4856, %v5128
        %v5169 = vadd.f32 %v4857, %v5133
        %v5170 = vadd.f32 %v4858, %v5136
        %s5171 = scalar_lea.vmem [#allocation8], 320
        %v5172 = vld [vmem:[%s5171] sm:$0xf]
        %v5173 = vld [vmem:[%s5171 + $0x4] sm:$0xf]
        %v5174 = vld [vmem:[%s5171 + $0x8] sm:$0xf]
        %v5175 = vld [vmem:[%s5171 + $0xc] sm:$0xf]
        %v5176 = vld [vmem:[%s5171 + $0x10] sm:$0xf]
        %v5177 = vld [vmem:[%s5171 + $0x14] sm:$0xf]
        %v5178 = vld [vmem:[%s5171 + $0x18] sm:$0xf]
        %v5179 = vld [vmem:[%s5171 + $0x1c] sm:$0xf]
        %v5180 = vld [vmem:[%s5171 + $0x20] sm:$0xf]
        %v5181 = vld [vmem:[%s5171 + $0x24] sm:$0xf]
        %v5182 = vld [vmem:[%s5171 + $0x28] sm:$0xf]
        %v5183 = vld [vmem:[%s5171 + $0x2c] sm:$0xf]
        %v5184 = vld [vmem:[%s5171 + $0x30] sm:$0xf]
        %v5185 = vld [vmem:[%s5171 + $0x34] sm:$0xf]
        %v5186 = vld [vmem:[%s5171 + $0x38] sm:$0xf]
        %v5187 = vld [vmem:[%s5171 + $0x3c] sm:$0xf]
        %v5204 = vunpack.c.l.b16 %v5172
        %v5205 = vunpack.c.l.b16 %v5173
        %v5206 = vunpack.c.l.b16 %v5174
        %v5207 = vunpack.c.l.b16 %v5175
        %v5208 = vunpack.c.l.b16 %v5176
        %v5209 = vunpack.c.l.b16 %v5177
        %v5210 = vunpack.c.l.b16 %v5178
        %v5211 = vunpack.c.l.b16 %v5179
        %v5212 = vunpack.c.l.b16 %v5180
        %v5213 = vunpack.c.l.b16 %v5181
        %v5214 = vunpack.c.l.b16 %v5182
        %v5215 = vunpack.c.l.b16 %v5183
        %v5216 = vunpack.c.l.b16 %v5184
        %v5217 = vunpack.c.l.b16 %v5185
        %v5218 = vunpack.c.l.b16 %v5186
        %v5219 = vunpack.c.l.b16 %v5187
        %v5220 = vpack.c.b16 %v5205, %v5204
        %v5221 = vpack.c.b16 %v5207, %v5206
        %v5222 = vpack.c.b16 %v5209, %v5208
        %v5223 = vpack.c.b16 %v5211, %v5210
        %v5224 = vpack.c.b16 %v5213, %v5212
        %v5225 = vpack.c.b16 %v5215, %v5214
        %v5226 = vpack.c.b16 %v5217, %v5216
        %v5227 = vpack.c.b16 %v5219, %v5218
        %5236 = vmatprep.subr.bf16.mxu0 0
        %5237 = vmatpush1.bf16.msra.mxu0 %v5220
        %5238 = vmatprep.subr.bf16.mxu0 0
        %5239 = vmatpush1.bf16.msra.mxu0 %v5221
        %5240 = vmatprep.subr.bf16.mxu0 0
        %5241 = vmatpush1.bf16.msra.mxu0 %v5222
        %5242 = vmatprep.subr.bf16.mxu0 0
        %5243 = vmatpush1.bf16.msra.mxu0 %v5223
        %5244 = vmatprep.subr.bf16.mxu0 0
        %5245 = vmatpush1.bf16.msra.mxu0 %v5224
        %5246 = vmatprep.subr.bf16.mxu0 0
        %5247 = vmatpush1.bf16.msra.mxu0 %v5225
        %5248 = vmatprep.subr.bf16.mxu0 0
        %5249 = vmatpush1.bf16.msra.mxu0 %v5226
        %5250 = vmatprep.subr.bf16.mxu0 0
        %5251 = vmatpush1.bf16.msra.mxu0 %v5227
        %5252 = vmatprep.subr.bf16.mxu0 0
        %5253 = vmatpush1.bf16.msra.mxu0 0
        %5254 = vmatprep.subr.bf16.mxu0 0
        %5255 = vmatpush1.bf16.msra.mxu0 0
        %5256 = vmatprep.subr.bf16.mxu0 0
        %5257 = vmatpush1.bf16.msra.mxu0 0
        %5258 = vmatprep.subr.bf16.mxu0 0
        %5259 = vmatpush1.bf16.msra.mxu0 0
        %5260 = vmatprep.subr.bf16.mxu0 0
        %5261 = vmatpush1.bf16.msra.mxu0 0
        %5262 = vmatprep.subr.bf16.mxu0 0
        %5263 = vmatpush1.bf16.msra.mxu0 0
        %5264 = vmatprep.subr.bf16.mxu0 0
        %5265 = vmatpush1.bf16.msra.mxu0 0
        %5266 = vmatprep.subr.bf16.mxu0 0
        %5267 = vmatpush1.bf16.msra.mxu0 0
        %5268 = vmatprep.mubr.bf16.mxu0 0
        %5269 = vmatmul.mubr.bf16.gmra.mrb[0].mxu0 %v4896
        %v5270 = vpop.f32.mrb[0].mxu0
        %v5271 = vadd.f32 0.0, %v5270
        %v5272 = vpop.f32.mrb[0].mxu0
        %v5273 = vpop.f32.mrb[0].mxu0
        %v5274 = vadd.f32 0.0, %v5273
        %v5275 = vpop.f32.mrb[0].mxu0
        %5276 = vmatprep.mubr.bf16.mxu0 0
        %5277 = vmatmul.mubr.bf16.gmra.mrb[0].mxu0 %v4897
        %v5278 = vpop.f32.mrb[0].mxu0
        %v5279 = vadd.f32 0.0, %v5278
        %v5280 = vpop.f32.mrb[0].mxu0
        %v5281 = vpop.f32.mrb[0].mxu0
        %v5282 = vadd.f32 0.0, %v5281
        %v5283 = vpop.f32.mrb[0].mxu0
        %5284 = vmatprep.mubr.bf16.mxu0 0
        %5285 = vmatmul.mubr.bf16.gmra.mrb[0].mxu0 %v4898
        %v5286 = vpop.f32.mrb[0].mxu0
        %v5287 = vadd.f32 0.0, %v5286
        %v5288 = vpop.f32.mrb[0].mxu0
        %v5289 = vpop.f32.mrb[0].mxu0
        %v5290 = vadd.f32 0.0, %v5289
        %v5291 = vpop.f32.mrb[0].mxu0
        %5292 = vmatprep.mubr.bf16.mxu0 0
        %5293 = vmatmul.mubr.bf16.gmra.mrb[0].mxu0 %v4899
        %v5294 = vpop.f32.mrb[0].mxu0
        %v5295 = vadd.f32 0.0, %v5294
        %v5296 = vpop.f32.mrb[0].mxu0
        %v5297 = vpop.f32.mrb[0].mxu0
        %v5298 = vadd.f32 0.0, %v5297
        %v5299 = vpop.f32.mrb[0].mxu0
        %5300 = vmatprep.mubr.bf16.mxu0 0
        %5301 = vmatmul.mubr.bf16.gmra.mrb[0].mxu0 %v4900
        %v5302 = vpop.f32.mrb[0].mxu0
        %v5303 = vadd.f32 0.0, %v5302
        %v5304 = vpop.f32.mrb[0].mxu0
        %v5305 = vpop.f32.mrb[0].mxu0
        %v5306 = vadd.f32 0.0, %v5305
        %v5307 = vpop.f32.mrb[0].mxu0
        %5308 = vmatprep.mubr.bf16.mxu0 0
        %5309 = vmatmul.mubr.bf16.gmra.mrb[0].mxu0 %v4901
        %v5310 = vpop.f32.mrb[0].mxu0
        %v5311 = vadd.f32 0.0, %v5310
        %v5312 = vpop.f32.mrb[0].mxu0
        %v5313 = vpop.f32.mrb[0].mxu0
        %v5314 = vadd.f32 0.0, %v5313
        %v5315 = vpop.f32.mrb[0].mxu0
        %5316 = vmatprep.mubr.bf16.mxu0 0
        %5317 = vmatmul.mubr.bf16.gmra.mrb[0].mxu0 %v4902
        %v5318 = vpop.f32.mrb[0].mxu0
        %v5319 = vadd.f32 0.0, %v5318
        %v5320 = vpop.f32.mrb[0].mxu0
        %v5321 = vpop.f32.mrb[0].mxu0
        %v5322 = vadd.f32 0.0, %v5321
        %v5323 = vpop.f32.mrb[0].mxu0
        %5324 = vmatprep.mubr.bf16.mxu0 0
        %5325 = vmatmul.mubr.bf16.gmra.mrb[0].mxu0 %v4903
        %v5326 = vpop.f32.mrb[0].mxu0
        %v5327 = vadd.f32 0.0, %v5326
        %v5328 = vpop.f32.mrb[0].mxu0
        %v5329 = vpop.f32.mrb[0].mxu0
        %v5330 = vadd.f32 0.0, %v5329
        %v5331 = vpop.f32.mrb[0].mxu0
        %5332 = vmatprep.mubr.bf16.mxu0 0
        %5333 = vmatmul.mubr.bf16.gmra.mrb[0].mxu0 %v4904
        %v5334 = vpop.f32.mrb[0].mxu0
        %v5335 = vadd.f32 0.0, %v5334
        %v5336 = vpop.f32.mrb[0].mxu0
        %v5337 = vpop.f32.mrb[0].mxu0
        %v5338 = vadd.f32 0.0, %v5337
        %v5339 = vpop.f32.mrb[0].mxu0
        %5340 = vmatprep.mubr.bf16.mxu0 0
        %5341 = vmatmul.mubr.bf16.gmra.mrb[0].mxu0 %v4905
        %v5342 = vpop.f32.mrb[0].mxu0
        %v5343 = vadd.f32 0.0, %v5342
        %v5344 = vpop.f32.mrb[0].mxu0
        %v5345 = vpop.f32.mrb[0].mxu0
        %v5346 = vadd.f32 0.0, %v5345
        %v5347 = vpop.f32.mrb[0].mxu0
        %5348 = vmatprep.mubr.bf16.mxu0 0
        %5349 = vmatmul.mubr.bf16.gmra.mrb[0].mxu0 %v4906
        %v5350 = vpop.f32.mrb[0].mxu0
        %v5351 = vadd.f32 0.0, %v5350
        %v5352 = vpop.f32.mrb[0].mxu0
        %v5353 = vpop.f32.mrb[0].mxu0
        %v5354 = vadd.f32 0.0, %v5353
        %v5355 = vpop.f32.mrb[0].mxu0
        %5356 = vmatprep.mubr.bf16.mxu0 0
        %5357 = vmatmul.mubr.bf16.gmra.mrb[0].mxu0 %v4907
        %v5358 = vpop.f32.mrb[0].mxu0
        %v5359 = vadd.f32 0.0, %v5358
        %v5360 = vpop.f32.mrb[0].mxu0
        %v5361 = vpop.f32.mrb[0].mxu0
        %v5362 = vadd.f32 0.0, %v5361
        %v5363 = vpop.f32.mrb[0].mxu0
        %5364 = vmatprep.mubr.bf16.mxu0 0
        %5365 = vmatmul.mubr.bf16.gmra.mrb[0].mxu0 %v4908
        %v5366 = vpop.f32.mrb[0].mxu0
        %v5367 = vadd.f32 0.0, %v5366
        %v5368 = vpop.f32.mrb[0].mxu0
        %v5369 = vpop.f32.mrb[0].mxu0
        %v5370 = vadd.f32 0.0, %v5369
        %v5371 = vpop.f32.mrb[0].mxu0
        %5372 = vmatprep.mubr.bf16.mxu0 0
        %5373 = vmatmul.mubr.bf16.gmra.mrb[0].mxu0 %v4909
        %v5374 = vpop.f32.mrb[0].mxu0
        %v5375 = vadd.f32 0.0, %v5374
        %v5376 = vpop.f32.mrb[0].mxu0
        %v5377 = vpop.f32.mrb[0].mxu0
        %v5378 = vadd.f32 0.0, %v5377
        %v5379 = vpop.f32.mrb[0].mxu0
        %5380 = vmatprep.mubr.bf16.mxu0 0
        %5381 = vmatmul.mubr.bf16.gmra.mrb[0].mxu0 %v4910
        %v5382 = vpop.f32.mrb[0].mxu0
        %v5383 = vadd.f32 0.0, %v5382
        %v5384 = vpop.f32.mrb[0].mxu0
        %v5385 = vpop.f32.mrb[0].mxu0
        %v5386 = vadd.f32 0.0, %v5385
        %v5387 = vpop.f32.mrb[0].mxu0
        %5388 = vmatprep.mubr.bf16.mxu0 0
        %5389 = vmatmul.mubr.bf16.gmra.mrb[0].mxu0 %v4911
        %v5390 = vpop.f32.mrb[0].mxu0
        %v5391 = vadd.f32 0.0, %v5390
        %v5392 = vpop.f32.mrb[0].mxu0
        %v5393 = vpop.f32.mrb[0].mxu0
        %v5394 = vadd.f32 0.0, %v5393
        %v5395 = vpop.f32.mrb[0].mxu0
        %5396 = vdwg.mxu0
        %v5397 = vadd.f32 %v5139, %v5271
        %v5398 = vadd.f32 %v5140, %v5274
        %v5399 = vadd.f32 %v5141, %v5279
        %v5400 = vadd.f32 %v5142, %v5282
        %v5401 = vadd.f32 %v5143, %v5287
        %v5402 = vadd.f32 %v5144, %v5290
        %v5403 = vadd.f32 %v5145, %v5295
        %v5404 = vadd.f32 %v5146, %v5298
        %v5405 = vadd.f32 %v5147, %v5303
        %v5406 = vadd.f32 %v5148, %v5306
        %v5407 = vadd.f32 %v5149, %v5311
        %v5408 = vadd.f32 %v5150, %v5314
        %v5409 = vadd.f32 %v5151, %v5319
        %v5410 = vadd.f32 %v5152, %v5322
        %v5411 = vadd.f32 %v5153, %v5327
        %v5412 = vadd.f32 %v5154, %v5330
        %v5413 = vadd.f32 %v5155, %v5335
        %v5414 = vadd.f32 %v5156, %v5338
        %v5415 = vadd.f32 %v5157, %v5343
        %v5416 = vadd.f32 %v5158, %v5346
        %v5417 = vadd.f32 %v5159, %v5351
        %v5418 = vadd.f32 %v5160, %v5354
        %v5419 = vadd.f32 %v5161, %v5359
        %v5420 = vadd.f32 %v5162, %v5362
        %v5421 = vadd.f32 %v5163, %v5367
        %v5422 = vadd.f32 %v5164, %v5370
        %v5423 = vadd.f32 %v5165, %v5375
        %v5424 = vadd.f32 %v5166, %v5378
        %v5425 = vadd.f32 %v5167, %v5383
        %v5426 = vadd.f32 %v5168, %v5386
        %v5427 = vadd.f32 %v5169, %v5391
        %v5428 = vadd.f32 %v5170, %v5394
        %s5429 = scalar_lea.vmem [#allocation8], 512
        %v5430 = vld [vmem:[%s5429] sm:$0xf]
        %v5431 = vld [vmem:[%s5429 + $0x4] sm:$0xf]
        %v5432 = vld [vmem:[%s5429 + $0x8] sm:$0xf]
        %v5433 = vld [vmem:[%s5429 + $0xc] sm:$0xf]
        %v5434 = vld [vmem:[%s5429 + $0x10] sm:$0xf]
        %v5435 = vld [vmem:[%s5429 + $0x14] sm:$0xf]
        %v5436 = vld [vmem:[%s5429 + $0x18] sm:$0xf]
        %v5437 = vld [vmem:[%s5429 + $0x1c] sm:$0xf]
        %v5438 = vld [vmem:[%s5429 + $0x20] sm:$0xf]
        %v5439 = vld [vmem:[%s5429 + $0x24] sm:$0xf]
        %v5440 = vld [vmem:[%s5429 + $0x28] sm:$0xf]
        %v5441 = vld [vmem:[%s5429 + $0x2c] sm:$0xf]
        %v5442 = vld [vmem:[%s5429 + $0x30] sm:$0xf]
        %v5443 = vld [vmem:[%s5429 + $0x34] sm:$0xf]
        %v5444 = vld [vmem:[%s5429 + $0x38] sm:$0xf]
        %v5445 = vld [vmem:[%s5429 + $0x3c] sm:$0xf]
        %v5462 = vunpack.c.l.b16 %v5430
        %v5463 = vunpack.c.l.b16 %v5431
        %v5464 = vunpack.c.l.b16 %v5432
        %v5465 = vunpack.c.l.b16 %v5433
        %v5466 = vunpack.c.l.b16 %v5434
        %v5467 = vunpack.c.l.b16 %v5435
        %v5468 = vunpack.c.l.b16 %v5436
        %v5469 = vunpack.c.l.b16 %v5437
        %v5470 = vunpack.c.l.b16 %v5438
        %v5471 = vunpack.c.l.b16 %v5439
        %v5472 = vunpack.c.l.b16 %v5440
        %v5473 = vunpack.c.l.b16 %v5441
        %v5474 = vunpack.c.l.b16 %v5442
        %v5475 = vunpack.c.l.b16 %v5443
        %v5476 = vunpack.c.l.b16 %v5444
        %v5477 = vunpack.c.l.b16 %v5445
        %v5478 = vpack.c.b16 %v5463, %v5462
        %v5479 = vpack.c.b16 %v5465, %v5464
        %v5480 = vpack.c.b16 %v5467, %v5466
        %v5481 = vpack.c.b16 %v5469, %v5468
        %v5482 = vpack.c.b16 %v5471, %v5470
        %v5483 = vpack.c.b16 %v5473, %v5472
        %v5484 = vpack.c.b16 %v5475, %v5474
        %v5485 = vpack.c.b16 %v5477, %v5476
        %5494 = vmatprep.subr.bf16.mxu0 0
        %5495 = vmatpush1.bf16.msra.mxu0 %v5478
        %5496 = vmatprep.subr.bf16.mxu0 0
        %5497 = vmatpush1.bf16.msra.mxu0 %v5479
        %5498 = vmatprep.subr.bf16.mxu0 0
        %5499 = vmatpush1.bf16.msra.mxu0 %v5480
        %5500 = vmatprep.subr.bf16.mxu0 0
        %5501 = vmatpush1.bf16.msra.mxu0 %v5481
        %5502 = vmatprep.subr.bf16.mxu0 0
        %5503 = vmatpush1.bf16.msra.mxu0 %v5482
        %5504 = vmatprep.subr.bf16.mxu0 0
        %5505 = vmatpush1.bf16.msra.mxu0 %v5483
        %5506 = vmatprep.subr.bf16.mxu0 0
        %5507 = vmatpush1.bf16.msra.mxu0 %v5484
        %5508 = vmatprep.subr.bf16.mxu0 0
        %5509 = vmatpush1.bf16.msra.mxu0 %v5485
        %5510 = vmatprep.subr.bf16.mxu0 0
        %5511 = vmatpush1.bf16.msra.mxu0 0
        %5512 = vmatprep.subr.bf16.mxu0 0
        %5513 = vmatpush1.bf16.msra.mxu0 0
        %5514 = vmatprep.subr.bf16.mxu0 0
        %5515 = vmatpush1.bf16.msra.mxu0 0
        %5516 = vmatprep.subr.bf16.mxu0 0
        %5517 = vmatpush1.bf16.msra.mxu0 0
        %5518 = vmatprep.subr.bf16.mxu0 0
        %5519 = vmatpush1.bf16.msra.mxu0 0
        %5520 = vmatprep.subr.bf16.mxu0 0
        %5521 = vmatpush1.bf16.msra.mxu0 0
        %5522 = vmatprep.subr.bf16.mxu0 0
        %5523 = vmatpush1.bf16.msra.mxu0 0
        %5524 = vmatprep.subr.bf16.mxu0 0
        %5525 = vmatpush1.bf16.msra.mxu0 0
        %5526 = vmatprep.mubr.bf16.mxu0 0
        %5527 = vmatmul.mubr.bf16.gmra.mrb[0].mxu0 %v4897
        %v5528 = vpop.f32.mrb[0].mxu0
        %v5529 = vadd.f32 0.0, %v5528
        %v5530 = vpop.f32.mrb[0].mxu0
        %v5531 = vpop.f32.mrb[0].mxu0
        %v5532 = vadd.f32 0.0, %v5531
        %v5533 = vpop.f32.mrb[0].mxu0
        %5534 = vmatprep.mubr.bf16.mxu0 0
        %5535 = vmatmul.mubr.bf16.gmra.mrb[0].mxu0 %v4898
        %v5536 = vpop.f32.mrb[0].mxu0
        %v5537 = vadd.f32 0.0, %v5536
        %v5538 = vpop.f32.mrb[0].mxu0
        %v5539 = vpop.f32.mrb[0].mxu0
        %v5540 = vadd.f32 0.0, %v5539
        %v5541 = vpop.f32.mrb[0].mxu0
        %5542 = vmatprep.mubr.bf16.mxu0 0
        %5543 = vmatmul.mubr.bf16.gmra.mrb[0].mxu0 %v4899
        %v5544 = vpop.f32.mrb[0].mxu0
        %v5545 = vadd.f32 0.0, %v5544
        %v5546 = vpop.f32.mrb[0].mxu0
        %v5547 = vpop.f32.mrb[0].mxu0
        %v5548 = vadd.f32 0.0, %v5547
        %v5549 = vpop.f32.mrb[0].mxu0
        %5550 = vmatprep.mubr.bf16.mxu0 0
        %5551 = vmatmul.mubr.bf16.gmra.mrb[0].mxu0 %v4900
        %v5552 = vpop.f32.mrb[0].mxu0
        %v5553 = vadd.f32 0.0, %v5552
        %v5554 = vpop.f32.mrb[0].mxu0
        %v5555 = vpop.f32.mrb[0].mxu0
        %v5556 = vadd.f32 0.0, %v5555
        %v5557 = vpop.f32.mrb[0].mxu0
        %5558 = vmatprep.mubr.bf16.mxu0 0
        %5559 = vmatmul.mubr.bf16.gmra.mrb[0].mxu0 %v4901
        %v5560 = vpop.f32.mrb[0].mxu0
        %v5561 = vadd.f32 0.0, %v5560
        %v5562 = vpop.f32.mrb[0].mxu0
        %v5563 = vpop.f32.mrb[0].mxu0
        %v5564 = vadd.f32 0.0, %v5563
        %v5565 = vpop.f32.mrb[0].mxu0
        %5566 = vmatprep.mubr.bf16.mxu0 0
        %5567 = vmatmul.mubr.bf16.gmra.mrb[0].mxu0 %v4902
        %v5568 = vpop.f32.mrb[0].mxu0
        %v5569 = vadd.f32 0.0, %v5568
        %v5570 = vpop.f32.mrb[0].mxu0
        %v5571 = vpop.f32.mrb[0].mxu0
        %v5572 = vadd.f32 0.0, %v5571
        %v5573 = vpop.f32.mrb[0].mxu0
        %5574 = vmatprep.mubr.bf16.mxu0 0
        %5575 = vmatmul.mubr.bf16.gmra.mrb[0].mxu0 %v4903
        %v5576 = vpop.f32.mrb[0].mxu0
        %v5577 = vadd.f32 0.0, %v5576
        %v5578 = vpop.f32.mrb[0].mxu0
        %v5579 = vpop.f32.mrb[0].mxu0
        %v5580 = vadd.f32 0.0, %v5579
        %v5581 = vpop.f32.mrb[0].mxu0
        %5582 = vmatprep.mubr.bf16.mxu0 0
        %5583 = vmatmul.mubr.bf16.gmra.mrb[0].mxu0 %v4904
        %v5584 = vpop.f32.mrb[0].mxu0
        %v5585 = vadd.f32 0.0, %v5584
        %v5586 = vpop.f32.mrb[0].mxu0
        %v5587 = vpop.f32.mrb[0].mxu0
        %v5588 = vadd.f32 0.0, %v5587
        %v5589 = vpop.f32.mrb[0].mxu0
        %5590 = vmatprep.mubr.bf16.mxu0 0
        %5591 = vmatmul.mubr.bf16.gmra.mrb[0].mxu0 %v4905
        %v5592 = vpop.f32.mrb[0].mxu0
        %v5593 = vadd.f32 0.0, %v5592
        %v5594 = vpop.f32.mrb[0].mxu0
        %v5595 = vpop.f32.mrb[0].mxu0
        %v5596 = vadd.f32 0.0, %v5595
        %v5597 = vpop.f32.mrb[0].mxu0
        %5598 = vmatprep.mubr.bf16.mxu0 0
        %5599 = vmatmul.mubr.bf16.gmra.mrb[0].mxu0 %v4906
        %v5600 = vpop.f32.mrb[0].mxu0
        %v5601 = vadd.f32 0.0, %v5600
        %v5602 = vpop.f32.mrb[0].mxu0
        %v5603 = vpop.f32.mrb[0].mxu0
        %v5604 = vadd.f32 0.0, %v5603
        %v5605 = vpop.f32.mrb[0].mxu0
        %5606 = vmatprep.mubr.bf16.mxu0 0
        %5607 = vmatmul.mubr.bf16.gmra.mrb[0].mxu0 %v4907
        %v5608 = vpop.f32.mrb[0].mxu0
        %v5609 = vadd.f32 0.0, %v5608
        %v5610 = vpop.f32.mrb[0].mxu0
        %v5611 = vpop.f32.mrb[0].mxu0
        %v5612 = vadd.f32 0.0, %v5611
        %v5613 = vpop.f32.mrb[0].mxu0
        %5614 = vmatprep.mubr.bf16.mxu0 0
        %5615 = vmatmul.mubr.bf16.gmra.mrb[0].mxu0 %v4908
        %v5616 = vpop.f32.mrb[0].mxu0
        %v5617 = vadd.f32 0.0, %v5616
        %v5618 = vpop.f32.mrb[0].mxu0
        %v5619 = vpop.f32.mrb[0].mxu0
        %v5620 = vadd.f32 0.0, %v5619
        %v5621 = vpop.f32.mrb[0].mxu0
        %5622 = vmatprep.mubr.bf16.mxu0 0
        %5623 = vmatmul.mubr.bf16.gmra.mrb[0].mxu0 %v4909
        %v5624 = vpop.f32.mrb[0].mxu0
        %v5625 = vadd.f32 0.0, %v5624
        %v5626 = vpop.f32.mrb[0].mxu0
        %v5627 = vpop.f32.mrb[0].mxu0
        %v5628 = vadd.f32 0.0, %v5627
        %v5629 = vpop.f32.mrb[0].mxu0
        %5630 = vmatprep.mubr.bf16.mxu0 0
        %5631 = vmatmul.mubr.bf16.gmra.mrb[0].mxu0 %v4910
        %v5632 = vpop.f32.mrb[0].mxu0
        %v5633 = vadd.f32 0.0, %v5632
        %v5634 = vpop.f32.mrb[0].mxu0
        %v5635 = vpop.f32.mrb[0].mxu0
        %v5636 = vadd.f32 0.0, %v5635
        %v5637 = vpop.f32.mrb[0].mxu0
        %5638 = vmatprep.mubr.bf16.mxu0 0
        %5639 = vmatmul.mubr.bf16.gmra.mrb[0].mxu0 %v4911
        %v5640 = vpop.f32.mrb[0].mxu0
        %v5641 = vadd.f32 0.0, %v5640
        %v5642 = vpop.f32.mrb[0].mxu0
        %v5643 = vpop.f32.mrb[0].mxu0
        %v5644 = vadd.f32 0.0, %v5643
        %v5645 = vpop.f32.mrb[0].mxu0
        %5646 = vmatprep.mubr.bf16.mxu0 0
        %5647 = vmatmul.mubr.bf16.gmra.mrb[0].mxu0 %v4912
        %v5648 = vpop.f32.mrb[0].mxu0
        %v5649 = vadd.f32 0.0, %v5648
        %v5650 = vpop.f32.mrb[0].mxu0
        %v5651 = vpop.f32.mrb[0].mxu0
        %v5652 = vadd.f32 0.0, %v5651
        %v5653 = vpop.f32.mrb[0].mxu0
        %5654 = vdwg.mxu0
        %v5655 = vadd.f32 %v5397, %v5529
        %v5656 = vadd.f32 %v5398, %v5532
        %v5657 = vadd.f32 %v5399, %v5537
        %v5658 = vadd.f32 %v5400, %v5540
        %v5659 = vadd.f32 %v5401, %v5545
        %v5660 = vadd.f32 %v5402, %v5548
        %v5661 = vadd.f32 %v5403, %v5553
        %v5662 = vadd.f32 %v5404, %v5556
        %v5663 = vadd.f32 %v5405, %v5561
        %v5664 = vadd.f32 %v5406, %v5564
        %v5665 = vadd.f32 %v5407, %v5569
        %v5666 = vadd.f32 %v5408, %v5572
        %v5667 = vadd.f32 %v5409, %v5577
        %v5668 = vadd.f32 %v5410, %v5580
        %v5669 = vadd.f32 %v5411, %v5585
        %v5670 = vadd.f32 %v5412, %v5588
        %v5671 = vadd.f32 %v5413, %v5593
        %v5672 = vadd.f32 %v5414, %v5596
        %v5673 = vadd.f32 %v5415, %v5601
        %v5674 = vadd.f32 %v5416, %v5604
        %v5675 = vadd.f32 %v5417, %v5609
        %v5676 = vadd.f32 %v5418, %v5612
        %v5677 = vadd.f32 %v5419, %v5617
        %v5678 = vadd.f32 %v5420, %v5620
        %v5679 = vadd.f32 %v5421, %v5625
        %v5680 = vadd.f32 %v5422, %v5628
        %v5681 = vadd.f32 %v5423, %v5633
        %v5682 = vadd.f32 %v5424, %v5636
        %v5683 = vadd.f32 %v5425, %v5641
        %v5684 = vadd.f32 %v5426, %v5644
        %v5685 = vadd.f32 %v5427, %v5649
        %v5686 = vadd.f32 %v5428, %v5652
        %v5687 = vld [vmem:[%s8] sm:$0x1]
        %v5689 = vlaneseq
        %v5690 = vshrl.u32 %v5689, 7
        %v5691 = vsub.s32 0, %v5690
        %v5692 = vrot.slane %v5687, %v5691
        %v5694 = vadd.f32 %v5655, %v5692
        %v5695 = vadd.f32 %v5656, %v5692
        %v5696 = vadd.f32 %v5657, %v5692
        %v5697 = vadd.f32 %v5658, %v5692
        %v5698 = vadd.f32 %v5659, %v5692
        %v5699 = vadd.f32 %v5660, %v5692
        %v5700 = vadd.f32 %v5661, %v5692
        %v5701 = vadd.f32 %v5662, %v5692
        %v5702 = vadd.f32 %v5663, %v5692
        %v5703 = vadd.f32 %v5664, %v5692
        %v5704 = vadd.f32 %v5665, %v5692
        %v5705 = vadd.f32 %v5666, %v5692
        %v5706 = vadd.f32 %v5667, %v5692
        %v5707 = vadd.f32 %v5668, %v5692
        %v5708 = vadd.f32 %v5669, %v5692
        %v5709 = vadd.f32 %v5670, %v5692
        %v5710 = vadd.f32 %v5671, %v5692
        %v5711 = vadd.f32 %v5672, %v5692
        %v5712 = vadd.f32 %v5673, %v5692
        %v5713 = vadd.f32 %v5674, %v5692
        %v5714 = vadd.f32 %v5675, %v5692
        %v5715 = vadd.f32 %v5676, %v5692
        %v5716 = vadd.f32 %v5677, %v5692
        %v5717 = vadd.f32 %v5678, %v5692
        %v5718 = vadd.f32 %v5679, %v5692
        %v5719 = vadd.f32 %v5680, %v5692
        %v5720 = vadd.f32 %v5681, %v5692
        %v5721 = vadd.f32 %v5682, %v5692
        %v5722 = vadd.f32 %v5683, %v5692
        %v5723 = vadd.f32 %v5684, %v5692
        %v5724 = vadd.f32 %v5685, %v5692
        %v5725 = vadd.f32 %v5686, %v5692
        %v5726 = vpack.c.bf16 %v451, %v450
        %v5727 = vpack.c.bf16 %v453, %v452
        %v5728 = vpack.c.bf16 %v455, %v454
        %v5729 = vpack.c.bf16 %v457, %v456
        %v5730 = vpack.c.bf16 %v459, %v458
        %v5731 = vpack.c.bf16 %v461, %v460
        %v5732 = vpack.c.bf16 %v463, %v462
        %v5733 = vpack.c.bf16 %v465, %v464
        %v5734 = vpack.c.bf16 %v467, %v466
        %v5735 = vpack.c.bf16 %v469, %v468
        %v5736 = vpack.c.bf16 %v471, %v470
        %v5737 = vpack.c.bf16 %v473, %v472
        %v5738 = vpack.c.bf16 %v475, %v474
        %v5739 = vpack.c.bf16 %v477, %v476
        %v5740 = vpack.c.bf16 %v479, %v478
        %v5741 = vpack.c.bf16 %v481, %v480
        %v5742 = vld [vmem:[#allocation9] sm:$0xf]
        %v5743 = vld [vmem:[#allocation9 + $0x4] sm:$0xf]
        %v5744 = vld [vmem:[#allocation9 + $0x8] sm:$0xf]
        %v5745 = vld [vmem:[#allocation9 + $0xc] sm:$0xf]
        %v5746 = vld [vmem:[#allocation9 + $0x10] sm:$0xf]
        %v5747 = vld [vmem:[#allocation9 + $0x14] sm:$0xf]
        %v5748 = vld [vmem:[#allocation9 + $0x18] sm:$0xf]
        %v5749 = vld [vmem:[#allocation9 + $0x1c] sm:$0xf]
        %v5750 = vld [vmem:[#allocation9 + $0x20] sm:$0xf]
        %v5751 = vld [vmem:[#allocation9 + $0x24] sm:$0xf]
        %v5752 = vld [vmem:[#allocation9 + $0x28] sm:$0xf]
        %v5753 = vld [vmem:[#allocation9 + $0x2c] sm:$0xf]
        %v5754 = vld [vmem:[#allocation9 + $0x30] sm:$0xf]
        %v5755 = vld [vmem:[#allocation9 + $0x34] sm:$0xf]
        %v5756 = vld [vmem:[#allocation9 + $0x38] sm:$0xf]
        %v5757 = vld [vmem:[#allocation9 + $0x3c] sm:$0xf]
        %v5774 = vunpack.c.l.b16 %v5742
        %v5775 = vunpack.c.l.b16 %v5743
        %v5776 = vunpack.c.l.b16 %v5744
        %v5777 = vunpack.c.l.b16 %v5745
        %v5778 = vunpack.c.l.b16 %v5746
        %v5779 = vunpack.c.l.b16 %v5747
        %v5780 = vunpack.c.l.b16 %v5748
        %v5781 = vunpack.c.l.b16 %v5749
        %v5782 = vunpack.c.l.b16 %v5750
        %v5783 = vunpack.c.l.b16 %v5751
        %v5784 = vunpack.c.l.b16 %v5752
        %v5785 = vunpack.c.l.b16 %v5753
        %v5786 = vunpack.c.l.b16 %v5754
        %v5787 = vunpack.c.l.b16 %v5755
        %v5788 = vunpack.c.l.b16 %v5756
        %v5789 = vunpack.c.l.b16 %v5757
        %v5790 = vpack.c.b16 %v5775, %v5774
        %v5791 = vpack.c.b16 %v5777, %v5776
        %v5792 = vpack.c.b16 %v5779, %v5778
        %v5793 = vpack.c.b16 %v5781, %v5780
        %v5794 = vpack.c.b16 %v5783, %v5782
        %v5795 = vpack.c.b16 %v5785, %v5784
        %v5796 = vpack.c.b16 %v5787, %v5786
        %v5797 = vpack.c.b16 %v5789, %v5788
        %5806 = vmatprep.subr.bf16.mxu0 0
        %5807 = vmatpush1.bf16.msra.mxu0 %v5790
        %5808 = vmatprep.subr.bf16.mxu0 0
        %5809 = vmatpush1.bf16.msra.mxu0 %v5791
        %5810 = vmatprep.subr.bf16.mxu0 0
        %5811 = vmatpush1.bf16.msra.mxu0 %v5792
        %5812 = vmatprep.subr.bf16.mxu0 0
        %5813 = vmatpush1.bf16.msra.mxu0 %v5793
        %5814 = vmatprep.subr.bf16.mxu0 0
        %5815 = vmatpush1.bf16.msra.mxu0 %v5794
        %5816 = vmatprep.subr.bf16.mxu0 0
        %5817 = vmatpush1.bf16.msra.mxu0 %v5795
        %5818 = vmatprep.subr.bf16.mxu0 0
        %5819 = vmatpush1.bf16.msra.mxu0 %v5796
        %5820 = vmatprep.subr.bf16.mxu0 0
        %5821 = vmatpush1.bf16.msra.mxu0 %v5797
        %5822 = vmatprep.subr.bf16.mxu0 0
        %5823 = vmatpush1.bf16.msra.mxu0 0
        %5824 = vmatprep.subr.bf16.mxu0 0
        %5825 = vmatpush1.bf16.msra.mxu0 0
        %5826 = vmatprep.subr.bf16.mxu0 0
        %5827 = vmatpush1.bf16.msra.mxu0 0
        %5828 = vmatprep.subr.bf16.mxu0 0
        %5829 = vmatpush1.bf16.msra.mxu0 0
        %5830 = vmatprep.subr.bf16.mxu0 0
        %5831 = vmatpush1.bf16.msra.mxu0 0
        %5832 = vmatprep.subr.bf16.mxu0 0
        %5833 = vmatpush1.bf16.msra.mxu0 0
        %5834 = vmatprep.subr.bf16.mxu0 0
        %5835 = vmatpush1.bf16.msra.mxu0 0
        %5836 = vmatprep.subr.bf16.mxu0 0
        %5837 = vmatpush1.bf16.msra.mxu0 0
        %5838 = vmatprep.mubr.bf16.mxu0 0
        %5839 = vmatmul.mubr.bf16.gmra.mrb[0].mxu0 %v5726
        %v5840 = vpop.f32.mrb[0].mxu0
        %v5841 = vadd.f32 0.0, %v5840
        %v5842 = vpop.f32.mrb[0].mxu0
        %v5843 = vpop.f32.mrb[0].mxu0
        %v5844 = vadd.f32 0.0, %v5843
        %v5845 = vpop.f32.mrb[0].mxu0
        %5846 = vmatprep.mubr.bf16.mxu0 0
        %5847 = vmatmul.mubr.bf16.gmra.mrb[0].mxu0 %v5727
        %v5848 = vpop.f32.mrb[0].mxu0
        %v5849 = vadd.f32 0.0, %v5848
        %v5850 = vpop.f32.mrb[0].mxu0
        %v5851 = vpop.f32.mrb[0].mxu0
        %v5852 = vadd.f32 0.0, %v5851
        %v5853 = vpop.f32.mrb[0].mxu0
        %5854 = vmatprep.mubr.bf16.mxu0 0
        %5855 = vmatmul.mubr.bf16.gmra.mrb[0].mxu0 %v5728
        %v5856 = vpop.f32.mrb[0].mxu0
        %v5857 = vadd.f32 0.0, %v5856
        %v5858 = vpop.f32.mrb[0].mxu0
        %v5859 = vpop.f32.mrb[0].mxu0
        %v5860 = vadd.f32 0.0, %v5859
        %v5861 = vpop.f32.mrb[0].mxu0
        %5862 = vmatprep.mubr.bf16.mxu0 0
        %5863 = vmatmul.mubr.bf16.gmra.mrb[0].mxu0 %v5729
        %v5864 = vpop.f32.mrb[0].mxu0
        %v5865 = vadd.f32 0.0, %v5864
        %v5866 = vpop.f32.mrb[0].mxu0
        %v5867 = vpop.f32.mrb[0].mxu0
        %v5868 = vadd.f32 0.0, %v5867
        %v5869 = vpop.f32.mrb[0].mxu0
        %5870 = vmatprep.mubr.bf16.mxu0 0
        %5871 = vmatmul.mubr.bf16.gmra.mrb[0].mxu0 %v5730
        %v5872 = vpop.f32.mrb[0].mxu0
        %v5873 = vadd.f32 0.0, %v5872
        %v5874 = vpop.f32.mrb[0].mxu0
        %v5875 = vpop.f32.mrb[0].mxu0
        %v5876 = vadd.f32 0.0, %v5875
        %v5877 = vpop.f32.mrb[0].mxu0
        %5878 = vmatprep.mubr.bf16.mxu0 0
        %5879 = vmatmul.mubr.bf16.gmra.mrb[0].mxu0 %v5731
        %v5880 = vpop.f32.mrb[0].mxu0
        %v5881 = vadd.f32 0.0, %v5880
        %v5882 = vpop.f32.mrb[0].mxu0
        %v5883 = vpop.f32.mrb[0].mxu0
        %v5884 = vadd.f32 0.0, %v5883
        %v5885 = vpop.f32.mrb[0].mxu0
        %5886 = vmatprep.mubr.bf16.mxu0 0
        %5887 = vmatmul.mubr.bf16.gmra.mrb[0].mxu0 %v5732
        %v5888 = vpop.f32.mrb[0].mxu0
        %v5889 = vadd.f32 0.0, %v5888
        %v5890 = vpop.f32.mrb[0].mxu0
        %v5891 = vpop.f32.mrb[0].mxu0
        %v5892 = vadd.f32 0.0, %v5891
        %v5893 = vpop.f32.mrb[0].mxu0
        %5894 = vmatprep.mubr.bf16.mxu0 0
        %5895 = vmatmul.mubr.bf16.gmra.mrb[0].mxu0 %v5733
        %v5896 = vpop.f32.mrb[0].mxu0
        %v5897 = vadd.f32 0.0, %v5896
        %v5898 = vpop.f32.mrb[0].mxu0
        %v5899 = vpop.f32.mrb[0].mxu0
        %v5900 = vadd.f32 0.0, %v5899
        %v5901 = vpop.f32.mrb[0].mxu0
        %5902 = vmatprep.mubr.bf16.mxu0 0
        %5903 = vmatmul.mubr.bf16.gmra.mrb[0].mxu0 %v5734
        %v5904 = vpop.f32.mrb[0].mxu0
        %v5905 = vadd.f32 0.0, %v5904
        %v5906 = vpop.f32.mrb[0].mxu0
        %v5907 = vpop.f32.mrb[0].mxu0
        %v5908 = vadd.f32 0.0, %v5907
        %v5909 = vpop.f32.mrb[0].mxu0
        %5910 = vmatprep.mubr.bf16.mxu0 0
        %5911 = vmatmul.mubr.bf16.gmra.mrb[0].mxu0 %v5735
        %v5912 = vpop.f32.mrb[0].mxu0
        %v5913 = vadd.f32 0.0, %v5912
        %v5914 = vpop.f32.mrb[0].mxu0
        %v5915 = vpop.f32.mrb[0].mxu0
        %v5916 = vadd.f32 0.0, %v5915
        %v5917 = vpop.f32.mrb[0].mxu0
        %5918 = vmatprep.mubr.bf16.mxu0 0
        %5919 = vmatmul.mubr.bf16.gmra.mrb[0].mxu0 %v5736
        %v5920 = vpop.f32.mrb[0].mxu0
        %v5921 = vadd.f32 0.0, %v5920
        %v5922 = vpop.f32.mrb[0].mxu0
        %v5923 = vpop.f32.mrb[0].mxu0
        %v5924 = vadd.f32 0.0, %v5923
        %v5925 = vpop.f32.mrb[0].mxu0
        %5926 = vmatprep.mubr.bf16.mxu0 0
        %5927 = vmatmul.mubr.bf16.gmra.mrb[0].mxu0 %v5737
        %v5928 = vpop.f32.mrb[0].mxu0
        %v5929 = vadd.f32 0.0, %v5928
        %v5930 = vpop.f32.mrb[0].mxu0
        %v5931 = vpop.f32.mrb[0].mxu0
        %v5932 = vadd.f32 0.0, %v5931
        %v5933 = vpop.f32.mrb[0].mxu0
        %5934 = vmatprep.mubr.bf16.mxu0 0
        %5935 = vmatmul.mubr.bf16.gmra.mrb[0].mxu0 %v5738
        %v5936 = vpop.f32.mrb[0].mxu0
        %v5937 = vadd.f32 0.0, %v5936
        %v5938 = vpop.f32.mrb[0].mxu0
        %v5939 = vpop.f32.mrb[0].mxu0
        %v5940 = vadd.f32 0.0, %v5939
        %v5941 = vpop.f32.mrb[0].mxu0
        %5942 = vmatprep.mubr.bf16.mxu0 0
        %5943 = vmatmul.mubr.bf16.gmra.mrb[0].mxu0 %v5739
        %v5944 = vpop.f32.mrb[0].mxu0
        %v5945 = vadd.f32 0.0, %v5944
        %v5946 = vpop.f32.mrb[0].mxu0
        %v5947 = vpop.f32.mrb[0].mxu0
        %v5948 = vadd.f32 0.0, %v5947
        %v5949 = vpop.f32.mrb[0].mxu0
        %5950 = vmatprep.mubr.bf16.mxu0 0
        %5951 = vmatmul.mubr.bf16.gmra.mrb[0].mxu0 %v5740
        %v5952 = vpop.f32.mrb[0].mxu0
        %v5953 = vadd.f32 0.0, %v5952
        %v5954 = vpop.f32.mrb[0].mxu0
        %v5955 = vpop.f32.mrb[0].mxu0
        %v5956 = vadd.f32 0.0, %v5955
        %v5957 = vpop.f32.mrb[0].mxu0
        %5958 = vmatprep.mubr.bf16.mxu0 0
        %5959 = vmatmul.mubr.bf16.gmra.mrb[0].mxu0 %v5741
        %v5960 = vpop.f32.mrb[0].mxu0
        %v5961 = vadd.f32 0.0, %v5960
        %v5962 = vpop.f32.mrb[0].mxu0
        %v5963 = vpop.f32.mrb[0].mxu0
        %v5964 = vadd.f32 0.0, %v5963
        %v5965 = vpop.f32.mrb[0].mxu0
        %5966 = vdwg.mxu0
        %v5967 = vld [vmem:[%s10] sm:$0x1]
        %v5969 = vlaneseq
        %v5970 = vshrl.u32 %v5969, 7
        %v5971 = vsub.s32 0, %v5970
        %v5972 = vrot.slane %v5967, %v5971
        %v5974 = vadd.f32 %v5841, %v5972
        %v5975 = vadd.f32 %v5844, %v5972
        %v5976 = vadd.f32 %v5849, %v5972
        %v5977 = vadd.f32 %v5852, %v5972
        %v5978 = vadd.f32 %v5857, %v5972
        %v5979 = vadd.f32 %v5860, %v5972
        %v5980 = vadd.f32 %v5865, %v5972
        %v5981 = vadd.f32 %v5868, %v5972
        %v5982 = vadd.f32 %v5873, %v5972
        %v5983 = vadd.f32 %v5876, %v5972
        %v5984 = vadd.f32 %v5881, %v5972
        %v5985 = vadd.f32 %v5884, %v5972
        %v5986 = vadd.f32 %v5889, %v5972
        %v5987 = vadd.f32 %v5892, %v5972
        %v5988 = vadd.f32 %v5897, %v5972
        %v5989 = vadd.f32 %v5900, %v5972
        %v5990 = vadd.f32 %v5905, %v5972
        %v5991 = vadd.f32 %v5908, %v5972
        %v5992 = vadd.f32 %v5913, %v5972
        %v5993 = vadd.f32 %v5916, %v5972
        %v5994 = vadd.f32 %v5921, %v5972
        %v5995 = vadd.f32 %v5924, %v5972
        %v5996 = vadd.f32 %v5929, %v5972
        %v5997 = vadd.f32 %v5932, %v5972
        %v5998 = vadd.f32 %v5937, %v5972
        %v5999 = vadd.f32 %v5940, %v5972
        %v6000 = vadd.f32 %v5945, %v5972
        %v6001 = vadd.f32 %v5948, %v5972
        %v6002 = vadd.f32 %v5953, %v5972
        %v6003 = vadd.f32 %v5956, %v5972
        %v6004 = vadd.f32 %v5961, %v5972
        %v6005 = vadd.f32 %v5964, %v5972
        %v6006 = vadd.f32 %v5694, %v5974
        %v6007 = vadd.f32 %v5695, %v5975
        %v6008 = vadd.f32 %v5696, %v5976
        %v6009 = vadd.f32 %v5697, %v5977
        %v6010 = vadd.f32 %v5698, %v5978
        %v6011 = vadd.f32 %v5699, %v5979
        %v6012 = vadd.f32 %v5700, %v5980
        %v6013 = vadd.f32 %v5701, %v5981
        %v6014 = vadd.f32 %v5702, %v5982
        %v6015 = vadd.f32 %v5703, %v5983
        %v6016 = vadd.f32 %v5704, %v5984
        %v6017 = vadd.f32 %v5705, %v5985
        %v6018 = vadd.f32 %v5706, %v5986
        %v6019 = vadd.f32 %v5707, %v5987
        %v6020 = vadd.f32 %v5708, %v5988
        %v6021 = vadd.f32 %v5709, %v5989
        %v6022 = vadd.f32 %v5710, %v5990
        %v6023 = vadd.f32 %v5711, %v5991
        %v6024 = vadd.f32 %v5712, %v5992
        %v6025 = vadd.f32 %v5713, %v5993
        %v6026 = vadd.f32 %v5714, %v5994
        %v6027 = vadd.f32 %v5715, %v5995
        %v6028 = vadd.f32 %v5716, %v5996
        %v6029 = vadd.f32 %v5717, %v5997
        %v6030 = vadd.f32 %v5718, %v5998
        %v6031 = vadd.f32 %v5719, %v5999
        %v6032 = vadd.f32 %v5720, %v6000
        %v6033 = vadd.f32 %v5721, %v6001
        %v6034 = vadd.f32 %v5722, %v6002
        %v6035 = vadd.f32 %v5723, %v6003
        %v6036 = vadd.f32 %v5724, %v6004
        %v6037 = vadd.f32 %v5725, %v6005
        %6038 = vst [vmem:[%s448] sm:$0xff] %v6006
        %6039 = vst [vmem:[%s448 + $0x8] sm:$0xff] %v6007
        %6040 = vst [vmem:[%s448 + $0x10] sm:$0xff] %v6008
        %6041 = vst [vmem:[%s448 + $0x18] sm:$0xff] %v6009
        %6042 = vst [vmem:[%s448 + $0x20] sm:$0xff] %v6010
        %6043 = vst [vmem:[%s448 + $0x28] sm:$0xff] %v6011
        %6044 = vst [vmem:[%s448 + $0x30] sm:$0xff] %v6012
        %6045 = vst [vmem:[%s448 + $0x38] sm:$0xff] %v6013
        %6046 = vst [vmem:[%s448 + $0x40] sm:$0xff] %v6014
        %6047 = vst [vmem:[%s448 + $0x48] sm:$0xff] %v6015
        %6048 = vst [vmem:[%s448 + $0x50] sm:$0xff] %v6016
        %6049 = vst [vmem:[%s448 + $0x58] sm:$0xff] %v6017
        %6050 = vst [vmem:[%s448 + $0x60] sm:$0xff] %v6018
        %6051 = vst [vmem:[%s448 + $0x68] sm:$0xff] %v6019
        %6052 = vst [vmem:[%s448 + $0x70] sm:$0xff] %v6020
        %6053 = vst [vmem:[%s448 + $0x78] sm:$0xff] %v6021
        %6054 = vst [vmem:[%s448 + $0x80] sm:$0xff] %v6022
        %6055 = vst [vmem:[%s448 + $0x88] sm:$0xff] %v6023
        %6056 = vst [vmem:[%s448 + $0x90] sm:$0xff] %v6024
        %6057 = vst [vmem:[%s448 + $0x98] sm:$0xff] %v6025
        %6058 = vst [vmem:[%s448 + $0xa0] sm:$0xff] %v6026
        %6059 = vst [vmem:[%s448 + $0xa8] sm:$0xff] %v6027
        %6060 = vst [vmem:[%s448 + $0xb0] sm:$0xff] %v6028
        %6061 = vst [vmem:[%s448 + $0xb8] sm:$0xff] %v6029
        %6062 = vst [vmem:[%s448 + $0xc0] sm:$0xff] %v6030
        %6063 = vst [vmem:[%s448 + $0xc8] sm:$0xff] %v6031
        %6064 = vst [vmem:[%s448 + $0xd0] sm:$0xff] %v6032
        %6065 = vst [vmem:[%s448 + $0xd8] sm:$0xff] %v6033
        %6066 = vst [vmem:[%s448 + $0xe0] sm:$0xff] %v6034
        %6067 = vst [vmem:[%s448 + $0xe8] sm:$0xff] %v6035
        %6068 = vst [vmem:[%s448 + $0xf0] sm:$0xff] %v6036
        %6069 = vst [vmem:[%s448 + $0xf8] sm:$0xff] %v6037
        %s6070 = sand.u32 %s274, 1
        %s6071 = scalar_lea.sflag [#allocation5], %s6070
        %s6072 = sand.u32 %s274, 1
        %s6073 = smul.addr %s6072, 256
        %s6074 = scalar_lea.vmem [#allocation11], %s6073
        // Predicated region
        $region81: #{tpu_custom_call.1} parent=63 // pred_check
          %p6075 = pneg %p284
        $region82: #{tpu_custom_call.1} parent=63 // pred_check_branch
          %6077 = sbr.rel (%p6075) target = $region84
        $region83: #{tpu_custom_call.1} parent=63 // pred_region
          %s6079 = ssub.s32 4096, 4096
          %6080 = vsyncadd %s6071, %s6079
          %s6081 = smul.addr %s30, 32
          %s6082 = smul.addr %s6081, 128
          %s6083 = scalar_lea.hbm %s11, %s6082
          %s6084 = sshll.u32 %s6074, 4
          %s6085 = int_to_ptr.vmem [resolvable:$true] %s6084
          %6090 = dma.vmem_to_hbm [thread:$0]  %s6085, 4096, %s6083, %s6071, 128, 128, 8
        $region84: #{tpu_custom_call.1} parent=63 // pred_fallthru
          _
      $region64: #{tpu_custom_call.1} parent=5 // pred_fallthru
        _
      %p6091 = scmp.le.s32.totalorder 2, %s25
      // Predicated region
      $region85: #{tpu_custom_call.1} parent=5 // pred_check
        %p6092 = pneg %p6091
      $region86: #{tpu_custom_call.1} parent=5 // pred_check_branch
        %6094 = sbr.rel (%p6092) target = $region88
      $region87: #{tpu_custom_call.1} parent=5 // pred_region
        %s6095 = ssub.s32 %s25, 2
        // Predicated region
        $region89: #{tpu_custom_call.1} parent=87 // pred_check
          %p6096 = pneg %p290
        $region90: #{tpu_custom_call.1} parent=87 // pred_check_branch
          %6098 = sbr.rel (%p6096) target = $region92
        $region91: #{tpu_custom_call.1} parent=87 // pred_region
          %s6099 = sand.u32 %s275, 1
          %s6100 = scalar_lea.sflag [#allocation5], %s6099
          %s6101 = sand.u32 %s275, 1
          %s6102 = smul.addr %s6101, 256
          %s6103 = scalar_lea.vmem [#allocation11], %s6102
          %6104 = dma.done %s6100, 4096
        $region92: #{tpu_custom_call.1} parent=87 // pred_fallthru
          _
      $region88: #{tpu_custom_call.1} parent=5 // pred_fallthru
        _
    $region6: #{tpu_custom_call.1} parent=1 // loop_footer
      %s29 = sadd.s32 1, %s25
    $region7: #{tpu_custom_call.1} parent=1 // loop_footer_branch
      %24 = sbr.rel target = $region3
    $region8: #{tpu_custom_call.1} parent=1 // loop_exit
      _
    %6105 = vsyncpa [#allocation4], 1
    %s6106 = scalar_lea.sflag [#allocation4], 1
    %6107 = vsyncpa %s6106, 1
    %6108 = vsyncpa [#allocation7], 1
    %6109 = vsyncpa [#allocation10], 1
    %6110 = vsyncpa [#allocation5], 1
    %s6111 = scalar_lea.sflag [#allocation5], 1
    %6112 = vsyncpa %s6111, 1

</llo_original>
